<compile_context>
chip_gen: v7x
topology: tpu7x:2x2x1
jax: 0.10.0
libtpu: 0.0.40
codegen_flags: <defaults>
</compile_context>

<pallas_src>
import math
from functools import partial

import numpy as np
import jax
import jax.numpy as jnp
from jax import lax
from jax.experimental import pallas as pl
from jax.experimental.pallas import tpu as pltpu


# ---------------------------------------------------------------------------
# Pallas kernels
# ---------------------------------------------------------------------------

def _embed_kernel(p_ref, w_ref, b_ref, cls_ref, pos_ref, o_ref):
    """Whole-batch patch embedding: (B*P, K) @ (K, D) + b + pos, CLS + pad rows."""
    B, P, K = p_ref.shape
    _, Tp, D = o_ref.shape

    pos = pos_ref[...]                                               # (P+1, D) f32
    emb = jnp.dot(p_ref[...].reshape(B * P, K).astype(jnp.bfloat16), w_ref[...],
                  preferred_element_type=jnp.float32)                # (B*P, D)
    emb = emb.reshape(B, P, D) + b_ref[...] + pos[1:, :]             # broadcast add
    cls_row = (cls_ref[...] + pos[0:1, :]).reshape(1, 1, D)          # (1, 1, D)
    cls_rows = jnp.broadcast_to(cls_row, (B, 1, D))
    pad = jnp.zeros((B, Tp - 1 - P, D), jnp.float32)                 # inert pad rows
    o_ref[...] = jnp.concatenate([cls_rows, emb, pad], axis=1)       # (B, Tp, D)


def _blocks_kernel(x_ref,
                   qkvw_ref, qkvb_ref, projw_ref, projb_ref,
                   fc1w_ref, fc1b_ref, fc2w_ref, fc2b_ref,
                   ln1g_ref, ln1b_ref, ln2g_ref, ln2b_ref,
                   ng_ref, nb_ref,
                   cls_ref,
                   acc_ref,
                   *, num_heads, eps, t_real):
    """One grid step == one transformer layer; residual stream lives in acc_ref."""
    l = pl.program_id(0)
    n_layers = pl.num_programs(0)

    @pl.when(l == 0)
    def _():
        acc_ref[...] = x_ref[...]                                    # load residual once

    x = acc_ref[...]                                                 # (B, Tp, D) f32
    B, Tp, D = x.shape
    M = B * Tp
    hd = D // num_heads
    scale = hd ** -0.5

    def layer_norm(v, g, b):                                         # v: (M, D)
        m = jnp.mean(v, axis=-1, keepdims=True)
        c = v - m
        var = jnp.mean(c * c, axis=-1, keepdims=True)
        return c * lax.rsqrt(var + eps) * g + b                      # rsqrt -> EUP

    xf = x.reshape(M, D)                                             # flattened rows

    # ---- attention branch --------------------------------------------------
    h = layer_norm(xf, ln1g_ref[0], ln1b_ref[0])
    qkv = jnp.dot(h.astype(jnp.bfloat16), qkvw_ref[0],
                  preferred_element_type=jnp.float32) + qkvb_ref[0]  # (M, 3D)
    qkv = qkv.reshape(B, Tp, 3 * D)

    # mask padded key columns out of every softmax denominator
    key_ids = lax.broadcasted_iota(jnp.int32, (1, 1, Tp), 2)
    key_mask = jnp.where(key_ids < t_real, 0.0, -1e30).astype(jnp.float32)

    attn_f = jnp.zeros((M, D), jnp.float32)
    projw = projw_ref[0]                                             # (D, D) bf16
    for n in range(num_heads):                                       # static unroll (3)
        q = qkv[:, :, n * hd:(n + 1) * hd].astype(jnp.bfloat16)
        k = qkv[:, :, D + n * hd:D + (n + 1) * hd].astype(jnp.bfloat16)
        v = qkv[:, :, 2 * D + n * hd:2 * D + (n + 1) * hd].astype(jnp.bfloat16)
        s = jnp.einsum('bqd,bkd->bqk', q, k,
                       preferred_element_type=jnp.float32) * scale + key_mask
        s = s - jnp.max(s, axis=-1, keepdims=True)
        p = jnp.exp(s)
        p = p / jnp.sum(p, axis=-1, keepdims=True)                   # exact softmax
        head = jnp.einsum('bqk,bkd->bqd', p.astype(jnp.bfloat16), v,
                          preferred_element_type=jnp.float32)        # (B, Tp, hd)
        # per-head accumulation into the output projection (no lane concat)
        attn_f = attn_f + jnp.dot(head.reshape(M, hd).astype(jnp.bfloat16),
                                  projw[n * hd:(n + 1) * hd, :],
                                  preferred_element_type=jnp.float32)
    xf = xf + attn_f + projb_ref[0]

    # ---- MLP branch ----------------------------------------------------------
    h = layer_norm(xf, ln2g_ref[0], ln2b_ref[0])
    h = jnp.dot(h.astype(jnp.bfloat16), fc1w_ref[0],
                preferred_element_type=jnp.float32) + fc1b_ref[0]
    # TODO(synk): PyTorch nn.GELU uses the exact erf form; erf lowering is not
    # guaranteed in Mosaic, so the tanh-approximate GELU is used in-kernel.
    h = 0.5 * h * (1.0 + jnp.tanh(0.7978845608028654 * (h + 0.044715 * h * h * h)))
    h = jnp.dot(h.astype(jnp.bfloat16), fc2w_ref[0],
                preferred_element_type=jnp.float32) + fc2b_ref[0]
    xf = xf + h

    acc_ref[...] = xf.reshape(B, Tp, D)

    # ---- fused final LayerNorm of the CLS row only (last layer) ------------
    @pl.when(l == n_layers - 1)
    def _():
        cls = xf.reshape(B, Tp, D)[:, 0, :]                          # (B, D)
        m = jnp.mean(cls, axis=-1, keepdims=True)
        c = cls - m
        var = jnp.mean(c * c, axis=-1, keepdims=True)
        cls_ref[...] = c * lax.rsqrt(var + eps) * ng_ref[...] + nb_ref[...]


# ---------------------------------------------------------------------------
# pallas_call wrappers
# ---------------------------------------------------------------------------

def patch_embed(patches, params, Tp):
    B, P, K = patches.shape
    D = params["patch_w"].shape[1]
    T_real = P + 1
    return pl.pallas_call(
        _embed_kernel,
        out_shape=jax.ShapeDtypeStruct((B, Tp, D), jnp.float32),
        grid=(1,),
        in_specs=[
            pl.BlockSpec((B, P, K), lambda i: (0, 0, 0)),
            pl.BlockSpec((K, D), lambda i: (0, 0)),
            pl.BlockSpec((1, D), lambda i: (0, 0)),
            pl.BlockSpec((1, D), lambda i: (0, 0)),
            pl.BlockSpec((T_real, D), lambda i: (0, 0)),
        ],
        out_specs=pl.BlockSpec((B, Tp, D), lambda i: (0, 0, 0)),
        compiler_params=pltpu.CompilerParams(dimension_semantics=("arbitrary",)),
    )(patches, params["patch_w"], params["patch_b"], params["cls"], params["pos"])


def fused_transformer(tokens, params, *, num_heads, eps, t_real):
    """All depth transformer blocks + final CLS LayerNorm in ONE pallas_call."""
    B, Tp, D = tokens.shape
    depth = params["qkv_w"].shape[0]
    H = params["fc1_w"].shape[-1]

    def wspec(shape):   # per-layer slice of a (depth, ...) stacked parameter
        nd = len(shape)
        return pl.BlockSpec((1,) + shape, lambda l, _n=nd: (l,) + (0,) * _n)

    def cspec(shape):   # constant (layer-invariant) parameter / activation
        nd = len(shape)
        return pl.BlockSpec(shape, lambda l, _n=nd: (0,) * _n)

    return pl.pallas_call(
        partial(_blocks_kernel, num_heads=num_heads, eps=eps, t_real=t_real),
        out_shape=jax.ShapeDtypeStruct((B, D), jnp.float32),
        grid=(depth,),
        in_specs=[
            cspec((B, Tp, D)),                          # embedded tokens (loaded once)
            wspec((D, 3 * D)), wspec((1, 3 * D)),       # qkv   (bf16 w, f32 b)
            wspec((D, D)),     wspec((1, D)),           # proj
            wspec((D, H)),     wspec((1, H)),           # fc1
            wspec((H, D)),     wspec((1, D)),           # fc2
            wspec((1, D)), wspec((1, D)),               # ln1 gamma/beta
            wspec((1, D)), wspec((1, D)),               # ln2 gamma/beta
            cspec((1, D)), cspec((1, D)),               # final norm gamma/beta
        ],
        out_specs=pl.BlockSpec((B, D), lambda l: (0, 0)),
        scratch_shapes=[pltpu.VMEM((B, Tp, D), jnp.float32)],   # residual stream
        compiler_params=pltpu.CompilerParams(dimension_semantics=("arbitrary",)),
    )(tokens,
      params["qkv_w"], params["qkv_b"], params["proj_w"], params["proj_b"],
      params["fc1_w"], params["fc1_b"], params["fc2_w"], params["fc2_b"],
      params["ln1_g"], params["ln1_b"], params["ln2_g"], params["ln2_b"],
      params["norm_g"], params["norm_b"])


# ---------------------------------------------------------------------------
# Fixed 2D sincos positional embedding (matches the reference numpy code)
# ---------------------------------------------------------------------------

def _sincos_1d(embed_dim, pos):
    omega = np.arange(embed_dim // 2, dtype=np.float32)
    omega /= embed_dim / 2.0
    omega = 1.0 / 10000 ** omega
    pos = pos.reshape(-1)
    out = np.einsum("m,d->md", pos, omega)
    return np.concatenate([np.sin(out), np.cos(out)], axis=1)


def get_2d_sincos_pos_embed(embed_dim, grid_size, cls_token=False):
    grid_h = np.arange(grid_size, dtype=np.float32)
    grid_w = np.arange(grid_size, dtype=np.float32)
    grid = np.stack(np.meshgrid(grid_w, grid_h), axis=0)
    grid = grid.reshape([2, 1, grid_size, grid_size])
    emb = np.concatenate([_sincos_1d(embed_dim // 2, grid[0]),
                          _sincos_1d(embed_dim // 2, grid[1])], axis=1)
    if cls_token:
        emb = np.concatenate([np.zeros([1, embed_dim]), emb], axis=0)
    return emb


# ---------------------------------------------------------------------------
# Parameter init (xavier-uniform linears, zero biases, unit LN gains,
# normal(0, 0.02) CLS token, fixed sincos pos-embed) — mirrors the spec init.
# Per-layer weights are STACKED on a leading (depth,) axis for the fused kernel,
# pre-transposed to (in, out), and stored in bf16 (MXU-native); f32 accumulation
# + f32 LayerNorm/softmax keep the numerics safe.
# ---------------------------------------------------------------------------

def init_params(key, img_size=32, patch_size=4, in_chans=3, embed_dim=192,
                depth=12, mlp_ratio=4.0):
    D = embed_dim
    H = int(D * mlp_ratio)
    K = in_chans * patch_size * patch_size
    keys = jax.random.split(key, 6)

    def xavier(k, shape, fan_in, fan_out):
        bound = math.sqrt(6.0 / (fan_in + fan_out))
        return jax.random.uniform(k, shape, jnp.float32, -bound, bound)

    # NOTE: nn.LayerNorm default eps=1e-5 (the spec passes plain nn.LayerNorm).
    return {
        "patch_w": xavier(keys[0], (K, D), K, D).astype(jnp.bfloat16),
        "patch_b": jnp.zeros((1, D), jnp.float32),
        "cls": (0.02 * jax.random.normal(keys[1], (1, D))).astype(jnp.float32),
        "pos": jnp.asarray(
            get_2d_sincos_pos_embed(D, img_size // patch_size, cls_token=True),
            dtype=jnp.float32),                                  # (num_patches+1, D)
        "norm_g": jnp.ones((1, D), jnp.float32),
        "norm_b": jnp.zeros((1, D), jnp.float32),
        # stacked per-layer params (leading layer axis) for the fused blocks kernel
        "qkv_w": xavier(keys[2], (depth, D, 3 * D), D, 3 * D).astype(jnp.bfloat16),
        "qkv_b": jnp.zeros((depth, 1, 3 * D), jnp.float32),
        "proj_w": xavier(keys[3], (depth, D, D), D, D).astype(jnp.bfloat16),
        "proj_b": jnp.zeros((depth, 1, D), jnp.float32),
        "fc1_w": xavier(keys[4], (depth, D, H), D, H).astype(jnp.bfloat16),
        "fc1_b": jnp.zeros((depth, 1, H), jnp.float32),
        "fc2_w": xavier(keys[5], (depth, H, D), H, D).astype(jnp.bfloat16),
        "fc2_b": jnp.zeros((depth, 1, D), jnp.float32),
        "ln1_g": jnp.ones((depth, 1, D), jnp.float32),
        "ln1_b": jnp.zeros((depth, 1, D), jnp.float32),
        "ln2_g": jnp.ones((depth, 1, D), jnp.float32),
        "ln2_b": jnp.zeros((depth, 1, D), jnp.float32),
    }


# ---------------------------------------------------------------------------
# Forward pass: EnergyNet(x) = forward_feature(x)[:, 0, :]
# ---------------------------------------------------------------------------

def energy_net_forward(params, x, *, patch_size=4, num_heads=3, eps=1e-5):
    B, C, Himg, Wimg = x.shape
    gh, gw = Himg // patch_size, Wimg // patch_size
    P = gh * gw
    T_real = P + 1
    Tp = ((T_real + 7) // 8) * 8                         # pad tokens to sublane multiple

    # Non-overlapping 4x4 patch extraction (pure layout glue; matches the
    # stride-4 Conv2d with weight flattened in (c, kh, kw) order).
    patches = x.reshape(B, C, gh, patch_size, gw, patch_size)
    patches = patches.transpose(0, 2, 4, 1, 3, 5).reshape(
        B, P, C * patch_size * patch_size).astype(jnp.float32)

    tokens = patch_embed(patches, params, Tp)            # (B, Tp, D), pad rows = 0
    return fused_transformer(tokens, params, num_heads=num_heads,
                             eps=eps, t_real=T_real)     # (B, D) CLS features


if __name__ == "__main__":
    key = jax.random.PRNGKey(0)
    kp, kx = jax.random.split(key)

    # Spec: img_size=32, patch_size=4, in_chans=3, embed_dim=192, depth=12, heads=3
    params = init_params(kp, img_size=32, patch_size=4, in_chans=3,
                         embed_dim=192, depth=12, mlp_ratio=4.0)
    x = jax.random.normal(kx, (2, 3, 32, 32), dtype=jnp.float32)

    z = jax.jit(energy_net_forward)(params, x)
    jax.block_until_ready(z)
    assert z.shape == (2, 192)
    assert bool(jnp.all(jnp.isfinite(z)))
    print("KERNEL_OK")
</pallas_src>

<mosaic_0001>
module attributes {stable_mosaic.version = 11 : i64} {
  func.func @_embed_kernel(%arg0: i32, %arg1: memref<2x64x48xf32, #tpu.memory_space<vmem>>, %arg2: memref<48x192xbf16, #tpu.memory_space<vmem>>, %arg3: memref<1x192xf32, #tpu.memory_space<vmem>>, %arg4: memref<1x192xf32, #tpu.memory_space<vmem>>, %arg5: memref<65x192xf32, #tpu.memory_space<vmem>>, %arg6: memref<2x72x192xf32, #tpu.memory_space<vmem>>) attributes {dimension_semantics = [#tpu.dimension_semantics<arbitrary>], iteration_bounds = array<i64: 1>, scalar_prefetch = 0 : i64, scratch_operands = 0 : i64, tpu.core_type = #tpu.core_type<tc>, window_params = [{pipeline_mode = #tpu.pipeline_mode<synchronous>, transform_indices = @transform_0, window_bounds = array<i64: 2, 64, 48>}, {pipeline_mode = #tpu.pipeline_mode<synchronous>, transform_indices = @transform_1, window_bounds = array<i64: 48, 192>}, {pipeline_mode = #tpu.pipeline_mode<synchronous>, transform_indices = @transform_2, window_bounds = array<i64: 1, 192>}, {pipeline_mode = #tpu.pipeline_mode<synchronous>, transform_indices = @transform_3, window_bounds = array<i64: 1, 192>}, {pipeline_mode = #tpu.pipeline_mode<synchronous>, transform_indices = @transform_4, window_bounds = array<i64: 65, 192>}, {pipeline_mode = #tpu.pipeline_mode<synchronous>, transform_indices = @transform_5, window_bounds = array<i64: 2, 72, 192>}]} {
    %c0 = arith.constant 0 : index
    %c0_0 = arith.constant 0 : index
    %0 = vector.load %arg5[%c0, %c0_0] : memref<65x192xf32, #tpu.memory_space<vmem>>, vector<65x192xf32>
    %c0_1 = arith.constant 0 : index
    %c0_2 = arith.constant 0 : index
    %c0_3 = arith.constant 0 : index
    %1 = vector.load %arg1[%c0_1, %c0_2, %c0_3] : memref<2x64x48xf32, #tpu.memory_space<vmem>>, vector<2x64x48xf32>
    %2 = vector.shape_cast %1 : vector<2x64x48xf32> to vector<128x48xf32>
    %3 = arith.truncf %2 : vector<128x48xf32> to vector<128x48xbf16>
    %c0_4 = arith.constant 0 : index
    %c0_5 = arith.constant 0 : index
    %4 = vector.load %arg2[%c0_4, %c0_5] : memref<48x192xbf16, #tpu.memory_space<vmem>>, vector<48x192xbf16>
    %cst = arith.constant dense<0.000000e+00> : vector<128x192xf32>
    %5 = tpu.matmul %3, %4, %cst {dimension_numbers = #tpu.dot_dimension_numbers<[1], [0], [0], [1], [0, 0, 1, 1], [], []>} : vector<128x48xbf16>, vector<48x192xbf16>, vector<128x192xf32> -> vector<128x192xf32>
    %6 = vector.shape_cast %5 : vector<128x192xf32> to vector<2x64x192xf32>
    %c0_6 = arith.constant 0 : index
    %c0_7 = arith.constant 0 : index
    %7 = vector.load %arg3[%c0_6, %c0_7] : memref<1x192xf32, #tpu.memory_space<vmem>>, vector<1x192xf32>
    %8 = vector.shape_cast %7 : vector<1x192xf32> to vector<1x1x192xf32>
    %9 = vector.broadcast %8 : vector<1x1x192xf32> to vector<2x64x192xf32>
    %10 = arith.addf %6, %9 : vector<2x64x192xf32>
    %11 = vector.extract_strided_slice %0 {offsets = [1, 0], sizes = [64, 192], strides = [1, 1]} : vector<65x192xf32> to vector<64x192xf32>
    %12 = vector.shape_cast %11 : vector<64x192xf32> to vector<1x64x192xf32>
    %13 = vector.broadcast %12 : vector<1x64x192xf32> to vector<2x64x192xf32>
    %14 = arith.addf %10, %13 : vector<2x64x192xf32>
    %c0_8 = arith.constant 0 : index
    %c0_9 = arith.constant 0 : index
    %15 = vector.load %arg4[%c0_8, %c0_9] : memref<1x192xf32, #tpu.memory_space<vmem>>, vector<1x192xf32>
    %16 = vector.extract_strided_slice %0 {offsets = [0, 0], sizes = [1, 192], strides = [1, 1]} : vector<65x192xf32> to vector<1x192xf32>
    %17 = arith.addf %15, %16 : vector<1x192xf32>
    %18 = vector.shape_cast %17 : vector<1x192xf32> to vector<1x1x192xf32>
    %19 = vector.shape_cast %18 : vector<1x1x192xf32> to vector<1x1x192xf32>
    %20 = vector.broadcast %19 : vector<1x1x192xf32> to vector<2x1x192xf32>
    %cst_10 = arith.constant 0.000000e+00 : f32
    %21 = vector.broadcast %cst_10 : f32 to vector<2x7x192xf32>
    %22 = tpu.concatenate %20, %14, %21 in 1 : vector<2x1x192xf32>, vector<2x64x192xf32>, vector<2x7x192xf32> -> vector<2x72x192xf32>
    %c0_11 = arith.constant 0 : index
    %c0_12 = arith.constant 0 : index
    %c0_13 = arith.constant 0 : index
    %23 = vector.load %arg6[%c0_11, %c0_12, %c0_13] : memref<2x72x192xf32, #tpu.memory_space<vmem>>, vector<2x72x192xf32>
    tpu.vector_store %arg6[%c0_11, %c0_12, %c0_13], %22 {strides = array<i32>} : memref<2x72x192xf32, #tpu.memory_space<vmem>>, vector<2x72x192xf32>,
    return
  }
  func.func @transform_0(%arg0: i32) -> (i32, i32, i32) {
    %c0_i32 = arith.constant 0 : i32
    %c0_i32_0 = arith.constant 0 : i32
    %c0_i32_1 = arith.constant 0 : i32
    %c0_i32_2 = arith.constant 0 : i32
    return %c0_i32, %c0_i32_0, %c0_i32_1 : i32, i32, i32
  }
  func.func @transform_1(%arg0: i32) -> (i32, i32) {
    %c0_i32 = arith.constant 0 : i32
    %c0_i32_0 = arith.constant 0 : i32
    %c0_i32_1 = arith.constant 0 : i32
    return %c0_i32, %c0_i32_0 : i32, i32
  }
  func.func @transform_2(%arg0: i32) -> (i32, i32) {
    %c0_i32 = arith.constant 0 : i32
    %c0_i32_0 = arith.constant 0 : i32
    %c0_i32_1 = arith.constant 0 : i32
    return %c0_i32, %c0_i32_0 : i32, i32
  }
  func.func @transform_3(%arg0: i32) -> (i32, i32) {
    %c0_i32 = arith.constant 0 : i32
    %c0_i32_0 = arith.constant 0 : i32
    %c0_i32_1 = arith.constant 0 : i32
    return %c0_i32, %c0_i32_0 : i32, i32
  }
  func.func @transform_4(%arg0: i32) -> (i32, i32) {
    %c0_i32 = arith.constant 0 : i32
    %c0_i32_0 = arith.constant 0 : i32
    %c0_i32_1 = arith.constant 0 : i32
    return %c0_i32, %c0_i32_0 : i32, i32
  }
  func.func @transform_5(%arg0: i32) -> (i32, i32, i32) {
    %c0_i32 = arith.constant 0 : i32
    %c0_i32_0 = arith.constant 0 : i32
    %c0_i32_1 = arith.constant 0 : i32
    %c0_i32_2 = arith.constant 0 : i32
    return %c0_i32, %c0_i32_0, %c0_i32_1 : i32, i32, i32
  }
}

module attributes {stable_mosaic.version = 11 : i64} {
  func.func @_blocks_kernel(%arg0: i32, %arg1: memref<2x72x192xf32, #tpu.memory_space<vmem>>, %arg2: memref<1x192x576xbf16, #tpu.memory_space<vmem>>, %arg3: memref<1x1x576xf32, #tpu.memory_space<vmem>>, %arg4: memref<1x192x192xbf16, #tpu.memory_space<vmem>>, %arg5: memref<1x1x192xf32, #tpu.memory_space<vmem>>, %arg6: memref<1x192x768xbf16, #tpu.memory_space<vmem>>, %arg7: memref<1x1x768xf32, #tpu.memory_space<vmem>>, %arg8: memref<1x768x192xbf16, #tpu.memory_space<vmem>>, %arg9: memref<1x1x192xf32, #tpu.memory_space<vmem>>, %arg10: memref<1x1x192xf32, #tpu.memory_space<vmem>>, %arg11: memref<1x1x192xf32, #tpu.memory_space<vmem>>, %arg12: memref<1x1x192xf32, #tpu.memory_space<vmem>>, %arg13: memref<1x1x192xf32, #tpu.memory_space<vmem>>, %arg14: memref<1x192xf32, #tpu.memory_space<vmem>>, %arg15: memref<1x192xf32, #tpu.memory_space<vmem>>, %arg16: memref<2x192xf32, #tpu.memory_space<vmem>>, %arg17: memref<2x72x192xf32, #tpu.memory_space<vmem>>) attributes {dimension_semantics = [#tpu.dimension_semantics<arbitrary>], iteration_bounds = array<i64: 12>, scalar_prefetch = 0 : i64, scratch_operands = 1 : i64, tpu.core_type = #tpu.core_type<tc>, window_params = [{pipeline_mode = #tpu.pipeline_mode<synchronous>, transform_indices = @transform_0, window_bounds = array<i64: 2, 72, 192>}, {transform_indices = @transform_1, window_bounds = array<i64: 1, 192, 576>}, {transform_indices = @transform_2, window_bounds = array<i64: 1, 1, 576>}, {transform_indices = @transform_3, window_bounds = array<i64: 1, 192, 192>}, {transform_indices = @transform_4, window_bounds = array<i64: 1, 1, 192>}, {transform_indices = @transform_5, window_bounds = array<i64: 1, 192, 768>}, {transform_indices = @transform_6, window_bounds = array<i64: 1, 1, 768>}, {transform_indices = @transform_7, window_bounds = array<i64: 1, 768, 192>}, {transform_indices = @transform_8, window_bounds = array<i64: 1, 1, 192>}, {transform_indices = @transform_9, window_bounds = array<i64: 1, 1, 192>}, {transform_indices = @transform_10, window_bounds = array<i64: 1, 1, 192>}, {transform_indices = @transform_11, window_bounds = array<i64: 1, 1, 192>}, {transform_indices = @transform_12, window_bounds = array<i64: 1, 1, 192>}, {pipeline_mode = #tpu.pipeline_mode<synchronous>, transform_indices = @transform_13, window_bounds = array<i64: 1, 192>}, {pipeline_mode = #tpu.pipeline_mode<synchronous>, transform_indices = @transform_14, window_bounds = array<i64: 1, 192>}, {pipeline_mode = #tpu.pipeline_mode<synchronous>, transform_indices = @transform_15, window_bounds = array<i64: 2, 192>}]} {
    %c0_i32 = arith.constant 0 : i32
    %0 = arith.cmpi eq, %arg0, %c0_i32 : i32
    %1 = arith.extui %0 : i1 to i32
    %c0_i32_0 = arith.constant 0 : i32
    %2 = arith.cmpi ne, %1, %c0_i32_0 : i32
    scf.if %2 {
      %c0_80 = arith.constant 0 : index
      %c0_81 = arith.constant 0 : index
      %c0_82 = arith.constant 0 : index
      %192 = vector.load %arg1[%c0_80, %c0_81, %c0_82] : memref<2x72x192xf32, #tpu.memory_space<vmem>>, vector<2x72x192xf32>
      %c0_83 = arith.constant 0 : index
      %c0_84 = arith.constant 0 : index
      %c0_85 = arith.constant 0 : index
      %193 = vector.load %arg17[%c0_83, %c0_84, %c0_85] : memref<2x72x192xf32, #tpu.memory_space<vmem>>, vector<2x72x192xf32>
      tpu.vector_store %arg17[%c0_83, %c0_84, %c0_85], %192 {strides = array<i32>} : memref<2x72x192xf32, #tpu.memory_space<vmem>>, vector<2x72x192xf32>,
    } else {
    }
    %c0 = arith.constant 0 : index
    %c0_1 = arith.constant 0 : index
    %c0_2 = arith.constant 0 : index
    %3 = vector.load %arg17[%c0, %c0_1, %c0_2] : memref<2x72x192xf32, #tpu.memory_space<vmem>>, vector<2x72x192xf32>
    %4 = vector.shape_cast %3 : vector<2x72x192xf32> to vector<144x192xf32>
    %c0_3 = arith.constant 0 : index
    %c0_4 = arith.constant 0 : index
    %c0_5 = arith.constant 0 : index
    %5 = vector.load %arg10[%c0_3, %c0_4, %c0_5] : memref<1x1x192xf32, #tpu.memory_space<vmem>>, vector<1x1x192xf32>
    %6 = vector.shape_cast %5 : vector<1x1x192xf32> to vector<1x192xf32>
    %c0_6 = arith.constant 0 : index
    %c0_7 = arith.constant 0 : index
    %c0_8 = arith.constant 0 : index
    %7 = vector.load %arg11[%c0_6, %c0_7, %c0_8] : memref<1x1x192xf32, #tpu.memory_space<vmem>>, vector<1x1x192xf32>
    %8 = vector.shape_cast %7 : vector<1x1x192xf32> to vector<1x192xf32>
    %cst = arith.constant dense<0.000000e+00> : vector<144xf32>
    %9 = vector.multi_reduction <add>, %4, %cst [1] : vector<144x192xf32> to vector<144xf32>
    %10 = vector.shape_cast %9 : vector<144xf32> to vector<144x1xf32>
    %cst_9 = arith.constant 1.920000e+02 : f32
    %11 = vector.broadcast %cst_9 : f32 to vector<144x1xf32>
    %12 = arith.divf %10, %11 : vector<144x1xf32>
    %13 = vector.broadcast %12 : vector<144x1xf32> to vector<144x192xf32>
    %14 = arith.subf %4, %13 : vector<144x192xf32>
    %15 = arith.mulf %14, %14 : vector<144x192xf32>
    %cst_10 = arith.constant dense<0.000000e+00> : vector<144xf32>
    %16 = vector.multi_reduction <add>, %15, %cst_10 [1] : vector<144x192xf32> to vector<144xf32>
    %17 = vector.shape_cast %16 : vector<144xf32> to vector<144x1xf32>
    %cst_11 = arith.constant 1.920000e+02 : f32
    %18 = vector.broadcast %cst_11 : f32 to vector<144x1xf32>
    %19 = arith.divf %17, %18 : vector<144x1xf32>
    %cst_12 = arith.constant 9.99999974E-6 : f32
    %20 = vector.broadcast %cst_12 : f32 to vector<144x1xf32>
    %21 = arith.addf %19, %20 : vector<144x1xf32>
    %22 = math.rsqrt %21 : vector<144x1xf32>
    %23 = vector.broadcast %22 : vector<144x1xf32> to vector<144x192xf32>
    %24 = arith.mulf %14, %23 : vector<144x192xf32>
    %25 = vector.broadcast %6 : vector<1x192xf32> to vector<144x192xf32>
    %26 = arith.mulf %24, %25 : vector<144x192xf32>
    %27 = vector.broadcast %8 : vector<1x192xf32> to vector<144x192xf32>
    %28 = arith.addf %26, %27 : vector<144x192xf32>
    %29 = arith.truncf %28 : vector<144x192xf32> to vector<144x192xbf16>
    %c0_13 = arith.constant 0 : index
    %c0_14 = arith.constant 0 : index
    %c0_15 = arith.constant 0 : index
    %30 = vector.load %arg2[%c0_13, %c0_14, %c0_15] : memref<1x192x576xbf16, #tpu.memory_space<vmem>>, vector<1x192x576xbf16>
    %31 = vector.shape_cast %30 : vector<1x192x576xbf16> to vector<192x576xbf16>
    %cst_16 = arith.constant dense<0.000000e+00> : vector<144x576xf32>
    %32 = tpu.matmul %29, %31, %cst_16 {dimension_numbers = #tpu.dot_dimension_numbers<[1], [0], [0], [1], [0, 0, 1, 1], [], []>} : vector<144x192xbf16>, vector<192x576xbf16>, vector<144x576xf32> -> vector<144x576xf32>
    %c0_17 = arith.constant 0 : index
    %c0_18 = arith.constant 0 : index
    %c0_19 = arith.constant 0 : index
    %33 = vector.load %arg3[%c0_17, %c0_18, %c0_19] : memref<1x1x576xf32, #tpu.memory_space<vmem>>, vector<1x1x576xf32>
    %34 = vector.shape_cast %33 : vector<1x1x576xf32> to vector<1x576xf32>
    %35 = vector.broadcast %34 : vector<1x576xf32> to vector<144x576xf32>
    %36 = arith.addf %32, %35 : vector<144x576xf32>
    %37 = vector.shape_cast %36 : vector<144x576xf32> to vector<2x72x576xf32>
    %38 = tpu.iota {dimensions = array<i32: 2>} : vector<1x1x72xi32>
    %c65_i32 = arith.constant 65 : i32
    %39 = vector.broadcast %c65_i32 : i32 to vector<1x1x72xi32>
    %40 = arith.cmpi slt, %38, %39 : vector<1x1x72xi32>
    %cst_20 = arith.constant 0.000000e+00 : f32
    %cst_21 = arith.constant -1.000000e+30 : f32
    %41 = vector.broadcast %cst_20 : f32 to vector<1x1x72xf32>
    %42 = vector.broadcast %cst_21 : f32 to vector<1x1x72xf32>
    %43 = arith.select %40, %41, %42 : vector<1x1x72xi1>, vector<1x1x72xf32>
    %cst_22 = arith.constant 0.000000e+00 : f32
    %44 = vector.broadcast %cst_22 : f32 to vector<144x192xf32>
    %c0_23 = arith.constant 0 : index
    %c0_24 = arith.constant 0 : index
    %c0_25 = arith.constant 0 : index
    %45 = vector.load %arg4[%c0_23, %c0_24, %c0_25] : memref<1x192x192xbf16, #tpu.memory_space<vmem>>, vector<1x192x192xbf16>
    %46 = vector.shape_cast %45 : vector<1x192x192xbf16> to vector<192x192xbf16>
    %47 = vector.extract_strided_slice %37 {offsets = [0, 0, 0], sizes = [2, 72, 64], strides = [1, 1, 1]} : vector<2x72x576xf32> to vector<2x72x64xf32>
    %48 = arith.truncf %47 : vector<2x72x64xf32> to vector<2x72x64xbf16>
    %49 = vector.extract_strided_slice %37 {offsets = [0, 0, 192], sizes = [2, 72, 64], strides = [1, 1, 1]} : vector<2x72x576xf32> to vector<2x72x64xf32>
    %50 = arith.truncf %49 : vector<2x72x64xf32> to vector<2x72x64xbf16>
    %51 = vector.extract_strided_slice %37 {offsets = [0, 0, 384], sizes = [2, 72, 64], strides = [1, 1, 1]} : vector<2x72x576xf32> to vector<2x72x64xf32>
    %52 = arith.truncf %51 : vector<2x72x64xf32> to vector<2x72x64xbf16>
    "tpu.trace_start"() <{level = 10 : i32, message = "bqd,bkd->bqk"}> : () -> ()
    %cst_26 = arith.constant dense<0.000000e+00> : vector<2x72x72xf32>
    %53 = tpu.matmul %48, %50, %cst_26 {dimension_numbers = #tpu.dot_dimension_numbers<[2], [2], [1], [1], [0, 0, 0, 1, 1, 1], [0], [0]>} : vector<2x72x64xbf16>, vector<2x72x64xbf16>, vector<2x72x72xf32> -> vector<2x72x72xf32>
    "tpu.trace_stop"() : () -> ()
    %cst_27 = arith.constant 1.250000e-01 : f32
    %54 = vector.broadcast %cst_27 : f32 to vector<2x72x72xf32>
    %55 = arith.mulf %53, %54 : vector<2x72x72xf32>
    %56 = vector.broadcast %43 : vector<1x1x72xf32> to vector<2x72x72xf32>
    %57 = arith.addf %55, %56 : vector<2x72x72xf32>
    %cst_28 = arith.constant dense<0xFF800000> : vector<2x72xf32>
    %58 = vector.multi_reduction <maximumf>, %57, %cst_28 [2] : vector<2x72x72xf32> to vector<2x72xf32>
    %59 = vector.shape_cast %58 : vector<2x72xf32> to vector<2x72x1xf32>
    %60 = vector.broadcast %59 : vector<2x72x1xf32> to vector<2x72x72xf32>
    %61 = arith.subf %57, %60 : vector<2x72x72xf32>
    %62 = math.exp %61 : vector<2x72x72xf32>
    %cst_29 = arith.constant dense<0.000000e+00> : vector<2x72xf32>
    %63 = vector.multi_reduction <add>, %62, %cst_29 [2] : vector<2x72x72xf32> to vector<2x72xf32>
    %64 = vector.shape_cast %63 : vector<2x72xf32> to vector<2x72x1xf32>
    %65 = vector.broadcast %64 : vector<2x72x1xf32> to vector<2x72x72xf32>
    %66 = arith.divf %62, %65 : vector<2x72x72xf32>
    %67 = arith.truncf %66 : vector<2x72x72xf32> to vector<2x72x72xbf16>
    "tpu.trace_start"() <{level = 10 : i32, message = "bqk,bkd->bqd"}> : () -> ()
    %cst_30 = arith.constant dense<0.000000e+00> : vector<2x72x64xf32>
    %68 = tpu.matmul %67, %52, %cst_30 {dimension_numbers = #tpu.dot_dimension_numbers<[2], [1], [1], [2], [0, 0, 0, 1, 1, 2], [0], [0]>} : vector<2x72x72xbf16>, vector<2x72x64xbf16>, vector<2x72x64xf32> -> vector<2x72x64xf32>
    "tpu.trace_stop"() : () -> ()
    %69 = vector.shape_cast %68 : vector<2x72x64xf32> to vector<144x64xf32>
    %70 = arith.truncf %69 : vector<144x64xf32> to vector<144x64xbf16>
    %71 = vector.extract_strided_slice %46 {offsets = [0, 0], sizes = [64, 192], strides = [1, 1]} : vector<192x192xbf16> to vector<64x192xbf16>
    %cst_31 = arith.constant dense<0.000000e+00> : vector<144x192xf32>
    %72 = tpu.matmul %70, %71, %cst_31 {dimension_numbers = #tpu.dot_dimension_numbers<[1], [0], [0], [1], [0, 0, 1, 1], [], []>} : vector<144x64xbf16>, vector<64x192xbf16>, vector<144x192xf32> -> vector<144x192xf32>
    %73 = arith.addf %44, %72 : vector<144x192xf32>
    %74 = vector.extract_strided_slice %37 {offsets = [0, 0, 64], sizes = [2, 72, 64], strides = [1, 1, 1]} : vector<2x72x576xf32> to vector<2x72x64xf32>
    %75 = arith.truncf %74 : vector<2x72x64xf32> to vector<2x72x64xbf16>
    %76 = vector.extract_strided_slice %37 {offsets = [0, 0, 256], sizes = [2, 72, 64], strides = [1, 1, 1]} : vector<2x72x576xf32> to vector<2x72x64xf32>
    %77 = arith.truncf %76 : vector<2x72x64xf32> to vector<2x72x64xbf16>
    %78 = vector.extract_strided_slice %37 {offsets = [0, 0, 448], sizes = [2, 72, 64], strides = [1, 1, 1]} : vector<2x72x576xf32> to vector<2x72x64xf32>
    %79 = arith.truncf %78 : vector<2x72x64xf32> to vector<2x72x64xbf16>
    "tpu.trace_start"() <{level = 10 : i32, message = "bqd,bkd->bqk"}> : () -> ()
    %cst_32 = arith.constant dense<0.000000e+00> : vector<2x72x72xf32>
    %80 = tpu.matmul %75, %77, %cst_32 {dimension_numbers = #tpu.dot_dimension_numbers<[2], [2], [1], [1], [0, 0, 0, 1, 1, 1], [0], [0]>} : vector<2x72x64xbf16>, vector<2x72x64xbf16>, vector<2x72x72xf32> -> vector<2x72x72xf32>
    "tpu.trace_stop"() : () -> ()
    %cst_33 = arith.constant 1.250000e-01 : f32
    %81 = vector.broadcast %cst_33 : f32 to vector<2x72x72xf32>
    %82 = arith.mulf %80, %81 : vector<2x72x72xf32>
    %83 = vector.broadcast %43 : vector<1x1x72xf32> to vector<2x72x72xf32>
    %84 = arith.addf %82, %83 : vector<2x72x72xf32>
    %cst_34 = arith.constant dense<0xFF800000> : vector<2x72xf32>
    %85 = vector.multi_reduction <maximumf>, %84, %cst_34 [2] : vector<2x72x72xf32> to vector<2x72xf32>
    %86 = vector.shape_cast %85 : vector<2x72xf32> to vector<2x72x1xf32>
    %87 = vector.broadcast %86 : vector<2x72x1xf32> to vector<2x72x72xf32>
    %88 = arith.subf %84, %87 : vector<2x72x72xf32>
    %89 = math.exp %88 : vector<2x72x72xf32>
    %cst_35 = arith.constant dense<0.000000e+00> : vector<2x72xf32>
    %90 = vector.multi_reduction <add>, %89, %cst_35 [2] : vector<2x72x72xf32> to vector<2x72xf32>
    %91 = vector.shape_cast %90 : vector<2x72xf32> to vector<2x72x1xf32>
    %92 = vector.broadcast %91 : vector<2x72x1xf32> to vector<2x72x72xf32>
    %93 = arith.divf %89, %92 : vector<2x72x72xf32>
    %94 = arith.truncf %93 : vector<2x72x72xf32> to vector<2x72x72xbf16>
    "tpu.trace_start"() <{level = 10 : i32, message = "bqk,bkd->bqd"}> : () -> ()
    %cst_36 = arith.constant dense<0.000000e+00> : vector<2x72x64xf32>
    %95 = tpu.matmul %94, %79, %cst_36 {dimension_numbers = #tpu.dot_dimension_numbers<[2], [1], [1], [2], [0, 0, 0, 1, 1, 2], [0], [0]>} : vector<2x72x72xbf16>, vector<2x72x64xbf16>, vector<2x72x64xf32> -> vector<2x72x64xf32>
    "tpu.trace_stop"() : () -> ()
    %96 = vector.shape_cast %95 : vector<2x72x64xf32> to vector<144x64xf32>
    %97 = arith.truncf %96 : vector<144x64xf32> to vector<144x64xbf16>
    %98 = vector.extract_strided_slice %46 {offsets = [64, 0], sizes = [64, 192], strides = [1, 1]} : vector<192x192xbf16> to vector<64x192xbf16>
    %cst_37 = arith.constant dense<0.000000e+00> : vector<144x192xf32>
    %99 = tpu.matmul %97, %98, %cst_37 {dimension_numbers = #tpu.dot_dimension_numbers<[1], [0], [0], [1], [0, 0, 1, 1], [], []>} : vector<144x64xbf16>, vector<64x192xbf16>, vector<144x192xf32> -> vector<144x192xf32>
    %100 = arith.addf %73, %99 : vector<144x192xf32>
    %101 = vector.extract_strided_slice %37 {offsets = [0, 0, 128], sizes = [2, 72, 64], strides = [1, 1, 1]} : vector<2x72x576xf32> to vector<2x72x64xf32>
    %102 = arith.truncf %101 : vector<2x72x64xf32> to vector<2x72x64xbf16>
    %103 = vector.extract_strided_slice %37 {offsets = [0, 0, 320], sizes = [2, 72, 64], strides = [1, 1, 1]} : vector<2x72x576xf32> to vector<2x72x64xf32>
    %104 = arith.truncf %103 : vector<2x72x64xf32> to vector<2x72x64xbf16>
    %105 = vector.extract_strided_slice %37 {offsets = [0, 0, 512], sizes = [2, 72, 64], strides = [1, 1, 1]} : vector<2x72x576xf32> to vector<2x72x64xf32>
    %106 = arith.truncf %105 : vector<2x72x64xf32> to vector<2x72x64xbf16>
    "tpu.trace_start"() <{level = 10 : i32, message = "bqd,bkd->bqk"}> : () -> ()
    %cst_38 = arith.constant dense<0.000000e+00> : vector<2x72x72xf32>
    %107 = tpu.matmul %102, %104, %cst_38 {dimension_numbers = #tpu.dot_dimension_numbers<[2], [2], [1], [1], [0, 0, 0, 1, 1, 1], [0], [0]>} : vector<2x72x64xbf16>, vector<2x72x64xbf16>, vector<2x72x72xf32> -> vector<2x72x72xf32>
    "tpu.trace_stop"() : () -> ()
    %cst_39 = arith.constant 1.250000e-01 : f32
    %108 = vector.broadcast %cst_39 : f32 to vector<2x72x72xf32>
    %109 = arith.mulf %107, %108 : vector<2x72x72xf32>
    %110 = vector.broadcast %43 : vector<1x1x72xf32> to vector<2x72x72xf32>
    %111 = arith.addf %109, %110 : vector<2x72x72xf32>
    %cst_40 = arith.constant dense<0xFF800000> : vector<2x72xf32>
    %112 = vector.multi_reduction <maximumf>, %111, %cst_40 [2] : vector<2x72x72xf32> to vector<2x72xf32>
    %113 = vector.shape_cast %112 : vector<2x72xf32> to vector<2x72x1xf32>
    %114 = vector.broadcast %113 : vector<2x72x1xf32> to vector<2x72x72xf32>
    %115 = arith.subf %111, %114 : vector<2x72x72xf32>
    %116 = math.exp %115 : vector<2x72x72xf32>
    %cst_41 = arith.constant dense<0.000000e+00> : vector<2x72xf32>
    %117 = vector.multi_reduction <add>, %116, %cst_41 [2] : vector<2x72x72xf32> to vector<2x72xf32>
    %118 = vector.shape_cast %117 : vector<2x72xf32> to vector<2x72x1xf32>
    %119 = vector.broadcast %118 : vector<2x72x1xf32> to vector<2x72x72xf32>
    %120 = arith.divf %116, %119 : vector<2x72x72xf32>
    %121 = arith.truncf %120 : vector<2x72x72xf32> to vector<2x72x72xbf16>
    "tpu.trace_start"() <{level = 10 : i32, message = "bqk,bkd->bqd"}> : () -> ()
    %cst_42 = arith.constant dense<0.000000e+00> : vector<2x72x64xf32>
    %122 = tpu.matmul %121, %106, %cst_42 {dimension_numbers = #tpu.dot_dimension_numbers<[2], [1], [1], [2], [0, 0, 0, 1, 1, 2], [0], [0]>} : vector<2x72x72xbf16>, vector<2x72x64xbf16>, vector<2x72x64xf32> -> vector<2x72x64xf32>
    "tpu.trace_stop"() : () -> ()
    %123 = vector.shape_cast %122 : vector<2x72x64xf32> to vector<144x64xf32>
    %124 = arith.truncf %123 : vector<144x64xf32> to vector<144x64xbf16>
    %125 = vector.extract_strided_slice %46 {offsets = [128, 0], sizes = [64, 192], strides = [1, 1]} : vector<192x192xbf16> to vector<64x192xbf16>
    %cst_43 = arith.constant dense<0.000000e+00> : vector<144x192xf32>
    %126 = tpu.matmul %124, %125, %cst_43 {dimension_numbers = #tpu.dot_dimension_numbers<[1], [0], [0], [1], [0, 0, 1, 1], [], []>} : vector<144x64xbf16>, vector<64x192xbf16>, vector<144x192xf32> -> vector<144x192xf32>
    %127 = arith.addf %100, %126 : vector<144x192xf32>
    %128 = arith.addf %4, %127 : vector<144x192xf32>
    %c0_44 = arith.constant 0 : index
    %c0_45 = arith.constant 0 : index
    %c0_46 = arith.constant 0 : index
    %129 = vector.load %arg5[%c0_44, %c0_45, %c0_46] : memref<1x1x192xf32, #tpu.memory_space<vmem>>, vector<1x1x192xf32>
    %130 = vector.shape_cast %129 : vector<1x1x192xf32> to vector<1x192xf32>
    %131 = vector.broadcast %130 : vector<1x192xf32> to vector<144x192xf32>
    %132 = arith.addf %128, %131 : vector<144x192xf32>
    %c0_47 = arith.constant 0 : index
    %c0_48 = arith.constant 0 : index
    %c0_49 = arith.constant 0 : index
    %133 = vector.load %arg12[%c0_47, %c0_48, %c0_49] : memref<1x1x192xf32, #tpu.memory_space<vmem>>, vector<1x1x192xf32>
    %134 = vector.shape_cast %133 : vector<1x1x192xf32> to vector<1x192xf32>
    %c0_50 = arith.constant 0 : index
    %c0_51 = arith.constant 0 : index
    %c0_52 = arith.constant 0 : index
    %135 = vector.load %arg13[%c0_50, %c0_51, %c0_52] : memref<1x1x192xf32, #tpu.memory_space<vmem>>, vector<1x1x192xf32>
    %136 = vector.shape_cast %135 : vector<1x1x192xf32> to vector<1x192xf32>
    %cst_53 = arith.constant dense<0.000000e+00> : vector<144xf32>
    %137 = vector.multi_reduction <add>, %132, %cst_53 [1] : vector<144x192xf32> to vector<144xf32>
    %138 = vector.shape_cast %137 : vector<144xf32> to vector<144x1xf32>
    %cst_54 = arith.constant 1.920000e+02 : f32
    %139 = vector.broadcast %cst_54 : f32 to vector<144x1xf32>
    %140 = arith.divf %138, %139 : vector<144x1xf32>
    %141 = vector.broadcast %140 : vector<144x1xf32> to vector<144x192xf32>
    %142 = arith.subf %132, %141 : vector<144x192xf32>
    %143 = arith.mulf %142, %142 : vector<144x192xf32>
    %cst_55 = arith.constant dense<0.000000e+00> : vector<144xf32>
    %144 = vector.multi_reduction <add>, %143, %cst_55 [1] : vector<144x192xf32> to vector<144xf32>
    %145 = vector.shape_cast %144 : vector<144xf32> to vector<144x1xf32>
    %cst_56 = arith.constant 1.920000e+02 : f32
    %146 = vector.broadcast %cst_56 : f32 to vector<144x1xf32>
    %147 = arith.divf %145, %146 : vector<144x1xf32>
    %cst_57 = arith.constant 9.99999974E-6 : f32
    %148 = vector.broadcast %cst_57 : f32 to vector<144x1xf32>
    %149 = arith.addf %147, %148 : vector<144x1xf32>
    %150 = math.rsqrt %149 : vector<144x1xf32>
    %151 = vector.broadcast %150 : vector<144x1xf32> to vector<144x192xf32>
    %152 = arith.mulf %142, %151 : vector<144x192xf32>
    %153 = vector.broadcast %134 : vector<1x192xf32> to vector<144x192xf32>
    %154 = arith.mulf %152, %153 : vector<144x192xf32>
    %155 = vector.broadcast %136 : vector<1x192xf32> to vector<144x192xf32>
    %156 = arith.addf %154, %155 : vector<144x192xf32>
    %157 = arith.truncf %156 : vector<144x192xf32> to vector<144x192xbf16>
    %c0_58 = arith.constant 0 : index
    %c0_59 = arith.constant 0 : index
    %c0_60 = arith.constant 0 : index
    %158 = vector.load %arg6[%c0_58, %c0_59, %c0_60] : memref<1x192x768xbf16, #tpu.memory_space<vmem>>, vector<1x192x768xbf16>
    %159 = vector.shape_cast %158 : vector<1x192x768xbf16> to vector<192x768xbf16>
    %cst_61 = arith.constant dense<0.000000e+00> : vector<144x768xf32>
    %160 = tpu.matmul %157, %159, %cst_61 {dimension_numbers = #tpu.dot_dimension_numbers<[1], [0], [0], [1], [0, 0, 1, 1], [], []>} : vector<144x192xbf16>, vector<192x768xbf16>, vector<144x768xf32> -> vector<144x768xf32>
    %c0_62 = arith.constant 0 : index
    %c0_63 = arith.constant 0 : index
    %c0_64 = arith.constant 0 : index
    %161 = vector.load %arg7[%c0_62, %c0_63, %c0_64] : memref<1x1x768xf32, #tpu.memory_space<vmem>>, vector<1x1x768xf32>
    %162 = vector.shape_cast %161 : vector<1x1x768xf32> to vector<1x768xf32>
    %163 = vector.broadcast %162 : vector<1x768xf32> to vector<144x768xf32>
    %164 = arith.addf %160, %163 : vector<144x768xf32>
    %cst_65 = arith.constant 5.000000e-01 : f32
    %165 = vector.broadcast %cst_65 : f32 to vector<144x768xf32>
    %166 = arith.mulf %165, %164 : vector<144x768xf32>
    %cst_66 = arith.constant 4.471500e-02 : f32
    %167 = vector.broadcast %cst_66 : f32 to vector<144x768xf32>
    %168 = arith.mulf %167, %164 : vector<144x768xf32>
    %169 = arith.mulf %168, %164 : vector<144x768xf32>
    %170 = arith.mulf %169, %164 : vector<144x768xf32>
    %171 = arith.addf %164, %170 : vector<144x768xf32>
    %cst_67 = arith.constant 0.797884583 : f32
    %172 = vector.broadcast %cst_67 : f32 to vector<144x768xf32>
    %173 = arith.mulf %172, %171 : vector<144x768xf32>
    %174 = math.tanh %173 : vector<144x768xf32>
    %cst_68 = arith.constant 1.000000e+00 : f32
    %175 = vector.broadcast %cst_68 : f32 to vector<144x768xf32>
    %176 = arith.addf %175, %174 : vector<144x768xf32>
    %177 = arith.mulf %166, %176 : vector<144x768xf32>
    %178 = arith.truncf %177 : vector<144x768xf32> to vector<144x768xbf16>
    %c0_69 = arith.constant 0 : index
    %c0_70 = arith.constant 0 : index
    %c0_71 = arith.constant 0 : index
    %179 = vector.load %arg8[%c0_69, %c0_70, %c0_71] : memref<1x768x192xbf16, #tpu.memory_space<vmem>>, vector<1x768x192xbf16>
    %180 = vector.shape_cast %179 : vector<1x768x192xbf16> to vector<768x192xbf16>
    %cst_72 = arith.constant dense<0.000000e+00> : vector<144x192xf32>
    %181 = tpu.matmul %178, %180, %cst_72 {dimension_numbers = #tpu.dot_dimension_numbers<[1], [0], [0], [1], [0, 0, 1, 1], [], []>} : vector<144x768xbf16>, vector<768x192xbf16>, vector<144x192xf32> -> vector<144x192xf32>
    %c0_73 = arith.constant 0 : index
    %c0_74 = arith.constant 0 : index
    %c0_75 = arith.constant 0 : index
    %182 = vector.load %arg9[%c0_73, %c0_74, %c0_75] : memref<1x1x192xf32, #tpu.memory_space<vmem>>, vector<1x1x192xf32>
    %183 = vector.shape_cast %182 : vector<1x1x192xf32> to vector<1x192xf32>
    %184 = vector.broadcast %183 : vector<1x192xf32> to vector<144x192xf32>
    %185 = arith.addf %181, %184 : vector<144x192xf32>
    %186 = arith.addf %132, %185 : vector<144x192xf32>
    %187 = vector.shape_cast %186 : vector<144x192xf32> to vector<2x72x192xf32>
    %c0_76 = arith.constant 0 : index
    %c0_77 = arith.constant 0 : index
    %c0_78 = arith.constant 0 : index
    %188 = vector.load %arg17[%c0_76, %c0_77, %c0_78] : memref<2x72x192xf32, #tpu.memory_space<vmem>>, vector<2x72x192xf32>
    tpu.vector_store %arg17[%c0_76, %c0_77, %c0_78], %187 {strides = array<i32>} : memref<2x72x192xf32, #tpu.memory_space<vmem>>, vector<2x72x192xf32>,
    %c11_i32 = arith.constant 11 : i32
    %189 = arith.cmpi eq, %arg0, %c11_i32 : i32
    %190 = arith.extui %189 : i1 to i32
    %c0_i32_79 = arith.constant 0 : i32
    %191 = arith.cmpi ne, %190, %c0_i32_79 : i32
    scf.if %191 {
      %192 = vector.shape_cast %186 : vector<144x192xf32> to vector<2x72x192xf32>
      %193 = vector.extract_strided_slice %192 {offsets = [0, 0, 0], sizes = [2, 1, 192], strides = [1, 1, 1]} : vector<2x72x192xf32> to vector<2x1x192xf32>
      %194 = vector.shape_cast %193 : vector<2x1x192xf32> to vector<2x192xf32>
      %cst_80 = arith.constant dense<0.000000e+00> : vector<2xf32>
      %195 = vector.multi_reduction <add>, %194, %cst_80 [1] : vector<2x192xf32> to vector<2xf32>
      %196 = vector.shape_cast %195 : vector<2xf32> to vector<2x1xf32>
      %cst_81 = arith.constant 1.920000e+02 : f32
      %197 = vector.broadcast %cst_81 : f32 to vector<2x1xf32>
      %198 = arith.divf %196, %197 : vector<2x1xf32>
      %199 = vector.broadcast %198 : vector<2x1xf32> to vector<2x192xf32>
      %200 = arith.subf %194, %199 : vector<2x192xf32>
      %201 = arith.mulf %200, %200 : vector<2x192xf32>
      %cst_82 = arith.constant dense<0.000000e+00> : vector<2xf32>
      %202 = vector.multi_reduction <add>, %201, %cst_82 [1] : vector<2x192xf32> to vector<2xf32>
      %203 = vector.shape_cast %202 : vector<2xf32> to vector<2x1xf32>
      %cst_83 = arith.constant 1.920000e+02 : f32
      %204 = vector.broadcast %cst_83 : f32 to vector<2x1xf32>
      %205 = arith.divf %203, %204 : vector<2x1xf32>
      %cst_84 = arith.constant 9.99999974E-6 : f32
      %206 = vector.broadcast %cst_84 : f32 to vector<2x1xf32>
      %207 = arith.addf %205, %206 : vector<2x1xf32>
      %208 = math.rsqrt %207 : vector<2x1xf32>
      %209 = vector.broadcast %208 : vector<2x1xf32> to vector<2x192xf32>
      %210 = arith.mulf %200, %209 : vector<2x192xf32>
      %c0_85 = arith.constant 0 : index
      %c0_86 = arith.constant 0 : index
      %211 = vector.load %arg14[%c0_85, %c0_86] : memref<1x192xf32, #tpu.memory_space<vmem>>, vector<1x192xf32>
      %212 = vector.broadcast %211 : vector<1x192xf32> to vector<2x192xf32>
      %213 = arith.mulf %210, %212 : vector<2x192xf32>
      %c0_87 = arith.constant 0 : index
      %c0_88 = arith.constant 0 : index
      %214 = vector.load %arg15[%c0_87, %c0_88] : memref<1x192xf32, #tpu.memory_space<vmem>>, vector<1x192xf32>
      %215 = vector.broadcast %214 : vector<1x192xf32> to vector<2x192xf32>
      %216 = arith.addf %213, %215 : vector<2x192xf32>
      %c0_89 = arith.constant 0 : index
      %c0_90 = arith.constant 0 : index
      %217 = vector.load %arg16[%c0_89, %c0_90] : memref<2x192xf32, #tpu.memory_space<vmem>>, vector<2x192xf32>
      tpu.vector_store %arg16[%c0_89, %c0_90], %216 {strides = array<i32>} : memref<2x192xf32, #tpu.memory_space<vmem>>, vector<2x192xf32>,
    } else {
    }
    return
  }
  func.func @transform_0(%arg0: i32) -> (i32, i32, i32) {
    %c0_i32 = arith.constant 0 : i32
    %c0_i32_0 = arith.constant 0 : i32
    %c0_i32_1 = arith.constant 0 : i32
    %c0_i32_2 = arith.constant 0 : i32
    return %c0_i32, %c0_i32_0, %c0_i32_1 : i32, i32, i32
  }
  func.func @transform_1(%arg0: i32) -> (i32, i32, i32) {
    %c0_i32 = arith.constant 0 : i32
    %c0_i32_0 = arith.constant 0 : i32
    %c0_i32_1 = arith.constant 0 : i32
    return %arg0, %c0_i32, %c0_i32_0 : i32, i32, i32
  }
  func.func @transform_2(%arg0: i32) -> (i32, i32, i32) {
    %c0_i32 = arith.constant 0 : i32
    %c0_i32_0 = arith.constant 0 : i32
    %c0_i32_1 = arith.constant 0 : i32
    return %arg0, %c0_i32, %c0_i32_0 : i32, i32, i32
  }
  func.func @transform_3(%arg0: i32) -> (i32, i32, i32) {
    %c0_i32 = arith.constant 0 : i32
    %c0_i32_0 = arith.constant 0 : i32
    %c0_i32_1 = arith.constant 0 : i32
    return %arg0, %c0_i32, %c0_i32_0 : i32, i32, i32
  }
  func.func @transform_4(%arg0: i32) -> (i32, i32, i32) {
    %c0_i32 = arith.constant 0 : i32
    %c0_i32_0 = arith.constant 0 : i32
    %c0_i32_1 = arith.constant 0 : i32
    return %arg0, %c0_i32, %c0_i32_0 : i32, i32, i32
  }
  func.func @transform_5(%arg0: i32) -> (i32, i32, i32) {
    %c0_i32 = arith.constant 0 : i32
    %c0_i32_0 = arith.constant 0 : i32
    %c0_i32_1 = arith.constant 0 : i32
    return %arg0, %c0_i32, %c0_i32_0 : i32, i32, i32
  }
  func.func @transform_6(%arg0: i32) -> (i32, i32, i32) {
    %c0_i32 = arith.constant 0 : i32
    %c0_i32_0 = arith.constant 0 : i32
    %c0_i32_1 = arith.constant 0 : i32
    return %arg0, %c0_i32, %c0_i32_0 : i32, i32, i32
  }
  func.func @transform_7(%arg0: i32) -> (i32, i32, i32) {
    %c0_i32 = arith.constant 0 : i32
    %c0_i32_0 = arith.constant 0 : i32
    %c0_i32_1 = arith.constant 0 : i32
    return %arg0, %c0_i32, %c0_i32_0 : i32, i32, i32
  }
  func.func @transform_8(%arg0: i32) -> (i32, i32, i32) {
    %c0_i32 = arith.constant 0 : i32
    %c0_i32_0 = arith.constant 0 : i32
    %c0_i32_1 = arith.constant 0 : i32
    return %arg0, %c0_i32, %c0_i32_0 : i32, i32, i32
  }
  func.func @transform_9(%arg0: i32) -> (i32, i32, i32) {
    %c0_i32 = arith.constant 0 : i32
    %c0_i32_0 = arith.constant 0 : i32
    %c0_i32_1 = arith.constant 0 : i32
    return %arg0, %c0_i32, %c0_i32_0 : i32, i32, i32
  }
  func.func @transform_10(%arg0: i32) -> (i32, i32, i32) {
    %c0_i32 = arith.constant 0 : i32
    %c0_i32_0 = arith.constant 0 : i32
    %c0_i32_1 = arith.constant 0 : i32
    return %arg0, %c0_i32, %c0_i32_0 : i32, i32, i32
  }
  func.func @transform_11(%arg0: i32) -> (i32, i32, i32) {
    %c0_i32 = arith.constant 0 : i32
    %c0_i32_0 = arith.constant 0 : i32
    %c0_i32_1 = arith.constant 0 : i32
    return %arg0, %c0_i32, %c0_i32_0 : i32, i32, i32
  }
  func.func @transform_12(%arg0: i32) -> (i32, i32, i32) {
    %c0_i32 = arith.constant 0 : i32
    %c0_i32_0 = arith.constant 0 : i32
    %c0_i32_1 = arith.constant 0 : i32
    return %arg0, %c0_i32, %c0_i32_0 : i32, i32, i32
  }
  func.func @transform_13(%arg0: i32) -> (i32, i32) {
    %c0_i32 = arith.constant 0 : i32
    %c0_i32_0 = arith.constant 0 : i32
    %c0_i32_1 = arith.constant 0 : i32
    return %c0_i32, %c0_i32_0 : i32, i32
  }
  func.func @transform_14(%arg0: i32) -> (i32, i32) {
    %c0_i32 = arith.constant 0 : i32
    %c0_i32_0 = arith.constant 0 : i32
    %c0_i32_1 = arith.constant 0 : i32
    return %c0_i32, %c0_i32_0 : i32, i32
  }
  func.func @transform_15(%arg0: i32) -> (i32, i32) {
    %c0_i32 = arith.constant 0 : i32
    %c0_i32_0 = arith.constant 0 : i32
    %c0_i32_1 = arith.constant 0 : i32
    return %c0_i32, %c0_i32_0 : i32, i32
  }
}

</mosaic_0001>

<llo_original>
// kernel: energy_net_forward.2
$region0: #{energy_net_forward.2}
  #allocation0 [shape = 'u32[]', space=smem, size = 0x4, offset = 0x4, fixed_abs, tag = 'smem constant byte address 0x4 - core index']
  #allocation1 [shape = 'u32[144,128]{1,0:T(1,128)}', space=vmem, size = 0x12000, scoped, tag = 'internal scratch']
  %s0 = inlined_call_operand.vmem [shape: f32[2,64,48], index: 0, kind: input, shape index: {}]
  %s1 = inlined_call_operand.hbm [shape: bf16[48,192], index: 1, kind: input, shape index: {}]
  %s2 = inlined_call_operand.hbm [shape: f32[1,192], index: 2, kind: input, shape index: {}]
  %s3 = inlined_call_operand.hbm [shape: f32[1,192], index: 3, kind: input, shape index: {}]
  %s4 = inlined_call_operand.hbm [shape: f32[65,192], index: 4, kind: input, shape index: {}]
  %s5 = inlined_call_operand.vmem [shape: f32[2,72,192], index: 5, kind: output, shape index: {}]
  %s6 = sld [smem:[#allocation0]]
  $region46: #{energy_net_forward.2} parent=0
    _
  %s8 = ssub.s32 1, %s6
  %s9 = scalar_select 0, %s8, %s6
  $region1: #{energy_net_forward.2} parent=0
    #allocation2 [shape = 'u8[24576]{0}', space=vmem, size = 0x6000, scoped, tag = 'input window, operand 1, single buffered']
    #allocation3 [shape = 's32[1]{0}', space=sflag, size = 0x4, scoped, tag = 'scoped memory for energy_net_forward.2']
    #allocation4 [shape = 'u8[1024]{0}', space=vmem, size = 0x400, scoped, tag = 'input window, operand 2, single buffered']
    #allocation5 [shape = 's32[1]{0}', space=sflag, size = 0x4, scoped, tag = 'scoped memory for energy_net_forward.2']
    #allocation6 [shape = 'u8[1024]{0}', space=vmem, size = 0x400, scoped, tag = 'input window, operand 3, single buffered']
    #allocation7 [shape = 'u8[73728]{0}', space=vmem, size = 0x12000, scoped, tag = 'input window, operand 4, single buffered']
    #allocation8 [shape = 's32[1]{0}', space=sflag, size = 0x4, scoped, tag = 'scoped memory for energy_net_forward.2']
    %10 = vsyncpa [#allocation3], 0
    %11 = vsyncpa [#allocation5], 0
    %12 = vsyncpa [#allocation8], 0
    // Predicated region
    $region2: #{energy_net_forward.2} parent=1 // pred_check
      _
    $region3: #{energy_net_forward.2} parent=1 // pred_check_branch
      %14 = sbr.rel (0) target = $region5
    $region4: #{energy_net_forward.2} parent=1 // pred_region
      _
    $region5: #{energy_net_forward.2} parent=1 // pred_fallthru
      _
    // Predicated region
    $region6: #{energy_net_forward.2} parent=1 // pred_check
      _
    $region7: #{energy_net_forward.2} parent=1 // pred_check_branch
      %16 = sbr.rel (0) target = $region9
    $region8: #{energy_net_forward.2} parent=1 // pred_region
      %s18 = ssub.s32 768, 768
      %19 = vsyncadd [#allocation3], %s18
      %s20 = sshll.u32 [#allocation2], 4
      %s21 = int_to_ptr.vmem [resolvable:$true] %s20
      %26 = dma.hbm_to_vmem [thread:$0]  %s1, 768, %s21, [#allocation3], 128, 128, 8
    $region9: #{energy_net_forward.2} parent=1 // pred_fallthru
      _
    // Predicated region
    $region10: #{energy_net_forward.2} parent=1 // pred_check
      _
    $region11: #{energy_net_forward.2} parent=1 // pred_check_branch
      %28 = sbr.rel (0) target = $region13
    $region12: #{energy_net_forward.2} parent=1 // pred_region
      %s30 = ssub.s32 32, 32
      %31 = vsyncadd [#allocation5], %s30
      %s33 = sshll.u32 [#allocation4], 4
      %s34 = int_to_ptr.vmem [resolvable:$true] %s33
      %36 = dma.hbm_to_vmem [thread:$0]  %s2, 32, %s34, [#allocation5]
    $region13: #{energy_net_forward.2} parent=1 // pred_fallthru
      _
    // Predicated region
    $region14: #{energy_net_forward.2} parent=1 // pred_check
      _
    $region15: #{energy_net_forward.2} parent=1 // pred_check_branch
      %38 = sbr.rel (0) target = $region17
    $region16: #{energy_net_forward.2} parent=1 // pred_region
      %s40 = ssub.s32 32, 32
      %41 = vsyncadd [#allocation5], %s40
      %s43 = sshll.u32 [#allocation6], 4
      %s44 = int_to_ptr.vmem [resolvable:$true] %s43
      %46 = dma.hbm_to_vmem [thread:$0]  %s3, 32, %s44, [#allocation5]
    $region17: #{energy_net_forward.2} parent=1 // pred_fallthru
      _
    // Predicated region
    $region18: #{energy_net_forward.2} parent=1 // pred_check
      _
    $region19: #{energy_net_forward.2} parent=1 // pred_check_branch
      %48 = sbr.rel (0) target = $region21
    $region20: #{energy_net_forward.2} parent=1 // pred_region
      %s50 = ssub.s32 2304, 2304
      %51 = vsyncadd [#allocation8], %s50
      %s52 = sshll.u32 [#allocation7], 4
      %s53 = int_to_ptr.vmem [resolvable:$true] %s52
      %58 = dma.hbm_to_vmem [thread:$0]  %s4, 2304, %s53, [#allocation8], 256, 256, 16
    $region21: #{energy_net_forward.2} parent=1 // pred_fallthru
      _
    // Predicated region
    $region22: #{energy_net_forward.2} parent=1 // pred_check
      _
    $region23: #{energy_net_forward.2} parent=1 // pred_check_branch
      %60 = sbr.rel (0) target = $region25
    $region24: #{energy_net_forward.2} parent=1 // pred_region
      %61 = dma.done [#allocation3], 768
    $region25: #{energy_net_forward.2} parent=1 // pred_fallthru
      _
    // Predicated region
    $region26: #{energy_net_forward.2} parent=1 // pred_check
      _
    $region27: #{energy_net_forward.2} parent=1 // pred_check_branch
      %63 = sbr.rel (0) target = $region29
    $region28: #{energy_net_forward.2} parent=1 // pred_region
      %64 = dma.done [#allocation5], 32
    $region29: #{energy_net_forward.2} parent=1 // pred_fallthru
      _
    // Predicated region
    $region30: #{energy_net_forward.2} parent=1 // pred_check
      _
    $region31: #{energy_net_forward.2} parent=1 // pred_check_branch
      %66 = sbr.rel (0) target = $region33
    $region32: #{energy_net_forward.2} parent=1 // pred_region
      %67 = dma.done [#allocation5], 32
    $region33: #{energy_net_forward.2} parent=1 // pred_fallthru
      _
    // Predicated region
    $region34: #{energy_net_forward.2} parent=1 // pred_check
      _
    $region35: #{energy_net_forward.2} parent=1 // pred_check_branch
      %69 = sbr.rel (0) target = $region37
    $region36: #{energy_net_forward.2} parent=1 // pred_region
      %70 = dma.done [#allocation8], 2304
    $region37: #{energy_net_forward.2} parent=1 // pred_fallthru
      _
    %v72 = vld [vmem:[#allocation7] sm:$0xff]
    %v73 = vld [vmem:[#allocation7 + $0x8] sm:$0xff]
    %v74 = vld [vmem:[#allocation7 + $0x10] sm:$0xff]
    %v75 = vld [vmem:[#allocation7 + $0x18] sm:$0xff]
    %v76 = vld [vmem:[#allocation7 + $0x20] sm:$0xff]
    %v77 = vld [vmem:[#allocation7 + $0x28] sm:$0xff]
    %v78 = vld [vmem:[#allocation7 + $0x30] sm:$0xff]
    %v79 = vld [vmem:[#allocation7 + $0x38] sm:$0xff]
    %v80 = vld [vmem:[#allocation7 + $0x40] sm:$0xff]
    %v81 = vld [vmem:[#allocation7 + $0x48] sm:$0xff]
    %v82 = vld [vmem:[#allocation7 + $0x50] sm:$0xff]
    %v83 = vld [vmem:[#allocation7 + $0x58] sm:$0xff]
    %v84 = vld [vmem:[#allocation7 + $0x60] sm:$0xff]
    %v85 = vld [vmem:[#allocation7 + $0x68] sm:$0xff]
    %v86 = vld [vmem:[#allocation7 + $0x70] sm:$0xff]
    %v87 = vld [vmem:[#allocation7 + $0x78] sm:$0xff]
    %v88 = vld [vmem:[#allocation7 + $0x80] sm:$0x1]
    %v89 = vld [vmem:[#allocation7 + $0x88] sm:$0x1]
    %v90 = vld [vmem:[%s0] sm:$0xff]
    %v91 = vld [vmem:[%s0 + $0x8] sm:$0xff]
    %v92 = vld [vmem:[%s0 + $0x10] sm:$0xff]
    %v93 = vld [vmem:[%s0 + $0x18] sm:$0xff]
    %v94 = vld [vmem:[%s0 + $0x20] sm:$0xff]
    %v95 = vld [vmem:[%s0 + $0x28] sm:$0xff]
    %v96 = vld [vmem:[%s0 + $0x30] sm:$0xff]
    %v97 = vld [vmem:[%s0 + $0x38] sm:$0xff]
    %v98 = vld [vmem:[%s0 + $0x40] sm:$0xff]
    %v99 = vld [vmem:[%s0 + $0x48] sm:$0xff]
    %v100 = vld [vmem:[%s0 + $0x50] sm:$0xff]
    %v101 = vld [vmem:[%s0 + $0x58] sm:$0xff]
    %v102 = vld [vmem:[%s0 + $0x60] sm:$0xff]
    %v103 = vld [vmem:[%s0 + $0x68] sm:$0xff]
    %v104 = vld [vmem:[%s0 + $0x70] sm:$0xff]
    %v105 = vld [vmem:[%s0 + $0x78] sm:$0xff]
    %v106 = vpack.c.bf16 %v91, %v90
    %v107 = vpack.c.bf16 %v93, %v92
    %v108 = vpack.c.bf16 %v95, %v94
    %v109 = vpack.c.bf16 %v97, %v96
    %v110 = vpack.c.bf16 %v99, %v98
    %v111 = vpack.c.bf16 %v101, %v100
    %v112 = vpack.c.bf16 %v103, %v102
    %v113 = vpack.c.bf16 %v105, %v104
    %v114 = vld [vmem:[#allocation2] sm:$0xff]
    %v115 = vld [vmem:[#allocation2 + $0x8] sm:$0xff]
    %v116 = vld [vmem:[#allocation2 + $0x10] sm:$0xff]
    %v117 = vld [vmem:[#allocation2 + $0x18] sm:$0xff]
    %v118 = vld [vmem:[#allocation2 + $0x20] sm:$0xff]
    %v119 = vld [vmem:[#allocation2 + $0x28] sm:$0xff]
    %v126 = vunpack.c.l.b16 %v114
    %v127 = vunpack.c.h.b16 %v114
    %v128 = vunpack.c.l.b16 %v115
    %v129 = vunpack.c.h.b16 %v115
    %v130 = vunpack.c.l.b16 %v116
    %v131 = vunpack.c.h.b16 %v116
    %v132 = vunpack.c.l.b16 %v117
    %v133 = vunpack.c.h.b16 %v117
    %v134 = vunpack.c.l.b16 %v118
    %v135 = vunpack.c.h.b16 %v118
    %v136 = vunpack.c.l.b16 %v119
    %v137 = vunpack.c.h.b16 %v119
    %v138 = vpack.c.b16 %v128, %v126
    %v139 = vpack.c.b16 %v129, %v127
    %v140 = vpack.c.b16 %v132, %v130
    %v141 = vpack.c.b16 %v133, %v131
    %v142 = vpack.c.b16 %v136, %v134
    %v143 = vpack.c.b16 %v137, %v135
    %vm150 = vcmask 392192
    %v152 = vsel %vm150, %v106, 0
    %v155 = vsel %vm150, %v107, 0
    %v158 = vsel %vm150, %v108, 0
    %v161 = vsel %vm150, %v109, 0
    %v164 = vsel %vm150, %v110, 0
    %v167 = vsel %vm150, %v111, 0
    %v170 = vsel %vm150, %v112, 0
    %v173 = vsel %vm150, %v113, 0
    %175 = vmatprep.subr.bf16.mxu0 %v139
    %176 = vmatpush1.bf16.msra.mxu0 %v138
    %177 = vmatprep.subr.bf16.mxu0 %v141
    %178 = vmatpush1.bf16.msra.mxu0 %v140
    %179 = vmatprep.subr.bf16.mxu0 %v143
    %180 = vmatpush1.bf16.msra.mxu0 %v142
    %181 = vmatprep.subr.bf16.mxu0 0
    %182 = vmatpush1.bf16.msra.mxu0 0
    %183 = vmatprep.subr.bf16.mxu0 0
    %184 = vmatpush1.bf16.msra.mxu0 0
    %185 = vmatprep.subr.bf16.mxu0 0
    %186 = vmatpush1.bf16.msra.mxu0 0
    %187 = vmatprep.subr.bf16.mxu0 0
    %188 = vmatpush1.bf16.msra.mxu0 0
    %189 = vmatprep.subr.bf16.mxu0 0
    %190 = vmatpush1.bf16.msra.mxu0 0
    %191 = vmatprep.subr.bf16.mxu0 0
    %192 = vmatpush1.bf16.msra.mxu0 0
    %193 = vmatprep.subr.bf16.mxu0 0
    %194 = vmatpush1.bf16.msra.mxu0 0
    %195 = vmatprep.subr.bf16.mxu0 0
    %196 = vmatpush1.bf16.msra.mxu0 0
    %197 = vmatprep.subr.bf16.mxu0 0
    %198 = vmatpush1.bf16.msra.mxu0 0
    %199 = vmatprep.subr.bf16.mxu0 0
    %200 = vmatpush1.bf16.msra.mxu0 0
    %201 = vmatprep.subr.bf16.mxu0 0
    %202 = vmatpush1.bf16.msra.mxu0 0
    %203 = vmatprep.subr.bf16.mxu0 0
    %204 = vmatpush1.bf16.msra.mxu0 0
    %205 = vmatprep.subr.bf16.mxu0 0
    %206 = vmatpush1.bf16.msra.mxu0 0
    %207 = vmatprep.mubr.bf16.mxu0 0
    %208 = vmatmul.mubr.bf16.gmra.mrb[0].mxu0 %v152
    %v209 = vpop.f32.mrb[0].mxu0
    %v210 = vadd.f32 0.0, %v209
    %v211 = vpop.f32.mrb[0].mxu0
    %v212 = vadd.f32 0.0, %v211
    %v213 = vpop.f32.mrb[0].mxu0
    %v214 = vadd.f32 0.0, %v213
    %v215 = vpop.f32.mrb[0].mxu0
    %v216 = vadd.f32 0.0, %v215
    %217 = vmatprep.mubr.bf16.mxu0 0
    %218 = vmatmul.mubr.bf16.gmra.mrb[0].mxu0 %v155
    %v219 = vpop.f32.mrb[0].mxu0
    %v220 = vadd.f32 0.0, %v219
    %v221 = vpop.f32.mrb[0].mxu0
    %v222 = vadd.f32 0.0, %v221
    %v223 = vpop.f32.mrb[0].mxu0
    %v224 = vadd.f32 0.0, %v223
    %v225 = vpop.f32.mrb[0].mxu0
    %v226 = vadd.f32 0.0, %v225
    %227 = vmatprep.mubr.bf16.mxu0 0
    %228 = vmatmul.mubr.bf16.gmra.mrb[0].mxu0 %v158
    %v229 = vpop.f32.mrb[0].mxu0
    %v230 = vadd.f32 0.0, %v229
    %v231 = vpop.f32.mrb[0].mxu0
    %v232 = vadd.f32 0.0, %v231
    %v233 = vpop.f32.mrb[0].mxu0
    %v234 = vadd.f32 0.0, %v233
    %v235 = vpop.f32.mrb[0].mxu0
    %v236 = vadd.f32 0.0, %v235
    %237 = vmatprep.mubr.bf16.mxu0 0
    %238 = vmatmul.mubr.bf16.gmra.mrb[0].mxu0 %v161
    %v239 = vpop.f32.mrb[0].mxu0
    %v240 = vadd.f32 0.0, %v239
    %v241 = vpop.f32.mrb[0].mxu0
    %v242 = vadd.f32 0.0, %v241
    %v243 = vpop.f32.mrb[0].mxu0
    %v244 = vadd.f32 0.0, %v243
    %v245 = vpop.f32.mrb[0].mxu0
    %v246 = vadd.f32 0.0, %v245
    %247 = vmatprep.mubr.bf16.mxu0 0
    %248 = vmatmul.mubr.bf16.gmra.mrb[0].mxu0 %v164
    %v249 = vpop.f32.mrb[0].mxu0
    %v250 = vadd.f32 0.0, %v249
    %v251 = vpop.f32.mrb[0].mxu0
    %v252 = vadd.f32 0.0, %v251
    %v253 = vpop.f32.mrb[0].mxu0
    %v254 = vadd.f32 0.0, %v253
    %v255 = vpop.f32.mrb[0].mxu0
    %v256 = vadd.f32 0.0, %v255
    %257 = vmatprep.mubr.bf16.mxu0 0
    %258 = vmatmul.mubr.bf16.gmra.mrb[0].mxu0 %v167
    %v259 = vpop.f32.mrb[0].mxu0
    %v260 = vadd.f32 0.0, %v259
    %v261 = vpop.f32.mrb[0].mxu0
    %v262 = vadd.f32 0.0, %v261
    %v263 = vpop.f32.mrb[0].mxu0
    %v264 = vadd.f32 0.0, %v263
    %v265 = vpop.f32.mrb[0].mxu0
    %v266 = vadd.f32 0.0, %v265
    %267 = vmatprep.mubr.bf16.mxu0 0
    %268 = vmatmul.mubr.bf16.gmra.mrb[0].mxu0 %v170
    %v269 = vpop.f32.mrb[0].mxu0
    %v270 = vadd.f32 0.0, %v269
    %v271 = vpop.f32.mrb[0].mxu0
    %v272 = vadd.f32 0.0, %v271
    %v273 = vpop.f32.mrb[0].mxu0
    %v274 = vadd.f32 0.0, %v273
    %v275 = vpop.f32.mrb[0].mxu0
    %v276 = vadd.f32 0.0, %v275
    %277 = vmatprep.mubr.bf16.mxu0 0
    %278 = vmatmul.mubr.bf16.gmra.mrb[0].mxu0 %v173
    %v279 = vpop.f32.mrb[0].mxu0
    %v280 = vadd.f32 0.0, %v279
    %v281 = vpop.f32.mrb[0].mxu0
    %v282 = vadd.f32 0.0, %v281
    %v283 = vpop.f32.mrb[0].mxu0
    %v284 = vadd.f32 0.0, %v283
    %v285 = vpop.f32.mrb[0].mxu0
    %v286 = vadd.f32 0.0, %v285
    %287 = vdwg.mxu0
    %v288 = vld [vmem:[#allocation4] sm:$0x3]
    %v290 = vlaneseq
    %v291 = vshrl.u32 %v290, 7
    %v292 = vsub.s32 0, %v291
    %v293 = vrot.slane %v288, %v292
    %v294 = vlaneseq
    %v295 = vshrl.u32 %v294, 7
    %v296 = vsub.s32 1, %v295
    %v297 = vrot.slane %v288, %v296
    %v300 = vadd.f32 %v210, %v293
    %v301 = vadd.f32 %v212, %v297
    %v302 = vadd.f32 %v214, %v293
    %v303 = vadd.f32 %v216, %v297
    %v304 = vadd.f32 %v220, %v293
    %v305 = vadd.f32 %v222, %v297
    %v306 = vadd.f32 %v224, %v293
    %v307 = vadd.f32 %v226, %v297
    %v308 = vadd.f32 %v230, %v293
    %v309 = vadd.f32 %v232, %v297
    %v310 = vadd.f32 %v234, %v293
    %v311 = vadd.f32 %v236, %v297
    %v312 = vadd.f32 %v240, %v293
    %v313 = vadd.f32 %v242, %v297
    %v314 = vadd.f32 %v244, %v293
    %v315 = vadd.f32 %v246, %v297
    %v316 = vadd.f32 %v250, %v293
    %v317 = vadd.f32 %v252, %v297
    %v318 = vadd.f32 %v254, %v293
    %v319 = vadd.f32 %v256, %v297
    %v320 = vadd.f32 %v260, %v293
    %v321 = vadd.f32 %v262, %v297
    %v322 = vadd.f32 %v264, %v293
    %v323 = vadd.f32 %v266, %v297
    %v324 = vadd.f32 %v270, %v293
    %v325 = vadd.f32 %v272, %v297
    %v326 = vadd.f32 %v274, %v293
    %v327 = vadd.f32 %v276, %v297
    %v328 = vadd.f32 %v280, %v293
    %v329 = vadd.f32 %v282, %v297
    %v330 = vadd.f32 %v284, %v293
    %v331 = vadd.f32 %v286, %v297
    %vm350 = vcmask 1046528
    %v351 = vrot.slane %v72, 1
    %v352 = vrot.slane %v74, 1
    %v353 = vsel %vm350, %v351, %v352
    %v354 = vrot.slane %v73, 1
    %v355 = vrot.slane %v75, 1
    %v356 = vsel %vm350, %v354, %v355
    %v357 = vrot.slane %v76, 1
    %v358 = vsel %vm350, %v352, %v357
    %v359 = vrot.slane %v77, 1
    %v360 = vsel %vm350, %v355, %v359
    %v361 = vrot.slane %v78, 1
    %v362 = vsel %vm350, %v357, %v361
    %v363 = vrot.slane %v79, 1
    %v364 = vsel %vm350, %v359, %v363
    %v365 = vrot.slane %v80, 1
    %v366 = vsel %vm350, %v361, %v365
    %v367 = vrot.slane %v81, 1
    %v368 = vsel %vm350, %v363, %v367
    %v369 = vrot.slane %v82, 1
    %v370 = vsel %vm350, %v365, %v369
    %v371 = vrot.slane %v83, 1
    %v372 = vsel %vm350, %v367, %v371
    %v373 = vrot.slane %v84, 1
    %v374 = vsel %vm350, %v369, %v373
    %v375 = vrot.slane %v85, 1
    %v376 = vsel %vm350, %v371, %v375
    %v377 = vrot.slane %v86, 1
    %v378 = vsel %vm350, %v373, %v377
    %v379 = vrot.slane %v87, 1
    %v380 = vsel %vm350, %v375, %v379
    %v381 = vrot.slane %v88, 1
    %v382 = vsel %vm350, %v377, %v381
    %v383 = vrot.slane %v89, 1
    %v384 = vsel %vm350, %v379, %v383
    %v401 = vadd.f32 %v300, %v353
    %v402 = vadd.f32 %v301, %v356
    %v403 = vadd.f32 %v302, %v358
    %v404 = vadd.f32 %v303, %v360
    %v405 = vadd.f32 %v304, %v362
    %v406 = vadd.f32 %v305, %v364
    %v407 = vadd.f32 %v306, %v366
    %v408 = vadd.f32 %v307, %v368
    %v409 = vadd.f32 %v308, %v370
    %v410 = vadd.f32 %v309, %v372
    %v411 = vadd.f32 %v310, %v374
    %v412 = vadd.f32 %v311, %v376
    %v413 = vadd.f32 %v312, %v378
    %v414 = vadd.f32 %v313, %v380
    %v415 = vadd.f32 %v314, %v382
    %v416 = vadd.f32 %v315, %v384
    %v417 = vadd.f32 %v316, %v353
    %v418 = vadd.f32 %v317, %v356
    %v419 = vadd.f32 %v318, %v358
    %v420 = vadd.f32 %v319, %v360
    %v421 = vadd.f32 %v320, %v362
    %v422 = vadd.f32 %v321, %v364
    %v423 = vadd.f32 %v322, %v366
    %v424 = vadd.f32 %v323, %v368
    %v425 = vadd.f32 %v324, %v370
    %v426 = vadd.f32 %v325, %v372
    %v427 = vadd.f32 %v326, %v374
    %v428 = vadd.f32 %v327, %v376
    %v429 = vadd.f32 %v328, %v378
    %v430 = vadd.f32 %v329, %v380
    %v431 = vadd.f32 %v330, %v382
    %v432 = vadd.f32 %v331, %v384
    %v433 = vld [vmem:[#allocation6] sm:$0x3]
    %v434 = vcombine.low %v72, %v73
    %v436 = vunpack.c.l.s4 1966171168
    %v437 = vunpack.c.0.s8 %v436
    %v438 = vlaneseq
    %v439 = vshrl.u32 %v438, 7
    %v440 = vsub.s32 %v437, %v439
    %v441 = vrot.slane %v434, %v440
    %v443 = vunpack.c.l.s4 1966171168
    %v444 = vunpack.c.0.s8 %v443
    %v445 = vlaneseq
    %v446 = vshrl.u32 %v445, 7
    %v447 = vsub.s32 %v444, %v446
    %v448 = vrot.slane %v441, %v447
    %v450 = vadd.f32 %v433, %v448
    %v452 = vlaneseq
    %v453 = vshrl.u32 %v452, 7
    %v454 = vsub.s32 0, %v453
    %v455 = vrot.slane %v450, %v454
    %v456 = vlaneseq
    %v457 = vshrl.u32 %v456, 7
    %v458 = vsub.s32 1, %v457
    %v459 = vrot.slane %v450, %v458
    %vm494 = vcmask 1040384
    %v495 = vrot.slane %v401, 7
    %v496 = vrot.slane %v402, 7
    %v497 = vrot.slane %v403, 7
    %v498 = vsel %vm494, %v495, %v497
    %v499 = vrot.slane %v404, 7
    %v500 = vsel %vm494, %v496, %v499
    %v501 = vrot.slane %v405, 7
    %v502 = vsel %vm494, %v497, %v501
    %v503 = vrot.slane %v406, 7
    %v504 = vsel %vm494, %v499, %v503
    %v505 = vrot.slane %v407, 7
    %v506 = vsel %vm494, %v501, %v505
    %v507 = vrot.slane %v408, 7
    %v508 = vsel %vm494, %v503, %v507
    %v509 = vrot.slane %v409, 7
    %v510 = vsel %vm494, %v505, %v509
    %v511 = vrot.slane %v410, 7
    %v512 = vsel %vm494, %v507, %v511
    %v513 = vrot.slane %v411, 7
    %v514 = vsel %vm494, %v509, %v513
    %v515 = vrot.slane %v412, 7
    %v516 = vsel %vm494, %v511, %v515
    %v517 = vrot.slane %v413, 7
    %v518 = vsel %vm494, %v513, %v517
    %v519 = vrot.slane %v414, 7
    %v520 = vsel %vm494, %v515, %v519
    %v521 = vrot.slane %v415, 7
    %v522 = vsel %vm494, %v517, %v521
    %v523 = vrot.slane %v416, 7
    %v524 = vsel %vm494, %v519, %v523
    %v525 = vrot.slane %v417, 7
    %v526 = vrot.slane %v418, 7
    %v527 = vrot.slane %v419, 7
    %v528 = vsel %vm494, %v525, %v527
    %v529 = vrot.slane %v420, 7
    %v530 = vsel %vm494, %v526, %v529
    %v531 = vrot.slane %v421, 7
    %v532 = vsel %vm494, %v527, %v531
    %v533 = vrot.slane %v422, 7
    %v534 = vsel %vm494, %v529, %v533
    %v535 = vrot.slane %v423, 7
    %v536 = vsel %vm494, %v531, %v535
    %v537 = vrot.slane %v424, 7
    %v538 = vsel %vm494, %v533, %v537
    %v539 = vrot.slane %v425, 7
    %v540 = vsel %vm494, %v535, %v539
    %v541 = vrot.slane %v426, 7
    %v542 = vsel %vm494, %v537, %v541
    %v543 = vrot.slane %v427, 7
    %v544 = vsel %vm494, %v539, %v543
    %v545 = vrot.slane %v428, 7
    %v546 = vsel %vm494, %v541, %v545
    %v547 = vrot.slane %v429, 7
    %v548 = vsel %vm494, %v543, %v547
    %v549 = vrot.slane %v430, 7
    %v550 = vsel %vm494, %v545, %v549
    %v551 = vrot.slane %v431, 7
    %v552 = vsel %vm494, %v547, %v551
    %v553 = vrot.slane %v432, 7
    %v554 = vsel %vm494, %v549, %v553
    %v591 = vsel %vm494, %v455, %v495
    %v592 = vsel %vm494, %v459, %v496
    %v593 = vsel %vm494, %v455, %v525
    %v594 = vsel %vm494, %v459, %v526
    %v595 = vsel %vm494, %v521, 0.0
    %v596 = vsel %vm494, %v523, 0.0
    %v597 = vsel %vm494, %v551, 0.0
    %v598 = vsel %vm494, %v553, 0.0
    %599 = vst [vmem:[%s5] sm:$0xff] %v591
    %vm600 = vcmask 523264
    %601 = vst.msk [vmem:[%s5 + $0x8] sm:$0xff] %vm600, %v592
    %602 = vst [vmem:[%s5 + $0x10] sm:$0xff] %v498
    %603 = vst.msk [vmem:[%s5 + $0x18] sm:$0xff] %vm600, %v500
    %604 = vst [vmem:[%s5 + $0x20] sm:$0xff] %v502
    %605 = vst.msk [vmem:[%s5 + $0x28] sm:$0xff] %vm600, %v504
    %606 = vst [vmem:[%s5 + $0x30] sm:$0xff] %v506
    %607 = vst.msk [vmem:[%s5 + $0x38] sm:$0xff] %vm600, %v508
    %608 = vst [vmem:[%s5 + $0x40] sm:$0xff] %v510
    %609 = vst.msk [vmem:[%s5 + $0x48] sm:$0xff] %vm600, %v512
    %610 = vst [vmem:[%s5 + $0x50] sm:$0xff] %v514
    %611 = vst.msk [vmem:[%s5 + $0x58] sm:$0xff] %vm600, %v516
    %612 = vst [vmem:[%s5 + $0x60] sm:$0xff] %v518
    %613 = vst.msk [vmem:[%s5 + $0x68] sm:$0xff] %vm600, %v520
    %614 = vst [vmem:[%s5 + $0x70] sm:$0xff] %v522
    %615 = vst.msk [vmem:[%s5 + $0x78] sm:$0xff] %vm600, %v524
    %616 = vst [vmem:[%s5 + $0x80] sm:$0xff] %v595
    %617 = vst.msk [vmem:[%s5 + $0x88] sm:$0xff] %vm600, %v596
    %618 = vst [vmem:[%s5 + $0x90] sm:$0xff] %v593
    %619 = vst.msk [vmem:[%s5 + $0x98] sm:$0xff] %vm600, %v594
    %620 = vst [vmem:[%s5 + $0xa0] sm:$0xff] %v528
    %621 = vst.msk [vmem:[%s5 + $0xa8] sm:$0xff] %vm600, %v530
    %622 = vst [vmem:[%s5 + $0xb0] sm:$0xff] %v532
    %623 = vst.msk [vmem:[%s5 + $0xb8] sm:$0xff] %vm600, %v534
    %624 = vst [vmem:[%s5 + $0xc0] sm:$0xff] %v536
    %625 = vst.msk [vmem:[%s5 + $0xc8] sm:$0xff] %vm600, %v538
    %626 = vst [vmem:[%s5 + $0xd0] sm:$0xff] %v540
    %627 = vst.msk [vmem:[%s5 + $0xd8] sm:$0xff] %vm600, %v542
    %628 = vst [vmem:[%s5 + $0xe0] sm:$0xff] %v544
    %629 = vst.msk [vmem:[%s5 + $0xe8] sm:$0xff] %vm600, %v546
    %630 = vst [vmem:[%s5 + $0xf0] sm:$0xff] %v548
    %631 = vst.msk [vmem:[%s5 + $0xf8] sm:$0xff] %vm600, %v550
    %632 = vst [vmem:[%s5 + $0x100] sm:$0xff] %v552
    %633 = vst.msk [vmem:[%s5 + $0x108] sm:$0xff] %vm600, %v554
    %634 = vst [vmem:[%s5 + $0x110] sm:$0xff] %v597
    %635 = vst.msk [vmem:[%s5 + $0x118] sm:$0xff] %vm600, %v598
    // Predicated region
    $region38: #{energy_net_forward.2} parent=1 // pred_check
      _
    $region39: #{energy_net_forward.2} parent=1 // pred_check_branch
      %637 = sbr.rel (0) target = $region41
    $region40: #{energy_net_forward.2} parent=1 // pred_region
      _
    $region41: #{energy_net_forward.2} parent=1 // pred_fallthru
      _
    // Predicated region
    $region42: #{energy_net_forward.2} parent=1 // pred_check
      _
    $region43: #{energy_net_forward.2} parent=1 // pred_check_branch
      %639 = sbr.rel (0) target = $region45
    $region44: #{energy_net_forward.2} parent=1 // pred_region
      _
    $region45: #{energy_net_forward.2} parent=1 // pred_fallthru
      _
    %640 = vsyncpa [#allocation3], 1
    %641 = vsyncpa [#allocation5], 1
    %642 = vsyncpa [#allocation8], 1

// kernel: energy_net_forward.3
$region0: #{energy_net_forward.3}
  #allocation0 [shape = 'u32[]', space=smem, size = 0x4, offset = 0x4, fixed_abs, tag = 'smem constant byte address 0x4 - core index']
  #allocation1 [shape = 'u32[144,128]{1,0:T(1,128)}', space=vmem, size = 0x12000, scoped, tag = 'internal scratch']
  #allocation2 [shape = 'f32[2,72,192]{2,1,0:T(8,128)}', space=vmem, size = 0x24000, scoped, tag = 'scratch operand']
  %s0 = inlined_call_operand.vmem [shape: f32[2,72,192], index: 0, kind: input, shape index: {}]
  %s1 = inlined_call_operand.vmem [shape: bf16[12,192,576], index: 1, kind: input, shape index: {}]
  %s2 = inlined_call_operand.vmem [shape: f32[12,1,576], index: 2, kind: input, shape index: {}]
  %s3 = inlined_call_operand.vmem [shape: bf16[12,192,192], index: 3, kind: input, shape index: {}]
  %s4 = inlined_call_operand.vmem [shape: f32[12,1,192], index: 4, kind: input, shape index: {}]
  %s5 = inlined_call_operand.vmem [shape: bf16[12,192,768], index: 5, kind: input, shape index: {}]
  %s6 = inlined_call_operand.vmem [shape: f32[12,1,768], index: 6, kind: input, shape index: {}]
  %s7 = inlined_call_operand.vmem [shape: bf16[12,768,192], index: 7, kind: input, shape index: {}]
  %s8 = inlined_call_operand.vmem [shape: f32[12,1,192], index: 8, kind: input, shape index: {}]
  %s9 = inlined_call_operand.vmem [shape: f32[12,1,192], index: 9, kind: input, shape index: {}]
  %s10 = inlined_call_operand.vmem [shape: f32[12,1,192], index: 10, kind: input, shape index: {}]
  %s11 = inlined_call_operand.vmem [shape: f32[12,1,192], index: 11, kind: input, shape index: {}]
  %s12 = inlined_call_operand.vmem [shape: f32[12,1,192], index: 12, kind: input, shape index: {}]
  %s13 = inlined_call_operand.vmem [shape: f32[1,192], index: 13, kind: input, shape index: {}]
  %s14 = inlined_call_operand.vmem [shape: f32[1,192], index: 14, kind: input, shape index: {}]
  %s15 = inlined_call_operand.hbm [shape: f32[2,192], index: 15, kind: output, shape index: {}]
  %s16 = sld [smem:[#allocation0]]
  $region101: #{energy_net_forward.3} parent=0
    _
  %s18 = ssub.s32 1, %s16
  %s19 = scalar_select 0, %s18, %s16
  $region1: #{energy_net_forward.3} parent=0
    #allocation3 [shape = 'u8[2048]{0}', space=vmem, size = 0x800, scoped, tag = 'output window, operand 0, single buffered']
    #allocation4 [shape = 's32[2]{0}', space=sflag, size = 0x8, scoped, tag = 'scoped memory for energy_net_forward.3']
    %20 = vsyncpa [#allocation4], 0
    loop: start=0, step=1, limit=14
    $region2: #{energy_net_forward.3} parent=1 // loop_pre_header
      _
    $region3: #{energy_net_forward.3} parent=1 // loop_header
      %s22 = sphi 0, %s26
      %p23 = scmp.ge.s32.totalorder %s22, 14
      %s30 = sphi 0, %s30
      %s32 = sphi 0, %s30
      %s33 = sphi 0, %s32
      %s47 = sphi 0, %s33
      %s53 = sphi 0, %s55
      %s56 = sphi 0, %s53
      %s57 = sphi 0, %s56
      %s73 = sphi 0, %s57
      %s79 = sphi 0, %s81
      %s82 = sphi 0, %s79
      %s83 = sphi 0, %s82
      %s99 = sphi 0, %s83
      %s105 = sphi 0, %s107
      %s108 = sphi 0, %s105
      %s109 = sphi 0, %s108
      %s125 = sphi 0, %s109
      %s131 = sphi 0, %s133
      %s134 = sphi 0, %s131
      %s135 = sphi 0, %s134
      %s151 = sphi 0, %s135
      %s157 = sphi 0, %s159
      %s160 = sphi 0, %s157
      %s161 = sphi 0, %s160
      %s177 = sphi 0, %s161
      %s183 = sphi 0, %s185
      %s186 = sphi 0, %s183
      %s187 = sphi 0, %s186
      %s203 = sphi 0, %s187
      %s209 = sphi 0, %s211
      %s212 = sphi 0, %s209
      %s213 = sphi 0, %s212
      %s229 = sphi 0, %s213
      %s235 = sphi 0, %s237
      %s238 = sphi 0, %s235
      %s239 = sphi 0, %s238
      %s255 = sphi 0, %s239
      %s261 = sphi 0, %s263
      %s264 = sphi 0, %s261
      %s265 = sphi 0, %s264
      %s281 = sphi 0, %s265
      %s287 = sphi 0, %s289
      %s290 = sphi 0, %s287
      %s291 = sphi 0, %s290
      %s307 = sphi 0, %s291
      %s313 = sphi 0, %s315
      %s316 = sphi 0, %s313
      %s317 = sphi 0, %s316
      %s333 = sphi 0, %s317
      %s339 = sphi 0, %s341
      %s342 = sphi 0, %s339
      %s343 = sphi 0, %s342
      %s359 = sphi 0, %s343
      %s363 = sphi 0, %s363
      %s365 = sphi 0, %s363
      %s366 = sphi 0, %s365
      %s380 = sphi 0, %s366
      %s384 = sphi 0, %s384
      %s386 = sphi 0, %s384
      %s387 = sphi 0, %s386
      %s401 = sphi 0, %s387
      %s405 = sphi 0, %s405
      %s407 = sphi 0, %s405
      %s408 = sphi 0, %s407
      %s422 = sphi 0, %s408
    $region4: #{energy_net_forward.3} parent=1 // loop_header_branch
      %25 = sbr.rel (%p23) target = $region8
    $region5: #{energy_net_forward.3} parent=1 // loop_body
      %s27 = ssub.s32 %s22, 1
      %s28 = ssub.s32 %s22, 2
      %s29 = sadd.s32 %s22, 1
      %s31 = sadd.s32 %s30, 1
      %p34 = scmp.eq.s32.totalorder %s22, 11
      %p35 = scmp.ne.s32.totalorder %s30, %s32
      %p36 = scmp.eq.s32.totalorder %s22, 0
      %p37 = por %p35, %p36
      %p38 = scmp.ne.s32.totalorder %s30, %s32
      %p39 = scmp.eq.s32.totalorder %s27, 11
      %p40 = por %p38, %p39
      %p41 = scmp.ne.s32.totalorder %s32, %s33
      %p42 = scmp.eq.s32.totalorder %s27, 0
      %p43 = por %p41, %p42
      %p44 = scmp.ne.s32.totalorder %s32, %s33
      %p45 = scmp.eq.s32.totalorder %s28, 11
      %p46 = por %p44, %p45
      %p48 = scmp.ne.s32.totalorder %s33, %s47
      %p49 = scmp.eq.s32.totalorder %s28, 0
      %p50 = por %p48, %p49
      %s51 = ssub.s32 %s22, %s29
      %p52 = scmp.eq.s32.totalorder %s51, 0
      %s54 = sadd.s32 %s53, 1
      %s55 = scalar_select %p52, %s53, %s54
      %p58 = pneg %p52
      %p59 = scmp.eq.s32.totalorder %s22, 11
      %p60 = por %p58, %p59
      %p61 = scmp.ne.s32.totalorder %s53, %s56
      %p62 = scmp.eq.s32.totalorder %s22, 0
      %p63 = por %p61, %p62
      %p64 = scmp.ne.s32.totalorder %s53, %s56
      %p65 = scmp.eq.s32.totalorder %s27, 11
      %p66 = por %p64, %p65
      %p67 = scmp.ne.s32.totalorder %s56, %s57
      %p68 = scmp.eq.s32.totalorder %s27, 0
      %p69 = por %p67, %p68
      %p70 = scmp.ne.s32.totalorder %s56, %s57
      %p71 = scmp.eq.s32.totalorder %s28, 11
      %p72 = por %p70, %p71
      %p74 = scmp.ne.s32.totalorder %s57, %s73
      %p75 = scmp.eq.s32.totalorder %s28, 0
      %p76 = por %p74, %p75
      %s77 = ssub.s32 %s22, %s29
      %p78 = scmp.eq.s32.totalorder %s77, 0
      %s80 = sadd.s32 %s79, 1
      %s81 = scalar_select %p78, %s79, %s80
      %p84 = pneg %p78
      %p85 = scmp.eq.s32.totalorder %s22, 11
      %p86 = por %p84, %p85
      %p87 = scmp.ne.s32.totalorder %s79, %s82
      %p88 = scmp.eq.s32.totalorder %s22, 0
      %p89 = por %p87, %p88
      %p90 = scmp.ne.s32.totalorder %s79, %s82
      %p91 = scmp.eq.s32.totalorder %s27, 11
      %p92 = por %p90, %p91
      %p93 = scmp.ne.s32.totalorder %s82, %s83
      %p94 = scmp.eq.s32.totalorder %s27, 0
      %p95 = por %p93, %p94
      %p96 = scmp.ne.s32.totalorder %s82, %s83
      %p97 = scmp.eq.s32.totalorder %s28, 11
      %p98 = por %p96, %p97
      %p100 = scmp.ne.s32.totalorder %s83, %s99
      %p101 = scmp.eq.s32.totalorder %s28, 0
      %p102 = por %p100, %p101
      %s103 = ssub.s32 %s22, %s29
      %p104 = scmp.eq.s32.totalorder %s103, 0
      %s106 = sadd.s32 %s105, 1
      %s107 = scalar_select %p104, %s105, %s106
      %p110 = pneg %p104
      %p111 = scmp.eq.s32.totalorder %s22, 11
      %p112 = por %p110, %p111
      %p113 = scmp.ne.s32.totalorder %s105, %s108
      %p114 = scmp.eq.s32.totalorder %s22, 0
      %p115 = por %p113, %p114
      %p116 = scmp.ne.s32.totalorder %s105, %s108
      %p117 = scmp.eq.s32.totalorder %s27, 11
      %p118 = por %p116, %p117
      %p119 = scmp.ne.s32.totalorder %s108, %s109
      %p120 = scmp.eq.s32.totalorder %s27, 0
      %p121 = por %p119, %p120
      %p122 = scmp.ne.s32.totalorder %s108, %s109
      %p123 = scmp.eq.s32.totalorder %s28, 11
      %p124 = por %p122, %p123
      %p126 = scmp.ne.s32.totalorder %s109, %s125
      %p127 = scmp.eq.s32.totalorder %s28, 0
      %p128 = por %p126, %p127
      %s129 = ssub.s32 %s22, %s29
      %p130 = scmp.eq.s32.totalorder %s129, 0
      %s132 = sadd.s32 %s131, 1
      %s133 = scalar_select %p130, %s131, %s132
      %p136 = pneg %p130
      %p137 = scmp.eq.s32.totalorder %s22, 11
      %p138 = por %p136, %p137
      %p139 = scmp.ne.s32.totalorder %s131, %s134
      %p140 = scmp.eq.s32.totalorder %s22, 0
      %p141 = por %p139, %p140
      %p142 = scmp.ne.s32.totalorder %s131, %s134
      %p143 = scmp.eq.s32.totalorder %s27, 11
      %p144 = por %p142, %p143
      %p145 = scmp.ne.s32.totalorder %s134, %s135
      %p146 = scmp.eq.s32.totalorder %s27, 0
      %p147 = por %p145, %p146
      %p148 = scmp.ne.s32.totalorder %s134, %s135
      %p149 = scmp.eq.s32.totalorder %s28, 11
      %p150 = por %p148, %p149
      %p152 = scmp.ne.s32.totalorder %s135, %s151
      %p153 = scmp.eq.s32.totalorder %s28, 0
      %p154 = por %p152, %p153
      %s155 = ssub.s32 %s22, %s29
      %p156 = scmp.eq.s32.totalorder %s155, 0
      %s158 = sadd.s32 %s157, 1
      %s159 = scalar_select %p156, %s157, %s158
      %p162 = pneg %p156
      %p163 = scmp.eq.s32.totalorder %s22, 11
      %p164 = por %p162, %p163
      %p165 = scmp.ne.s32.totalorder %s157, %s160
      %p166 = scmp.eq.s32.totalorder %s22, 0
      %p167 = por %p165, %p166
      %p168 = scmp.ne.s32.totalorder %s157, %s160
      %p169 = scmp.eq.s32.totalorder %s27, 11
      %p170 = por %p168, %p169
      %p171 = scmp.ne.s32.totalorder %s160, %s161
      %p172 = scmp.eq.s32.totalorder %s27, 0
      %p173 = por %p171, %p172
      %p174 = scmp.ne.s32.totalorder %s160, %s161
      %p175 = scmp.eq.s32.totalorder %s28, 11
      %p176 = por %p174, %p175
      %p178 = scmp.ne.s32.totalorder %s161, %s177
      %p179 = scmp.eq.s32.totalorder %s28, 0
      %p180 = por %p178, %p179
      %s181 = ssub.s32 %s22, %s29
      %p182 = scmp.eq.s32.totalorder %s181, 0
      %s184 = sadd.s32 %s183, 1
      %s185 = scalar_select %p182, %s183, %s184
      %p188 = pneg %p182
      %p189 = scmp.eq.s32.totalorder %s22, 11
      %p190 = por %p188, %p189
      %p191 = scmp.ne.s32.totalorder %s183, %s186
      %p192 = scmp.eq.s32.totalorder %s22, 0
      %p193 = por %p191, %p192
      %p194 = scmp.ne.s32.totalorder %s183, %s186
      %p195 = scmp.eq.s32.totalorder %s27, 11
      %p196 = por %p194, %p195
      %p197 = scmp.ne.s32.totalorder %s186, %s187
      %p198 = scmp.eq.s32.totalorder %s27, 0
      %p199 = por %p197, %p198
      %p200 = scmp.ne.s32.totalorder %s186, %s187
      %p201 = scmp.eq.s32.totalorder %s28, 11
      %p202 = por %p200, %p201
      %p204 = scmp.ne.s32.totalorder %s187, %s203
      %p205 = scmp.eq.s32.totalorder %s28, 0
      %p206 = por %p204, %p205
      %s207 = ssub.s32 %s22, %s29
      %p208 = scmp.eq.s32.totalorder %s207, 0
      %s210 = sadd.s32 %s209, 1
      %s211 = scalar_select %p208, %s209, %s210
      %p214 = pneg %p208
      %p215 = scmp.eq.s32.totalorder %s22, 11
      %p216 = por %p214, %p215
      %p217 = scmp.ne.s32.totalorder %s209, %s212
      %p218 = scmp.eq.s32.totalorder %s22, 0
      %p219 = por %p217, %p218
      %p220 = scmp.ne.s32.totalorder %s209, %s212
      %p221 = scmp.eq.s32.totalorder %s27, 11
      %p222 = por %p220, %p221
      %p223 = scmp.ne.s32.totalorder %s212, %s213
      %p224 = scmp.eq.s32.totalorder %s27, 0
      %p225 = por %p223, %p224
      %p226 = scmp.ne.s32.totalorder %s212, %s213
      %p227 = scmp.eq.s32.totalorder %s28, 11
      %p228 = por %p226, %p227
      %p230 = scmp.ne.s32.totalorder %s213, %s229
      %p231 = scmp.eq.s32.totalorder %s28, 0
      %p232 = por %p230, %p231
      %s233 = ssub.s32 %s22, %s29
      %p234 = scmp.eq.s32.totalorder %s233, 0
      %s236 = sadd.s32 %s235, 1
      %s237 = scalar_select %p234, %s235, %s236
      %p240 = pneg %p234
      %p241 = scmp.eq.s32.totalorder %s22, 11
      %p242 = por %p240, %p241
      %p243 = scmp.ne.s32.totalorder %s235, %s238
      %p244 = scmp.eq.s32.totalorder %s22, 0
      %p245 = por %p243, %p244
      %p246 = scmp.ne.s32.totalorder %s235, %s238
      %p247 = scmp.eq.s32.totalorder %s27, 11
      %p248 = por %p246, %p247
      %p249 = scmp.ne.s32.totalorder %s238, %s239
      %p250 = scmp.eq.s32.totalorder %s27, 0
      %p251 = por %p249, %p250
      %p252 = scmp.ne.s32.totalorder %s238, %s239
      %p253 = scmp.eq.s32.totalorder %s28, 11
      %p254 = por %p252, %p253
      %p256 = scmp.ne.s32.totalorder %s239, %s255
      %p257 = scmp.eq.s32.totalorder %s28, 0
      %p258 = por %p256, %p257
      %s259 = ssub.s32 %s22, %s29
      %p260 = scmp.eq.s32.totalorder %s259, 0
      %s262 = sadd.s32 %s261, 1
      %s263 = scalar_select %p260, %s261, %s262
      %p266 = pneg %p260
      %p267 = scmp.eq.s32.totalorder %s22, 11
      %p268 = por %p266, %p267
      %p269 = scmp.ne.s32.totalorder %s261, %s264
      %p270 = scmp.eq.s32.totalorder %s22, 0
      %p271 = por %p269, %p270
      %p272 = scmp.ne.s32.totalorder %s261, %s264
      %p273 = scmp.eq.s32.totalorder %s27, 11
      %p274 = por %p272, %p273
      %p275 = scmp.ne.s32.totalorder %s264, %s265
      %p276 = scmp.eq.s32.totalorder %s27, 0
      %p277 = por %p275, %p276
      %p278 = scmp.ne.s32.totalorder %s264, %s265
      %p279 = scmp.eq.s32.totalorder %s28, 11
      %p280 = por %p278, %p279
      %p282 = scmp.ne.s32.totalorder %s265, %s281
      %p283 = scmp.eq.s32.totalorder %s28, 0
      %p284 = por %p282, %p283
      %s285 = ssub.s32 %s22, %s29
      %p286 = scmp.eq.s32.totalorder %s285, 0
      %s288 = sadd.s32 %s287, 1
      %s289 = scalar_select %p286, %s287, %s288
      %p292 = pneg %p286
      %p293 = scmp.eq.s32.totalorder %s22, 11
      %p294 = por %p292, %p293
      %p295 = scmp.ne.s32.totalorder %s287, %s290
      %p296 = scmp.eq.s32.totalorder %s22, 0
      %p297 = por %p295, %p296
      %p298 = scmp.ne.s32.totalorder %s287, %s290
      %p299 = scmp.eq.s32.totalorder %s27, 11
      %p300 = por %p298, %p299
      %p301 = scmp.ne.s32.totalorder %s290, %s291
      %p302 = scmp.eq.s32.totalorder %s27, 0
      %p303 = por %p301, %p302
      %p304 = scmp.ne.s32.totalorder %s290, %s291
      %p305 = scmp.eq.s32.totalorder %s28, 11
      %p306 = por %p304, %p305
      %p308 = scmp.ne.s32.totalorder %s291, %s307
      %p309 = scmp.eq.s32.totalorder %s28, 0
      %p310 = por %p308, %p309
      %s311 = ssub.s32 %s22, %s29
      %p312 = scmp.eq.s32.totalorder %s311, 0
      %s314 = sadd.s32 %s313, 1
      %s315 = scalar_select %p312, %s313, %s314
      %p318 = pneg %p312
      %p319 = scmp.eq.s32.totalorder %s22, 11
      %p320 = por %p318, %p319
      %p321 = scmp.ne.s32.totalorder %s313, %s316
      %p322 = scmp.eq.s32.totalorder %s22, 0
      %p323 = por %p321, %p322
      %p324 = scmp.ne.s32.totalorder %s313, %s316
      %p325 = scmp.eq.s32.totalorder %s27, 11
      %p326 = por %p324, %p325
      %p327 = scmp.ne.s32.totalorder %s316, %s317
      %p328 = scmp.eq.s32.totalorder %s27, 0
      %p329 = por %p327, %p328
      %p330 = scmp.ne.s32.totalorder %s316, %s317
      %p331 = scmp.eq.s32.totalorder %s28, 11
      %p332 = por %p330, %p331
      %p334 = scmp.ne.s32.totalorder %s317, %s333
      %p335 = scmp.eq.s32.totalorder %s28, 0
      %p336 = por %p334, %p335
      %s337 = ssub.s32 %s22, %s29
      %p338 = scmp.eq.s32.totalorder %s337, 0
      %s340 = sadd.s32 %s339, 1
      %s341 = scalar_select %p338, %s339, %s340
      %p344 = pneg %p338
      %p345 = scmp.eq.s32.totalorder %s22, 11
      %p346 = por %p344, %p345
      %p347 = scmp.ne.s32.totalorder %s339, %s342
      %p348 = scmp.eq.s32.totalorder %s22, 0
      %p349 = por %p347, %p348
      %p350 = scmp.ne.s32.totalorder %s339, %s342
      %p351 = scmp.eq.s32.totalorder %s27, 11
      %p352 = por %p350, %p351
      %p353 = scmp.ne.s32.totalorder %s342, %s343
      %p354 = scmp.eq.s32.totalorder %s27, 0
      %p355 = por %p353, %p354
      %p356 = scmp.ne.s32.totalorder %s342, %s343
      %p357 = scmp.eq.s32.totalorder %s28, 11
      %p358 = por %p356, %p357
      %p360 = scmp.ne.s32.totalorder %s343, %s359
      %p361 = scmp.eq.s32.totalorder %s28, 0
      %p362 = por %p360, %p361
      %s364 = sadd.s32 %s363, 1
      %p367 = scmp.eq.s32.totalorder %s22, 11
      %p368 = scmp.ne.s32.totalorder %s363, %s365
      %p369 = scmp.eq.s32.totalorder %s22, 0
      %p370 = por %p368, %p369
      %p371 = scmp.ne.s32.totalorder %s363, %s365
      %p372 = scmp.eq.s32.totalorder %s27, 11
      %p373 = por %p371, %p372
      %p374 = scmp.ne.s32.totalorder %s365, %s366
      %p375 = scmp.eq.s32.totalorder %s27, 0
      %p376 = por %p374, %p375
      %p377 = scmp.ne.s32.totalorder %s365, %s366
      %p378 = scmp.eq.s32.totalorder %s28, 11
      %p379 = por %p377, %p378
      %p381 = scmp.ne.s32.totalorder %s366, %s380
      %p382 = scmp.eq.s32.totalorder %s28, 0
      %p383 = por %p381, %p382
      %s385 = sadd.s32 %s384, 1
      %p388 = scmp.eq.s32.totalorder %s22, 11
      %p389 = scmp.ne.s32.totalorder %s384, %s386
      %p390 = scmp.eq.s32.totalorder %s22, 0
      %p391 = por %p389, %p390
      %p392 = scmp.ne.s32.totalorder %s384, %s386
      %p393 = scmp.eq.s32.totalorder %s27, 11
      %p394 = por %p392, %p393
      %p395 = scmp.ne.s32.totalorder %s386, %s387
      %p396 = scmp.eq.s32.totalorder %s27, 0
      %p397 = por %p395, %p396
      %p398 = scmp.ne.s32.totalorder %s386, %s387
      %p399 = scmp.eq.s32.totalorder %s28, 11
      %p400 = por %p398, %p399
      %p402 = scmp.ne.s32.totalorder %s387, %s401
      %p403 = scmp.eq.s32.totalorder %s28, 0
      %p404 = por %p402, %p403
      %s406 = sadd.s32 %s405, 1
      %p409 = scmp.eq.s32.totalorder %s22, 11
      %p410 = scmp.ne.s32.totalorder %s405, %s407
      %p411 = scmp.eq.s32.totalorder %s22, 0
      %p412 = por %p410, %p411
      %p413 = scmp.ne.s32.totalorder %s405, %s407
      %p414 = scmp.eq.s32.totalorder %s27, 11
      %p415 = por %p413, %p414
      %p416 = scmp.ne.s32.totalorder %s407, %s408
      %p417 = scmp.eq.s32.totalorder %s27, 0
      %p418 = por %p416, %p417
      %p419 = scmp.ne.s32.totalorder %s407, %s408
      %p420 = scmp.eq.s32.totalorder %s28, 11
      %p421 = por %p419, %p420
      %p423 = scmp.ne.s32.totalorder %s408, %s422
      %p424 = scmp.eq.s32.totalorder %s28, 0
      %p425 = por %p423, %p424
      %p426 = scmp.le.s32.totalorder 1, %s22
      %p427 = scmp.lt.s32.totalorder %s22, 13
      %p428 = pnand %p426, %p427
      %p429 = pneg %p428
      // Predicated region
      $region9: #{energy_net_forward.3} parent=5 // pred_check
        _
      $region10: #{energy_net_forward.3} parent=5 // pred_check_branch
        %431 = sbr.rel (%p428) target = $region12
      $region11: #{energy_net_forward.3} parent=5 // pred_region
        %s432 = ssub.s32 %s22, 1
        // Predicated region
        $region13: #{energy_net_forward.3} parent=11 // pred_check
          %p433 = pneg %p43
        $region14: #{energy_net_forward.3} parent=11 // pred_check_branch
          %435 = sbr.rel (%p433) target = $region16
        $region15: #{energy_net_forward.3} parent=11 // pred_region
          _
        $region16: #{energy_net_forward.3} parent=11 // pred_fallthru
          _
        // Predicated region
        $region17: #{energy_net_forward.3} parent=11 // pred_check
          %p436 = pneg %p376
        $region18: #{energy_net_forward.3} parent=11 // pred_check_branch
          %438 = sbr.rel (%p436) target = $region20
        $region19: #{energy_net_forward.3} parent=11 // pred_region
          _
        $region20: #{energy_net_forward.3} parent=11 // pred_fallthru
          _
        // Predicated region
        $region21: #{energy_net_forward.3} parent=11 // pred_check
          %p439 = pneg %p397
        $region22: #{energy_net_forward.3} parent=11 // pred_check_branch
          %441 = sbr.rel (%p439) target = $region24
        $region23: #{energy_net_forward.3} parent=11 // pred_region
          _
        $region24: #{energy_net_forward.3} parent=11 // pred_fallthru
          _
      $region12: #{energy_net_forward.3} parent=5 // pred_fallthru
        _
      %p442 = scmp.lt.s32.totalorder %s22, 12
      // Predicated region
      $region25: #{energy_net_forward.3} parent=5 // pred_check
        %p443 = pneg %p442
      $region26: #{energy_net_forward.3} parent=5 // pred_check_branch
        %445 = sbr.rel (%p443) target = $region28
      $region27: #{energy_net_forward.3} parent=5 // pred_region
        // Predicated region
        $region29: #{energy_net_forward.3} parent=27 // pred_check
          %p446 = pneg %p63
        $region30: #{energy_net_forward.3} parent=27 // pred_check_branch
          %448 = sbr.rel (%p446) target = $region32
        $region31: #{energy_net_forward.3} parent=27 // pred_region
          %p449 = scmp.lt.s32.totalorder %s22, 11
          %s450 = scalar_select %p449, %s22, 11
          %s451 = smul.addr %s450, 120
          %s452 = smul.addr %s451, 4
          %s453 = scalar_lea.vmem %s1, %s452
        $region32: #{energy_net_forward.3} parent=27 // pred_fallthru
          _
        // Predicated region
        $region33: #{energy_net_forward.3} parent=27 // pred_check
          %p454 = pneg %p89
        $region34: #{energy_net_forward.3} parent=27 // pred_check_branch
          %456 = sbr.rel (%p454) target = $region36
        $region35: #{energy_net_forward.3} parent=27 // pred_region
          %p457 = scmp.lt.s32.totalorder %s22, 11
          %s458 = scalar_select %p457, %s22, 11
          %s459 = smul.addr %s458, 5
          %s460 = scalar_lea.vmem %s2, %s459
        $region36: #{energy_net_forward.3} parent=27 // pred_fallthru
          _
        // Predicated region
        $region37: #{energy_net_forward.3} parent=27 // pred_check
          %p461 = pneg %p115
        $region38: #{energy_net_forward.3} parent=27 // pred_check_branch
          %463 = sbr.rel (%p461) target = $region40
        $region39: #{energy_net_forward.3} parent=27 // pred_region
          %p464 = scmp.lt.s32.totalorder %s22, 11
          %s465 = scalar_select %p464, %s22, 11
          %s466 = smul.addr %s465, 48
          %s467 = smul.addr %s466, 4
          %s468 = scalar_lea.vmem %s3, %s467
        $region40: #{energy_net_forward.3} parent=27 // pred_fallthru
          _
        // Predicated region
        $region41: #{energy_net_forward.3} parent=27 // pred_check
          %p469 = pneg %p141
        $region42: #{energy_net_forward.3} parent=27 // pred_check_branch
          %471 = sbr.rel (%p469) target = $region44
        $region43: #{energy_net_forward.3} parent=27 // pred_region
          %p472 = scmp.lt.s32.totalorder %s22, 11
          %s473 = scalar_select %p472, %s22, 11
          %s474 = smul.addr %s473, 2
          %s475 = scalar_lea.vmem %s4, %s474
        $region44: #{energy_net_forward.3} parent=27 // pred_fallthru
          _
        // Predicated region
        $region45: #{energy_net_forward.3} parent=27 // pred_check
          %p476 = pneg %p167
        $region46: #{energy_net_forward.3} parent=27 // pred_check_branch
          %478 = sbr.rel (%p476) target = $region48
        $region47: #{energy_net_forward.3} parent=27 // pred_region
          %p479 = scmp.lt.s32.totalorder %s22, 11
          %s480 = scalar_select %p479, %s22, 11
          %s481 = smul.addr %s480, 144
          %s482 = smul.addr %s481, 4
          %s483 = scalar_lea.vmem %s5, %s482
        $region48: #{energy_net_forward.3} parent=27 // pred_fallthru
          _
        // Predicated region
        $region49: #{energy_net_forward.3} parent=27 // pred_check
          %p484 = pneg %p193
        $region50: #{energy_net_forward.3} parent=27 // pred_check_branch
          %486 = sbr.rel (%p484) target = $region52
        $region51: #{energy_net_forward.3} parent=27 // pred_region
          %p487 = scmp.lt.s32.totalorder %s22, 11
          %s488 = scalar_select %p487, %s22, 11
          %s489 = smul.addr %s488, 6
          %s490 = scalar_lea.vmem %s6, %s489
        $region52: #{energy_net_forward.3} parent=27 // pred_fallthru
          _
        // Predicated region
        $region53: #{energy_net_forward.3} parent=27 // pred_check
          %p491 = pneg %p219
        $region54: #{energy_net_forward.3} parent=27 // pred_check_branch
          %493 = sbr.rel (%p491) target = $region56
        $region55: #{energy_net_forward.3} parent=27 // pred_region
          %p494 = scmp.lt.s32.totalorder %s22, 11
          %s495 = scalar_select %p494, %s22, 11
          %s496 = smul.addr %s495, 192
          %s497 = smul.addr %s496, 4
          %s498 = scalar_lea.vmem %s7, %s497
        $region56: #{energy_net_forward.3} parent=27 // pred_fallthru
          _
        // Predicated region
        $region57: #{energy_net_forward.3} parent=27 // pred_check
          %p499 = pneg %p245
        $region58: #{energy_net_forward.3} parent=27 // pred_check_branch
          %501 = sbr.rel (%p499) target = $region60
        $region59: #{energy_net_forward.3} parent=27 // pred_region
          %p502 = scmp.lt.s32.totalorder %s22, 11
          %s503 = scalar_select %p502, %s22, 11
          %s504 = smul.addr %s503, 2
          %s505 = scalar_lea.vmem %s8, %s504
        $region60: #{energy_net_forward.3} parent=27 // pred_fallthru
          _
        // Predicated region
        $region61: #{energy_net_forward.3} parent=27 // pred_check
          %p506 = pneg %p271
        $region62: #{energy_net_forward.3} parent=27 // pred_check_branch
          %508 = sbr.rel (%p506) target = $region64
        $region63: #{energy_net_forward.3} parent=27 // pred_region
          %p509 = scmp.lt.s32.totalorder %s22, 11
          %s510 = scalar_select %p509, %s22, 11
          %s511 = smul.addr %s510, 2
          %s512 = scalar_lea.vmem %s9, %s511
        $region64: #{energy_net_forward.3} parent=27 // pred_fallthru
          _
        // Predicated region
        $region65: #{energy_net_forward.3} parent=27 // pred_check
          %p513 = pneg %p297
        $region66: #{energy_net_forward.3} parent=27 // pred_check_branch
          %515 = sbr.rel (%p513) target = $region68
        $region67: #{energy_net_forward.3} parent=27 // pred_region
          %p516 = scmp.lt.s32.totalorder %s22, 11
          %s517 = scalar_select %p516, %s22, 11
          %s518 = smul.addr %s517, 2
          %s519 = scalar_lea.vmem %s10, %s518
        $region68: #{energy_net_forward.3} parent=27 // pred_fallthru
          _
        // Predicated region
        $region69: #{energy_net_forward.3} parent=27 // pred_check
          %p520 = pneg %p323
        $region70: #{energy_net_forward.3} parent=27 // pred_check_branch
          %522 = sbr.rel (%p520) target = $region72
        $region71: #{energy_net_forward.3} parent=27 // pred_region
          %p523 = scmp.lt.s32.totalorder %s22, 11
          %s524 = scalar_select %p523, %s22, 11
          %s525 = smul.addr %s524, 2
          %s526 = scalar_lea.vmem %s11, %s525
        $region72: #{energy_net_forward.3} parent=27 // pred_fallthru
          _
        // Predicated region
        $region73: #{energy_net_forward.3} parent=27 // pred_check
          %p527 = pneg %p349
        $region74: #{energy_net_forward.3} parent=27 // pred_check_branch
          %529 = sbr.rel (%p527) target = $region76
        $region75: #{energy_net_forward.3} parent=27 // pred_region
          %p530 = scmp.lt.s32.totalorder %s22, 11
          %s531 = scalar_select %p530, %s22, 11
          %s532 = smul.addr %s531, 2
          %s533 = scalar_lea.vmem %s12, %s532
        $region76: #{energy_net_forward.3} parent=27 // pred_fallthru
          _
      $region28: #{energy_net_forward.3} parent=5 // pred_fallthru
        _
      %p534 = scmp.le.s32.totalorder 1, %s22
      %p535 = scmp.lt.s32.totalorder %s22, 13
      %p536 = pnand %p534, %p535
      %p537 = pneg %p536
      // Predicated region
      $region77: #{energy_net_forward.3} parent=5 // pred_check
        _
      $region78: #{energy_net_forward.3} parent=5 // pred_check_branch
        %539 = sbr.rel (%p536) target = $region80
      $region79: #{energy_net_forward.3} parent=5 // pred_region
        %s540 = ssub.s32 %s22, 1
        %p541 = pneg %p43
        %p542 = pneg %p40
        %p543 = scmp.lt.s32.totalorder %s27, 11
        %s544 = scalar_select %p543, %s27, 11
        %s545 = smul.addr %s544, 120
        %s546 = smul.addr %s545, 4
        %s547 = scalar_lea.vmem %s1, %s546
        %p548 = pneg %p69
        %p549 = pneg %p66
        %p550 = scmp.lt.s32.totalorder %s27, 11
        %s551 = scalar_select %p550, %s27, 11
        %s552 = smul.addr %s551, 5
        %s553 = scalar_lea.vmem %s2, %s552
        %p554 = pneg %p95
        %p555 = pneg %p92
        %p556 = scmp.lt.s32.totalorder %s27, 11
        %s557 = scalar_select %p556, %s27, 11
        %s558 = smul.addr %s557, 48
        %s559 = smul.addr %s558, 4
        %s560 = scalar_lea.vmem %s3, %s559
        %p561 = pneg %p121
        %p562 = pneg %p118
        %p563 = scmp.lt.s32.totalorder %s27, 11
        %s564 = scalar_select %p563, %s27, 11
        %s565 = smul.addr %s564, 2
        %s566 = scalar_lea.vmem %s4, %s565
        %p567 = pneg %p147
        %p568 = pneg %p144
        %p569 = scmp.lt.s32.totalorder %s27, 11
        %s570 = scalar_select %p569, %s27, 11
        %s571 = smul.addr %s570, 144
        %s572 = smul.addr %s571, 4
        %s573 = scalar_lea.vmem %s5, %s572
        %p574 = pneg %p173
        %p575 = pneg %p170
        %p576 = scmp.lt.s32.totalorder %s27, 11
        %s577 = scalar_select %p576, %s27, 11
        %s578 = smul.addr %s577, 6
        %s579 = scalar_lea.vmem %s6, %s578
        %p580 = pneg %p199
        %p581 = pneg %p196
        %p582 = scmp.lt.s32.totalorder %s27, 11
        %s583 = scalar_select %p582, %s27, 11
        %s584 = smul.addr %s583, 192
        %s585 = smul.addr %s584, 4
        %s586 = scalar_lea.vmem %s7, %s585
        %p587 = pneg %p225
        %p588 = pneg %p222
        %p589 = scmp.lt.s32.totalorder %s27, 11
        %s590 = scalar_select %p589, %s27, 11
        %s591 = smul.addr %s590, 2
        %s592 = scalar_lea.vmem %s8, %s591
        %p593 = pneg %p251
        %p594 = pneg %p248
        %p595 = scmp.lt.s32.totalorder %s27, 11
        %s596 = scalar_select %p595, %s27, 11
        %s597 = smul.addr %s596, 2
        %s598 = scalar_lea.vmem %s9, %s597
        %p599 = pneg %p277
        %p600 = pneg %p274
        %p601 = scmp.lt.s32.totalorder %s27, 11
        %s602 = scalar_select %p601, %s27, 11
        %s603 = smul.addr %s602, 2
        %s604 = scalar_lea.vmem %s10, %s603
        %p605 = pneg %p303
        %p606 = pneg %p300
        %p607 = scmp.lt.s32.totalorder %s27, 11
        %s608 = scalar_select %p607, %s27, 11
        %s609 = smul.addr %s608, 2
        %s610 = scalar_lea.vmem %s11, %s609
        %p611 = pneg %p329
        %p612 = pneg %p326
        %p613 = scmp.lt.s32.totalorder %s27, 11
        %s614 = scalar_select %p613, %s27, 11
        %s615 = smul.addr %s614, 2
        %s616 = scalar_lea.vmem %s12, %s615
        %p617 = pneg %p355
        %p618 = pneg %p352
        %p619 = pneg %p376
        %p620 = pneg %p373
        %p621 = pneg %p397
        %p622 = pneg %p394
        %p623 = pneg %p418
        %p624 = pneg %p415
        %p625 = scmp.lt.s32.totalorder %s27, 11
        %s626 = scalar_select %p625, %s27, 11
        %s627 = smul.addr %s626, 120
        %s628 = smul.addr %s627, 4
        %s629 = scalar_lea.vmem %s1, %s628
        %p630 = scmp.lt.s32.totalorder %s27, 11
        %s631 = scalar_select %p630, %s27, 11
        %s632 = smul.addr %s631, 5
        %s633 = scalar_lea.vmem %s2, %s632
        %p634 = scmp.lt.s32.totalorder %s27, 11
        %s635 = scalar_select %p634, %s27, 11
        %s636 = smul.addr %s635, 48
        %s637 = smul.addr %s636, 4
        %s638 = scalar_lea.vmem %s3, %s637
        %p639 = scmp.lt.s32.totalorder %s27, 11
        %s640 = scalar_select %p639, %s27, 11
        %s641 = smul.addr %s640, 2
        %s642 = scalar_lea.vmem %s4, %s641
        %p643 = scmp.lt.s32.totalorder %s27, 11
        %s644 = scalar_select %p643, %s27, 11
        %s645 = smul.addr %s644, 144
        %s646 = smul.addr %s645, 4
        %s647 = scalar_lea.vmem %s5, %s646
        %p648 = scmp.lt.s32.totalorder %s27, 11
        %s649 = scalar_select %p648, %s27, 11
        %s650 = smul.addr %s649, 6
        %s651 = scalar_lea.vmem %s6, %s650
        %p652 = scmp.lt.s32.totalorder %s27, 11
        %s653 = scalar_select %p652, %s27, 11
        %s654 = smul.addr %s653, 192
        %s655 = smul.addr %s654, 4
        %s656 = scalar_lea.vmem %s7, %s655
        %p657 = scmp.lt.s32.totalorder %s27, 11
        %s658 = scalar_select %p657, %s27, 11
        %s659 = smul.addr %s658, 2
        %s660 = scalar_lea.vmem %s8, %s659
        %p661 = scmp.lt.s32.totalorder %s27, 11
        %s662 = scalar_select %p661, %s27, 11
        %s663 = smul.addr %s662, 2
        %s664 = scalar_lea.vmem %s9, %s663
        %p665 = scmp.lt.s32.totalorder %s27, 11
        %s666 = scalar_select %p665, %s27, 11
        %s667 = smul.addr %s666, 2
        %s668 = scalar_lea.vmem %s10, %s667
        %p669 = scmp.lt.s32.totalorder %s27, 11
        %s670 = scalar_select %p669, %s27, 11
        %s671 = smul.addr %s670, 2
        %s672 = scalar_lea.vmem %s11, %s671
        %p673 = scmp.lt.s32.totalorder %s27, 11
        %s674 = scalar_select %p673, %s27, 11
        %s675 = smul.addr %s674, 2
        %s676 = scalar_lea.vmem %s12, %s675
        %p678 = scmp.eq.s32.totalorder %s27, 0
        // Predicated region
        $region81: #{energy_net_forward.3} parent=79 // pred_check
          %p679 = pneg %p678
        $region82: #{energy_net_forward.3} parent=79 // pred_check_branch
          %681 = sbr.rel (%p679) target = $region84
        $region83: #{energy_net_forward.3} parent=79 // pred_region
          %v682 = vld [vmem:[%s0] sm:$0xff]
          %v683 = vld [vmem:[%s0 + $0x8] sm:$0xff]
          %v684 = vld [vmem:[%s0 + $0x10] sm:$0xff]
          %v685 = vld [vmem:[%s0 + $0x18] sm:$0xff]
          %v686 = vld [vmem:[%s0 + $0x20] sm:$0xff]
          %v687 = vld [vmem:[%s0 + $0x28] sm:$0xff]
          %v688 = vld [vmem:[%s0 + $0x30] sm:$0xff]
          %v689 = vld [vmem:[%s0 + $0x38] sm:$0xff]
          %v690 = vld [vmem:[%s0 + $0x40] sm:$0xff]
          %v691 = vld [vmem:[%s0 + $0x48] sm:$0xff]
          %v692 = vld [vmem:[%s0 + $0x50] sm:$0xff]
          %v693 = vld [vmem:[%s0 + $0x58] sm:$0xff]
          %v694 = vld [vmem:[%s0 + $0x60] sm:$0xff]
          %v695 = vld [vmem:[%s0 + $0x68] sm:$0xff]
          %v696 = vld [vmem:[%s0 + $0x70] sm:$0xff]
          %v697 = vld [vmem:[%s0 + $0x78] sm:$0xff]
          %v698 = vld [vmem:[%s0 + $0x80] sm:$0xff]
          %v699 = vld [vmem:[%s0 + $0x88] sm:$0xff]
          %v700 = vld [vmem:[%s0 + $0x90] sm:$0xff]
          %v701 = vld [vmem:[%s0 + $0x98] sm:$0xff]
          %v702 = vld [vmem:[%s0 + $0xa0] sm:$0xff]
          %v703 = vld [vmem:[%s0 + $0xa8] sm:$0xff]
          %v704 = vld [vmem:[%s0 + $0xb0] sm:$0xff]
          %v705 = vld [vmem:[%s0 + $0xb8] sm:$0xff]
          %v706 = vld [vmem:[%s0 + $0xc0] sm:$0xff]
          %v707 = vld [vmem:[%s0 + $0xc8] sm:$0xff]
          %v708 = vld [vmem:[%s0 + $0xd0] sm:$0xff]
          %v709 = vld [vmem:[%s0 + $0xd8] sm:$0xff]
          %v710 = vld [vmem:[%s0 + $0xe0] sm:$0xff]
          %v711 = vld [vmem:[%s0 + $0xe8] sm:$0xff]
          %v712 = vld [vmem:[%s0 + $0xf0] sm:$0xff]
          %v713 = vld [vmem:[%s0 + $0xf8] sm:$0xff]
          %v714 = vld [vmem:[%s0 + $0x100] sm:$0xff]
          %v715 = vld [vmem:[%s0 + $0x108] sm:$0xff]
          %v716 = vld [vmem:[%s0 + $0x110] sm:$0xff]
          %v717 = vld [vmem:[%s0 + $0x118] sm:$0xff]
          %718 = vst [vmem:[#allocation2] sm:$0xff] %v682
          %vm719 = vcmask 523264
          %720 = vst.msk [vmem:[#allocation2 + $0x8] sm:$0xff] %vm719, %v683
          %721 = vst [vmem:[#allocation2 + $0x10] sm:$0xff] %v684
          %722 = vst.msk [vmem:[#allocation2 + $0x18] sm:$0xff] %vm719, %v685
          %723 = vst [vmem:[#allocation2 + $0x20] sm:$0xff] %v686
          %724 = vst.msk [vmem:[#allocation2 + $0x28] sm:$0xff] %vm719, %v687
          %725 = vst [vmem:[#allocation2 + $0x30] sm:$0xff] %v688
          %726 = vst.msk [vmem:[#allocation2 + $0x38] sm:$0xff] %vm719, %v689
          %727 = vst [vmem:[#allocation2 + $0x40] sm:$0xff] %v690
          %728 = vst.msk [vmem:[#allocation2 + $0x48] sm:$0xff] %vm719, %v691
          %729 = vst [vmem:[#allocation2 + $0x50] sm:$0xff] %v692
          %730 = vst.msk [vmem:[#allocation2 + $0x58] sm:$0xff] %vm719, %v693
          %731 = vst [vmem:[#allocation2 + $0x60] sm:$0xff] %v694
          %732 = vst.msk [vmem:[#allocation2 + $0x68] sm:$0xff] %vm719, %v695
          %733 = vst [vmem:[#allocation2 + $0x70] sm:$0xff] %v696
          %734 = vst.msk [vmem:[#allocation2 + $0x78] sm:$0xff] %vm719, %v697
          %735 = vst [vmem:[#allocation2 + $0x80] sm:$0xff] %v698
          %736 = vst.msk [vmem:[#allocation2 + $0x88] sm:$0xff] %vm719, %v699
          %737 = vst [vmem:[#allocation2 + $0x90] sm:$0xff] %v700
          %738 = vst.msk [vmem:[#allocation2 + $0x98] sm:$0xff] %vm719, %v701
          %739 = vst [vmem:[#allocation2 + $0xa0] sm:$0xff] %v702
          %740 = vst.msk [vmem:[#allocation2 + $0xa8] sm:$0xff] %vm719, %v703
          %741 = vst [vmem:[#allocation2 + $0xb0] sm:$0xff] %v704
          %742 = vst.msk [vmem:[#allocation2 + $0xb8] sm:$0xff] %vm719, %v705
          %743 = vst [vmem:[#allocation2 + $0xc0] sm:$0xff] %v706
          %744 = vst.msk [vmem:[#allocation2 + $0xc8] sm:$0xff] %vm719, %v707
          %745 = vst [vmem:[#allocation2 + $0xd0] sm:$0xff] %v708
          %746 = vst.msk [vmem:[#allocation2 + $0xd8] sm:$0xff] %vm719, %v709
          %747 = vst [vmem:[#allocation2 + $0xe0] sm:$0xff] %v710
          %748 = vst.msk [vmem:[#allocation2 + $0xe8] sm:$0xff] %vm719, %v711
          %749 = vst [vmem:[#allocation2 + $0xf0] sm:$0xff] %v712
          %750 = vst.msk [vmem:[#allocation2 + $0xf8] sm:$0xff] %vm719, %v713
          %751 = vst [vmem:[#allocation2 + $0x100] sm:$0xff] %v714
          %752 = vst.msk [vmem:[#allocation2 + $0x108] sm:$0xff] %vm719, %v715
          %753 = vst [vmem:[#allocation2 + $0x110] sm:$0xff] %v716
          %754 = vst.msk [vmem:[#allocation2 + $0x118] sm:$0xff] %vm719, %v717
        $region84: #{energy_net_forward.3} parent=79 // pred_fallthru
          _
        %v755 = vld [vmem:[#allocation2] sm:$0xff]
        %v756 = vld [vmem:[#allocation2 + $0x8] sm:$0xff]
        %v757 = vld [vmem:[#allocation2 + $0x10] sm:$0xff]
        %v758 = vld [vmem:[#allocation2 + $0x18] sm:$0xff]
        %v759 = vld [vmem:[#allocation2 + $0x20] sm:$0xff]
        %v760 = vld [vmem:[#allocation2 + $0x28] sm:$0xff]
        %v761 = vld [vmem:[#allocation2 + $0x30] sm:$0xff]
        %v762 = vld [vmem:[#allocation2 + $0x38] sm:$0xff]
        %v763 = vld [vmem:[#allocation2 + $0x40] sm:$0xff]
        %v764 = vld [vmem:[#allocation2 + $0x48] sm:$0xff]
        %v765 = vld [vmem:[#allocation2 + $0x50] sm:$0xff]
        %v766 = vld [vmem:[#allocation2 + $0x58] sm:$0xff]
        %v767 = vld [vmem:[#allocation2 + $0x60] sm:$0xff]
        %v768 = vld [vmem:[#allocation2 + $0x68] sm:$0xff]
        %v769 = vld [vmem:[#allocation2 + $0x70] sm:$0xff]
        %v770 = vld [vmem:[#allocation2 + $0x78] sm:$0xff]
        %v771 = vld [vmem:[#allocation2 + $0x80] sm:$0xff]
        %v772 = vld [vmem:[#allocation2 + $0x88] sm:$0xff]
        %v773 = vld [vmem:[#allocation2 + $0x90] sm:$0xff]
        %v774 = vld [vmem:[#allocation2 + $0x98] sm:$0xff]
        %v775 = vld [vmem:[#allocation2 + $0xa0] sm:$0xff]
        %v776 = vld [vmem:[#allocation2 + $0xa8] sm:$0xff]
        %v777 = vld [vmem:[#allocation2 + $0xb0] sm:$0xff]
        %v778 = vld [vmem:[#allocation2 + $0xb8] sm:$0xff]
        %v779 = vld [vmem:[#allocation2 + $0xc0] sm:$0xff]
        %v780 = vld [vmem:[#allocation2 + $0xc8] sm:$0xff]
        %v781 = vld [vmem:[#allocation2 + $0xd0] sm:$0xff]
        %v782 = vld [vmem:[#allocation2 + $0xd8] sm:$0xff]
        %v783 = vld [vmem:[#allocation2 + $0xe0] sm:$0xff]
        %v784 = vld [vmem:[#allocation2 + $0xe8] sm:$0xff]
        %v785 = vld [vmem:[#allocation2 + $0xf0] sm:$0xff]
        %v786 = vld [vmem:[#allocation2 + $0xf8] sm:$0xff]
        %v787 = vld [vmem:[#allocation2 + $0x100] sm:$0xff]
        %v788 = vld [vmem:[#allocation2 + $0x108] sm:$0xff]
        %v789 = vld [vmem:[#allocation2 + $0x110] sm:$0xff]
        %v790 = vld [vmem:[#allocation2 + $0x118] sm:$0xff]
        %v791 = vld [vmem:[%s664] sm:$0x3]
        %v792 = vld [vmem:[%s668] sm:$0x3]
        %vm793 = vcmask 523264
        %v794 = vsel %vm793, %v756, 0.0
        %v795 = vadd.f32 %v755, %v794
        %796 = vadd.xlane.f32.xlu0 %v795
        %v797 = vpop.xlane.xlu0 %796
        %v798 = vsel %vm793, %v758, 0.0
        %v799 = vadd.f32 %v757, %v798
        %800 = vadd.xlane.f32.xlu0 %v799
        %v801 = vpop.xlane.xlu0 %800
        %v802 = vsel %vm793, %v760, 0.0
        %v803 = vadd.f32 %v759, %v802
        %804 = vadd.xlane.f32.xlu0 %v803
        %v805 = vpop.xlane.xlu0 %804
        %v806 = vsel %vm793, %v762, 0.0
        %v807 = vadd.f32 %v761, %v806
        %808 = vadd.xlane.f32.xlu0 %v807
        %v809 = vpop.xlane.xlu0 %808
        %v810 = vsel %vm793, %v764, 0.0
        %v811 = vadd.f32 %v763, %v810
        %812 = vadd.xlane.f32.xlu0 %v811
        %v813 = vpop.xlane.xlu0 %812
        %v814 = vsel %vm793, %v766, 0.0
        %v815 = vadd.f32 %v765, %v814
        %816 = vadd.xlane.f32.xlu0 %v815
        %v817 = vpop.xlane.xlu0 %816
        %v818 = vsel %vm793, %v768, 0.0
        %v819 = vadd.f32 %v767, %v818
        %820 = vadd.xlane.f32.xlu0 %v819
        %v821 = vpop.xlane.xlu0 %820
        %v822 = vsel %vm793, %v770, 0.0
        %v823 = vadd.f32 %v769, %v822
        %824 = vadd.xlane.f32.xlu0 %v823
        %v825 = vpop.xlane.xlu0 %824
        %v826 = vsel %vm793, %v772, 0.0
        %v827 = vadd.f32 %v771, %v826
        %828 = vadd.xlane.f32.xlu0 %v827
        %v829 = vpop.xlane.xlu0 %828
        %v830 = vsel %vm793, %v774, 0.0
        %v831 = vadd.f32 %v773, %v830
        %832 = vadd.xlane.f32.xlu0 %v831
        %v833 = vpop.xlane.xlu0 %832
        %v834 = vsel %vm793, %v776, 0.0
        %v835 = vadd.f32 %v775, %v834
        %836 = vadd.xlane.f32.xlu0 %v835
        %v837 = vpop.xlane.xlu0 %836
        %v838 = vsel %vm793, %v778, 0.0
        %v839 = vadd.f32 %v777, %v838
        %840 = vadd.xlane.f32.xlu0 %v839
        %v841 = vpop.xlane.xlu0 %840
        %v842 = vsel %vm793, %v780, 0.0
        %v843 = vadd.f32 %v779, %v842
        %844 = vadd.xlane.f32.xlu0 %v843
        %v845 = vpop.xlane.xlu0 %844
        %v846 = vsel %vm793, %v782, 0.0
        %v847 = vadd.f32 %v781, %v846
        %848 = vadd.xlane.f32.xlu0 %v847
        %v849 = vpop.xlane.xlu0 %848
        %v850 = vsel %vm793, %v784, 0.0
        %v851 = vadd.f32 %v783, %v850
        %852 = vadd.xlane.f32.xlu0 %v851
        %v853 = vpop.xlane.xlu0 %852
        %v854 = vsel %vm793, %v786, 0.0
        %v855 = vadd.f32 %v785, %v854
        %856 = vadd.xlane.f32.xlu0 %v855
        %v857 = vpop.xlane.xlu0 %856
        %v858 = vsel %vm793, %v788, 0.0
        %v859 = vadd.f32 %v787, %v858
        %860 = vadd.xlane.f32.xlu0 %v859
        %v861 = vpop.xlane.xlu0 %860
        %v862 = vsel %vm793, %v790, 0.0
        %v863 = vadd.f32 %v789, %v862
        %864 = vadd.xlane.f32.xlu0 %v863
        %v865 = vpop.xlane.xlu0 %864
        %v866 = vrcp.pop 192.0
        %v867 = vmul.f32 %v797, %v866
        %v868 = vmul.f32 %v801, %v866
        %v869 = vmul.f32 %v805, %v866
        %v870 = vmul.f32 %v809, %v866
        %v871 = vmul.f32 %v813, %v866
        %v872 = vmul.f32 %v817, %v866
        %v873 = vmul.f32 %v821, %v866
        %v874 = vmul.f32 %v825, %v866
        %v875 = vmul.f32 %v829, %v866
        %v876 = vmul.f32 %v833, %v866
        %v877 = vmul.f32 %v837, %v866
        %v878 = vmul.f32 %v841, %v866
        %v879 = vmul.f32 %v845, %v866
        %v880 = vmul.f32 %v849, %v866
        %v881 = vmul.f32 %v853, %v866
        %v882 = vmul.f32 %v857, %v866
        %v883 = vmul.f32 %v861, %v866
        %v884 = vmul.f32 %v865, %v866
        %v885 = vsub.f32 %v755, %v867
        %v886 = vsub.f32 %v756, %v867
        %v887 = vsub.f32 %v757, %v868
        %v888 = vsub.f32 %v758, %v868
        %v889 = vsub.f32 %v759, %v869
        %v890 = vsub.f32 %v760, %v869
        %v891 = vsub.f32 %v761, %v870
        %v892 = vsub.f32 %v762, %v870
        %v893 = vsub.f32 %v763, %v871
        %v894 = vsub.f32 %v764, %v871
        %v895 = vsub.f32 %v765, %v872
        %v896 = vsub.f32 %v766, %v872
        %v897 = vsub.f32 %v767, %v873
        %v898 = vsub.f32 %v768, %v873
        %v899 = vsub.f32 %v769, %v874
        %v900 = vsub.f32 %v770, %v874
        %v901 = vsub.f32 %v771, %v875
        %v902 = vsub.f32 %v772, %v875
        %v903 = vsub.f32 %v773, %v876
        %v904 = vsub.f32 %v774, %v876
        %v905 = vsub.f32 %v775, %v877
        %v906 = vsub.f32 %v776, %v877
        %v907 = vsub.f32 %v777, %v878
        %v908 = vsub.f32 %v778, %v878
        %v909 = vsub.f32 %v779, %v879
        %v910 = vsub.f32 %v780, %v879
        %v911 = vsub.f32 %v781, %v880
        %v912 = vsub.f32 %v782, %v880
        %v913 = vsub.f32 %v783, %v881
        %v914 = vsub.f32 %v784, %v881
        %v915 = vsub.f32 %v785, %v882
        %v916 = vsub.f32 %v786, %v882
        %v917 = vsub.f32 %v787, %v883
        %v918 = vsub.f32 %v788, %v883
        %v919 = vsub.f32 %v789, %v884
        %v920 = vsub.f32 %v790, %v884
        %v921 = vmul.f32 %v885, %v885
        %v922 = vmul.f32 %v886, %v886
        %v923 = vmul.f32 %v887, %v887
        %v924 = vmul.f32 %v888, %v888
        %v925 = vmul.f32 %v889, %v889
        %v926 = vmul.f32 %v890, %v890
        %v927 = vmul.f32 %v891, %v891
        %v928 = vmul.f32 %v892, %v892
        %v929 = vmul.f32 %v893, %v893
        %v930 = vmul.f32 %v894, %v894
        %v931 = vmul.f32 %v895, %v895
        %v932 = vmul.f32 %v896, %v896
        %v933 = vmul.f32 %v897, %v897
        %v934 = vmul.f32 %v898, %v898
        %v935 = vmul.f32 %v899, %v899
        %v936 = vmul.f32 %v900, %v900
        %v937 = vmul.f32 %v901, %v901
        %v938 = vmul.f32 %v902, %v902
        %v939 = vmul.f32 %v903, %v903
        %v940 = vmul.f32 %v904, %v904
        %v941 = vmul.f32 %v905, %v905
        %v942 = vmul.f32 %v906, %v906
        %v943 = vmul.f32 %v907, %v907
        %v944 = vmul.f32 %v908, %v908
        %v945 = vmul.f32 %v909, %v909
        %v946 = vmul.f32 %v910, %v910
        %v947 = vmul.f32 %v911, %v911
        %v948 = vmul.f32 %v912, %v912
        %v949 = vmul.f32 %v913, %v913
        %v950 = vmul.f32 %v914, %v914
        %v951 = vmul.f32 %v915, %v915
        %v952 = vmul.f32 %v916, %v916
        %v953 = vmul.f32 %v917, %v917
        %v954 = vmul.f32 %v918, %v918
        %v955 = vmul.f32 %v919, %v919
        %v956 = vmul.f32 %v920, %v920
        %v957 = vsel %vm793, %v922, 0.0
        %v958 = vadd.f32 %v921, %v957
        %959 = vadd.xlane.f32.xlu0 %v958
        %v960 = vpop.xlane.xlu0 %959
        %v961 = vsel %vm793, %v924, 0.0
        %v962 = vadd.f32 %v923, %v961
        %963 = vadd.xlane.f32.xlu0 %v962
        %v964 = vpop.xlane.xlu0 %963
        %v965 = vsel %vm793, %v926, 0.0
        %v966 = vadd.f32 %v925, %v965
        %967 = vadd.xlane.f32.xlu0 %v966
        %v968 = vpop.xlane.xlu0 %967
        %v969 = vsel %vm793, %v928, 0.0
        %v970 = vadd.f32 %v927, %v969
        %971 = vadd.xlane.f32.xlu0 %v970
        %v972 = vpop.xlane.xlu0 %971
        %v973 = vsel %vm793, %v930, 0.0
        %v974 = vadd.f32 %v929, %v973
        %975 = vadd.xlane.f32.xlu0 %v974
        %v976 = vpop.xlane.xlu0 %975
        %v977 = vsel %vm793, %v932, 0.0
        %v978 = vadd.f32 %v931, %v977
        %979 = vadd.xlane.f32.xlu0 %v978
        %v980 = vpop.xlane.xlu0 %979
        %v981 = vsel %vm793, %v934, 0.0
        %v982 = vadd.f32 %v933, %v981
        %983 = vadd.xlane.f32.xlu0 %v982
        %v984 = vpop.xlane.xlu0 %983
        %v985 = vsel %vm793, %v936, 0.0
        %v986 = vadd.f32 %v935, %v985
        %987 = vadd.xlane.f32.xlu0 %v986
        %v988 = vpop.xlane.xlu0 %987
        %v989 = vsel %vm793, %v938, 0.0
        %v990 = vadd.f32 %v937, %v989
        %991 = vadd.xlane.f32.xlu0 %v990
        %v992 = vpop.xlane.xlu0 %991
        %v993 = vsel %vm793, %v940, 0.0
        %v994 = vadd.f32 %v939, %v993
        %995 = vadd.xlane.f32.xlu0 %v994
        %v996 = vpop.xlane.xlu0 %995
        %v997 = vsel %vm793, %v942, 0.0
        %v998 = vadd.f32 %v941, %v997
        %999 = vadd.xlane.f32.xlu0 %v998
        %v1000 = vpop.xlane.xlu0 %999
        %v1001 = vsel %vm793, %v944, 0.0
        %v1002 = vadd.f32 %v943, %v1001
        %1003 = vadd.xlane.f32.xlu0 %v1002
        %v1004 = vpop.xlane.xlu0 %1003
        %v1005 = vsel %vm793, %v946, 0.0
        %v1006 = vadd.f32 %v945, %v1005
        %1007 = vadd.xlane.f32.xlu0 %v1006
        %v1008 = vpop.xlane.xlu0 %1007
        %v1009 = vsel %vm793, %v948, 0.0
        %v1010 = vadd.f32 %v947, %v1009
        %1011 = vadd.xlane.f32.xlu0 %v1010
        %v1012 = vpop.xlane.xlu0 %1011
        %v1013 = vsel %vm793, %v950, 0.0
        %v1014 = vadd.f32 %v949, %v1013
        %1015 = vadd.xlane.f32.xlu0 %v1014
        %v1016 = vpop.xlane.xlu0 %1015
        %v1017 = vsel %vm793, %v952, 0.0
        %v1018 = vadd.f32 %v951, %v1017
        %1019 = vadd.xlane.f32.xlu0 %v1018
        %v1020 = vpop.xlane.xlu0 %1019
        %v1021 = vsel %vm793, %v954, 0.0
        %v1022 = vadd.f32 %v953, %v1021
        %1023 = vadd.xlane.f32.xlu0 %v1022
        %v1024 = vpop.xlane.xlu0 %1023
        %v1025 = vsel %vm793, %v956, 0.0
        %v1026 = vadd.f32 %v955, %v1025
        %1027 = vadd.xlane.f32.xlu0 %v1026
        %v1028 = vpop.xlane.xlu0 %1027
        %v1029 = vmul.f32 %v960, %v866
        %v1030 = vmul.f32 %v964, %v866
        %v1031 = vmul.f32 %v968, %v866
        %v1032 = vmul.f32 %v972, %v866
        %v1033 = vmul.f32 %v976, %v866
        %v1034 = vmul.f32 %v980, %v866
        %v1035 = vmul.f32 %v984, %v866
        %v1036 = vmul.f32 %v988, %v866
        %v1037 = vmul.f32 %v992, %v866
        %v1038 = vmul.f32 %v996, %v866
        %v1039 = vmul.f32 %v1000, %v866
        %v1040 = vmul.f32 %v1004, %v866
        %v1041 = vmul.f32 %v1008, %v866
        %v1042 = vmul.f32 %v1012, %v866
        %v1043 = vmul.f32 %v1016, %v866
        %v1044 = vmul.f32 %v1020, %v866
        %v1045 = vmul.f32 %v1024, %v866
        %v1046 = vmul.f32 %v1028, %v866
        %v1047 = vadd.f32 %v1029, 1e-05
        %v1048 = vadd.f32 %v1030, 1e-05
        %v1049 = vadd.f32 %v1031, 1e-05
        %v1050 = vadd.f32 %v1032, 1e-05
        %v1051 = vadd.f32 %v1033, 1e-05
        %v1052 = vadd.f32 %v1034, 1e-05
        %v1053 = vadd.f32 %v1035, 1e-05
        %v1054 = vadd.f32 %v1036, 1e-05
        %v1055 = vadd.f32 %v1037, 1e-05
        %v1056 = vadd.f32 %v1038, 1e-05
        %v1057 = vadd.f32 %v1039, 1e-05
        %v1058 = vadd.f32 %v1040, 1e-05
        %v1059 = vadd.f32 %v1041, 1e-05
        %v1060 = vadd.f32 %v1042, 1e-05
        %v1061 = vadd.f32 %v1043, 1e-05
        %v1062 = vadd.f32 %v1044, 1e-05
        %v1063 = vadd.f32 %v1045, 1e-05
        %v1064 = vadd.f32 %v1046, 1e-05
        %v1065 = vrsqrt.pop %v1047
        %v1066 = vrsqrt.pop %v1048
        %v1067 = vrsqrt.pop %v1049
        %v1068 = vrsqrt.pop %v1050
        %v1069 = vrsqrt.pop %v1051
        %v1070 = vrsqrt.pop %v1052
        %v1071 = vrsqrt.pop %v1053
        %v1072 = vrsqrt.pop %v1054
        %v1073 = vrsqrt.pop %v1055
        %v1074 = vrsqrt.pop %v1056
        %v1075 = vrsqrt.pop %v1057
        %v1076 = vrsqrt.pop %v1058
        %v1077 = vrsqrt.pop %v1059
        %v1078 = vrsqrt.pop %v1060
        %v1079 = vrsqrt.pop %v1061
        %v1080 = vrsqrt.pop %v1062
        %v1081 = vrsqrt.pop %v1063
        %v1082 = vrsqrt.pop %v1064
        %v1083 = vmul.f32 %v885, %v1065
        %v1084 = vmul.f32 %v886, %v1065
        %v1085 = vmul.f32 %v887, %v1066
        %v1086 = vmul.f32 %v888, %v1066
        %v1087 = vmul.f32 %v889, %v1067
        %v1088 = vmul.f32 %v890, %v1067
        %v1089 = vmul.f32 %v891, %v1068
        %v1090 = vmul.f32 %v892, %v1068
        %v1091 = vmul.f32 %v893, %v1069
        %v1092 = vmul.f32 %v894, %v1069
        %v1093 = vmul.f32 %v895, %v1070
        %v1094 = vmul.f32 %v896, %v1070
        %v1095 = vmul.f32 %v897, %v1071
        %v1096 = vmul.f32 %v898, %v1071
        %v1097 = vmul.f32 %v899, %v1072
        %v1098 = vmul.f32 %v900, %v1072
        %v1099 = vmul.f32 %v901, %v1073
        %v1100 = vmul.f32 %v902, %v1073
        %v1101 = vmul.f32 %v903, %v1074
        %v1102 = vmul.f32 %v904, %v1074
        %v1103 = vmul.f32 %v905, %v1075
        %v1104 = vmul.f32 %v906, %v1075
        %v1105 = vmul.f32 %v907, %v1076
        %v1106 = vmul.f32 %v908, %v1076
        %v1107 = vmul.f32 %v909, %v1077
        %v1108 = vmul.f32 %v910, %v1077
        %v1109 = vmul.f32 %v911, %v1078
        %v1110 = vmul.f32 %v912, %v1078
        %v1111 = vmul.f32 %v913, %v1079
        %v1112 = vmul.f32 %v914, %v1079
        %v1113 = vmul.f32 %v915, %v1080
        %v1114 = vmul.f32 %v916, %v1080
        %v1115 = vmul.f32 %v917, %v1081
        %v1116 = vmul.f32 %v918, %v1081
        %v1117 = vmul.f32 %v919, %v1082
        %v1118 = vmul.f32 %v920, %v1082
        %v1120 = vlaneseq
        %v1121 = vshrl.u32 %v1120, 7
        %v1122 = vsub.s32 0, %v1121
        %v1123 = vrot.slane %v791, %v1122
        %v1124 = vlaneseq
        %v1125 = vshrl.u32 %v1124, 7
        %v1126 = vsub.s32 1, %v1125
        %v1127 = vrot.slane %v791, %v1126
        %v1130 = vmul.f32 %v1083, %v1123
        %v1131 = vmul.f32 %v1084, %v1127
        %v1132 = vmul.f32 %v1085, %v1123
        %v1133 = vmul.f32 %v1086, %v1127
        %v1134 = vmul.f32 %v1087, %v1123
        %v1135 = vmul.f32 %v1088, %v1127
        %v1136 = vmul.f32 %v1089, %v1123
        %v1137 = vmul.f32 %v1090, %v1127
        %v1138 = vmul.f32 %v1091, %v1123
        %v1139 = vmul.f32 %v1092, %v1127
        %v1140 = vmul.f32 %v1093, %v1123
        %v1141 = vmul.f32 %v1094, %v1127
        %v1142 = vmul.f32 %v1095, %v1123
        %v1143 = vmul.f32 %v1096, %v1127
        %v1144 = vmul.f32 %v1097, %v1123
        %v1145 = vmul.f32 %v1098, %v1127
        %v1146 = vmul.f32 %v1099, %v1123
        %v1147 = vmul.f32 %v1100, %v1127
        %v1148 = vmul.f32 %v1101, %v1123
        %v1149 = vmul.f32 %v1102, %v1127
        %v1150 = vmul.f32 %v1103, %v1123
        %v1151 = vmul.f32 %v1104, %v1127
        %v1152 = vmul.f32 %v1105, %v1123
        %v1153 = vmul.f32 %v1106, %v1127
        %v1154 = vmul.f32 %v1107, %v1123
        %v1155 = vmul.f32 %v1108, %v1127
        %v1156 = vmul.f32 %v1109, %v1123
        %v1157 = vmul.f32 %v1110, %v1127
        %v1158 = vmul.f32 %v1111, %v1123
        %v1159 = vmul.f32 %v1112, %v1127
        %v1160 = vmul.f32 %v1113, %v1123
        %v1161 = vmul.f32 %v1114, %v1127
        %v1162 = vmul.f32 %v1115, %v1123
        %v1163 = vmul.f32 %v1116, %v1127
        %v1164 = vmul.f32 %v1117, %v1123
        %v1165 = vmul.f32 %v1118, %v1127
        %v1167 = vlaneseq
        %v1168 = vshrl.u32 %v1167, 7
        %v1169 = vsub.s32 0, %v1168
        %v1170 = vrot.slane %v792, %v1169
        %v1171 = vlaneseq
        %v1172 = vshrl.u32 %v1171, 7
        %v1173 = vsub.s32 1, %v1172
        %v1174 = vrot.slane %v792, %v1173
        %v1177 = vadd.f32 %v1130, %v1170
        %v1178 = vadd.f32 %v1131, %v1174
        %v1179 = vadd.f32 %v1132, %v1170
        %v1180 = vadd.f32 %v1133, %v1174
        %v1181 = vadd.f32 %v1134, %v1170
        %v1182 = vadd.f32 %v1135, %v1174
        %v1183 = vadd.f32 %v1136, %v1170
        %v1184 = vadd.f32 %v1137, %v1174
        %v1185 = vadd.f32 %v1138, %v1170
        %v1186 = vadd.f32 %v1139, %v1174
        %v1187 = vadd.f32 %v1140, %v1170
        %v1188 = vadd.f32 %v1141, %v1174
        %v1189 = vadd.f32 %v1142, %v1170
        %v1190 = vadd.f32 %v1143, %v1174
        %v1191 = vadd.f32 %v1144, %v1170
        %v1192 = vadd.f32 %v1145, %v1174
        %v1193 = vadd.f32 %v1146, %v1170
        %v1194 = vadd.f32 %v1147, %v1174
        %v1195 = vadd.f32 %v1148, %v1170
        %v1196 = vadd.f32 %v1149, %v1174
        %v1197 = vadd.f32 %v1150, %v1170
        %v1198 = vadd.f32 %v1151, %v1174
        %v1199 = vadd.f32 %v1152, %v1170
        %v1200 = vadd.f32 %v1153, %v1174
        %v1201 = vadd.f32 %v1154, %v1170
        %v1202 = vadd.f32 %v1155, %v1174
        %v1203 = vadd.f32 %v1156, %v1170
        %v1204 = vadd.f32 %v1157, %v1174
        %v1205 = vadd.f32 %v1158, %v1170
        %v1206 = vadd.f32 %v1159, %v1174
        %v1207 = vadd.f32 %v1160, %v1170
        %v1208 = vadd.f32 %v1161, %v1174
        %v1209 = vadd.f32 %v1162, %v1170
        %v1210 = vadd.f32 %v1163, %v1174
        %v1211 = vadd.f32 %v1164, %v1170
        %v1212 = vadd.f32 %v1165, %v1174
        %v1213 = vpack.c.bf16 %v1179, %v1177
        %v1214 = vpack.c.bf16 %v1180, %v1178
        %v1215 = vpack.c.bf16 %v1183, %v1181
        %v1216 = vpack.c.bf16 %v1184, %v1182
        %v1217 = vpack.c.bf16 %v1187, %v1185
        %v1218 = vpack.c.bf16 %v1188, %v1186
        %v1219 = vpack.c.bf16 %v1191, %v1189
        %v1220 = vpack.c.bf16 %v1192, %v1190
        %v1221 = vpack.c.bf16 %v1195, %v1193
        %v1222 = vpack.c.bf16 %v1196, %v1194
        %v1223 = vpack.c.bf16 %v1199, %v1197
        %v1224 = vpack.c.bf16 %v1200, %v1198
        %v1225 = vpack.c.bf16 %v1203, %v1201
        %v1226 = vpack.c.bf16 %v1204, %v1202
        %v1227 = vpack.c.bf16 %v1207, %v1205
        %v1228 = vpack.c.bf16 %v1208, %v1206
        %v1229 = vpack.c.bf16 %v1211, %v1209
        %v1230 = vpack.c.bf16 %v1212, %v1210
        %v1231 = vld [vmem:[%s629] sm:$0xff]
        %v1232 = vld [vmem:[%s629 + $0x8] sm:$0xff]
        %v1233 = vld [vmem:[%s629 + $0x10] sm:$0xf]
        %v1234 = vld [vmem:[%s629 + $0x14] sm:$0xff]
        %v1235 = vld [vmem:[%s629 + $0x1c] sm:$0xff]
        %v1236 = vld [vmem:[%s629 + $0x24] sm:$0xf]
        %v1237 = vld [vmem:[%s629 + $0x28] sm:$0xff]
        %v1238 = vld [vmem:[%s629 + $0x30] sm:$0xff]
        %v1239 = vld [vmem:[%s629 + $0x38] sm:$0xf]
        %v1240 = vld [vmem:[%s629 + $0x3c] sm:$0xff]
        %v1241 = vld [vmem:[%s629 + $0x44] sm:$0xff]
        %v1242 = vld [vmem:[%s629 + $0x4c] sm:$0xf]
        %v1243 = vld [vmem:[%s629 + $0x50] sm:$0xff]
        %v1244 = vld [vmem:[%s629 + $0x58] sm:$0xff]
        %v1245 = vld [vmem:[%s629 + $0x60] sm:$0xf]
        %v1246 = vld [vmem:[%s629 + $0x64] sm:$0xff]
        %v1247 = vld [vmem:[%s629 + $0x6c] sm:$0xff]
        %v1248 = vld [vmem:[%s629 + $0x74] sm:$0xf]
        %v1249 = vld [vmem:[%s629 + $0x78] sm:$0xff]
        %v1250 = vld [vmem:[%s629 + $0x80] sm:$0xff]
        %v1251 = vld [vmem:[%s629 + $0x88] sm:$0xf]
        %v1252 = vld [vmem:[%s629 + $0x8c] sm:$0xff]
        %v1253 = vld [vmem:[%s629 + $0x94] sm:$0xff]
        %v1254 = vld [vmem:[%s629 + $0x9c] sm:$0xf]
        %v1255 = vld [vmem:[%s629 + $0xa0] sm:$0xff]
        %v1256 = vld [vmem:[%s629 + $0xa8] sm:$0xff]
        %v1257 = vld [vmem:[%s629 + $0xb0] sm:$0xf]
        %v1258 = vld [vmem:[%s629 + $0xb4] sm:$0xff]
        %v1259 = vld [vmem:[%s629 + $0xbc] sm:$0xff]
        %v1260 = vld [vmem:[%s629 + $0xc4] sm:$0xf]
        %v1261 = vld [vmem:[%s629 + $0xc8] sm:$0xff]
        %v1262 = vld [vmem:[%s629 + $0xd0] sm:$0xff]
        %v1263 = vld [vmem:[%s629 + $0xd8] sm:$0xf]
        %v1264 = vld [vmem:[%s629 + $0xdc] sm:$0xff]
        %v1265 = vld [vmem:[%s629 + $0xe4] sm:$0xff]
        %v1266 = vld [vmem:[%s629 + $0xec] sm:$0xf]
        %v1267 = vld [vmem:[%s629 + $0xf0] sm:$0xff]
        %v1268 = vld [vmem:[%s629 + $0xf8] sm:$0xff]
        %v1269 = vld [vmem:[%s629 + $0x100] sm:$0xf]
        %v1270 = vld [vmem:[%s629 + $0x104] sm:$0xff]
        %v1271 = vld [vmem:[%s629 + $0x10c] sm:$0xff]
        %v1272 = vld [vmem:[%s629 + $0x114] sm:$0xf]
        %v1273 = vld [vmem:[%s629 + $0x118] sm:$0xff]
        %v1274 = vld [vmem:[%s629 + $0x120] sm:$0xff]
        %v1275 = vld [vmem:[%s629 + $0x128] sm:$0xf]
        %v1276 = vld [vmem:[%s629 + $0x12c] sm:$0xff]
        %v1277 = vld [vmem:[%s629 + $0x134] sm:$0xff]
        %v1278 = vld [vmem:[%s629 + $0x13c] sm:$0xf]
        %v1279 = vld [vmem:[%s629 + $0x140] sm:$0xff]
        %v1280 = vld [vmem:[%s629 + $0x148] sm:$0xff]
        %v1281 = vld [vmem:[%s629 + $0x150] sm:$0xf]
        %v1282 = vld [vmem:[%s629 + $0x154] sm:$0xff]
        %v1283 = vld [vmem:[%s629 + $0x15c] sm:$0xff]
        %v1284 = vld [vmem:[%s629 + $0x164] sm:$0xf]
        %v1285 = vld [vmem:[%s629 + $0x168] sm:$0xff]
        %v1286 = vld [vmem:[%s629 + $0x170] sm:$0xff]
        %v1287 = vld [vmem:[%s629 + $0x178] sm:$0xf]
        %v1288 = vld [vmem:[%s629 + $0x17c] sm:$0xff]
        %v1289 = vld [vmem:[%s629 + $0x184] sm:$0xff]
        %v1290 = vld [vmem:[%s629 + $0x18c] sm:$0xf]
        %v1291 = vld [vmem:[%s629 + $0x190] sm:$0xff]
        %v1292 = vld [vmem:[%s629 + $0x198] sm:$0xff]
        %v1293 = vld [vmem:[%s629 + $0x1a0] sm:$0xf]
        %v1294 = vld [vmem:[%s629 + $0x1a4] sm:$0xff]
        %v1295 = vld [vmem:[%s629 + $0x1ac] sm:$0xff]
        %v1296 = vld [vmem:[%s629 + $0x1b4] sm:$0xf]
        %v1297 = vld [vmem:[%s629 + $0x1b8] sm:$0xff]
        %v1298 = vld [vmem:[%s629 + $0x1c0] sm:$0xff]
        %v1299 = vld [vmem:[%s629 + $0x1c8] sm:$0xf]
        %v1300 = vld [vmem:[%s629 + $0x1cc] sm:$0xff]
        %v1301 = vld [vmem:[%s629 + $0x1d4] sm:$0xff]
        %v1302 = vld [vmem:[%s629 + $0x1dc] sm:$0xf]
        %v1303 = vld [vmem:[%s633] sm:$0x1f]
        %v1305 = vlaneseq
        %v1306 = vshrl.u32 %v1305, 7
        %v1307 = vsub.s32 0, %v1306
        %v1308 = vrot.slane %v1303, %v1307
        %v1309 = vlaneseq
        %v1310 = vshrl.u32 %v1309, 7
        %v1311 = vsub.s32 1, %v1310
        %v1312 = vrot.slane %v1303, %v1311
        %v1313 = vlaneseq
        %v1314 = vshrl.u32 %v1313, 7
        %v1315 = vsub.s32 2, %v1314
        %v1316 = vrot.slane %v1303, %v1315
        %v1317 = vlaneseq
        %v1318 = vshrl.u32 %v1317, 7
        %v1319 = vsub.s32 3, %v1318
        %v1320 = vrot.slane %v1303, %v1319
        %v1321 = vlaneseq
        %v1322 = vshrl.u32 %v1321, 7
        %v1323 = vsub.s32 4, %v1322
        %v1324 = vrot.slane %v1303, %v1323
        %v1402 = vunpack.c.l.b16 %v1231
        %v1403 = vunpack.c.h.b16 %v1231
        %v1404 = vunpack.c.l.b16 %v1232
        %v1405 = vunpack.c.h.b16 %v1232
        %v1406 = vunpack.c.l.b16 %v1233
        %v1407 = vunpack.c.l.b16 %v1234
        %v1408 = vunpack.c.h.b16 %v1234
        %v1409 = vunpack.c.l.b16 %v1235
        %v1410 = vunpack.c.h.b16 %v1235
        %v1411 = vunpack.c.l.b16 %v1236
        %v1412 = vunpack.c.l.b16 %v1237
        %v1413 = vunpack.c.h.b16 %v1237
        %v1414 = vunpack.c.l.b16 %v1238
        %v1415 = vunpack.c.h.b16 %v1238
        %v1416 = vunpack.c.l.b16 %v1239
        %v1417 = vunpack.c.l.b16 %v1240
        %v1418 = vunpack.c.h.b16 %v1240
        %v1419 = vunpack.c.l.b16 %v1241
        %v1420 = vunpack.c.h.b16 %v1241
        %v1421 = vunpack.c.l.b16 %v1242
        %v1422 = vunpack.c.l.b16 %v1243
        %v1423 = vunpack.c.h.b16 %v1243
        %v1424 = vunpack.c.l.b16 %v1244
        %v1425 = vunpack.c.h.b16 %v1244
        %v1426 = vunpack.c.l.b16 %v1245
        %v1427 = vunpack.c.l.b16 %v1246
        %v1428 = vunpack.c.h.b16 %v1246
        %v1429 = vunpack.c.l.b16 %v1247
        %v1430 = vunpack.c.h.b16 %v1247
        %v1431 = vunpack.c.l.b16 %v1248
        %v1432 = vunpack.c.l.b16 %v1249
        %v1433 = vunpack.c.h.b16 %v1249
        %v1434 = vunpack.c.l.b16 %v1250
        %v1435 = vunpack.c.h.b16 %v1250
        %v1436 = vunpack.c.l.b16 %v1251
        %v1437 = vunpack.c.l.b16 %v1252
        %v1438 = vunpack.c.h.b16 %v1252
        %v1439 = vunpack.c.l.b16 %v1253
        %v1440 = vunpack.c.h.b16 %v1253
        %v1441 = vunpack.c.l.b16 %v1254
        %v1442 = vunpack.c.l.b16 %v1255
        %v1443 = vunpack.c.h.b16 %v1255
        %v1444 = vunpack.c.l.b16 %v1256
        %v1445 = vunpack.c.h.b16 %v1256
        %v1446 = vunpack.c.l.b16 %v1257
        %v1447 = vunpack.c.l.b16 %v1258
        %v1448 = vunpack.c.h.b16 %v1258
        %v1449 = vunpack.c.l.b16 %v1259
        %v1450 = vunpack.c.h.b16 %v1259
        %v1451 = vunpack.c.l.b16 %v1260
        %v1452 = vunpack.c.l.b16 %v1261
        %v1453 = vunpack.c.h.b16 %v1261
        %v1454 = vunpack.c.l.b16 %v1262
        %v1455 = vunpack.c.h.b16 %v1262
        %v1456 = vunpack.c.l.b16 %v1263
        %v1457 = vunpack.c.l.b16 %v1264
        %v1458 = vunpack.c.h.b16 %v1264
        %v1459 = vunpack.c.l.b16 %v1265
        %v1460 = vunpack.c.h.b16 %v1265
        %v1461 = vunpack.c.l.b16 %v1266
        %v1462 = vunpack.c.l.b16 %v1267
        %v1463 = vunpack.c.h.b16 %v1267
        %v1464 = vunpack.c.l.b16 %v1268
        %v1465 = vunpack.c.h.b16 %v1268
        %v1466 = vunpack.c.l.b16 %v1269
        %v1467 = vunpack.c.l.b16 %v1270
        %v1468 = vunpack.c.h.b16 %v1270
        %v1469 = vunpack.c.l.b16 %v1271
        %v1470 = vunpack.c.h.b16 %v1271
        %v1471 = vunpack.c.l.b16 %v1272
        %v1472 = vunpack.c.l.b16 %v1273
        %v1473 = vunpack.c.h.b16 %v1273
        %v1474 = vunpack.c.l.b16 %v1274
        %v1475 = vunpack.c.h.b16 %v1274
        %v1476 = vunpack.c.l.b16 %v1275
        %v1477 = vunpack.c.l.b16 %v1276
        %v1478 = vunpack.c.h.b16 %v1276
        %v1479 = vunpack.c.l.b16 %v1277
        %v1480 = vunpack.c.h.b16 %v1277
        %v1481 = vunpack.c.l.b16 %v1278
        %v1482 = vunpack.c.l.b16 %v1279
        %v1483 = vunpack.c.h.b16 %v1279
        %v1484 = vunpack.c.l.b16 %v1280
        %v1485 = vunpack.c.h.b16 %v1280
        %v1486 = vunpack.c.l.b16 %v1281
        %v1487 = vunpack.c.l.b16 %v1282
        %v1488 = vunpack.c.h.b16 %v1282
        %v1489 = vunpack.c.l.b16 %v1283
        %v1490 = vunpack.c.h.b16 %v1283
        %v1491 = vunpack.c.l.b16 %v1284
        %v1492 = vunpack.c.l.b16 %v1285
        %v1493 = vunpack.c.h.b16 %v1285
        %v1494 = vunpack.c.l.b16 %v1286
        %v1495 = vunpack.c.h.b16 %v1286
        %v1496 = vunpack.c.l.b16 %v1287
        %v1497 = vunpack.c.l.b16 %v1288
        %v1498 = vunpack.c.h.b16 %v1288
        %v1499 = vunpack.c.l.b16 %v1289
        %v1500 = vunpack.c.h.b16 %v1289
        %v1501 = vunpack.c.l.b16 %v1290
        %v1502 = vunpack.c.l.b16 %v1291
        %v1503 = vunpack.c.h.b16 %v1291
        %v1504 = vunpack.c.l.b16 %v1292
        %v1505 = vunpack.c.h.b16 %v1292
        %v1506 = vunpack.c.l.b16 %v1293
        %v1507 = vunpack.c.l.b16 %v1294
        %v1508 = vunpack.c.h.b16 %v1294
        %v1509 = vunpack.c.l.b16 %v1295
        %v1510 = vunpack.c.h.b16 %v1295
        %v1511 = vunpack.c.l.b16 %v1296
        %v1512 = vunpack.c.l.b16 %v1297
        %v1513 = vunpack.c.h.b16 %v1297
        %v1514 = vunpack.c.l.b16 %v1298
        %v1515 = vunpack.c.h.b16 %v1298
        %v1516 = vunpack.c.l.b16 %v1299
        %v1517 = vunpack.c.l.b16 %v1300
        %v1518 = vunpack.c.h.b16 %v1300
        %v1519 = vunpack.c.l.b16 %v1301
        %v1520 = vunpack.c.h.b16 %v1301
        %v1521 = vunpack.c.l.b16 %v1302
        %v1522 = vpack.c.b16 %v1407, %v1402
        %v1523 = vpack.c.b16 %v1408, %v1403
        %v1524 = vpack.c.b16 %v1409, %v1404
        %v1525 = vpack.c.b16 %v1410, %v1405
        %v1526 = vpack.c.b16 %v1411, %v1406
        %v1527 = vpack.c.b16 %v1417, %v1412
        %v1528 = vpack.c.b16 %v1418, %v1413
        %v1529 = vpack.c.b16 %v1419, %v1414
        %v1530 = vpack.c.b16 %v1420, %v1415
        %v1531 = vpack.c.b16 %v1421, %v1416
        %v1532 = vpack.c.b16 %v1427, %v1422
        %v1533 = vpack.c.b16 %v1428, %v1423
        %v1534 = vpack.c.b16 %v1429, %v1424
        %v1535 = vpack.c.b16 %v1430, %v1425
        %v1536 = vpack.c.b16 %v1431, %v1426
        %v1537 = vpack.c.b16 %v1437, %v1432
        %v1538 = vpack.c.b16 %v1438, %v1433
        %v1539 = vpack.c.b16 %v1439, %v1434
        %v1540 = vpack.c.b16 %v1440, %v1435
        %v1541 = vpack.c.b16 %v1441, %v1436
        %v1542 = vpack.c.b16 %v1447, %v1442
        %v1543 = vpack.c.b16 %v1448, %v1443
        %v1544 = vpack.c.b16 %v1449, %v1444
        %v1545 = vpack.c.b16 %v1450, %v1445
        %v1546 = vpack.c.b16 %v1451, %v1446
        %v1547 = vpack.c.b16 %v1457, %v1452
        %v1548 = vpack.c.b16 %v1458, %v1453
        %v1549 = vpack.c.b16 %v1459, %v1454
        %v1550 = vpack.c.b16 %v1460, %v1455
        %v1551 = vpack.c.b16 %v1461, %v1456
        %v1552 = vpack.c.b16 %v1467, %v1462
        %v1553 = vpack.c.b16 %v1468, %v1463
        %v1554 = vpack.c.b16 %v1469, %v1464
        %v1555 = vpack.c.b16 %v1470, %v1465
        %v1556 = vpack.c.b16 %v1471, %v1466
        %v1557 = vpack.c.b16 %v1477, %v1472
        %v1558 = vpack.c.b16 %v1478, %v1473
        %v1559 = vpack.c.b16 %v1479, %v1474
        %v1560 = vpack.c.b16 %v1480, %v1475
        %v1561 = vpack.c.b16 %v1481, %v1476
        %v1562 = vpack.c.b16 %v1487, %v1482
        %v1563 = vpack.c.b16 %v1488, %v1483
        %v1564 = vpack.c.b16 %v1489, %v1484
        %v1565 = vpack.c.b16 %v1490, %v1485
        %v1566 = vpack.c.b16 %v1491, %v1486
        %v1567 = vpack.c.b16 %v1497, %v1492
        %v1568 = vpack.c.b16 %v1498, %v1493
        %v1569 = vpack.c.b16 %v1499, %v1494
        %v1570 = vpack.c.b16 %v1500, %v1495
        %v1571 = vpack.c.b16 %v1501, %v1496
        %v1572 = vpack.c.b16 %v1507, %v1502
        %v1573 = vpack.c.b16 %v1508, %v1503
        %v1574 = vpack.c.b16 %v1509, %v1504
        %v1575 = vpack.c.b16 %v1510, %v1505
        %v1576 = vpack.c.b16 %v1511, %v1506
        %v1577 = vpack.c.b16 %v1517, %v1512
        %v1578 = vpack.c.b16 %v1518, %v1513
        %v1579 = vpack.c.b16 %v1519, %v1514
        %v1580 = vpack.c.b16 %v1520, %v1515
        %v1581 = vpack.c.b16 %v1521, %v1516
        %v1643 = vsel %vm793, %v1214, 0
        %v1646 = vsel %vm793, %v1216, 0
        %v1649 = vsel %vm793, %v1218, 0
        %v1652 = vsel %vm793, %v1220, 0
        %v1655 = vsel %vm793, %v1222, 0
        %v1658 = vsel %vm793, %v1224, 0
        %v1661 = vsel %vm793, %v1226, 0
        %v1664 = vsel %vm793, %v1228, 0
        %v1667 = vsel %vm793, %v1230, 0
        %1669 = vmatprep.subr.bf16.mxu0 %v1523
        %1670 = vmatpush1.bf16.msra.mxu0 %v1522
        %1671 = vmatprep.subr.bf16.mxu0 %v1528
        %1672 = vmatpush1.bf16.msra.mxu0 %v1527
        %1673 = vmatprep.subr.bf16.mxu0 %v1533
        %1674 = vmatpush1.bf16.msra.mxu0 %v1532
        %1675 = vmatprep.subr.bf16.mxu0 %v1538
        %1676 = vmatpush1.bf16.msra.mxu0 %v1537
        %1677 = vmatprep.subr.bf16.mxu0 %v1543
        %1678 = vmatpush1.bf16.msra.mxu0 %v1542
        %1679 = vmatprep.subr.bf16.mxu0 %v1548
        %1680 = vmatpush1.bf16.msra.mxu0 %v1547
        %1681 = vmatprep.subr.bf16.mxu0 %v1553
        %1682 = vmatpush1.bf16.msra.mxu0 %v1552
        %1683 = vmatprep.subr.bf16.mxu0 %v1558
        %1684 = vmatpush1.bf16.msra.mxu0 %v1557
        %1685 = vmatprep.subr.bf16.mxu0 %v1563
        %1686 = vmatpush1.bf16.msra.mxu0 %v1562
        %1687 = vmatprep.subr.bf16.mxu0 %v1568
        %1688 = vmatpush1.bf16.msra.mxu0 %v1567
        %1689 = vmatprep.subr.bf16.mxu0 %v1573
        %1690 = vmatpush1.bf16.msra.mxu0 %v1572
        %1691 = vmatprep.subr.bf16.mxu0 %v1578
        %1692 = vmatpush1.bf16.msra.mxu0 %v1577
        %1693 = vmatprep.subr.bf16.mxu0 0
        %1694 = vmatpush1.bf16.msra.mxu0 0
        %1695 = vmatprep.subr.bf16.mxu0 0
        %1696 = vmatpush1.bf16.msra.mxu0 0
        %1697 = vmatprep.subr.bf16.mxu0 0
        %1698 = vmatpush1.bf16.msra.mxu0 0
        %1699 = vmatprep.subr.bf16.mxu0 0
        %1700 = vmatpush1.bf16.msra.mxu0 0
        %1701 = vmatprep.mubr.bf16.mxu0 %v1643
        %1702 = vmatmul.mubr.bf16.gmra.mrb[0].mxu0 %v1213
        %v1703 = vpop.f32.mrb[0].mxu0
        %v1704 = vadd.f32 %v1308, %v1703
        %v1705 = vpop.f32.mrb[0].mxu0
        %v1706 = vadd.f32 %v1312, %v1705
        %v1707 = vpop.f32.mrb[0].mxu0
        %v1708 = vadd.f32 %v1308, %v1707
        %v1709 = vpop.f32.mrb[0].mxu0
        %v1710 = vadd.f32 %v1312, %v1709
        %1711 = vmatprep.mubr.bf16.mxu0 %v1646
        %1712 = vmatmul.mubr.bf16.gmra.mrb[0].mxu0 %v1215
        %v1713 = vpop.f32.mrb[0].mxu0
        %v1714 = vadd.f32 %v1308, %v1713
        %v1715 = vpop.f32.mrb[0].mxu0
        %v1716 = vadd.f32 %v1312, %v1715
        %v1717 = vpop.f32.mrb[0].mxu0
        %v1718 = vadd.f32 %v1308, %v1717
        %v1719 = vpop.f32.mrb[0].mxu0
        %v1720 = vadd.f32 %v1312, %v1719
        %1721 = vmatprep.mubr.bf16.mxu0 %v1649
        %1722 = vmatmul.mubr.bf16.gmra.mrb[0].mxu0 %v1217
        %v1723 = vpop.f32.mrb[0].mxu0
        %v1724 = vadd.f32 %v1308, %v1723
        %v1725 = vpop.f32.mrb[0].mxu0
        %v1726 = vadd.f32 %v1312, %v1725
        %v1727 = vpop.f32.mrb[0].mxu0
        %v1728 = vadd.f32 %v1308, %v1727
        %v1729 = vpop.f32.mrb[0].mxu0
        %v1730 = vadd.f32 %v1312, %v1729
        %1731 = vmatprep.mubr.bf16.mxu0 %v1652
        %1732 = vmatmul.mubr.bf16.gmra.mrb[0].mxu0 %v1219
        %v1733 = vpop.f32.mrb[0].mxu0
        %v1734 = vadd.f32 %v1308, %v1733
        %v1735 = vpop.f32.mrb[0].mxu0
        %v1736 = vadd.f32 %v1312, %v1735
        %v1737 = vpop.f32.mrb[0].mxu0
        %v1738 = vadd.f32 %v1308, %v1737
        %v1739 = vpop.f32.mrb[0].mxu0
        %v1740 = vadd.f32 %v1312, %v1739
        %1741 = vmatprep.mubr.bf16.mxu0 %v1655
        %1742 = vmatmul.mubr.bf16.gmra.mrb[0].mxu0 %v1221
        %v1743 = vpop.f32.mrb[0].mxu0
        %v1744 = vadd.f32 %v1308, %v1743
        %v1745 = vpop.f32.mrb[0].mxu0
        %v1746 = vadd.f32 %v1312, %v1745
        %v1747 = vpop.f32.mrb[0].mxu0
        %v1748 = vadd.f32 %v1308, %v1747
        %v1749 = vpop.f32.mrb[0].mxu0
        %v1750 = vadd.f32 %v1312, %v1749
        %1751 = vmatprep.mubr.bf16.mxu0 %v1658
        %1752 = vmatmul.mubr.bf16.gmra.mrb[0].mxu0 %v1223
        %v1753 = vpop.f32.mrb[0].mxu0
        %v1754 = vadd.f32 %v1308, %v1753
        %v1755 = vpop.f32.mrb[0].mxu0
        %v1756 = vadd.f32 %v1312, %v1755
        %v1757 = vpop.f32.mrb[0].mxu0
        %v1758 = vadd.f32 %v1308, %v1757
        %v1759 = vpop.f32.mrb[0].mxu0
        %v1760 = vadd.f32 %v1312, %v1759
        %1761 = vmatprep.mubr.bf16.mxu0 %v1661
        %1762 = vmatmul.mubr.bf16.gmra.mrb[0].mxu0 %v1225
        %v1763 = vpop.f32.mrb[0].mxu0
        %v1764 = vadd.f32 %v1308, %v1763
        %v1765 = vpop.f32.mrb[0].mxu0
        %v1766 = vadd.f32 %v1312, %v1765
        %v1767 = vpop.f32.mrb[0].mxu0
        %v1768 = vadd.f32 %v1308, %v1767
        %v1769 = vpop.f32.mrb[0].mxu0
        %v1770 = vadd.f32 %v1312, %v1769
        %1771 = vmatprep.mubr.bf16.mxu0 %v1664
        %1772 = vmatmul.mubr.bf16.gmra.mrb[0].mxu0 %v1227
        %v1773 = vpop.f32.mrb[0].mxu0
        %v1774 = vadd.f32 %v1308, %v1773
        %v1775 = vpop.f32.mrb[0].mxu0
        %v1776 = vadd.f32 %v1312, %v1775
        %v1777 = vpop.f32.mrb[0].mxu0
        %v1778 = vadd.f32 %v1308, %v1777
        %v1779 = vpop.f32.mrb[0].mxu0
        %v1780 = vadd.f32 %v1312, %v1779
        %1781 = vmatprep.mubr.bf16.mxu0 %v1667
        %1782 = vmatmul.mubr.bf16.gmra.mrb[0].mxu0 %v1229
        %v1783 = vpop.f32.mrb[0].mxu0
        %v1784 = vadd.f32 %v1308, %v1783
        %v1785 = vpop.f32.mrb[0].mxu0
        %v1786 = vadd.f32 %v1312, %v1785
        %v1787 = vpop.f32.mrb[0].mxu0
        %v1788 = vadd.f32 %v1308, %v1787
        %v1789 = vpop.f32.mrb[0].mxu0
        %v1790 = vadd.f32 %v1312, %v1789
        %1791 = vdwg.mxu0
        %1792 = vmatprep.subr.bf16.mxu0 %v1525
        %1793 = vmatpush1.bf16.msra.mxu0 %v1524
        %1794 = vmatprep.subr.bf16.mxu0 %v1530
        %1795 = vmatpush1.bf16.msra.mxu0 %v1529
        %1796 = vmatprep.subr.bf16.mxu0 %v1535
        %1797 = vmatpush1.bf16.msra.mxu0 %v1534
        %1798 = vmatprep.subr.bf16.mxu0 %v1540
        %1799 = vmatpush1.bf16.msra.mxu0 %v1539
        %1800 = vmatprep.subr.bf16.mxu0 %v1545
        %1801 = vmatpush1.bf16.msra.mxu0 %v1544
        %1802 = vmatprep.subr.bf16.mxu0 %v1550
        %1803 = vmatpush1.bf16.msra.mxu0 %v1549
        %1804 = vmatprep.subr.bf16.mxu0 %v1555
        %1805 = vmatpush1.bf16.msra.mxu0 %v1554
        %1806 = vmatprep.subr.bf16.mxu0 %v1560
        %1807 = vmatpush1.bf16.msra.mxu0 %v1559
        %1808 = vmatprep.subr.bf16.mxu0 %v1565
        %1809 = vmatpush1.bf16.msra.mxu0 %v1564
        %1810 = vmatprep.subr.bf16.mxu0 %v1570
        %1811 = vmatpush1.bf16.msra.mxu0 %v1569
        %1812 = vmatprep.subr.bf16.mxu0 %v1575
        %1813 = vmatpush1.bf16.msra.mxu0 %v1574
        %1814 = vmatprep.subr.bf16.mxu0 %v1580
        %1815 = vmatpush1.bf16.msra.mxu0 %v1579
        %1816 = vmatprep.subr.bf16.mxu0 0
        %1817 = vmatpush1.bf16.msra.mxu0 0
        %1818 = vmatprep.subr.bf16.mxu0 0
        %1819 = vmatpush1.bf16.msra.mxu0 0
        %1820 = vmatprep.subr.bf16.mxu0 0
        %1821 = vmatpush1.bf16.msra.mxu0 0
        %1822 = vmatprep.subr.bf16.mxu0 0
        %1823 = vmatpush1.bf16.msra.mxu0 0
        %1824 = vmatprep.mubr.bf16.mxu0 %v1643
        %1825 = vmatmul.mubr.bf16.gmra.mrb[0].mxu0 %v1213
        %v1826 = vpop.f32.mrb[0].mxu0
        %v1827 = vadd.f32 %v1316, %v1826
        %v1828 = vpop.f32.mrb[0].mxu0
        %v1829 = vadd.f32 %v1320, %v1828
        %v1830 = vpop.f32.mrb[0].mxu0
        %v1831 = vadd.f32 %v1316, %v1830
        %v1832 = vpop.f32.mrb[0].mxu0
        %v1833 = vadd.f32 %v1320, %v1832
        %1834 = vmatprep.mubr.bf16.mxu0 %v1646
        %1835 = vmatmul.mubr.bf16.gmra.mrb[0].mxu0 %v1215
        %v1836 = vpop.f32.mrb[0].mxu0
        %v1837 = vadd.f32 %v1316, %v1836
        %v1838 = vpop.f32.mrb[0].mxu0
        %v1839 = vadd.f32 %v1320, %v1838
        %v1840 = vpop.f32.mrb[0].mxu0
        %v1841 = vadd.f32 %v1316, %v1840
        %v1842 = vpop.f32.mrb[0].mxu0
        %v1843 = vadd.f32 %v1320, %v1842
        %1844 = vmatprep.mubr.bf16.mxu0 %v1649
        %1845 = vmatmul.mubr.bf16.gmra.mrb[0].mxu0 %v1217
        %v1846 = vpop.f32.mrb[0].mxu0
        %v1847 = vadd.f32 %v1316, %v1846
        %v1848 = vpop.f32.mrb[0].mxu0
        %v1849 = vadd.f32 %v1320, %v1848
        %v1850 = vpop.f32.mrb[0].mxu0
        %v1851 = vadd.f32 %v1316, %v1850
        %v1852 = vpop.f32.mrb[0].mxu0
        %v1853 = vadd.f32 %v1320, %v1852
        %1854 = vmatprep.mubr.bf16.mxu0 %v1652
        %1855 = vmatmul.mubr.bf16.gmra.mrb[0].mxu0 %v1219
        %v1856 = vpop.f32.mrb[0].mxu0
        %v1857 = vadd.f32 %v1316, %v1856
        %v1858 = vpop.f32.mrb[0].mxu0
        %v1859 = vadd.f32 %v1320, %v1858
        %v1860 = vpop.f32.mrb[0].mxu0
        %v1861 = vadd.f32 %v1316, %v1860
        %v1862 = vpop.f32.mrb[0].mxu0
        %v1863 = vadd.f32 %v1320, %v1862
        %1864 = vmatprep.mubr.bf16.mxu0 %v1655
        %1865 = vmatmul.mubr.bf16.gmra.mrb[0].mxu0 %v1221
        %v1866 = vpop.f32.mrb[0].mxu0
        %v1867 = vadd.f32 %v1316, %v1866
        %v1868 = vpop.f32.mrb[0].mxu0
        %v1869 = vadd.f32 %v1320, %v1868
        %v1870 = vpop.f32.mrb[0].mxu0
        %v1871 = vadd.f32 %v1316, %v1870
        %v1872 = vpop.f32.mrb[0].mxu0
        %v1873 = vadd.f32 %v1320, %v1872
        %1874 = vmatprep.mubr.bf16.mxu0 %v1658
        %1875 = vmatmul.mubr.bf16.gmra.mrb[0].mxu0 %v1223
        %v1876 = vpop.f32.mrb[0].mxu0
        %v1877 = vadd.f32 %v1316, %v1876
        %v1878 = vpop.f32.mrb[0].mxu0
        %v1879 = vadd.f32 %v1320, %v1878
        %v1880 = vpop.f32.mrb[0].mxu0
        %v1881 = vadd.f32 %v1316, %v1880
        %v1882 = vpop.f32.mrb[0].mxu0
        %v1883 = vadd.f32 %v1320, %v1882
        %1884 = vmatprep.mubr.bf16.mxu0 %v1661
        %1885 = vmatmul.mubr.bf16.gmra.mrb[0].mxu0 %v1225
        %v1886 = vpop.f32.mrb[0].mxu0
        %v1887 = vadd.f32 %v1316, %v1886
        %v1888 = vpop.f32.mrb[0].mxu0
        %v1889 = vadd.f32 %v1320, %v1888
        %v1890 = vpop.f32.mrb[0].mxu0
        %v1891 = vadd.f32 %v1316, %v1890
        %v1892 = vpop.f32.mrb[0].mxu0
        %v1893 = vadd.f32 %v1320, %v1892
        %1894 = vmatprep.mubr.bf16.mxu0 %v1664
        %1895 = vmatmul.mubr.bf16.gmra.mrb[0].mxu0 %v1227
        %v1896 = vpop.f32.mrb[0].mxu0
        %v1897 = vadd.f32 %v1316, %v1896
        %v1898 = vpop.f32.mrb[0].mxu0
        %v1899 = vadd.f32 %v1320, %v1898
        %v1900 = vpop.f32.mrb[0].mxu0
        %v1901 = vadd.f32 %v1316, %v1900
        %v1902 = vpop.f32.mrb[0].mxu0
        %v1903 = vadd.f32 %v1320, %v1902
        %1904 = vmatprep.mubr.bf16.mxu0 %v1667
        %1905 = vmatmul.mubr.bf16.gmra.mrb[0].mxu0 %v1229
        %v1906 = vpop.f32.mrb[0].mxu0
        %v1907 = vadd.f32 %v1316, %v1906
        %v1908 = vpop.f32.mrb[0].mxu0
        %v1909 = vadd.f32 %v1320, %v1908
        %v1910 = vpop.f32.mrb[0].mxu0
        %v1911 = vadd.f32 %v1316, %v1910
        %v1912 = vpop.f32.mrb[0].mxu0
        %v1913 = vadd.f32 %v1320, %v1912
        %1914 = vdwg.mxu0
        %1915 = vmatprep.subr.bf16.mxu0 0
        %1916 = vmatpush1.bf16.msra.mxu0 %v1526
        %1917 = vmatprep.subr.bf16.mxu0 0
        %1918 = vmatpush1.bf16.msra.mxu0 %v1531
        %1919 = vmatprep.subr.bf16.mxu0 0
        %1920 = vmatpush1.bf16.msra.mxu0 %v1536
        %1921 = vmatprep.subr.bf16.mxu0 0
        %1922 = vmatpush1.bf16.msra.mxu0 %v1541
        %1923 = vmatprep.subr.bf16.mxu0 0
        %1924 = vmatpush1.bf16.msra.mxu0 %v1546
        %1925 = vmatprep.subr.bf16.mxu0 0
        %1926 = vmatpush1.bf16.msra.mxu0 %v1551
        %1927 = vmatprep.subr.bf16.mxu0 0
        %1928 = vmatpush1.bf16.msra.mxu0 %v1556
        %1929 = vmatprep.subr.bf16.mxu0 0
        %1930 = vmatpush1.bf16.msra.mxu0 %v1561
        %1931 = vmatprep.subr.bf16.mxu0 0
        %1932 = vmatpush1.bf16.msra.mxu0 %v1566
        %1933 = vmatprep.subr.bf16.mxu0 0
        %1934 = vmatpush1.bf16.msra.mxu0 %v1571
        %1935 = vmatprep.subr.bf16.mxu0 0
        %1936 = vmatpush1.bf16.msra.mxu0 %v1576
        %1937 = vmatprep.subr.bf16.mxu0 0
        %1938 = vmatpush1.bf16.msra.mxu0 %v1581
        %1939 = vmatprep.subr.bf16.mxu0 0
        %1940 = vmatpush1.bf16.msra.mxu0 0
        %1941 = vmatprep.subr.bf16.mxu0 0
        %1942 = vmatpush1.bf16.msra.mxu0 0
        %1943 = vmatprep.subr.bf16.mxu0 0
        %1944 = vmatpush1.bf16.msra.mxu0 0
        %1945 = vmatprep.subr.bf16.mxu0 0
        %1946 = vmatpush1.bf16.msra.mxu0 0
        %1947 = vmatprep.mubr.bf16.mxu0 %v1643
        %1948 = vmatmul.mubr.bf16.gmra.mrb[0].mxu0 %v1213
        %v1949 = vpop.f32.mrb[0].mxu0
        %v1950 = vadd.f32 %v1324, %v1949
        %v1951 = vpop.f32.mrb[0].mxu0
        %v1952 = vpop.f32.mrb[0].mxu0
        %v1953 = vadd.f32 %v1324, %v1952
        %v1954 = vpop.f32.mrb[0].mxu0
        %1955 = vmatprep.mubr.bf16.mxu0 %v1646
        %1956 = vmatmul.mubr.bf16.gmra.mrb[0].mxu0 %v1215
        %v1957 = vpop.f32.mrb[0].mxu0
        %v1958 = vadd.f32 %v1324, %v1957
        %v1959 = vpop.f32.mrb[0].mxu0
        %v1960 = vpop.f32.mrb[0].mxu0
        %v1961 = vadd.f32 %v1324, %v1960
        %v1962 = vpop.f32.mrb[0].mxu0
        %1963 = vmatprep.mubr.bf16.mxu0 %v1649
        %1964 = vmatmul.mubr.bf16.gmra.mrb[0].mxu0 %v1217
        %v1965 = vpop.f32.mrb[0].mxu0
        %v1966 = vadd.f32 %v1324, %v1965
        %v1967 = vpop.f32.mrb[0].mxu0
        %v1968 = vpop.f32.mrb[0].mxu0
        %v1969 = vadd.f32 %v1324, %v1968
        %v1970 = vpop.f32.mrb[0].mxu0
        %1971 = vmatprep.mubr.bf16.mxu0 %v1652
        %1972 = vmatmul.mubr.bf16.gmra.mrb[0].mxu0 %v1219
        %v1973 = vpop.f32.mrb[0].mxu0
        %v1974 = vadd.f32 %v1324, %v1973
        %v1975 = vpop.f32.mrb[0].mxu0
        %v1976 = vpop.f32.mrb[0].mxu0
        %v1977 = vadd.f32 %v1324, %v1976
        %v1978 = vpop.f32.mrb[0].mxu0
        %1979 = vmatprep.mubr.bf16.mxu0 %v1655
        %1980 = vmatmul.mubr.bf16.gmra.mrb[0].mxu0 %v1221
        %v1981 = vpop.f32.mrb[0].mxu0
        %v1982 = vadd.f32 %v1324, %v1981
        %v1983 = vpop.f32.mrb[0].mxu0
        %v1984 = vpop.f32.mrb[0].mxu0
        %v1985 = vadd.f32 %v1324, %v1984
        %v1986 = vpop.f32.mrb[0].mxu0
        %1987 = vmatprep.mubr.bf16.mxu0 %v1658
        %1988 = vmatmul.mubr.bf16.gmra.mrb[0].mxu0 %v1223
        %v1989 = vpop.f32.mrb[0].mxu0
        %v1990 = vadd.f32 %v1324, %v1989
        %v1991 = vpop.f32.mrb[0].mxu0
        %v1992 = vpop.f32.mrb[0].mxu0
        %v1993 = vadd.f32 %v1324, %v1992
        %v1994 = vpop.f32.mrb[0].mxu0
        %1995 = vmatprep.mubr.bf16.mxu0 %v1661
        %1996 = vmatmul.mubr.bf16.gmra.mrb[0].mxu0 %v1225
        %v1997 = vpop.f32.mrb[0].mxu0
        %v1998 = vadd.f32 %v1324, %v1997
        %v1999 = vpop.f32.mrb[0].mxu0
        %v2000 = vpop.f32.mrb[0].mxu0
        %v2001 = vadd.f32 %v1324, %v2000
        %v2002 = vpop.f32.mrb[0].mxu0
        %2003 = vmatprep.mubr.bf16.mxu0 %v1664
        %2004 = vmatmul.mubr.bf16.gmra.mrb[0].mxu0 %v1227
        %v2005 = vpop.f32.mrb[0].mxu0
        %v2006 = vadd.f32 %v1324, %v2005
        %v2007 = vpop.f32.mrb[0].mxu0
        %v2008 = vpop.f32.mrb[0].mxu0
        %v2009 = vadd.f32 %v1324, %v2008
        %v2010 = vpop.f32.mrb[0].mxu0
        %2011 = vmatprep.mubr.bf16.mxu0 %v1667
        %2012 = vmatmul.mubr.bf16.gmra.mrb[0].mxu0 %v1229
        %v2013 = vpop.f32.mrb[0].mxu0
        %v2014 = vadd.f32 %v1324, %v2013
        %v2015 = vpop.f32.mrb[0].mxu0
        %v2016 = vpop.f32.mrb[0].mxu0
        %v2017 = vadd.f32 %v1324, %v2016
        %v2018 = vpop.f32.mrb[0].mxu0
        %2019 = vdwg.mxu0
        %v2020 = vlaneseq
        %v2021 = vand.u32 %v2020, 127
        %vm2022 = vcmp.lt.s32.totalorder %v2021, 65
        %v2023 = vsel %vm2022, 0.0, -1e+30
        %v2024 = vld [vmem:[%s638] sm:$0xff]
        %v2025 = vld [vmem:[%s638 + $0x8] sm:$0xff]
        %v2026 = vld [vmem:[%s638 + $0x10] sm:$0xff]
        %v2027 = vld [vmem:[%s638 + $0x18] sm:$0xff]
        %v2028 = vld [vmem:[%s638 + $0x20] sm:$0xff]
        %v2029 = vld [vmem:[%s638 + $0x28] sm:$0xff]
        %v2030 = vld [vmem:[%s638 + $0x30] sm:$0xff]
        %v2031 = vld [vmem:[%s638 + $0x38] sm:$0xff]
        %v2032 = vld [vmem:[%s638 + $0x40] sm:$0xff]
        %v2033 = vld [vmem:[%s638 + $0x48] sm:$0xff]
        %v2034 = vld [vmem:[%s638 + $0x50] sm:$0xff]
        %v2035 = vld [vmem:[%s638 + $0x58] sm:$0xff]
        %v2036 = vld [vmem:[%s638 + $0x60] sm:$0xff]
        %v2037 = vld [vmem:[%s638 + $0x68] sm:$0xff]
        %v2038 = vld [vmem:[%s638 + $0x70] sm:$0xff]
        %v2039 = vld [vmem:[%s638 + $0x78] sm:$0xff]
        %v2040 = vld [vmem:[%s638 + $0x80] sm:$0xff]
        %v2041 = vld [vmem:[%s638 + $0x88] sm:$0xff]
        %v2042 = vld [vmem:[%s638 + $0x90] sm:$0xff]
        %v2043 = vld [vmem:[%s638 + $0x98] sm:$0xff]
        %v2044 = vld [vmem:[%s638 + $0xa0] sm:$0xff]
        %v2045 = vld [vmem:[%s638 + $0xa8] sm:$0xff]
        %v2046 = vld [vmem:[%s638 + $0xb0] sm:$0xff]
        %v2047 = vld [vmem:[%s638 + $0xb8] sm:$0xff]
        %v2048 = vpack.c.bf16 %v1708, %v1704
        %v2049 = vpack.c.bf16 %v1718, %v1714
        %v2050 = vpack.c.bf16 %v1728, %v1724
        %v2051 = vpack.c.bf16 %v1738, %v1734
        %v2052 = vpack.c.bf16 %v1744, %v1744
        %v2053 = vpack.c.bf16 %v1754, %v1748
        %v2054 = vpack.c.bf16 %v1764, %v1758
        %v2055 = vpack.c.bf16 %v1774, %v1768
        %v2056 = vpack.c.bf16 %v1784, %v1778
        %v2057 = vpack.c.bf16 %v1788, %v1788
        %v2058 = vpack.c.bf16 %v1710, %v1706
        %v2059 = vpack.c.bf16 %v1720, %v1716
        %v2060 = vpack.c.bf16 %v1730, %v1726
        %v2061 = vpack.c.bf16 %v1740, %v1736
        %v2062 = vpack.c.bf16 %v1746, %v1746
        %v2063 = vpack.c.bf16 %v1756, %v1750
        %v2064 = vpack.c.bf16 %v1766, %v1760
        %v2065 = vpack.c.bf16 %v1776, %v1770
        %v2066 = vpack.c.bf16 %v1786, %v1780
        %v2067 = vpack.c.bf16 %v1790, %v1790
        %v2068 = vpack.c.bf16 %v1833, %v1829
        %v2069 = vpack.c.bf16 %v1843, %v1839
        %v2070 = vpack.c.bf16 %v1853, %v1849
        %v2071 = vpack.c.bf16 %v1863, %v1859
        %v2072 = vpack.c.bf16 %v1869, %v1869
        %v2073 = vpack.c.bf16 %v1879, %v1873
        %v2074 = vpack.c.bf16 %v1889, %v1883
        %v2075 = vpack.c.bf16 %v1899, %v1893
        %v2076 = vpack.c.bf16 %v1909, %v1903
        %v2077 = vpack.c.bf16 %v1913, %v1913
        %2083 = vrot.lane.b32.xlu0 %v2058, 64
        %v2084 = vpop.permute.xlu0 %2083
        %2085 = vrot.lane.b32.xlu0 %v2059, 64
        %v2086 = vpop.permute.xlu0 %2085
        %2087 = vrot.lane.b32.xlu0 %v2060, 64
        %v2088 = vpop.permute.xlu0 %2087
        %2089 = vrot.lane.b32.xlu0 %v2061, 64
        %v2090 = vpop.permute.xlu0 %2089
        %2091 = vrot.lane.b32.xlu0 %v2062, 64
        %v2092 = vpop.permute.xlu0 %2091
        %v2094 = vsel %vm793, %v2048, 0
        %v2097 = vsel %vm793, %v2049, 0
        %v2100 = vsel %vm793, %v2050, 0
        %v2103 = vsel %vm793, %v2051, 0
        %v2106 = vsel %vm793, %v2052, 0
        %v2109 = vsel %vm793, %v2084, 0
        %v2112 = vsel %vm793, %v2086, 0
        %v2115 = vsel %vm793, %v2088, 0
        %v2118 = vsel %vm793, %v2090, 0
        %v2121 = vsel %vm793, %v2092, 0
        %2123 = vmatprep.subr.bf16.mxu0 0
        %2124 = vmatpush1.bf16.xpose.msra.mxu0 %v2109
        %2125 = vmatprep.subr.bf16.mxu0 0
        %2126 = vmatpush1.bf16.xpose.msra.mxu0 %v2112
        %2127 = vmatprep.subr.bf16.mxu0 0
        %2128 = vmatpush1.bf16.xpose.msra.mxu0 %v2115
        %2129 = vmatprep.subr.bf16.mxu0 0
        %2130 = vmatpush1.bf16.xpose.msra.mxu0 %v2118
        %2131 = vmatprep.subr.bf16.mxu0 0
        %2132 = vmatpush1.bf16.xpose.msra.mxu0 %v2121
        %2133 = vmatprep.subr.bf16.mxu0 0
        %2134 = vmatpush1.bf16.xpose.msra.mxu0 0
        %2135 = vmatprep.subr.bf16.mxu0 0
        %2136 = vmatpush1.bf16.xpose.msra.mxu0 0
        %2137 = vmatprep.subr.bf16.mxu0 0
        %2138 = vmatpush1.bf16.xpose.msra.mxu0 0
        %2139 = vmatprep.subr.bf16.mxu0 0
        %2140 = vmatpush1.bf16.xpose.msra.mxu0 0
        %2141 = vmatprep.subr.bf16.mxu0 0
        %2142 = vmatpush1.bf16.xpose.msra.mxu0 0
        %2143 = vmatprep.subr.bf16.mxu0 0
        %2144 = vmatpush1.bf16.xpose.msra.mxu0 0
        %2145 = vmatprep.subr.bf16.mxu0 0
        %2146 = vmatpush1.bf16.xpose.msra.mxu0 0
        %2147 = vmatprep.subr.bf16.mxu0 0
        %2148 = vmatpush1.bf16.xpose.msra.mxu0 0
        %2149 = vmatprep.subr.bf16.mxu0 0
        %2150 = vmatpush1.bf16.xpose.msra.mxu0 0
        %2151 = vmatprep.subr.bf16.mxu0 0
        %2152 = vmatpush1.bf16.xpose.msra.mxu0 0
        %2153 = vmatprep.subr.bf16.mxu0 0
        %2154 = vmatpush1.bf16.xpose.msra.mxu0 0
        %2155 = vmatprep.mubr.bf16.mxu0 0
        %2156 = vmatmul.mubr.bf16.gmra.mrb[0].mxu0 %v2094
        %v2157 = vpop.f32.mrb[0].mxu0
        %v2158 = vadd.f32 0.0, %v2157
        %v2159 = vpop.f32.mrb[0].mxu0
        %v2160 = vpop.f32.mrb[0].mxu0
        %v2161 = vadd.f32 0.0, %v2160
        %v2162 = vpop.f32.mrb[0].mxu0
        %2163 = vmatprep.mubr.bf16.mxu0 0
        %2164 = vmatmul.mubr.bf16.gmra.mrb[0].mxu0 %v2097
        %v2165 = vpop.f32.mrb[0].mxu0
        %v2166 = vadd.f32 0.0, %v2165
        %v2167 = vpop.f32.mrb[0].mxu0
        %v2168 = vpop.f32.mrb[0].mxu0
        %v2169 = vadd.f32 0.0, %v2168
        %v2170 = vpop.f32.mrb[0].mxu0
        %2171 = vmatprep.mubr.bf16.mxu0 0
        %2172 = vmatmul.mubr.bf16.gmra.mrb[0].mxu0 %v2100
        %v2173 = vpop.f32.mrb[0].mxu0
        %v2174 = vadd.f32 0.0, %v2173
        %v2175 = vpop.f32.mrb[0].mxu0
        %v2176 = vpop.f32.mrb[0].mxu0
        %v2177 = vadd.f32 0.0, %v2176
        %v2178 = vpop.f32.mrb[0].mxu0
        %2179 = vmatprep.mubr.bf16.mxu0 0
        %2180 = vmatmul.mubr.bf16.gmra.mrb[0].mxu0 %v2103
        %v2181 = vpop.f32.mrb[0].mxu0
        %v2182 = vadd.f32 0.0, %v2181
        %v2183 = vpop.f32.mrb[0].mxu0
        %v2184 = vpop.f32.mrb[0].mxu0
        %v2185 = vadd.f32 0.0, %v2184
        %v2186 = vpop.f32.mrb[0].mxu0
        %2187 = vmatprep.mubr.bf16.mxu0 0
        %2188 = vmatmul.mubr.bf16.gmra.mrb[0].mxu0 %v2106
        %v2189 = vpop.f32.mrb[0].mxu0
        %v2190 = vadd.f32 0.0, %v2189
        %v2191 = vpop.f32.mrb[0].mxu0
        %v2192 = vpop.f32.mrb[0].mxu0
        %v2193 = vpop.f32.mrb[0].mxu0
        %2194 = vdwg.mxu0
        %2200 = vrot.lane.b32.xlu0 %v2063, 64
        %v2201 = vpop.permute.xlu0 %2200
        %2202 = vrot.lane.b32.xlu0 %v2064, 64
        %v2203 = vpop.permute.xlu0 %2202
        %2204 = vrot.lane.b32.xlu0 %v2065, 64
        %v2205 = vpop.permute.xlu0 %2204
        %2206 = vrot.lane.b32.xlu0 %v2066, 64
        %v2207 = vpop.permute.xlu0 %2206
        %2208 = vrot.lane.b32.xlu0 %v2067, 64
        %v2209 = vpop.permute.xlu0 %2208
        %v2211 = vsel %vm793, %v2053, 0
        %v2214 = vsel %vm793, %v2054, 0
        %v2217 = vsel %vm793, %v2055, 0
        %v2220 = vsel %vm793, %v2056, 0
        %v2223 = vsel %vm793, %v2057, 0
        %v2226 = vsel %vm793, %v2201, 0
        %v2229 = vsel %vm793, %v2203, 0
        %v2232 = vsel %vm793, %v2205, 0
        %v2235 = vsel %vm793, %v2207, 0
        %v2238 = vsel %vm793, %v2209, 0
        %2240 = vmatprep.subr.bf16.mxu0 0
        %2241 = vmatpush1.bf16.xpose.msra.mxu0 %v2226
        %2242 = vmatprep.subr.bf16.mxu0 0
        %2243 = vmatpush1.bf16.xpose.msra.mxu0 %v2229
        %2244 = vmatprep.subr.bf16.mxu0 0
        %2245 = vmatpush1.bf16.xpose.msra.mxu0 %v2232
        %2246 = vmatprep.subr.bf16.mxu0 0
        %2247 = vmatpush1.bf16.xpose.msra.mxu0 %v2235
        %2248 = vmatprep.subr.bf16.mxu0 0
        %2249 = vmatpush1.bf16.xpose.msra.mxu0 %v2238
        %2250 = vmatprep.subr.bf16.mxu0 0
        %2251 = vmatpush1.bf16.xpose.msra.mxu0 0
        %2252 = vmatprep.subr.bf16.mxu0 0
        %2253 = vmatpush1.bf16.xpose.msra.mxu0 0
        %2254 = vmatprep.subr.bf16.mxu0 0
        %2255 = vmatpush1.bf16.xpose.msra.mxu0 0
        %2256 = vmatprep.subr.bf16.mxu0 0
        %2257 = vmatpush1.bf16.xpose.msra.mxu0 0
        %2258 = vmatprep.subr.bf16.mxu0 0
        %2259 = vmatpush1.bf16.xpose.msra.mxu0 0
        %2260 = vmatprep.subr.bf16.mxu0 0
        %2261 = vmatpush1.bf16.xpose.msra.mxu0 0
        %2262 = vmatprep.subr.bf16.mxu0 0
        %2263 = vmatpush1.bf16.xpose.msra.mxu0 0
        %2264 = vmatprep.subr.bf16.mxu0 0
        %2265 = vmatpush1.bf16.xpose.msra.mxu0 0
        %2266 = vmatprep.subr.bf16.mxu0 0
        %2267 = vmatpush1.bf16.xpose.msra.mxu0 0
        %2268 = vmatprep.subr.bf16.mxu0 0
        %2269 = vmatpush1.bf16.xpose.msra.mxu0 0
        %2270 = vmatprep.subr.bf16.mxu0 0
        %2271 = vmatpush1.bf16.xpose.msra.mxu0 0
        %2272 = vmatprep.mubr.bf16.mxu0 0
        %2273 = vmatmul.mubr.bf16.gmra.mrb[0].mxu0 %v2211
        %v2274 = vpop.f32.mrb[0].mxu0
        %v2275 = vadd.f32 0.0, %v2274
        %v2276 = vpop.f32.mrb[0].mxu0
        %v2277 = vpop.f32.mrb[0].mxu0
        %v2278 = vadd.f32 0.0, %v2277
        %v2279 = vpop.f32.mrb[0].mxu0
        %2280 = vmatprep.mubr.bf16.mxu0 0
        %2281 = vmatmul.mubr.bf16.gmra.mrb[0].mxu0 %v2214
        %v2282 = vpop.f32.mrb[0].mxu0
        %v2283 = vadd.f32 0.0, %v2282
        %v2284 = vpop.f32.mrb[0].mxu0
        %v2285 = vpop.f32.mrb[0].mxu0
        %v2286 = vadd.f32 0.0, %v2285
        %v2287 = vpop.f32.mrb[0].mxu0
        %2288 = vmatprep.mubr.bf16.mxu0 0
        %2289 = vmatmul.mubr.bf16.gmra.mrb[0].mxu0 %v2217
        %v2290 = vpop.f32.mrb[0].mxu0
        %v2291 = vadd.f32 0.0, %v2290
        %v2292 = vpop.f32.mrb[0].mxu0
        %v2293 = vpop.f32.mrb[0].mxu0
        %v2294 = vadd.f32 0.0, %v2293
        %v2295 = vpop.f32.mrb[0].mxu0
        %2296 = vmatprep.mubr.bf16.mxu0 0
        %2297 = vmatmul.mubr.bf16.gmra.mrb[0].mxu0 %v2220
        %v2298 = vpop.f32.mrb[0].mxu0
        %v2299 = vadd.f32 0.0, %v2298
        %v2300 = vpop.f32.mrb[0].mxu0
        %v2301 = vpop.f32.mrb[0].mxu0
        %v2302 = vadd.f32 0.0, %v2301
        %v2303 = vpop.f32.mrb[0].mxu0
        %2304 = vmatprep.mubr.bf16.mxu0 0
        %2305 = vmatmul.mubr.bf16.gmra.mrb[0].mxu0 %v2223
        %v2306 = vpop.f32.mrb[0].mxu0
        %v2307 = vadd.f32 0.0, %v2306
        %v2308 = vpop.f32.mrb[0].mxu0
        %v2309 = vpop.f32.mrb[0].mxu0
        %v2310 = vpop.f32.mrb[0].mxu0
        %2311 = vdwg.mxu0
        %v2312 = vmul.f32 %v2158, 0.125
        %v2313 = vmul.f32 %v2161, 0.125
        %v2314 = vmul.f32 %v2166, 0.125
        %v2315 = vmul.f32 %v2169, 0.125
        %v2316 = vmul.f32 %v2174, 0.125
        %v2317 = vmul.f32 %v2177, 0.125
        %v2318 = vmul.f32 %v2182, 0.125
        %v2319 = vmul.f32 %v2185, 0.125
        %v2320 = vmul.f32 %v2190, 0.125
        %v2321 = vmul.f32 %v2275, 0.125
        %v2322 = vmul.f32 %v2278, 0.125
        %v2323 = vmul.f32 %v2283, 0.125
        %v2324 = vmul.f32 %v2286, 0.125
        %v2325 = vmul.f32 %v2291, 0.125
        %v2326 = vmul.f32 %v2294, 0.125
        %v2327 = vmul.f32 %v2299, 0.125
        %v2328 = vmul.f32 %v2302, 0.125
        %v2329 = vmul.f32 %v2307, 0.125
        %v2330 = vadd.f32 %v2312, %v2023
        %v2331 = vadd.f32 %v2313, %v2023
        %v2332 = vadd.f32 %v2314, %v2023
        %v2333 = vadd.f32 %v2315, %v2023
        %v2334 = vadd.f32 %v2316, %v2023
        %v2335 = vadd.f32 %v2317, %v2023
        %v2336 = vadd.f32 %v2318, %v2023
        %v2337 = vadd.f32 %v2319, %v2023
        %v2338 = vadd.f32 %v2320, %v2023
        %v2339 = vadd.f32 %v2321, %v2023
        %v2340 = vadd.f32 %v2322, %v2023
        %v2341 = vadd.f32 %v2323, %v2023
        %v2342 = vadd.f32 %v2324, %v2023
        %v2343 = vadd.f32 %v2325, %v2023
        %v2344 = vadd.f32 %v2326, %v2023
        %v2345 = vadd.f32 %v2327, %v2023
        %v2346 = vadd.f32 %v2328, %v2023
        %v2347 = vadd.f32 %v2329, %v2023
        %vm2348 = vcmask 588800
        %v2349 = vsel %vm2348, %v2330, -inf
        %2350 = vmax.xlane.f32.xlu0 %v2349
        %v2351 = vpop.xlane.xlu0 %2350
        %v2352 = vsel %vm2348, %v2331, -inf
        %2353 = vmax.xlane.f32.xlu0 %v2352
        %v2354 = vpop.xlane.xlu0 %2353
        %v2355 = vsel %vm2348, %v2332, -inf
        %2356 = vmax.xlane.f32.xlu0 %v2355
        %v2357 = vpop.xlane.xlu0 %2356
        %v2358 = vsel %vm2348, %v2333, -inf
        %2359 = vmax.xlane.f32.xlu0 %v2358
        %v2360 = vpop.xlane.xlu0 %2359
        %v2361 = vsel %vm2348, %v2334, -inf
        %2362 = vmax.xlane.f32.xlu0 %v2361
        %v2363 = vpop.xlane.xlu0 %2362
        %v2364 = vsel %vm2348, %v2335, -inf
        %2365 = vmax.xlane.f32.xlu0 %v2364
        %v2366 = vpop.xlane.xlu0 %2365
        %v2367 = vsel %vm2348, %v2336, -inf
        %2368 = vmax.xlane.f32.xlu0 %v2367
        %v2369 = vpop.xlane.xlu0 %2368
        %v2370 = vsel %vm2348, %v2337, -inf
        %2371 = vmax.xlane.f32.xlu0 %v2370
        %v2372 = vpop.xlane.xlu0 %2371
        %v2373 = vsel %vm2348, %v2338, -inf
        %2374 = vmax.xlane.f32.xlu0 %v2373
        %v2375 = vpop.xlane.xlu0 %2374
        %v2376 = vsel %vm2348, %v2339, -inf
        %2377 = vmax.xlane.f32.xlu0 %v2376
        %v2378 = vpop.xlane.xlu0 %2377
        %v2379 = vsel %vm2348, %v2340, -inf
        %2380 = vmax.xlane.f32.xlu0 %v2379
        %v2381 = vpop.xlane.xlu0 %2380
        %v2382 = vsel %vm2348, %v2341, -inf
        %2383 = vmax.xlane.f32.xlu0 %v2382
        %v2384 = vpop.xlane.xlu0 %2383
        %v2385 = vsel %vm2348, %v2342, -inf
        %2386 = vmax.xlane.f32.xlu0 %v2385
        %v2387 = vpop.xlane.xlu0 %2386
        %v2388 = vsel %vm2348, %v2343, -inf
        %2389 = vmax.xlane.f32.xlu0 %v2388
        %v2390 = vpop.xlane.xlu0 %2389
        %v2391 = vsel %vm2348, %v2344, -inf
        %2392 = vmax.xlane.f32.xlu0 %v2391
        %v2393 = vpop.xlane.xlu0 %2392
        %v2394 = vsel %vm2348, %v2345, -inf
        %2395 = vmax.xlane.f32.xlu0 %v2394
        %v2396 = vpop.xlane.xlu0 %2395
        %v2397 = vsel %vm2348, %v2346, -inf
        %2398 = vmax.xlane.f32.xlu0 %v2397
        %v2399 = vpop.xlane.xlu0 %2398
        %v2400 = vsel %vm2348, %v2347, -inf
        %2401 = vmax.xlane.f32.xlu0 %v2400
        %v2402 = vpop.xlane.xlu0 %2401
        %v2403 = vsub.f32 %v2330, %v2351
        %v2404 = vsub.f32 %v2331, %v2354
        %v2405 = vsub.f32 %v2332, %v2357
        %v2406 = vsub.f32 %v2333, %v2360
        %v2407 = vsub.f32 %v2334, %v2363
        %v2408 = vsub.f32 %v2335, %v2366
        %v2409 = vsub.f32 %v2336, %v2369
        %v2410 = vsub.f32 %v2337, %v2372
        %v2411 = vsub.f32 %v2338, %v2375
        %v2412 = vsub.f32 %v2339, %v2378
        %v2413 = vsub.f32 %v2340, %v2381
        %v2414 = vsub.f32 %v2341, %v2384
        %v2415 = vsub.f32 %v2342, %v2387
        %v2416 = vsub.f32 %v2343, %v2390
        %v2417 = vsub.f32 %v2344, %v2393
        %v2418 = vsub.f32 %v2345, %v2396
        %v2419 = vsub.f32 %v2346, %v2399
        %v2420 = vsub.f32 %v2347, %v2402
        %v2421 = vmul.f32 %v2403, 1.442695
        %v2422 = vpow.pop %v2421
        %v2423 = vmul.f32 %v2404, 1.442695
        %v2424 = vpow.pop %v2423
        %v2425 = vmul.f32 %v2405, 1.442695
        %v2426 = vpow.pop %v2425
        %v2427 = vmul.f32 %v2406, 1.442695
        %v2428 = vpow.pop %v2427
        %v2429 = vmul.f32 %v2407, 1.442695
        %v2430 = vpow.pop %v2429
        %v2431 = vmul.f32 %v2408, 1.442695
        %v2432 = vpow.pop %v2431
        %v2433 = vmul.f32 %v2409, 1.442695
        %v2434 = vpow.pop %v2433
        %v2435 = vmul.f32 %v2410, 1.442695
        %v2436 = vpow.pop %v2435
        %v2437 = vmul.f32 %v2411, 1.442695
        %v2438 = vpow.pop %v2437
        %v2439 = vmul.f32 %v2412, 1.442695
        %v2440 = vpow.pop %v2439
        %v2441 = vmul.f32 %v2413, 1.442695
        %v2442 = vpow.pop %v2441
        %v2443 = vmul.f32 %v2414, 1.442695
        %v2444 = vpow.pop %v2443
        %v2445 = vmul.f32 %v2415, 1.442695
        %v2446 = vpow.pop %v2445
        %v2447 = vmul.f32 %v2416, 1.442695
        %v2448 = vpow.pop %v2447
        %v2449 = vmul.f32 %v2417, 1.442695
        %v2450 = vpow.pop %v2449
        %v2451 = vmul.f32 %v2418, 1.442695
        %v2452 = vpow.pop %v2451
        %v2453 = vmul.f32 %v2419, 1.442695
        %v2454 = vpow.pop %v2453
        %v2455 = vmul.f32 %v2420, 1.442695
        %v2456 = vpow.pop %v2455
        %v2457 = vsel %vm2348, %v2422, 0.0
        %2458 = vadd.xlane.f32.xlu0 %v2457
        %v2459 = vpop.xlane.xlu0 %2458
        %v2460 = vsel %vm2348, %v2424, 0.0
        %2461 = vadd.xlane.f32.xlu0 %v2460
        %v2462 = vpop.xlane.xlu0 %2461
        %v2463 = vsel %vm2348, %v2426, 0.0
        %2464 = vadd.xlane.f32.xlu0 %v2463
        %v2465 = vpop.xlane.xlu0 %2464
        %v2466 = vsel %vm2348, %v2428, 0.0
        %2467 = vadd.xlane.f32.xlu0 %v2466
        %v2468 = vpop.xlane.xlu0 %2467
        %v2469 = vsel %vm2348, %v2430, 0.0
        %2470 = vadd.xlane.f32.xlu0 %v2469
        %v2471 = vpop.xlane.xlu0 %2470
        %v2472 = vsel %vm2348, %v2432, 0.0
        %2473 = vadd.xlane.f32.xlu0 %v2472
        %v2474 = vpop.xlane.xlu0 %2473
        %v2475 = vsel %vm2348, %v2434, 0.0
        %2476 = vadd.xlane.f32.xlu0 %v2475
        %v2477 = vpop.xlane.xlu0 %2476
        %v2478 = vsel %vm2348, %v2436, 0.0
        %2479 = vadd.xlane.f32.xlu0 %v2478
        %v2480 = vpop.xlane.xlu0 %2479
        %v2481 = vsel %vm2348, %v2438, 0.0
        %2482 = vadd.xlane.f32.xlu0 %v2481
        %v2483 = vpop.xlane.xlu0 %2482
        %v2484 = vsel %vm2348, %v2440, 0.0
        %2485 = vadd.xlane.f32.xlu0 %v2484
        %v2486 = vpop.xlane.xlu0 %2485
        %v2487 = vsel %vm2348, %v2442, 0.0
        %2488 = vadd.xlane.f32.xlu0 %v2487
        %v2489 = vpop.xlane.xlu0 %2488
        %v2490 = vsel %vm2348, %v2444, 0.0
        %2491 = vadd.xlane.f32.xlu0 %v2490
        %v2492 = vpop.xlane.xlu0 %2491
        %v2493 = vsel %vm2348, %v2446, 0.0
        %2494 = vadd.xlane.f32.xlu0 %v2493
        %v2495 = vpop.xlane.xlu0 %2494
        %v2496 = vsel %vm2348, %v2448, 0.0
        %2497 = vadd.xlane.f32.xlu0 %v2496
        %v2498 = vpop.xlane.xlu0 %2497
        %v2499 = vsel %vm2348, %v2450, 0.0
        %2500 = vadd.xlane.f32.xlu0 %v2499
        %v2501 = vpop.xlane.xlu0 %2500
        %v2502 = vsel %vm2348, %v2452, 0.0
        %2503 = vadd.xlane.f32.xlu0 %v2502
        %v2504 = vpop.xlane.xlu0 %2503
        %v2505 = vsel %vm2348, %v2454, 0.0
        %2506 = vadd.xlane.f32.xlu0 %v2505
        %v2507 = vpop.xlane.xlu0 %2506
        %v2508 = vsel %vm2348, %v2456, 0.0
        %2509 = vadd.xlane.f32.xlu0 %v2508
        %v2510 = vpop.xlane.xlu0 %2509
        %v2511 = vrcp.pop %v2459
        %v2512 = vmul.f32 %v2422, %v2511
        %v2513 = vrcp.pop %v2462
        %v2514 = vmul.f32 %v2424, %v2513
        %v2515 = vrcp.pop %v2465
        %v2516 = vmul.f32 %v2426, %v2515
        %v2517 = vrcp.pop %v2468
        %v2518 = vmul.f32 %v2428, %v2517
        %v2519 = vrcp.pop %v2471
        %v2520 = vmul.f32 %v2430, %v2519
        %v2521 = vrcp.pop %v2474
        %v2522 = vmul.f32 %v2432, %v2521
        %v2523 = vrcp.pop %v2477
        %v2524 = vmul.f32 %v2434, %v2523
        %v2525 = vrcp.pop %v2480
        %v2526 = vmul.f32 %v2436, %v2525
        %v2527 = vrcp.pop %v2483
        %v2528 = vmul.f32 %v2438, %v2527
        %v2529 = vrcp.pop %v2486
        %v2530 = vmul.f32 %v2440, %v2529
        %v2531 = vrcp.pop %v2489
        %v2532 = vmul.f32 %v2442, %v2531
        %v2533 = vrcp.pop %v2492
        %v2534 = vmul.f32 %v2444, %v2533
        %v2535 = vrcp.pop %v2495
        %v2536 = vmul.f32 %v2446, %v2535
        %v2537 = vrcp.pop %v2498
        %v2538 = vmul.f32 %v2448, %v2537
        %v2539 = vrcp.pop %v2501
        %v2540 = vmul.f32 %v2450, %v2539
        %v2541 = vrcp.pop %v2504
        %v2542 = vmul.f32 %v2452, %v2541
        %v2543 = vrcp.pop %v2507
        %v2544 = vmul.f32 %v2454, %v2543
        %v2545 = vrcp.pop %v2510
        %v2546 = vmul.f32 %v2456, %v2545
        %v2547 = vpack.c.bf16 %v2514, %v2512
        %v2548 = vpack.c.bf16 %v2518, %v2516
        %v2549 = vpack.c.bf16 %v2522, %v2520
        %v2550 = vpack.c.bf16 %v2526, %v2524
        %v2551 = vpack.c.bf16 %v2528, %v2528
        %v2552 = vpack.c.bf16 %v2532, %v2530
        %v2553 = vpack.c.bf16 %v2536, %v2534
        %v2554 = vpack.c.bf16 %v2540, %v2538
        %v2555 = vpack.c.bf16 %v2544, %v2542
        %v2556 = vpack.c.bf16 %v2546, %v2546
        %v2558 = vsel %vm2348, %v2547, 0
        %v2561 = vsel %vm2348, %v2548, 0
        %v2564 = vsel %vm2348, %v2549, 0
        %v2567 = vsel %vm2348, %v2550, 0
        %v2570 = vsel %vm2348, %v2551, 0
        %vm2572 = vcmask 1043456
        %v2574 = vsel %vm2572, %v2072, 0
        %2576 = vmatprep.subr.bf16.mxu0 0
        %2577 = vmatpush1.bf16.msra.mxu0 %v2068
        %2578 = vmatprep.subr.bf16.mxu0 0
        %2579 = vmatpush1.bf16.msra.mxu0 %v2069
        %2580 = vmatprep.subr.bf16.mxu0 0
        %2581 = vmatpush1.bf16.msra.mxu0 %v2070
        %2582 = vmatprep.subr.bf16.mxu0 0
        %2583 = vmatpush1.bf16.msra.mxu0 %v2071
        %2584 = vmatprep.subr.bf16.mxu0 0
        %2585 = vmatpush1.bf16.msra.mxu0 %v2574
        %2586 = vmatprep.subr.bf16.mxu0 0
        %2587 = vmatpush1.bf16.msra.mxu0 0
        %2588 = vmatprep.subr.bf16.mxu0 0
        %2589 = vmatpush1.bf16.msra.mxu0 0
        %2590 = vmatprep.subr.bf16.mxu0 0
        %2591 = vmatpush1.bf16.msra.mxu0 0
        %2592 = vmatprep.subr.bf16.mxu0 0
        %2593 = vmatpush1.bf16.msra.mxu0 0
        %2594 = vmatprep.subr.bf16.mxu0 0
        %2595 = vmatpush1.bf16.msra.mxu0 0
        %2596 = vmatprep.subr.bf16.mxu0 0
        %2597 = vmatpush1.bf16.msra.mxu0 0
        %2598 = vmatprep.subr.bf16.mxu0 0
        %2599 = vmatpush1.bf16.msra.mxu0 0
        %2600 = vmatprep.subr.bf16.mxu0 0
        %2601 = vmatpush1.bf16.msra.mxu0 0
        %2602 = vmatprep.subr.bf16.mxu0 0
        %2603 = vmatpush1.bf16.msra.mxu0 0
        %2604 = vmatprep.subr.bf16.mxu0 0
        %2605 = vmatpush1.bf16.msra.mxu0 0
        %2606 = vmatprep.subr.bf16.mxu0 0
        %2607 = vmatpush1.bf16.msra.mxu0 0
        %2608 = vmatprep.mubr.bf16.mxu0 0
        %2609 = vmatmul.mubr.bf16.gmra.mrb[0].mxu0 %v2558
        %v2610 = vpop.f32.mrb[0].mxu0
        %v2611 = vadd.f32 0.0, %v2610
        %v2612 = vpop.f32.mrb[0].mxu0
        %v2613 = vpop.f32.mrb[0].mxu0
        %v2614 = vadd.f32 0.0, %v2613
        %v2615 = vpop.f32.mrb[0].mxu0
        %2616 = vmatprep.mubr.bf16.mxu0 0
        %2617 = vmatmul.mubr.bf16.gmra.mrb[0].mxu0 %v2561
        %v2618 = vpop.f32.mrb[0].mxu0
        %v2619 = vadd.f32 0.0, %v2618
        %v2620 = vpop.f32.mrb[0].mxu0
        %v2621 = vpop.f32.mrb[0].mxu0
        %v2622 = vadd.f32 0.0, %v2621
        %v2623 = vpop.f32.mrb[0].mxu0
        %2624 = vmatprep.mubr.bf16.mxu0 0
        %2625 = vmatmul.mubr.bf16.gmra.mrb[0].mxu0 %v2564
        %v2626 = vpop.f32.mrb[0].mxu0
        %v2627 = vadd.f32 0.0, %v2626
        %v2628 = vpop.f32.mrb[0].mxu0
        %v2629 = vpop.f32.mrb[0].mxu0
        %v2630 = vadd.f32 0.0, %v2629
        %v2631 = vpop.f32.mrb[0].mxu0
        %2632 = vmatprep.mubr.bf16.mxu0 0
        %2633 = vmatmul.mubr.bf16.gmra.mrb[0].mxu0 %v2567
        %v2634 = vpop.f32.mrb[0].mxu0
        %v2635 = vadd.f32 0.0, %v2634
        %v2636 = vpop.f32.mrb[0].mxu0
        %v2637 = vpop.f32.mrb[0].mxu0
        %v2638 = vadd.f32 0.0, %v2637
        %v2639 = vpop.f32.mrb[0].mxu0
        %2640 = vmatprep.mubr.bf16.mxu0 0
        %2641 = vmatmul.mubr.bf16.gmra.mrb[0].mxu0 %v2570
        %v2642 = vpop.f32.mrb[0].mxu0
        %v2643 = vadd.f32 0.0, %v2642
        %v2644 = vpop.f32.mrb[0].mxu0
        %v2645 = vpop.f32.mrb[0].mxu0
        %v2646 = vpop.f32.mrb[0].mxu0
        %2647 = vdwg.mxu0
        %v2649 = vsel %vm2348, %v2552, 0
        %v2652 = vsel %vm2348, %v2553, 0
        %v2655 = vsel %vm2348, %v2554, 0
        %v2658 = vsel %vm2348, %v2555, 0
        %v2661 = vsel %vm2348, %v2556, 0
        %v2664 = vsel %vm2572, %v2077, 0
        %2666 = vmatprep.subr.bf16.mxu0 0
        %2667 = vmatpush1.bf16.msra.mxu0 %v2073
        %2668 = vmatprep.subr.bf16.mxu0 0
        %2669 = vmatpush1.bf16.msra.mxu0 %v2074
        %2670 = vmatprep.subr.bf16.mxu0 0
        %2671 = vmatpush1.bf16.msra.mxu0 %v2075
        %2672 = vmatprep.subr.bf16.mxu0 0
        %2673 = vmatpush1.bf16.msra.mxu0 %v2076
        %2674 = vmatprep.subr.bf16.mxu0 0
        %2675 = vmatpush1.bf16.msra.mxu0 %v2664
        %2676 = vmatprep.subr.bf16.mxu0 0
        %2677 = vmatpush1.bf16.msra.mxu0 0
        %2678 = vmatprep.subr.bf16.mxu0 0
        %2679 = vmatpush1.bf16.msra.mxu0 0
        %2680 = vmatprep.subr.bf16.mxu0 0
        %2681 = vmatpush1.bf16.msra.mxu0 0
        %2682 = vmatprep.subr.bf16.mxu0 0
        %2683 = vmatpush1.bf16.msra.mxu0 0
        %2684 = vmatprep.subr.bf16.mxu0 0
        %2685 = vmatpush1.bf16.msra.mxu0 0
        %2686 = vmatprep.subr.bf16.mxu0 0
        %2687 = vmatpush1.bf16.msra.mxu0 0
        %2688 = vmatprep.subr.bf16.mxu0 0
        %2689 = vmatpush1.bf16.msra.mxu0 0
        %2690 = vmatprep.subr.bf16.mxu0 0
        %2691 = vmatpush1.bf16.msra.mxu0 0
        %2692 = vmatprep.subr.bf16.mxu0 0
        %2693 = vmatpush1.bf16.msra.mxu0 0
        %2694 = vmatprep.subr.bf16.mxu0 0
        %2695 = vmatpush1.bf16.msra.mxu0 0
        %2696 = vmatprep.subr.bf16.mxu0 0
        %2697 = vmatpush1.bf16.msra.mxu0 0
        %2698 = vmatprep.mubr.bf16.mxu0 0
        %2699 = vmatmul.mubr.bf16.gmra.mrb[0].mxu0 %v2649
        %v2700 = vpop.f32.mrb[0].mxu0
        %v2701 = vadd.f32 0.0, %v2700
        %v2702 = vpop.f32.mrb[0].mxu0
        %v2703 = vpop.f32.mrb[0].mxu0
        %v2704 = vadd.f32 0.0, %v2703
        %v2705 = vpop.f32.mrb[0].mxu0
        %2706 = vmatprep.mubr.bf16.mxu0 0
        %2707 = vmatmul.mubr.bf16.gmra.mrb[0].mxu0 %v2652
        %v2708 = vpop.f32.mrb[0].mxu0
        %v2709 = vadd.f32 0.0, %v2708
        %v2710 = vpop.f32.mrb[0].mxu0
        %v2711 = vpop.f32.mrb[0].mxu0
        %v2712 = vadd.f32 0.0, %v2711
        %v2713 = vpop.f32.mrb[0].mxu0
        %2714 = vmatprep.mubr.bf16.mxu0 0
        %2715 = vmatmul.mubr.bf16.gmra.mrb[0].mxu0 %v2655
        %v2716 = vpop.f32.mrb[0].mxu0
        %v2717 = vadd.f32 0.0, %v2716
        %v2718 = vpop.f32.mrb[0].mxu0
        %v2719 = vpop.f32.mrb[0].mxu0
        %v2720 = vadd.f32 0.0, %v2719
        %v2721 = vpop.f32.mrb[0].mxu0
        %2722 = vmatprep.mubr.bf16.mxu0 0
        %2723 = vmatmul.mubr.bf16.gmra.mrb[0].mxu0 %v2658
        %v2724 = vpop.f32.mrb[0].mxu0
        %v2725 = vadd.f32 0.0, %v2724
        %v2726 = vpop.f32.mrb[0].mxu0
        %v2727 = vpop.f32.mrb[0].mxu0
        %v2728 = vadd.f32 0.0, %v2727
        %v2729 = vpop.f32.mrb[0].mxu0
        %2730 = vmatprep.mubr.bf16.mxu0 0
        %2731 = vmatmul.mubr.bf16.gmra.mrb[0].mxu0 %v2661
        %v2732 = vpop.f32.mrb[0].mxu0
        %v2733 = vadd.f32 0.0, %v2732
        %v2734 = vpop.f32.mrb[0].mxu0
        %v2735 = vpop.f32.mrb[0].mxu0
        %v2736 = vpop.f32.mrb[0].mxu0
        %2737 = vdwg.mxu0
        %v2738 = vpack.c.bf16 %v2614, %v2611
        %v2739 = vpack.c.bf16 %v2622, %v2619
        %v2740 = vpack.c.bf16 %v2630, %v2627
        %v2741 = vpack.c.bf16 %v2638, %v2635
        %v2742 = vpack.c.bf16 %v2701, %v2643
        %v2743 = vpack.c.bf16 %v2709, %v2704
        %v2744 = vpack.c.bf16 %v2717, %v2712
        %v2745 = vpack.c.bf16 %v2725, %v2720
        %v2746 = vpack.c.bf16 %v2733, %v2728
        %v2747 = vpack.c.bf16 %v1831, %v1827
        %v2748 = vpack.c.bf16 %v1841, %v1837
        %v2749 = vpack.c.bf16 %v1851, %v1847
        %v2750 = vpack.c.bf16 %v1861, %v1857
        %v2751 = vpack.c.bf16 %v1867, %v1867
        %v2752 = vpack.c.bf16 %v1877, %v1871
        %v2753 = vpack.c.bf16 %v1887, %v1881
        %v2754 = vpack.c.bf16 %v1897, %v1891
        %v2755 = vpack.c.bf16 %v1907, %v1901
        %v2756 = vpack.c.bf16 %v1911, %v1911
        %2762 = vrot.lane.b32.xlu0 %v2048, 64
        %v2763 = vpop.permute.xlu0 %2762
        %2764 = vrot.lane.b32.xlu0 %v2049, 64
        %v2765 = vpop.permute.xlu0 %2764
        %2766 = vrot.lane.b32.xlu0 %v2050, 64
        %v2767 = vpop.permute.xlu0 %2766
        %2768 = vrot.lane.b32.xlu0 %v2051, 64
        %v2769 = vpop.permute.xlu0 %2768
        %2770 = vrot.lane.b32.xlu0 %v2052, 64
        %v2771 = vpop.permute.xlu0 %2770
        %v2773 = vsel %vm793, %v2763, 0
        %v2776 = vsel %vm793, %v2765, 0
        %v2779 = vsel %vm793, %v2767, 0
        %v2782 = vsel %vm793, %v2769, 0
        %v2785 = vsel %vm793, %v2771, 0
        %v2788 = vsel %vm793, %v2747, 0
        %v2791 = vsel %vm793, %v2748, 0
        %v2794 = vsel %vm793, %v2749, 0
        %v2797 = vsel %vm793, %v2750, 0
        %v2800 = vsel %vm793, %v2751, 0
        %2802 = vmatprep.subr.bf16.mxu0 0
        %2803 = vmatpush1.bf16.xpose.msra.mxu0 %v2788
        %2804 = vmatprep.subr.bf16.mxu0 0
        %2805 = vmatpush1.bf16.xpose.msra.mxu0 %v2791
        %2806 = vmatprep.subr.bf16.mxu0 0
        %2807 = vmatpush1.bf16.xpose.msra.mxu0 %v2794
        %2808 = vmatprep.subr.bf16.mxu0 0
        %2809 = vmatpush1.bf16.xpose.msra.mxu0 %v2797
        %2810 = vmatprep.subr.bf16.mxu0 0
        %2811 = vmatpush1.bf16.xpose.msra.mxu0 %v2800
        %2812 = vmatprep.subr.bf16.mxu0 0
        %2813 = vmatpush1.bf16.xpose.msra.mxu0 0
        %2814 = vmatprep.subr.bf16.mxu0 0
        %2815 = vmatpush1.bf16.xpose.msra.mxu0 0
        %2816 = vmatprep.subr.bf16.mxu0 0
        %2817 = vmatpush1.bf16.xpose.msra.mxu0 0
        %2818 = vmatprep.subr.bf16.mxu0 0
        %2819 = vmatpush1.bf16.xpose.msra.mxu0 0
        %2820 = vmatprep.subr.bf16.mxu0 0
        %2821 = vmatpush1.bf16.xpose.msra.mxu0 0
        %2822 = vmatprep.subr.bf16.mxu0 0
        %2823 = vmatpush1.bf16.xpose.msra.mxu0 0
        %2824 = vmatprep.subr.bf16.mxu0 0
        %2825 = vmatpush1.bf16.xpose.msra.mxu0 0
        %2826 = vmatprep.subr.bf16.mxu0 0
        %2827 = vmatpush1.bf16.xpose.msra.mxu0 0
        %2828 = vmatprep.subr.bf16.mxu0 0
        %2829 = vmatpush1.bf16.xpose.msra.mxu0 0
        %2830 = vmatprep.subr.bf16.mxu0 0
        %2831 = vmatpush1.bf16.xpose.msra.mxu0 0
        %2832 = vmatprep.subr.bf16.mxu0 0
        %2833 = vmatpush1.bf16.xpose.msra.mxu0 0
        %2834 = vmatprep.mubr.bf16.mxu0 0
        %2835 = vmatmul.mubr.bf16.gmra.mrb[0].mxu0 %v2773
        %v2836 = vpop.f32.mrb[0].mxu0
        %v2837 = vadd.f32 0.0, %v2836
        %v2838 = vpop.f32.mrb[0].mxu0
        %v2839 = vpop.f32.mrb[0].mxu0
        %v2840 = vadd.f32 0.0, %v2839
        %v2841 = vpop.f32.mrb[0].mxu0
        %2842 = vmatprep.mubr.bf16.mxu0 0
        %2843 = vmatmul.mubr.bf16.gmra.mrb[0].mxu0 %v2776
        %v2844 = vpop.f32.mrb[0].mxu0
        %v2845 = vadd.f32 0.0, %v2844
        %v2846 = vpop.f32.mrb[0].mxu0
        %v2847 = vpop.f32.mrb[0].mxu0
        %v2848 = vadd.f32 0.0, %v2847
        %v2849 = vpop.f32.mrb[0].mxu0
        %2850 = vmatprep.mubr.bf16.mxu0 0
        %2851 = vmatmul.mubr.bf16.gmra.mrb[0].mxu0 %v2779
        %v2852 = vpop.f32.mrb[0].mxu0
        %v2853 = vadd.f32 0.0, %v2852
        %v2854 = vpop.f32.mrb[0].mxu0
        %v2855 = vpop.f32.mrb[0].mxu0
        %v2856 = vadd.f32 0.0, %v2855
        %v2857 = vpop.f32.mrb[0].mxu0
        %2858 = vmatprep.mubr.bf16.mxu0 0
        %2859 = vmatmul.mubr.bf16.gmra.mrb[0].mxu0 %v2782
        %v2860 = vpop.f32.mrb[0].mxu0
        %v2861 = vadd.f32 0.0, %v2860
        %v2862 = vpop.f32.mrb[0].mxu0
        %v2863 = vpop.f32.mrb[0].mxu0
        %v2864 = vadd.f32 0.0, %v2863
        %v2865 = vpop.f32.mrb[0].mxu0
        %2866 = vmatprep.mubr.bf16.mxu0 0
        %2867 = vmatmul.mubr.bf16.gmra.mrb[0].mxu0 %v2785
        %v2868 = vpop.f32.mrb[0].mxu0
        %v2869 = vadd.f32 0.0, %v2868
        %v2870 = vpop.f32.mrb[0].mxu0
        %v2871 = vpop.f32.mrb[0].mxu0
        %v2872 = vpop.f32.mrb[0].mxu0
        %2873 = vdwg.mxu0
        %2879 = vrot.lane.b32.xlu0 %v2053, 64
        %v2880 = vpop.permute.xlu0 %2879
        %2881 = vrot.lane.b32.xlu0 %v2054, 64
        %v2882 = vpop.permute.xlu0 %2881
        %2883 = vrot.lane.b32.xlu0 %v2055, 64
        %v2884 = vpop.permute.xlu0 %2883
        %2885 = vrot.lane.b32.xlu0 %v2056, 64
        %v2886 = vpop.permute.xlu0 %2885
        %2887 = vrot.lane.b32.xlu0 %v2057, 64
        %v2888 = vpop.permute.xlu0 %2887
        %v2890 = vsel %vm793, %v2880, 0
        %v2893 = vsel %vm793, %v2882, 0
        %v2896 = vsel %vm793, %v2884, 0
        %v2899 = vsel %vm793, %v2886, 0
        %v2902 = vsel %vm793, %v2888, 0
        %v2905 = vsel %vm793, %v2752, 0
        %v2908 = vsel %vm793, %v2753, 0
        %v2911 = vsel %vm793, %v2754, 0
        %v2914 = vsel %vm793, %v2755, 0
        %v2917 = vsel %vm793, %v2756, 0
        %2919 = vmatprep.subr.bf16.mxu0 0
        %2920 = vmatpush1.bf16.xpose.msra.mxu0 %v2905
        %2921 = vmatprep.subr.bf16.mxu0 0
        %2922 = vmatpush1.bf16.xpose.msra.mxu0 %v2908
        %2923 = vmatprep.subr.bf16.mxu0 0
        %2924 = vmatpush1.bf16.xpose.msra.mxu0 %v2911
        %2925 = vmatprep.subr.bf16.mxu0 0
        %2926 = vmatpush1.bf16.xpose.msra.mxu0 %v2914
        %2927 = vmatprep.subr.bf16.mxu0 0
        %2928 = vmatpush1.bf16.xpose.msra.mxu0 %v2917
        %2929 = vmatprep.subr.bf16.mxu0 0
        %2930 = vmatpush1.bf16.xpose.msra.mxu0 0
        %2931 = vmatprep.subr.bf16.mxu0 0
        %2932 = vmatpush1.bf16.xpose.msra.mxu0 0
        %2933 = vmatprep.subr.bf16.mxu0 0
        %2934 = vmatpush1.bf16.xpose.msra.mxu0 0
        %2935 = vmatprep.subr.bf16.mxu0 0
        %2936 = vmatpush1.bf16.xpose.msra.mxu0 0
        %2937 = vmatprep.subr.bf16.mxu0 0
        %2938 = vmatpush1.bf16.xpose.msra.mxu0 0
        %2939 = vmatprep.subr.bf16.mxu0 0
        %2940 = vmatpush1.bf16.xpose.msra.mxu0 0
        %2941 = vmatprep.subr.bf16.mxu0 0
        %2942 = vmatpush1.bf16.xpose.msra.mxu0 0
        %2943 = vmatprep.subr.bf16.mxu0 0
        %2944 = vmatpush1.bf16.xpose.msra.mxu0 0
        %2945 = vmatprep.subr.bf16.mxu0 0
        %2946 = vmatpush1.bf16.xpose.msra.mxu0 0
        %2947 = vmatprep.subr.bf16.mxu0 0
        %2948 = vmatpush1.bf16.xpose.msra.mxu0 0
        %2949 = vmatprep.subr.bf16.mxu0 0
        %2950 = vmatpush1.bf16.xpose.msra.mxu0 0
        %2951 = vmatprep.mubr.bf16.mxu0 0
        %2952 = vmatmul.mubr.bf16.gmra.mrb[0].mxu0 %v2890
        %v2953 = vpop.f32.mrb[0].mxu0
        %v2954 = vadd.f32 0.0, %v2953
        %v2955 = vpop.f32.mrb[0].mxu0
        %v2956 = vpop.f32.mrb[0].mxu0
        %v2957 = vadd.f32 0.0, %v2956
        %v2958 = vpop.f32.mrb[0].mxu0
        %2959 = vmatprep.mubr.bf16.mxu0 0
        %2960 = vmatmul.mubr.bf16.gmra.mrb[0].mxu0 %v2893
        %v2961 = vpop.f32.mrb[0].mxu0
        %v2962 = vadd.f32 0.0, %v2961
        %v2963 = vpop.f32.mrb[0].mxu0
        %v2964 = vpop.f32.mrb[0].mxu0
        %v2965 = vadd.f32 0.0, %v2964
        %v2966 = vpop.f32.mrb[0].mxu0
        %2967 = vmatprep.mubr.bf16.mxu0 0
        %2968 = vmatmul.mubr.bf16.gmra.mrb[0].mxu0 %v2896
        %v2969 = vpop.f32.mrb[0].mxu0
        %v2970 = vadd.f32 0.0, %v2969
        %v2971 = vpop.f32.mrb[0].mxu0
        %v2972 = vpop.f32.mrb[0].mxu0
        %v2973 = vadd.f32 0.0, %v2972
        %v2974 = vpop.f32.mrb[0].mxu0
        %2975 = vmatprep.mubr.bf16.mxu0 0
        %2976 = vmatmul.mubr.bf16.gmra.mrb[0].mxu0 %v2899
        %v2977 = vpop.f32.mrb[0].mxu0
        %v2978 = vadd.f32 0.0, %v2977
        %v2979 = vpop.f32.mrb[0].mxu0
        %v2980 = vpop.f32.mrb[0].mxu0
        %v2981 = vadd.f32 0.0, %v2980
        %v2982 = vpop.f32.mrb[0].mxu0
        %2983 = vmatprep.mubr.bf16.mxu0 0
        %2984 = vmatmul.mubr.bf16.gmra.mrb[0].mxu0 %v2902
        %v2985 = vpop.f32.mrb[0].mxu0
        %v2986 = vadd.f32 0.0, %v2985
        %v2987 = vpop.f32.mrb[0].mxu0
        %v2988 = vpop.f32.mrb[0].mxu0
        %v2989 = vpop.f32.mrb[0].mxu0
        %2990 = vdwg.mxu0
        %v2991 = vmul.f32 %v2837, 0.125
        %v2992 = vmul.f32 %v2840, 0.125
        %v2993 = vmul.f32 %v2845, 0.125
        %v2994 = vmul.f32 %v2848, 0.125
        %v2995 = vmul.f32 %v2853, 0.125
        %v2996 = vmul.f32 %v2856, 0.125
        %v2997 = vmul.f32 %v2861, 0.125
        %v2998 = vmul.f32 %v2864, 0.125
        %v2999 = vmul.f32 %v2869, 0.125
        %v3000 = vmul.f32 %v2954, 0.125
        %v3001 = vmul.f32 %v2957, 0.125
        %v3002 = vmul.f32 %v2962, 0.125
        %v3003 = vmul.f32 %v2965, 0.125
        %v3004 = vmul.f32 %v2970, 0.125
        %v3005 = vmul.f32 %v2973, 0.125
        %v3006 = vmul.f32 %v2978, 0.125
        %v3007 = vmul.f32 %v2981, 0.125
        %v3008 = vmul.f32 %v2986, 0.125
        %v3009 = vadd.f32 %v2991, %v2023
        %v3010 = vadd.f32 %v2992, %v2023
        %v3011 = vadd.f32 %v2993, %v2023
        %v3012 = vadd.f32 %v2994, %v2023
        %v3013 = vadd.f32 %v2995, %v2023
        %v3014 = vadd.f32 %v2996, %v2023
        %v3015 = vadd.f32 %v2997, %v2023
        %v3016 = vadd.f32 %v2998, %v2023
        %v3017 = vadd.f32 %v2999, %v2023
        %v3018 = vadd.f32 %v3000, %v2023
        %v3019 = vadd.f32 %v3001, %v2023
        %v3020 = vadd.f32 %v3002, %v2023
        %v3021 = vadd.f32 %v3003, %v2023
        %v3022 = vadd.f32 %v3004, %v2023
        %v3023 = vadd.f32 %v3005, %v2023
        %v3024 = vadd.f32 %v3006, %v2023
        %v3025 = vadd.f32 %v3007, %v2023
        %v3026 = vadd.f32 %v3008, %v2023
        %v3027 = vsel %vm2348, %v3009, -inf
        %3028 = vmax.xlane.f32.xlu0 %v3027
        %v3029 = vpop.xlane.xlu0 %3028
        %v3030 = vsel %vm2348, %v3010, -inf
        %3031 = vmax.xlane.f32.xlu0 %v3030
        %v3032 = vpop.xlane.xlu0 %3031
        %v3033 = vsel %vm2348, %v3011, -inf
        %3034 = vmax.xlane.f32.xlu0 %v3033
        %v3035 = vpop.xlane.xlu0 %3034
        %v3036 = vsel %vm2348, %v3012, -inf
        %3037 = vmax.xlane.f32.xlu0 %v3036
        %v3038 = vpop.xlane.xlu0 %3037
        %v3039 = vsel %vm2348, %v3013, -inf
        %3040 = vmax.xlane.f32.xlu0 %v3039
        %v3041 = vpop.xlane.xlu0 %3040
        %v3042 = vsel %vm2348, %v3014, -inf
        %3043 = vmax.xlane.f32.xlu0 %v3042
        %v3044 = vpop.xlane.xlu0 %3043
        %v3045 = vsel %vm2348, %v3015, -inf
        %3046 = vmax.xlane.f32.xlu0 %v3045
        %v3047 = vpop.xlane.xlu0 %3046
        %v3048 = vsel %vm2348, %v3016, -inf
        %3049 = vmax.xlane.f32.xlu0 %v3048
        %v3050 = vpop.xlane.xlu0 %3049
        %v3051 = vsel %vm2348, %v3017, -inf
        %3052 = vmax.xlane.f32.xlu0 %v3051
        %v3053 = vpop.xlane.xlu0 %3052
        %v3054 = vsel %vm2348, %v3018, -inf
        %3055 = vmax.xlane.f32.xlu0 %v3054
        %v3056 = vpop.xlane.xlu0 %3055
        %v3057 = vsel %vm2348, %v3019, -inf
        %3058 = vmax.xlane.f32.xlu0 %v3057
        %v3059 = vpop.xlane.xlu0 %3058
        %v3060 = vsel %vm2348, %v3020, -inf
        %3061 = vmax.xlane.f32.xlu0 %v3060
        %v3062 = vpop.xlane.xlu0 %3061
        %v3063 = vsel %vm2348, %v3021, -inf
        %3064 = vmax.xlane.f32.xlu0 %v3063
        %v3065 = vpop.xlane.xlu0 %3064
        %v3066 = vsel %vm2348, %v3022, -inf
        %3067 = vmax.xlane.f32.xlu0 %v3066
        %v3068 = vpop.xlane.xlu0 %3067
        %v3069 = vsel %vm2348, %v3023, -inf
        %3070 = vmax.xlane.f32.xlu0 %v3069
        %v3071 = vpop.xlane.xlu0 %3070
        %v3072 = vsel %vm2348, %v3024, -inf
        %3073 = vmax.xlane.f32.xlu0 %v3072
        %v3074 = vpop.xlane.xlu0 %3073
        %v3075 = vsel %vm2348, %v3025, -inf
        %3076 = vmax.xlane.f32.xlu0 %v3075
        %v3077 = vpop.xlane.xlu0 %3076
        %v3078 = vsel %vm2348, %v3026, -inf
        %3079 = vmax.xlane.f32.xlu0 %v3078
        %v3080 = vpop.xlane.xlu0 %3079
        %v3081 = vsub.f32 %v3009, %v3029
        %v3082 = vsub.f32 %v3010, %v3032
        %v3083 = vsub.f32 %v3011, %v3035
        %v3084 = vsub.f32 %v3012, %v3038
        %v3085 = vsub.f32 %v3013, %v3041
        %v3086 = vsub.f32 %v3014, %v3044
        %v3087 = vsub.f32 %v3015, %v3047
        %v3088 = vsub.f32 %v3016, %v3050
        %v3089 = vsub.f32 %v3017, %v3053
        %v3090 = vsub.f32 %v3018, %v3056
        %v3091 = vsub.f32 %v3019, %v3059
        %v3092 = vsub.f32 %v3020, %v3062
        %v3093 = vsub.f32 %v3021, %v3065
        %v3094 = vsub.f32 %v3022, %v3068
        %v3095 = vsub.f32 %v3023, %v3071
        %v3096 = vsub.f32 %v3024, %v3074
        %v3097 = vsub.f32 %v3025, %v3077
        %v3098 = vsub.f32 %v3026, %v3080
        %v3099 = vmul.f32 %v3081, 1.442695
        %v3100 = vpow.pop %v3099
        %v3101 = vmul.f32 %v3082, 1.442695
        %v3102 = vpow.pop %v3101
        %v3103 = vmul.f32 %v3083, 1.442695
        %v3104 = vpow.pop %v3103
        %v3105 = vmul.f32 %v3084, 1.442695
        %v3106 = vpow.pop %v3105
        %v3107 = vmul.f32 %v3085, 1.442695
        %v3108 = vpow.pop %v3107
        %v3109 = vmul.f32 %v3086, 1.442695
        %v3110 = vpow.pop %v3109
        %v3111 = vmul.f32 %v3087, 1.442695
        %v3112 = vpow.pop %v3111
        %v3113 = vmul.f32 %v3088, 1.442695
        %v3114 = vpow.pop %v3113
        %v3115 = vmul.f32 %v3089, 1.442695
        %v3116 = vpow.pop %v3115
        %v3117 = vmul.f32 %v3090, 1.442695
        %v3118 = vpow.pop %v3117
        %v3119 = vmul.f32 %v3091, 1.442695
        %v3120 = vpow.pop %v3119
        %v3121 = vmul.f32 %v3092, 1.442695
        %v3122 = vpow.pop %v3121
        %v3123 = vmul.f32 %v3093, 1.442695
        %v3124 = vpow.pop %v3123
        %v3125 = vmul.f32 %v3094, 1.442695
        %v3126 = vpow.pop %v3125
        %v3127 = vmul.f32 %v3095, 1.442695
        %v3128 = vpow.pop %v3127
        %v3129 = vmul.f32 %v3096, 1.442695
        %v3130 = vpow.pop %v3129
        %v3131 = vmul.f32 %v3097, 1.442695
        %v3132 = vpow.pop %v3131
        %v3133 = vmul.f32 %v3098, 1.442695
        %v3134 = vpow.pop %v3133
        %v3135 = vsel %vm2348, %v3100, 0.0
        %3136 = vadd.xlane.f32.xlu0 %v3135
        %v3137 = vpop.xlane.xlu0 %3136
        %v3138 = vsel %vm2348, %v3102, 0.0
        %3139 = vadd.xlane.f32.xlu0 %v3138
        %v3140 = vpop.xlane.xlu0 %3139
        %v3141 = vsel %vm2348, %v3104, 0.0
        %3142 = vadd.xlane.f32.xlu0 %v3141
        %v3143 = vpop.xlane.xlu0 %3142
        %v3144 = vsel %vm2348, %v3106, 0.0
        %3145 = vadd.xlane.f32.xlu0 %v3144
        %v3146 = vpop.xlane.xlu0 %3145
        %v3147 = vsel %vm2348, %v3108, 0.0
        %3148 = vadd.xlane.f32.xlu0 %v3147
        %v3149 = vpop.xlane.xlu0 %3148
        %v3150 = vsel %vm2348, %v3110, 0.0
        %3151 = vadd.xlane.f32.xlu0 %v3150
        %v3152 = vpop.xlane.xlu0 %3151
        %v3153 = vsel %vm2348, %v3112, 0.0
        %3154 = vadd.xlane.f32.xlu0 %v3153
        %v3155 = vpop.xlane.xlu0 %3154
        %v3156 = vsel %vm2348, %v3114, 0.0
        %3157 = vadd.xlane.f32.xlu0 %v3156
        %v3158 = vpop.xlane.xlu0 %3157
        %v3159 = vsel %vm2348, %v3116, 0.0
        %3160 = vadd.xlane.f32.xlu0 %v3159
        %v3161 = vpop.xlane.xlu0 %3160
        %v3162 = vsel %vm2348, %v3118, 0.0
        %3163 = vadd.xlane.f32.xlu0 %v3162
        %v3164 = vpop.xlane.xlu0 %3163
        %v3165 = vsel %vm2348, %v3120, 0.0
        %3166 = vadd.xlane.f32.xlu0 %v3165
        %v3167 = vpop.xlane.xlu0 %3166
        %v3168 = vsel %vm2348, %v3122, 0.0
        %3169 = vadd.xlane.f32.xlu0 %v3168
        %v3170 = vpop.xlane.xlu0 %3169
        %v3171 = vsel %vm2348, %v3124, 0.0
        %3172 = vadd.xlane.f32.xlu0 %v3171
        %v3173 = vpop.xlane.xlu0 %3172
        %v3174 = vsel %vm2348, %v3126, 0.0
        %3175 = vadd.xlane.f32.xlu0 %v3174
        %v3176 = vpop.xlane.xlu0 %3175
        %v3177 = vsel %vm2348, %v3128, 0.0
        %3178 = vadd.xlane.f32.xlu0 %v3177
        %v3179 = vpop.xlane.xlu0 %3178
        %v3180 = vsel %vm2348, %v3130, 0.0
        %3181 = vadd.xlane.f32.xlu0 %v3180
        %v3182 = vpop.xlane.xlu0 %3181
        %v3183 = vsel %vm2348, %v3132, 0.0
        %3184 = vadd.xlane.f32.xlu0 %v3183
        %v3185 = vpop.xlane.xlu0 %3184
        %v3186 = vsel %vm2348, %v3134, 0.0
        %3187 = vadd.xlane.f32.xlu0 %v3186
        %v3188 = vpop.xlane.xlu0 %3187
        %v3189 = vrcp.pop %v3137
        %v3190 = vmul.f32 %v3100, %v3189
        %v3191 = vrcp.pop %v3140
        %v3192 = vmul.f32 %v3102, %v3191
        %v3193 = vrcp.pop %v3143
        %v3194 = vmul.f32 %v3104, %v3193
        %v3195 = vrcp.pop %v3146
        %v3196 = vmul.f32 %v3106, %v3195
        %v3197 = vrcp.pop %v3149
        %v3198 = vmul.f32 %v3108, %v3197
        %v3199 = vrcp.pop %v3152
        %v3200 = vmul.f32 %v3110, %v3199
        %v3201 = vrcp.pop %v3155
        %v3202 = vmul.f32 %v3112, %v3201
        %v3203 = vrcp.pop %v3158
        %v3204 = vmul.f32 %v3114, %v3203
        %v3205 = vrcp.pop %v3161
        %v3206 = vmul.f32 %v3116, %v3205
        %v3207 = vrcp.pop %v3164
        %v3208 = vmul.f32 %v3118, %v3207
        %v3209 = vrcp.pop %v3167
        %v3210 = vmul.f32 %v3120, %v3209
        %v3211 = vrcp.pop %v3170
        %v3212 = vmul.f32 %v3122, %v3211
        %v3213 = vrcp.pop %v3173
        %v3214 = vmul.f32 %v3124, %v3213
        %v3215 = vrcp.pop %v3176
        %v3216 = vmul.f32 %v3126, %v3215
        %v3217 = vrcp.pop %v3179
        %v3218 = vmul.f32 %v3128, %v3217
        %v3219 = vrcp.pop %v3182
        %v3220 = vmul.f32 %v3130, %v3219
        %v3221 = vrcp.pop %v3185
        %v3222 = vmul.f32 %v3132, %v3221
        %v3223 = vrcp.pop %v3188
        %v3224 = vmul.f32 %v3134, %v3223
        %v3225 = vpack.c.bf16 %v3192, %v3190
        %v3226 = vpack.c.bf16 %v3196, %v3194
        %v3227 = vpack.c.bf16 %v3200, %v3198
        %v3228 = vpack.c.bf16 %v3204, %v3202
        %v3229 = vpack.c.bf16 %v3206, %v3206
        %v3230 = vpack.c.bf16 %v3210, %v3208
        %v3231 = vpack.c.bf16 %v3214, %v3212
        %v3232 = vpack.c.bf16 %v3218, %v3216
        %v3233 = vpack.c.bf16 %v3222, %v3220
        %v3234 = vpack.c.bf16 %v3224, %v3224
        %3240 = vrot.lane.b32.xlu0 %v2068, 64
        %v3241 = vpop.permute.xlu0 %3240
        %3242 = vrot.lane.b32.xlu0 %v2069, 64
        %v3243 = vpop.permute.xlu0 %3242
        %3244 = vrot.lane.b32.xlu0 %v2070, 64
        %v3245 = vpop.permute.xlu0 %3244
        %3246 = vrot.lane.b32.xlu0 %v2071, 64
        %v3247 = vpop.permute.xlu0 %3246
        %3248 = vrot.lane.b32.xlu0 %v2072, 64
        %v3249 = vpop.permute.xlu0 %3248
        %v3255 = vsel %vm2348, %v3225, 0
        %v3258 = vsel %vm2348, %v3226, 0
        %v3261 = vsel %vm2348, %v3227, 0
        %v3264 = vsel %vm2348, %v3228, 0
        %v3267 = vsel %vm2348, %v3229, 0
        %v3270 = vsel %vm2572, %v3249, 0
        %3272 = vmatprep.subr.bf16.mxu0 0
        %3273 = vmatpush1.bf16.msra.mxu0 %v3241
        %3274 = vmatprep.subr.bf16.mxu0 0
        %3275 = vmatpush1.bf16.msra.mxu0 %v3243
        %3276 = vmatprep.subr.bf16.mxu0 0
        %3277 = vmatpush1.bf16.msra.mxu0 %v3245
        %3278 = vmatprep.subr.bf16.mxu0 0
        %3279 = vmatpush1.bf16.msra.mxu0 %v3247
        %3280 = vmatprep.subr.bf16.mxu0 0
        %3281 = vmatpush1.bf16.msra.mxu0 %v3270
        %3282 = vmatprep.subr.bf16.mxu0 0
        %3283 = vmatpush1.bf16.msra.mxu0 0
        %3284 = vmatprep.subr.bf16.mxu0 0
        %3285 = vmatpush1.bf16.msra.mxu0 0
        %3286 = vmatprep.subr.bf16.mxu0 0
        %3287 = vmatpush1.bf16.msra.mxu0 0
        %3288 = vmatprep.subr.bf16.mxu0 0
        %3289 = vmatpush1.bf16.msra.mxu0 0
        %3290 = vmatprep.subr.bf16.mxu0 0
        %3291 = vmatpush1.bf16.msra.mxu0 0
        %3292 = vmatprep.subr.bf16.mxu0 0
        %3293 = vmatpush1.bf16.msra.mxu0 0
        %3294 = vmatprep.subr.bf16.mxu0 0
        %3295 = vmatpush1.bf16.msra.mxu0 0
        %3296 = vmatprep.subr.bf16.mxu0 0
        %3297 = vmatpush1.bf16.msra.mxu0 0
        %3298 = vmatprep.subr.bf16.mxu0 0
        %3299 = vmatpush1.bf16.msra.mxu0 0
        %3300 = vmatprep.subr.bf16.mxu0 0
        %3301 = vmatpush1.bf16.msra.mxu0 0
        %3302 = vmatprep.subr.bf16.mxu0 0
        %3303 = vmatpush1.bf16.msra.mxu0 0
        %3304 = vmatprep.mubr.bf16.mxu0 0
        %3305 = vmatmul.mubr.bf16.gmra.mrb[0].mxu0 %v3255
        %v3306 = vpop.f32.mrb[0].mxu0
        %v3307 = vadd.f32 0.0, %v3306
        %v3308 = vpop.f32.mrb[0].mxu0
        %v3309 = vpop.f32.mrb[0].mxu0
        %v3310 = vadd.f32 0.0, %v3309
        %v3311 = vpop.f32.mrb[0].mxu0
        %3312 = vmatprep.mubr.bf16.mxu0 0
        %3313 = vmatmul.mubr.bf16.gmra.mrb[0].mxu0 %v3258
        %v3314 = vpop.f32.mrb[0].mxu0
        %v3315 = vadd.f32 0.0, %v3314
        %v3316 = vpop.f32.mrb[0].mxu0
        %v3317 = vpop.f32.mrb[0].mxu0
        %v3318 = vadd.f32 0.0, %v3317
        %v3319 = vpop.f32.mrb[0].mxu0
        %3320 = vmatprep.mubr.bf16.mxu0 0
        %3321 = vmatmul.mubr.bf16.gmra.mrb[0].mxu0 %v3261
        %v3322 = vpop.f32.mrb[0].mxu0
        %v3323 = vadd.f32 0.0, %v3322
        %v3324 = vpop.f32.mrb[0].mxu0
        %v3325 = vpop.f32.mrb[0].mxu0
        %v3326 = vadd.f32 0.0, %v3325
        %v3327 = vpop.f32.mrb[0].mxu0
        %3328 = vmatprep.mubr.bf16.mxu0 0
        %3329 = vmatmul.mubr.bf16.gmra.mrb[0].mxu0 %v3264
        %v3330 = vpop.f32.mrb[0].mxu0
        %v3331 = vadd.f32 0.0, %v3330
        %v3332 = vpop.f32.mrb[0].mxu0
        %v3333 = vpop.f32.mrb[0].mxu0
        %v3334 = vadd.f32 0.0, %v3333
        %v3335 = vpop.f32.mrb[0].mxu0
        %3336 = vmatprep.mubr.bf16.mxu0 0
        %3337 = vmatmul.mubr.bf16.gmra.mrb[0].mxu0 %v3267
        %v3338 = vpop.f32.mrb[0].mxu0
        %v3339 = vadd.f32 0.0, %v3338
        %v3340 = vpop.f32.mrb[0].mxu0
        %v3341 = vpop.f32.mrb[0].mxu0
        %v3342 = vpop.f32.mrb[0].mxu0
        %3343 = vdwg.mxu0
        %3349 = vrot.lane.b32.xlu0 %v2073, 64
        %v3350 = vpop.permute.xlu0 %3349
        %3351 = vrot.lane.b32.xlu0 %v2074, 64
        %v3352 = vpop.permute.xlu0 %3351
        %3353 = vrot.lane.b32.xlu0 %v2075, 64
        %v3354 = vpop.permute.xlu0 %3353
        %3355 = vrot.lane.b32.xlu0 %v2076, 64
        %v3356 = vpop.permute.xlu0 %3355
        %3357 = vrot.lane.b32.xlu0 %v2077, 64
        %v3358 = vpop.permute.xlu0 %3357
        %v3364 = vsel %vm2348, %v3230, 0
        %v3367 = vsel %vm2348, %v3231, 0
        %v3370 = vsel %vm2348, %v3232, 0
        %v3373 = vsel %vm2348, %v3233, 0
        %v3376 = vsel %vm2348, %v3234, 0
        %v3379 = vsel %vm2572, %v3358, 0
        %3381 = vmatprep.subr.bf16.mxu0 0
        %3382 = vmatpush1.bf16.msra.mxu0 %v3350
        %3383 = vmatprep.subr.bf16.mxu0 0
        %3384 = vmatpush1.bf16.msra.mxu0 %v3352
        %3385 = vmatprep.subr.bf16.mxu0 0
        %3386 = vmatpush1.bf16.msra.mxu0 %v3354
        %3387 = vmatprep.subr.bf16.mxu0 0
        %3388 = vmatpush1.bf16.msra.mxu0 %v3356
        %3389 = vmatprep.subr.bf16.mxu0 0
        %3390 = vmatpush1.bf16.msra.mxu0 %v3379
        %3391 = vmatprep.subr.bf16.mxu0 0
        %3392 = vmatpush1.bf16.msra.mxu0 0
        %3393 = vmatprep.subr.bf16.mxu0 0
        %3394 = vmatpush1.bf16.msra.mxu0 0
        %3395 = vmatprep.subr.bf16.mxu0 0
        %3396 = vmatpush1.bf16.msra.mxu0 0
        %3397 = vmatprep.subr.bf16.mxu0 0
        %3398 = vmatpush1.bf16.msra.mxu0 0
        %3399 = vmatprep.subr.bf16.mxu0 0
        %3400 = vmatpush1.bf16.msra.mxu0 0
        %3401 = vmatprep.subr.bf16.mxu0 0
        %3402 = vmatpush1.bf16.msra.mxu0 0
        %3403 = vmatprep.subr.bf16.mxu0 0
        %3404 = vmatpush1.bf16.msra.mxu0 0
        %3405 = vmatprep.subr.bf16.mxu0 0
        %3406 = vmatpush1.bf16.msra.mxu0 0
        %3407 = vmatprep.subr.bf16.mxu0 0
        %3408 = vmatpush1.bf16.msra.mxu0 0
        %3409 = vmatprep.subr.bf16.mxu0 0
        %3410 = vmatpush1.bf16.msra.mxu0 0
        %3411 = vmatprep.subr.bf16.mxu0 0
        %3412 = vmatpush1.bf16.msra.mxu0 0
        %3413 = vmatprep.mubr.bf16.mxu0 0
        %3414 = vmatmul.mubr.bf16.gmra.mrb[0].mxu0 %v3364
        %v3415 = vpop.f32.mrb[0].mxu0
        %v3416 = vadd.f32 0.0, %v3415
        %v3417 = vpop.f32.mrb[0].mxu0
        %v3418 = vpop.f32.mrb[0].mxu0
        %v3419 = vadd.f32 0.0, %v3418
        %v3420 = vpop.f32.mrb[0].mxu0
        %3421 = vmatprep.mubr.bf16.mxu0 0
        %3422 = vmatmul.mubr.bf16.gmra.mrb[0].mxu0 %v3367
        %v3423 = vpop.f32.mrb[0].mxu0
        %v3424 = vadd.f32 0.0, %v3423
        %v3425 = vpop.f32.mrb[0].mxu0
        %v3426 = vpop.f32.mrb[0].mxu0
        %v3427 = vadd.f32 0.0, %v3426
        %v3428 = vpop.f32.mrb[0].mxu0
        %3429 = vmatprep.mubr.bf16.mxu0 0
        %3430 = vmatmul.mubr.bf16.gmra.mrb[0].mxu0 %v3370
        %v3431 = vpop.f32.mrb[0].mxu0
        %v3432 = vadd.f32 0.0, %v3431
        %v3433 = vpop.f32.mrb[0].mxu0
        %v3434 = vpop.f32.mrb[0].mxu0
        %v3435 = vadd.f32 0.0, %v3434
        %v3436 = vpop.f32.mrb[0].mxu0
        %3437 = vmatprep.mubr.bf16.mxu0 0
        %3438 = vmatmul.mubr.bf16.gmra.mrb[0].mxu0 %v3373
        %v3439 = vpop.f32.mrb[0].mxu0
        %v3440 = vadd.f32 0.0, %v3439
        %v3441 = vpop.f32.mrb[0].mxu0
        %v3442 = vpop.f32.mrb[0].mxu0
        %v3443 = vadd.f32 0.0, %v3442
        %v3444 = vpop.f32.mrb[0].mxu0
        %3445 = vmatprep.mubr.bf16.mxu0 0
        %3446 = vmatmul.mubr.bf16.gmra.mrb[0].mxu0 %v3376
        %v3447 = vpop.f32.mrb[0].mxu0
        %v3448 = vadd.f32 0.0, %v3447
        %v3449 = vpop.f32.mrb[0].mxu0
        %v3450 = vpop.f32.mrb[0].mxu0
        %v3451 = vpop.f32.mrb[0].mxu0
        %3452 = vdwg.mxu0
        %v3453 = vpack.c.bf16 %v3310, %v3307
        %v3454 = vpack.c.bf16 %v3318, %v3315
        %v3455 = vpack.c.bf16 %v3326, %v3323
        %v3456 = vpack.c.bf16 %v3334, %v3331
        %v3457 = vpack.c.bf16 %v3416, %v3339
        %v3458 = vpack.c.bf16 %v3424, %v3419
        %v3459 = vpack.c.bf16 %v3432, %v3427
        %v3460 = vpack.c.bf16 %v3440, %v3435
        %v3461 = vpack.c.bf16 %v3448, %v3443
        %v3470 = vunpack.c.l.b16 %v2032
        %v3471 = vunpack.c.h.b16 %v2032
        %v3472 = vunpack.c.l.b16 %v2033
        %v3473 = vunpack.c.h.b16 %v2033
        %v3474 = vunpack.c.l.b16 %v2034
        %v3475 = vunpack.c.h.b16 %v2034
        %v3476 = vunpack.c.l.b16 %v2035
        %v3477 = vunpack.c.h.b16 %v2035
        %v3478 = vunpack.c.l.b16 %v2036
        %v3479 = vunpack.c.h.b16 %v2036
        %v3480 = vunpack.c.l.b16 %v2037
        %v3481 = vunpack.c.h.b16 %v2037
        %v3482 = vunpack.c.l.b16 %v2038
        %v3483 = vunpack.c.h.b16 %v2038
        %v3484 = vunpack.c.l.b16 %v2039
        %v3485 = vunpack.c.h.b16 %v2039
        %v3486 = vpack.c.b16 %v3472, %v3470
        %v3487 = vpack.c.b16 %v3473, %v3471
        %v3488 = vpack.c.b16 %v3476, %v3474
        %v3489 = vpack.c.b16 %v3477, %v3475
        %v3490 = vpack.c.b16 %v3480, %v3478
        %v3491 = vpack.c.b16 %v3481, %v3479
        %v3492 = vpack.c.b16 %v3484, %v3482
        %v3493 = vpack.c.b16 %v3485, %v3483
        %v3503 = vsel %vm793, %v3453, 0
        %v3506 = vsel %vm793, %v3454, 0
        %v3509 = vsel %vm793, %v3455, 0
        %v3512 = vsel %vm793, %v3456, 0
        %v3515 = vsel %vm793, %v3457, 0
        %v3518 = vsel %vm793, %v3458, 0
        %v3521 = vsel %vm793, %v3459, 0
        %v3524 = vsel %vm793, %v3460, 0
        %v3527 = vsel %vm793, %v3461, 0
        %3529 = vmatprep.subr.bf16.mxu0 %v3487
        %3530 = vmatpush1.bf16.msra.mxu0 %v3486
        %3531 = vmatprep.subr.bf16.mxu0 %v3489
        %3532 = vmatpush1.bf16.msra.mxu0 %v3488
        %3533 = vmatprep.subr.bf16.mxu0 %v3491
        %3534 = vmatpush1.bf16.msra.mxu0 %v3490
        %3535 = vmatprep.subr.bf16.mxu0 %v3493
        %3536 = vmatpush1.bf16.msra.mxu0 %v3492
        %3537 = vmatprep.subr.bf16.mxu0 0
        %3538 = vmatpush1.bf16.msra.mxu0 0
        %3539 = vmatprep.subr.bf16.mxu0 0
        %3540 = vmatpush1.bf16.msra.mxu0 0
        %3541 = vmatprep.subr.bf16.mxu0 0
        %3542 = vmatpush1.bf16.msra.mxu0 0
        %3543 = vmatprep.subr.bf16.mxu0 0
        %3544 = vmatpush1.bf16.msra.mxu0 0
        %3545 = vmatprep.subr.bf16.mxu0 0
        %3546 = vmatpush1.bf16.msra.mxu0 0
        %3547 = vmatprep.subr.bf16.mxu0 0
        %3548 = vmatpush1.bf16.msra.mxu0 0
        %3549 = vmatprep.subr.bf16.mxu0 0
        %3550 = vmatpush1.bf16.msra.mxu0 0
        %3551 = vmatprep.subr.bf16.mxu0 0
        %3552 = vmatpush1.bf16.msra.mxu0 0
        %3553 = vmatprep.subr.bf16.mxu0 0
        %3554 = vmatpush1.bf16.msra.mxu0 0
        %3555 = vmatprep.subr.bf16.mxu0 0
        %3556 = vmatpush1.bf16.msra.mxu0 0
        %3557 = vmatprep.subr.bf16.mxu0 0
        %3558 = vmatpush1.bf16.msra.mxu0 0
        %3559 = vmatprep.subr.bf16.mxu0 0
        %3560 = vmatpush1.bf16.msra.mxu0 0
        %3561 = vmatprep.mubr.bf16.mxu0 0
        %3562 = vmatmul.mubr.bf16.gmra.mrb[0].mxu0 %v3503
        %v3563 = vpop.f32.mrb[0].mxu0
        %v3564 = vadd.f32 0.0, %v3563
        %v3565 = vpop.f32.mrb[0].mxu0
        %v3566 = vadd.f32 0.0, %v3565
        %v3567 = vpop.f32.mrb[0].mxu0
        %v3568 = vadd.f32 0.0, %v3567
        %v3569 = vpop.f32.mrb[0].mxu0
        %v3570 = vadd.f32 0.0, %v3569
        %3571 = vmatprep.mubr.bf16.mxu0 0
        %3572 = vmatmul.mubr.bf16.gmra.mrb[0].mxu0 %v3506
        %v3573 = vpop.f32.mrb[0].mxu0
        %v3574 = vadd.f32 0.0, %v3573
        %v3575 = vpop.f32.mrb[0].mxu0
        %v3576 = vadd.f32 0.0, %v3575
        %v3577 = vpop.f32.mrb[0].mxu0
        %v3578 = vadd.f32 0.0, %v3577
        %v3579 = vpop.f32.mrb[0].mxu0
        %v3580 = vadd.f32 0.0, %v3579
        %3581 = vmatprep.mubr.bf16.mxu0 0
        %3582 = vmatmul.mubr.bf16.gmra.mrb[0].mxu0 %v3509
        %v3583 = vpop.f32.mrb[0].mxu0
        %v3584 = vadd.f32 0.0, %v3583
        %v3585 = vpop.f32.mrb[0].mxu0
        %v3586 = vadd.f32 0.0, %v3585
        %v3587 = vpop.f32.mrb[0].mxu0
        %v3588 = vadd.f32 0.0, %v3587
        %v3589 = vpop.f32.mrb[0].mxu0
        %v3590 = vadd.f32 0.0, %v3589
        %3591 = vmatprep.mubr.bf16.mxu0 0
        %3592 = vmatmul.mubr.bf16.gmra.mrb[0].mxu0 %v3512
        %v3593 = vpop.f32.mrb[0].mxu0
        %v3594 = vadd.f32 0.0, %v3593
        %v3595 = vpop.f32.mrb[0].mxu0
        %v3596 = vadd.f32 0.0, %v3595
        %v3597 = vpop.f32.mrb[0].mxu0
        %v3598 = vadd.f32 0.0, %v3597
        %v3599 = vpop.f32.mrb[0].mxu0
        %v3600 = vadd.f32 0.0, %v3599
        %3601 = vmatprep.mubr.bf16.mxu0 0
        %3602 = vmatmul.mubr.bf16.gmra.mrb[0].mxu0 %v3515
        %v3603 = vpop.f32.mrb[0].mxu0
        %v3604 = vadd.f32 0.0, %v3603
        %v3605 = vpop.f32.mrb[0].mxu0
        %v3606 = vadd.f32 0.0, %v3605
        %v3607 = vpop.f32.mrb[0].mxu0
        %v3608 = vadd.f32 0.0, %v3607
        %v3609 = vpop.f32.mrb[0].mxu0
        %v3610 = vadd.f32 0.0, %v3609
        %3611 = vmatprep.mubr.bf16.mxu0 0
        %3612 = vmatmul.mubr.bf16.gmra.mrb[0].mxu0 %v3518
        %v3613 = vpop.f32.mrb[0].mxu0
        %v3614 = vadd.f32 0.0, %v3613
        %v3615 = vpop.f32.mrb[0].mxu0
        %v3616 = vadd.f32 0.0, %v3615
        %v3617 = vpop.f32.mrb[0].mxu0
        %v3618 = vadd.f32 0.0, %v3617
        %v3619 = vpop.f32.mrb[0].mxu0
        %v3620 = vadd.f32 0.0, %v3619
        %3621 = vmatprep.mubr.bf16.mxu0 0
        %3622 = vmatmul.mubr.bf16.gmra.mrb[0].mxu0 %v3521
        %v3623 = vpop.f32.mrb[0].mxu0
        %v3624 = vadd.f32 0.0, %v3623
        %v3625 = vpop.f32.mrb[0].mxu0
        %v3626 = vadd.f32 0.0, %v3625
        %v3627 = vpop.f32.mrb[0].mxu0
        %v3628 = vadd.f32 0.0, %v3627
        %v3629 = vpop.f32.mrb[0].mxu0
        %v3630 = vadd.f32 0.0, %v3629
        %3631 = vmatprep.mubr.bf16.mxu0 0
        %3632 = vmatmul.mubr.bf16.gmra.mrb[0].mxu0 %v3524
        %v3633 = vpop.f32.mrb[0].mxu0
        %v3634 = vadd.f32 0.0, %v3633
        %v3635 = vpop.f32.mrb[0].mxu0
        %v3636 = vadd.f32 0.0, %v3635
        %v3637 = vpop.f32.mrb[0].mxu0
        %v3638 = vadd.f32 0.0, %v3637
        %v3639 = vpop.f32.mrb[0].mxu0
        %v3640 = vadd.f32 0.0, %v3639
        %3641 = vmatprep.mubr.bf16.mxu0 0
        %3642 = vmatmul.mubr.bf16.gmra.mrb[0].mxu0 %v3527
        %v3643 = vpop.f32.mrb[0].mxu0
        %v3644 = vadd.f32 0.0, %v3643
        %v3645 = vpop.f32.mrb[0].mxu0
        %v3646 = vadd.f32 0.0, %v3645
        %v3647 = vpop.f32.mrb[0].mxu0
        %v3648 = vadd.f32 0.0, %v3647
        %v3649 = vpop.f32.mrb[0].mxu0
        %v3650 = vadd.f32 0.0, %v3649
        %3651 = vdwg.mxu0
        %v3660 = vunpack.c.l.b16 %v2024
        %v3661 = vunpack.c.h.b16 %v2024
        %v3662 = vunpack.c.l.b16 %v2025
        %v3663 = vunpack.c.h.b16 %v2025
        %v3664 = vunpack.c.l.b16 %v2026
        %v3665 = vunpack.c.h.b16 %v2026
        %v3666 = vunpack.c.l.b16 %v2027
        %v3667 = vunpack.c.h.b16 %v2027
        %v3668 = vunpack.c.l.b16 %v2028
        %v3669 = vunpack.c.h.b16 %v2028
        %v3670 = vunpack.c.l.b16 %v2029
        %v3671 = vunpack.c.h.b16 %v2029
        %v3672 = vunpack.c.l.b16 %v2030
        %v3673 = vunpack.c.h.b16 %v2030
        %v3674 = vunpack.c.l.b16 %v2031
        %v3675 = vunpack.c.h.b16 %v2031
        %v3676 = vpack.c.b16 %v3662, %v3660
        %v3677 = vpack.c.b16 %v3663, %v3661
        %v3678 = vpack.c.b16 %v3666, %v3664
        %v3679 = vpack.c.b16 %v3667, %v3665
        %v3680 = vpack.c.b16 %v3670, %v3668
        %v3681 = vpack.c.b16 %v3671, %v3669
        %v3682 = vpack.c.b16 %v3674, %v3672
        %v3683 = vpack.c.b16 %v3675, %v3673
        %v3693 = vsel %vm793, %v2738, 0
        %v3696 = vsel %vm793, %v2739, 0
        %v3699 = vsel %vm793, %v2740, 0
        %v3702 = vsel %vm793, %v2741, 0
        %v3705 = vsel %vm793, %v2742, 0
        %v3708 = vsel %vm793, %v2743, 0
        %v3711 = vsel %vm793, %v2744, 0
        %v3714 = vsel %vm793, %v2745, 0
        %v3717 = vsel %vm793, %v2746, 0
        %3719 = vmatprep.subr.bf16.mxu0 %v3677
        %3720 = vmatpush1.bf16.msra.mxu0 %v3676
        %3721 = vmatprep.subr.bf16.mxu0 %v3679
        %3722 = vmatpush1.bf16.msra.mxu0 %v3678
        %3723 = vmatprep.subr.bf16.mxu0 %v3681
        %3724 = vmatpush1.bf16.msra.mxu0 %v3680
        %3725 = vmatprep.subr.bf16.mxu0 %v3683
        %3726 = vmatpush1.bf16.msra.mxu0 %v3682
        %3727 = vmatprep.subr.bf16.mxu0 0
        %3728 = vmatpush1.bf16.msra.mxu0 0
        %3729 = vmatprep.subr.bf16.mxu0 0
        %3730 = vmatpush1.bf16.msra.mxu0 0
        %3731 = vmatprep.subr.bf16.mxu0 0
        %3732 = vmatpush1.bf16.msra.mxu0 0
        %3733 = vmatprep.subr.bf16.mxu0 0
        %3734 = vmatpush1.bf16.msra.mxu0 0
        %3735 = vmatprep.subr.bf16.mxu0 0
        %3736 = vmatpush1.bf16.msra.mxu0 0
        %3737 = vmatprep.subr.bf16.mxu0 0
        %3738 = vmatpush1.bf16.msra.mxu0 0
        %3739 = vmatprep.subr.bf16.mxu0 0
        %3740 = vmatpush1.bf16.msra.mxu0 0
        %3741 = vmatprep.subr.bf16.mxu0 0
        %3742 = vmatpush1.bf16.msra.mxu0 0
        %3743 = vmatprep.subr.bf16.mxu0 0
        %3744 = vmatpush1.bf16.msra.mxu0 0
        %3745 = vmatprep.subr.bf16.mxu0 0
        %3746 = vmatpush1.bf16.msra.mxu0 0
        %3747 = vmatprep.subr.bf16.mxu0 0
        %3748 = vmatpush1.bf16.msra.mxu0 0
        %3749 = vmatprep.subr.bf16.mxu0 0
        %3750 = vmatpush1.bf16.msra.mxu0 0
        %3751 = vmatprep.mubr.bf16.mxu0 0
        %3752 = vmatmul.mubr.bf16.gmra.mrb[0].mxu0 %v3693
        %v3753 = vpop.f32.mrb[0].mxu0
        %v3754 = vadd.f32 %v3564, %v3753
        %v3755 = vpop.f32.mrb[0].mxu0
        %v3756 = vadd.f32 %v3566, %v3755
        %v3757 = vpop.f32.mrb[0].mxu0
        %v3758 = vadd.f32 %v3568, %v3757
        %v3759 = vpop.f32.mrb[0].mxu0
        %v3760 = vadd.f32 %v3570, %v3759
        %3761 = vmatprep.mubr.bf16.mxu0 0
        %3762 = vmatmul.mubr.bf16.gmra.mrb[0].mxu0 %v3696
        %v3763 = vpop.f32.mrb[0].mxu0
        %v3764 = vadd.f32 %v3574, %v3763
        %v3765 = vpop.f32.mrb[0].mxu0
        %v3766 = vadd.f32 %v3576, %v3765
        %v3767 = vpop.f32.mrb[0].mxu0
        %v3768 = vadd.f32 %v3578, %v3767
        %v3769 = vpop.f32.mrb[0].mxu0
        %v3770 = vadd.f32 %v3580, %v3769
        %3771 = vmatprep.mubr.bf16.mxu0 0
        %3772 = vmatmul.mubr.bf16.gmra.mrb[0].mxu0 %v3699
        %v3773 = vpop.f32.mrb[0].mxu0
        %v3774 = vadd.f32 %v3584, %v3773
        %v3775 = vpop.f32.mrb[0].mxu0
        %v3776 = vadd.f32 %v3586, %v3775
        %v3777 = vpop.f32.mrb[0].mxu0
        %v3778 = vadd.f32 %v3588, %v3777
        %v3779 = vpop.f32.mrb[0].mxu0
        %v3780 = vadd.f32 %v3590, %v3779
        %3781 = vmatprep.mubr.bf16.mxu0 0
        %3782 = vmatmul.mubr.bf16.gmra.mrb[0].mxu0 %v3702
        %v3783 = vpop.f32.mrb[0].mxu0
        %v3784 = vadd.f32 %v3594, %v3783
        %v3785 = vpop.f32.mrb[0].mxu0
        %v3786 = vadd.f32 %v3596, %v3785
        %v3787 = vpop.f32.mrb[0].mxu0
        %v3788 = vadd.f32 %v3598, %v3787
        %v3789 = vpop.f32.mrb[0].mxu0
        %v3790 = vadd.f32 %v3600, %v3789
        %3791 = vmatprep.mubr.bf16.mxu0 0
        %3792 = vmatmul.mubr.bf16.gmra.mrb[0].mxu0 %v3705
        %v3793 = vpop.f32.mrb[0].mxu0
        %v3794 = vadd.f32 %v3604, %v3793
        %v3795 = vpop.f32.mrb[0].mxu0
        %v3796 = vadd.f32 %v3606, %v3795
        %v3797 = vpop.f32.mrb[0].mxu0
        %v3798 = vadd.f32 %v3608, %v3797
        %v3799 = vpop.f32.mrb[0].mxu0
        %v3800 = vadd.f32 %v3610, %v3799
        %3801 = vmatprep.mubr.bf16.mxu0 0
        %3802 = vmatmul.mubr.bf16.gmra.mrb[0].mxu0 %v3708
        %v3803 = vpop.f32.mrb[0].mxu0
        %v3804 = vadd.f32 %v3614, %v3803
        %v3805 = vpop.f32.mrb[0].mxu0
        %v3806 = vadd.f32 %v3616, %v3805
        %v3807 = vpop.f32.mrb[0].mxu0
        %v3808 = vadd.f32 %v3618, %v3807
        %v3809 = vpop.f32.mrb[0].mxu0
        %v3810 = vadd.f32 %v3620, %v3809
        %3811 = vmatprep.mubr.bf16.mxu0 0
        %3812 = vmatmul.mubr.bf16.gmra.mrb[0].mxu0 %v3711
        %v3813 = vpop.f32.mrb[0].mxu0
        %v3814 = vadd.f32 %v3624, %v3813
        %v3815 = vpop.f32.mrb[0].mxu0
        %v3816 = vadd.f32 %v3626, %v3815
        %v3817 = vpop.f32.mrb[0].mxu0
        %v3818 = vadd.f32 %v3628, %v3817
        %v3819 = vpop.f32.mrb[0].mxu0
        %v3820 = vadd.f32 %v3630, %v3819
        %3821 = vmatprep.mubr.bf16.mxu0 0
        %3822 = vmatmul.mubr.bf16.gmra.mrb[0].mxu0 %v3714
        %v3823 = vpop.f32.mrb[0].mxu0
        %v3824 = vadd.f32 %v3634, %v3823
        %v3825 = vpop.f32.mrb[0].mxu0
        %v3826 = vadd.f32 %v3636, %v3825
        %v3827 = vpop.f32.mrb[0].mxu0
        %v3828 = vadd.f32 %v3638, %v3827
        %v3829 = vpop.f32.mrb[0].mxu0
        %v3830 = vadd.f32 %v3640, %v3829
        %3831 = vmatprep.mubr.bf16.mxu0 0
        %3832 = vmatmul.mubr.bf16.gmra.mrb[0].mxu0 %v3717
        %v3833 = vpop.f32.mrb[0].mxu0
        %v3834 = vadd.f32 %v3644, %v3833
        %v3835 = vpop.f32.mrb[0].mxu0
        %v3836 = vadd.f32 %v3646, %v3835
        %v3837 = vpop.f32.mrb[0].mxu0
        %v3838 = vadd.f32 %v3648, %v3837
        %v3839 = vpop.f32.mrb[0].mxu0
        %v3840 = vadd.f32 %v3650, %v3839
        %3841 = vdwg.mxu0
        %v3842 = vpack.c.bf16 %v1953, %v1950
        %v3843 = vpack.c.bf16 %v1961, %v1958
        %v3844 = vpack.c.bf16 %v1969, %v1966
        %v3845 = vpack.c.bf16 %v1977, %v1974
        %v3846 = vpack.c.bf16 %v1982, %v1982
        %v3847 = vpack.c.bf16 %v1990, %v1985
        %v3848 = vpack.c.bf16 %v1998, %v1993
        %v3849 = vpack.c.bf16 %v2006, %v2001
        %v3850 = vpack.c.bf16 %v2014, %v2009
        %v3851 = vpack.c.bf16 %v2017, %v2017
        %3857 = vrot.lane.b32.xlu0 %v2747, 64
        %v3858 = vpop.permute.xlu0 %3857
        %3859 = vrot.lane.b32.xlu0 %v2748, 64
        %v3860 = vpop.permute.xlu0 %3859
        %3861 = vrot.lane.b32.xlu0 %v2749, 64
        %v3862 = vpop.permute.xlu0 %3861
        %3863 = vrot.lane.b32.xlu0 %v2750, 64
        %v3864 = vpop.permute.xlu0 %3863
        %3865 = vrot.lane.b32.xlu0 %v2751, 64
        %v3866 = vpop.permute.xlu0 %3865
        %v3868 = vsel %vm793, %v2058, 0
        %v3871 = vsel %vm793, %v2059, 0
        %v3874 = vsel %vm793, %v2060, 0
        %v3877 = vsel %vm793, %v2061, 0
        %v3880 = vsel %vm793, %v2062, 0
        %v3883 = vsel %vm793, %v3858, 0
        %v3886 = vsel %vm793, %v3860, 0
        %v3889 = vsel %vm793, %v3862, 0
        %v3892 = vsel %vm793, %v3864, 0
        %v3895 = vsel %vm793, %v3866, 0
        %3897 = vmatprep.subr.bf16.mxu0 0
        %3898 = vmatpush1.bf16.xpose.msra.mxu0 %v3883
        %3899 = vmatprep.subr.bf16.mxu0 0
        %3900 = vmatpush1.bf16.xpose.msra.mxu0 %v3886
        %3901 = vmatprep.subr.bf16.mxu0 0
        %3902 = vmatpush1.bf16.xpose.msra.mxu0 %v3889
        %3903 = vmatprep.subr.bf16.mxu0 0
        %3904 = vmatpush1.bf16.xpose.msra.mxu0 %v3892
        %3905 = vmatprep.subr.bf16.mxu0 0
        %3906 = vmatpush1.bf16.xpose.msra.mxu0 %v3895
        %3907 = vmatprep.subr.bf16.mxu0 0
        %3908 = vmatpush1.bf16.xpose.msra.mxu0 0
        %3909 = vmatprep.subr.bf16.mxu0 0
        %3910 = vmatpush1.bf16.xpose.msra.mxu0 0
        %3911 = vmatprep.subr.bf16.mxu0 0
        %3912 = vmatpush1.bf16.xpose.msra.mxu0 0
        %3913 = vmatprep.subr.bf16.mxu0 0
        %3914 = vmatpush1.bf16.xpose.msra.mxu0 0
        %3915 = vmatprep.subr.bf16.mxu0 0
        %3916 = vmatpush1.bf16.xpose.msra.mxu0 0
        %3917 = vmatprep.subr.bf16.mxu0 0
        %3918 = vmatpush1.bf16.xpose.msra.mxu0 0
        %3919 = vmatprep.subr.bf16.mxu0 0
        %3920 = vmatpush1.bf16.xpose.msra.mxu0 0
        %3921 = vmatprep.subr.bf16.mxu0 0
        %3922 = vmatpush1.bf16.xpose.msra.mxu0 0
        %3923 = vmatprep.subr.bf16.mxu0 0
        %3924 = vmatpush1.bf16.xpose.msra.mxu0 0
        %3925 = vmatprep.subr.bf16.mxu0 0
        %3926 = vmatpush1.bf16.xpose.msra.mxu0 0
        %3927 = vmatprep.subr.bf16.mxu0 0
        %3928 = vmatpush1.bf16.xpose.msra.mxu0 0
        %3929 = vmatprep.mubr.bf16.mxu0 0
        %3930 = vmatmul.mubr.bf16.gmra.mrb[0].mxu0 %v3868
        %v3931 = vpop.f32.mrb[0].mxu0
        %v3932 = vadd.f32 0.0, %v3931
        %v3933 = vpop.f32.mrb[0].mxu0
        %v3934 = vpop.f32.mrb[0].mxu0
        %v3935 = vadd.f32 0.0, %v3934
        %v3936 = vpop.f32.mrb[0].mxu0
        %3937 = vmatprep.mubr.bf16.mxu0 0
        %3938 = vmatmul.mubr.bf16.gmra.mrb[0].mxu0 %v3871
        %v3939 = vpop.f32.mrb[0].mxu0
        %v3940 = vadd.f32 0.0, %v3939
        %v3941 = vpop.f32.mrb[0].mxu0
        %v3942 = vpop.f32.mrb[0].mxu0
        %v3943 = vadd.f32 0.0, %v3942
        %v3944 = vpop.f32.mrb[0].mxu0
        %3945 = vmatprep.mubr.bf16.mxu0 0
        %3946 = vmatmul.mubr.bf16.gmra.mrb[0].mxu0 %v3874
        %v3947 = vpop.f32.mrb[0].mxu0
        %v3948 = vadd.f32 0.0, %v3947
        %v3949 = vpop.f32.mrb[0].mxu0
        %v3950 = vpop.f32.mrb[0].mxu0
        %v3951 = vadd.f32 0.0, %v3950
        %v3952 = vpop.f32.mrb[0].mxu0
        %3953 = vmatprep.mubr.bf16.mxu0 0
        %3954 = vmatmul.mubr.bf16.gmra.mrb[0].mxu0 %v3877
        %v3955 = vpop.f32.mrb[0].mxu0
        %v3956 = vadd.f32 0.0, %v3955
        %v3957 = vpop.f32.mrb[0].mxu0
        %v3958 = vpop.f32.mrb[0].mxu0
        %v3959 = vadd.f32 0.0, %v3958
        %v3960 = vpop.f32.mrb[0].mxu0
        %3961 = vmatprep.mubr.bf16.mxu0 0
        %3962 = vmatmul.mubr.bf16.gmra.mrb[0].mxu0 %v3880
        %v3963 = vpop.f32.mrb[0].mxu0
        %v3964 = vadd.f32 0.0, %v3963
        %v3965 = vpop.f32.mrb[0].mxu0
        %v3966 = vpop.f32.mrb[0].mxu0
        %v3967 = vpop.f32.mrb[0].mxu0
        %3968 = vdwg.mxu0
        %3974 = vrot.lane.b32.xlu0 %v2752, 64
        %v3975 = vpop.permute.xlu0 %3974
        %3976 = vrot.lane.b32.xlu0 %v2753, 64
        %v3977 = vpop.permute.xlu0 %3976
        %3978 = vrot.lane.b32.xlu0 %v2754, 64
        %v3979 = vpop.permute.xlu0 %3978
        %3980 = vrot.lane.b32.xlu0 %v2755, 64
        %v3981 = vpop.permute.xlu0 %3980
        %3982 = vrot.lane.b32.xlu0 %v2756, 64
        %v3983 = vpop.permute.xlu0 %3982
        %v3985 = vsel %vm793, %v2063, 0
        %v3988 = vsel %vm793, %v2064, 0
        %v3991 = vsel %vm793, %v2065, 0
        %v3994 = vsel %vm793, %v2066, 0
        %v3997 = vsel %vm793, %v2067, 0
        %v4000 = vsel %vm793, %v3975, 0
        %v4003 = vsel %vm793, %v3977, 0
        %v4006 = vsel %vm793, %v3979, 0
        %v4009 = vsel %vm793, %v3981, 0
        %v4012 = vsel %vm793, %v3983, 0
        %4014 = vmatprep.subr.bf16.mxu0 0
        %4015 = vmatpush1.bf16.xpose.msra.mxu0 %v4000
        %4016 = vmatprep.subr.bf16.mxu0 0
        %4017 = vmatpush1.bf16.xpose.msra.mxu0 %v4003
        %4018 = vmatprep.subr.bf16.mxu0 0
        %4019 = vmatpush1.bf16.xpose.msra.mxu0 %v4006
        %4020 = vmatprep.subr.bf16.mxu0 0
        %4021 = vmatpush1.bf16.xpose.msra.mxu0 %v4009
        %4022 = vmatprep.subr.bf16.mxu0 0
        %4023 = vmatpush1.bf16.xpose.msra.mxu0 %v4012
        %4024 = vmatprep.subr.bf16.mxu0 0
        %4025 = vmatpush1.bf16.xpose.msra.mxu0 0
        %4026 = vmatprep.subr.bf16.mxu0 0
        %4027 = vmatpush1.bf16.xpose.msra.mxu0 0
        %4028 = vmatprep.subr.bf16.mxu0 0
        %4029 = vmatpush1.bf16.xpose.msra.mxu0 0
        %4030 = vmatprep.subr.bf16.mxu0 0
        %4031 = vmatpush1.bf16.xpose.msra.mxu0 0
        %4032 = vmatprep.subr.bf16.mxu0 0
        %4033 = vmatpush1.bf16.xpose.msra.mxu0 0
        %4034 = vmatprep.subr.bf16.mxu0 0
        %4035 = vmatpush1.bf16.xpose.msra.mxu0 0
        %4036 = vmatprep.subr.bf16.mxu0 0
        %4037 = vmatpush1.bf16.xpose.msra.mxu0 0
        %4038 = vmatprep.subr.bf16.mxu0 0
        %4039 = vmatpush1.bf16.xpose.msra.mxu0 0
        %4040 = vmatprep.subr.bf16.mxu0 0
        %4041 = vmatpush1.bf16.xpose.msra.mxu0 0
        %4042 = vmatprep.subr.bf16.mxu0 0
        %4043 = vmatpush1.bf16.xpose.msra.mxu0 0
        %4044 = vmatprep.subr.bf16.mxu0 0
        %4045 = vmatpush1.bf16.xpose.msra.mxu0 0
        %4046 = vmatprep.mubr.bf16.mxu0 0
        %4047 = vmatmul.mubr.bf16.gmra.mrb[0].mxu0 %v3985
        %v4048 = vpop.f32.mrb[0].mxu0
        %v4049 = vadd.f32 0.0, %v4048
        %v4050 = vpop.f32.mrb[0].mxu0
        %v4051 = vpop.f32.mrb[0].mxu0
        %v4052 = vadd.f32 0.0, %v4051
        %v4053 = vpop.f32.mrb[0].mxu0
        %4054 = vmatprep.mubr.bf16.mxu0 0
        %4055 = vmatmul.mubr.bf16.gmra.mrb[0].mxu0 %v3988
        %v4056 = vpop.f32.mrb[0].mxu0
        %v4057 = vadd.f32 0.0, %v4056
        %v4058 = vpop.f32.mrb[0].mxu0
        %v4059 = vpop.f32.mrb[0].mxu0
        %v4060 = vadd.f32 0.0, %v4059
        %v4061 = vpop.f32.mrb[0].mxu0
        %4062 = vmatprep.mubr.bf16.mxu0 0
        %4063 = vmatmul.mubr.bf16.gmra.mrb[0].mxu0 %v3991
        %v4064 = vpop.f32.mrb[0].mxu0
        %v4065 = vadd.f32 0.0, %v4064
        %v4066 = vpop.f32.mrb[0].mxu0
        %v4067 = vpop.f32.mrb[0].mxu0
        %v4068 = vadd.f32 0.0, %v4067
        %v4069 = vpop.f32.mrb[0].mxu0
        %4070 = vmatprep.mubr.bf16.mxu0 0
        %4071 = vmatmul.mubr.bf16.gmra.mrb[0].mxu0 %v3994
        %v4072 = vpop.f32.mrb[0].mxu0
        %v4073 = vadd.f32 0.0, %v4072
        %v4074 = vpop.f32.mrb[0].mxu0
        %v4075 = vpop.f32.mrb[0].mxu0
        %v4076 = vadd.f32 0.0, %v4075
        %v4077 = vpop.f32.mrb[0].mxu0
        %4078 = vmatprep.mubr.bf16.mxu0 0
        %4079 = vmatmul.mubr.bf16.gmra.mrb[0].mxu0 %v3997
        %v4080 = vpop.f32.mrb[0].mxu0
        %v4081 = vadd.f32 0.0, %v4080
        %v4082 = vpop.f32.mrb[0].mxu0
        %v4083 = vpop.f32.mrb[0].mxu0
        %v4084 = vpop.f32.mrb[0].mxu0
        %4085 = vdwg.mxu0
        %v4086 = vmul.f32 %v3932, 0.125
        %v4087 = vmul.f32 %v3935, 0.125
        %v4088 = vmul.f32 %v3940, 0.125
        %v4089 = vmul.f32 %v3943, 0.125
        %v4090 = vmul.f32 %v3948, 0.125
        %v4091 = vmul.f32 %v3951, 0.125
        %v4092 = vmul.f32 %v3956, 0.125
        %v4093 = vmul.f32 %v3959, 0.125
        %v4094 = vmul.f32 %v3964, 0.125
        %v4095 = vmul.f32 %v4049, 0.125
        %v4096 = vmul.f32 %v4052, 0.125
        %v4097 = vmul.f32 %v4057, 0.125
        %v4098 = vmul.f32 %v4060, 0.125
        %v4099 = vmul.f32 %v4065, 0.125
        %v4100 = vmul.f32 %v4068, 0.125
        %v4101 = vmul.f32 %v4073, 0.125
        %v4102 = vmul.f32 %v4076, 0.125
        %v4103 = vmul.f32 %v4081, 0.125
        %v4104 = vadd.f32 %v4086, %v2023
        %v4105 = vadd.f32 %v4087, %v2023
        %v4106 = vadd.f32 %v4088, %v2023
        %v4107 = vadd.f32 %v4089, %v2023
        %v4108 = vadd.f32 %v4090, %v2023
        %v4109 = vadd.f32 %v4091, %v2023
        %v4110 = vadd.f32 %v4092, %v2023
        %v4111 = vadd.f32 %v4093, %v2023
        %v4112 = vadd.f32 %v4094, %v2023
        %v4113 = vadd.f32 %v4095, %v2023
        %v4114 = vadd.f32 %v4096, %v2023
        %v4115 = vadd.f32 %v4097, %v2023
        %v4116 = vadd.f32 %v4098, %v2023
        %v4117 = vadd.f32 %v4099, %v2023
        %v4118 = vadd.f32 %v4100, %v2023
        %v4119 = vadd.f32 %v4101, %v2023
        %v4120 = vadd.f32 %v4102, %v2023
        %v4121 = vadd.f32 %v4103, %v2023
        %v4122 = vsel %vm2348, %v4104, -inf
        %4123 = vmax.xlane.f32.xlu0 %v4122
        %v4124 = vpop.xlane.xlu0 %4123
        %v4125 = vsel %vm2348, %v4105, -inf
        %4126 = vmax.xlane.f32.xlu0 %v4125
        %v4127 = vpop.xlane.xlu0 %4126
        %v4128 = vsel %vm2348, %v4106, -inf
        %4129 = vmax.xlane.f32.xlu0 %v4128
        %v4130 = vpop.xlane.xlu0 %4129
        %v4131 = vsel %vm2348, %v4107, -inf
        %4132 = vmax.xlane.f32.xlu0 %v4131
        %v4133 = vpop.xlane.xlu0 %4132
        %v4134 = vsel %vm2348, %v4108, -inf
        %4135 = vmax.xlane.f32.xlu0 %v4134
        %v4136 = vpop.xlane.xlu0 %4135
        %v4137 = vsel %vm2348, %v4109, -inf
        %4138 = vmax.xlane.f32.xlu0 %v4137
        %v4139 = vpop.xlane.xlu0 %4138
        %v4140 = vsel %vm2348, %v4110, -inf
        %4141 = vmax.xlane.f32.xlu0 %v4140
        %v4142 = vpop.xlane.xlu0 %4141
        %v4143 = vsel %vm2348, %v4111, -inf
        %4144 = vmax.xlane.f32.xlu0 %v4143
        %v4145 = vpop.xlane.xlu0 %4144
        %v4146 = vsel %vm2348, %v4112, -inf
        %4147 = vmax.xlane.f32.xlu0 %v4146
        %v4148 = vpop.xlane.xlu0 %4147
        %v4149 = vsel %vm2348, %v4113, -inf
        %4150 = vmax.xlane.f32.xlu0 %v4149
        %v4151 = vpop.xlane.xlu0 %4150
        %v4152 = vsel %vm2348, %v4114, -inf
        %4153 = vmax.xlane.f32.xlu0 %v4152
        %v4154 = vpop.xlane.xlu0 %4153
        %v4155 = vsel %vm2348, %v4115, -inf
        %4156 = vmax.xlane.f32.xlu0 %v4155
        %v4157 = vpop.xlane.xlu0 %4156
        %v4158 = vsel %vm2348, %v4116, -inf
        %4159 = vmax.xlane.f32.xlu0 %v4158
        %v4160 = vpop.xlane.xlu0 %4159
        %v4161 = vsel %vm2348, %v4117, -inf
        %4162 = vmax.xlane.f32.xlu0 %v4161
        %v4163 = vpop.xlane.xlu0 %4162
        %v4164 = vsel %vm2348, %v4118, -inf
        %4165 = vmax.xlane.f32.xlu0 %v4164
        %v4166 = vpop.xlane.xlu0 %4165
        %v4167 = vsel %vm2348, %v4119, -inf
        %4168 = vmax.xlane.f32.xlu0 %v4167
        %v4169 = vpop.xlane.xlu0 %4168
        %v4170 = vsel %vm2348, %v4120, -inf
        %4171 = vmax.xlane.f32.xlu0 %v4170
        %v4172 = vpop.xlane.xlu0 %4171
        %v4173 = vsel %vm2348, %v4121, -inf
        %4174 = vmax.xlane.f32.xlu0 %v4173
        %v4175 = vpop.xlane.xlu0 %4174
        %v4176 = vsub.f32 %v4104, %v4124
        %v4177 = vsub.f32 %v4105, %v4127
        %v4178 = vsub.f32 %v4106, %v4130
        %v4179 = vsub.f32 %v4107, %v4133
        %v4180 = vsub.f32 %v4108, %v4136
        %v4181 = vsub.f32 %v4109, %v4139
        %v4182 = vsub.f32 %v4110, %v4142
        %v4183 = vsub.f32 %v4111, %v4145
        %v4184 = vsub.f32 %v4112, %v4148
        %v4185 = vsub.f32 %v4113, %v4151
        %v4186 = vsub.f32 %v4114, %v4154
        %v4187 = vsub.f32 %v4115, %v4157
        %v4188 = vsub.f32 %v4116, %v4160
        %v4189 = vsub.f32 %v4117, %v4163
        %v4190 = vsub.f32 %v4118, %v4166
        %v4191 = vsub.f32 %v4119, %v4169
        %v4192 = vsub.f32 %v4120, %v4172
        %v4193 = vsub.f32 %v4121, %v4175
        %v4194 = vmul.f32 %v4176, 1.442695
        %v4195 = vpow.pop %v4194
        %v4196 = vmul.f32 %v4177, 1.442695
        %v4197 = vpow.pop %v4196
        %v4198 = vmul.f32 %v4178, 1.442695
        %v4199 = vpow.pop %v4198
        %v4200 = vmul.f32 %v4179, 1.442695
        %v4201 = vpow.pop %v4200
        %v4202 = vmul.f32 %v4180, 1.442695
        %v4203 = vpow.pop %v4202
        %v4204 = vmul.f32 %v4181, 1.442695
        %v4205 = vpow.pop %v4204
        %v4206 = vmul.f32 %v4182, 1.442695
        %v4207 = vpow.pop %v4206
        %v4208 = vmul.f32 %v4183, 1.442695
        %v4209 = vpow.pop %v4208
        %v4210 = vmul.f32 %v4184, 1.442695
        %v4211 = vpow.pop %v4210
        %v4212 = vmul.f32 %v4185, 1.442695
        %v4213 = vpow.pop %v4212
        %v4214 = vmul.f32 %v4186, 1.442695
        %v4215 = vpow.pop %v4214
        %v4216 = vmul.f32 %v4187, 1.442695
        %v4217 = vpow.pop %v4216
        %v4218 = vmul.f32 %v4188, 1.442695
        %v4219 = vpow.pop %v4218
        %v4220 = vmul.f32 %v4189, 1.442695
        %v4221 = vpow.pop %v4220
        %v4222 = vmul.f32 %v4190, 1.442695
        %v4223 = vpow.pop %v4222
        %v4224 = vmul.f32 %v4191, 1.442695
        %v4225 = vpow.pop %v4224
        %v4226 = vmul.f32 %v4192, 1.442695
        %v4227 = vpow.pop %v4226
        %v4228 = vmul.f32 %v4193, 1.442695
        %v4229 = vpow.pop %v4228
        %v4230 = vsel %vm2348, %v4195, 0.0
        %4231 = vadd.xlane.f32.xlu0 %v4230
        %v4232 = vpop.xlane.xlu0 %4231
        %v4233 = vsel %vm2348, %v4197, 0.0
        %4234 = vadd.xlane.f32.xlu0 %v4233
        %v4235 = vpop.xlane.xlu0 %4234
        %v4236 = vsel %vm2348, %v4199, 0.0
        %4237 = vadd.xlane.f32.xlu0 %v4236
        %v4238 = vpop.xlane.xlu0 %4237
        %v4239 = vsel %vm2348, %v4201, 0.0
        %4240 = vadd.xlane.f32.xlu0 %v4239
        %v4241 = vpop.xlane.xlu0 %4240
        %v4242 = vsel %vm2348, %v4203, 0.0
        %4243 = vadd.xlane.f32.xlu0 %v4242
        %v4244 = vpop.xlane.xlu0 %4243
        %v4245 = vsel %vm2348, %v4205, 0.0
        %4246 = vadd.xlane.f32.xlu0 %v4245
        %v4247 = vpop.xlane.xlu0 %4246
        %v4248 = vsel %vm2348, %v4207, 0.0
        %4249 = vadd.xlane.f32.xlu0 %v4248
        %v4250 = vpop.xlane.xlu0 %4249
        %v4251 = vsel %vm2348, %v4209, 0.0
        %4252 = vadd.xlane.f32.xlu0 %v4251
        %v4253 = vpop.xlane.xlu0 %4252
        %v4254 = vsel %vm2348, %v4211, 0.0
        %4255 = vadd.xlane.f32.xlu0 %v4254
        %v4256 = vpop.xlane.xlu0 %4255
        %v4257 = vsel %vm2348, %v4213, 0.0
        %4258 = vadd.xlane.f32.xlu0 %v4257
        %v4259 = vpop.xlane.xlu0 %4258
        %v4260 = vsel %vm2348, %v4215, 0.0
        %4261 = vadd.xlane.f32.xlu0 %v4260
        %v4262 = vpop.xlane.xlu0 %4261
        %v4263 = vsel %vm2348, %v4217, 0.0
        %4264 = vadd.xlane.f32.xlu0 %v4263
        %v4265 = vpop.xlane.xlu0 %4264
        %v4266 = vsel %vm2348, %v4219, 0.0
        %4267 = vadd.xlane.f32.xlu0 %v4266
        %v4268 = vpop.xlane.xlu0 %4267
        %v4269 = vsel %vm2348, %v4221, 0.0
        %4270 = vadd.xlane.f32.xlu0 %v4269
        %v4271 = vpop.xlane.xlu0 %4270
        %v4272 = vsel %vm2348, %v4223, 0.0
        %4273 = vadd.xlane.f32.xlu0 %v4272
        %v4274 = vpop.xlane.xlu0 %4273
        %v4275 = vsel %vm2348, %v4225, 0.0
        %4276 = vadd.xlane.f32.xlu0 %v4275
        %v4277 = vpop.xlane.xlu0 %4276
        %v4278 = vsel %vm2348, %v4227, 0.0
        %4279 = vadd.xlane.f32.xlu0 %v4278
        %v4280 = vpop.xlane.xlu0 %4279
        %v4281 = vsel %vm2348, %v4229, 0.0
        %4282 = vadd.xlane.f32.xlu0 %v4281
        %v4283 = vpop.xlane.xlu0 %4282
        %v4284 = vrcp.pop %v4232
        %v4285 = vmul.f32 %v4195, %v4284
        %v4286 = vrcp.pop %v4235
        %v4287 = vmul.f32 %v4197, %v4286
        %v4288 = vrcp.pop %v4238
        %v4289 = vmul.f32 %v4199, %v4288
        %v4290 = vrcp.pop %v4241
        %v4291 = vmul.f32 %v4201, %v4290
        %v4292 = vrcp.pop %v4244
        %v4293 = vmul.f32 %v4203, %v4292
        %v4294 = vrcp.pop %v4247
        %v4295 = vmul.f32 %v4205, %v4294
        %v4296 = vrcp.pop %v4250
        %v4297 = vmul.f32 %v4207, %v4296
        %v4298 = vrcp.pop %v4253
        %v4299 = vmul.f32 %v4209, %v4298
        %v4300 = vrcp.pop %v4256
        %v4301 = vmul.f32 %v4211, %v4300
        %v4302 = vrcp.pop %v4259
        %v4303 = vmul.f32 %v4213, %v4302
        %v4304 = vrcp.pop %v4262
        %v4305 = vmul.f32 %v4215, %v4304
        %v4306 = vrcp.pop %v4265
        %v4307 = vmul.f32 %v4217, %v4306
        %v4308 = vrcp.pop %v4268
        %v4309 = vmul.f32 %v4219, %v4308
        %v4310 = vrcp.pop %v4271
        %v4311 = vmul.f32 %v4221, %v4310
        %v4312 = vrcp.pop %v4274
        %v4313 = vmul.f32 %v4223, %v4312
        %v4314 = vrcp.pop %v4277
        %v4315 = vmul.f32 %v4225, %v4314
        %v4316 = vrcp.pop %v4280
        %v4317 = vmul.f32 %v4227, %v4316
        %v4318 = vrcp.pop %v4283
        %v4319 = vmul.f32 %v4229, %v4318
        %v4320 = vpack.c.bf16 %v4287, %v4285
        %v4321 = vpack.c.bf16 %v4291, %v4289
        %v4322 = vpack.c.bf16 %v4295, %v4293
        %v4323 = vpack.c.bf16 %v4299, %v4297
        %v4324 = vpack.c.bf16 %v4301, %v4301
        %v4325 = vpack.c.bf16 %v4305, %v4303
        %v4326 = vpack.c.bf16 %v4309, %v4307
        %v4327 = vpack.c.bf16 %v4313, %v4311
        %v4328 = vpack.c.bf16 %v4317, %v4315
        %v4329 = vpack.c.bf16 %v4319, %v4319
        %v4331 = vsel %vm2348, %v4320, 0
        %v4334 = vsel %vm2348, %v4321, 0
        %v4337 = vsel %vm2348, %v4322, 0
        %v4340 = vsel %vm2348, %v4323, 0
        %v4343 = vsel %vm2348, %v4324, 0
        %v4346 = vsel %vm2572, %v3846, 0
        %4348 = vmatprep.subr.bf16.mxu0 0
        %4349 = vmatpush1.bf16.msra.mxu0 %v3842
        %4350 = vmatprep.subr.bf16.mxu0 0
        %4351 = vmatpush1.bf16.msra.mxu0 %v3843
        %4352 = vmatprep.subr.bf16.mxu0 0
        %4353 = vmatpush1.bf16.msra.mxu0 %v3844
        %4354 = vmatprep.subr.bf16.mxu0 0
        %4355 = vmatpush1.bf16.msra.mxu0 %v3845
        %4356 = vmatprep.subr.bf16.mxu0 0
        %4357 = vmatpush1.bf16.msra.mxu0 %v4346
        %4358 = vmatprep.subr.bf16.mxu0 0
        %4359 = vmatpush1.bf16.msra.mxu0 0
        %4360 = vmatprep.subr.bf16.mxu0 0
        %4361 = vmatpush1.bf16.msra.mxu0 0
        %4362 = vmatprep.subr.bf16.mxu0 0
        %4363 = vmatpush1.bf16.msra.mxu0 0
        %4364 = vmatprep.subr.bf16.mxu0 0
        %4365 = vmatpush1.bf16.msra.mxu0 0
        %4366 = vmatprep.subr.bf16.mxu0 0
        %4367 = vmatpush1.bf16.msra.mxu0 0
        %4368 = vmatprep.subr.bf16.mxu0 0
        %4369 = vmatpush1.bf16.msra.mxu0 0
        %4370 = vmatprep.subr.bf16.mxu0 0
        %4371 = vmatpush1.bf16.msra.mxu0 0
        %4372 = vmatprep.subr.bf16.mxu0 0
        %4373 = vmatpush1.bf16.msra.mxu0 0
        %4374 = vmatprep.subr.bf16.mxu0 0
        %4375 = vmatpush1.bf16.msra.mxu0 0
        %4376 = vmatprep.subr.bf16.mxu0 0
        %4377 = vmatpush1.bf16.msra.mxu0 0
        %4378 = vmatprep.subr.bf16.mxu0 0
        %4379 = vmatpush1.bf16.msra.mxu0 0
        %4380 = vmatprep.mubr.bf16.mxu0 0
        %4381 = vmatmul.mubr.bf16.gmra.mrb[0].mxu0 %v4331
        %v4382 = vpop.f32.mrb[0].mxu0
        %v4383 = vadd.f32 0.0, %v4382
        %v4384 = vpop.f32.mrb[0].mxu0
        %v4385 = vpop.f32.mrb[0].mxu0
        %v4386 = vadd.f32 0.0, %v4385
        %v4387 = vpop.f32.mrb[0].mxu0
        %4388 = vmatprep.mubr.bf16.mxu0 0
        %4389 = vmatmul.mubr.bf16.gmra.mrb[0].mxu0 %v4334
        %v4390 = vpop.f32.mrb[0].mxu0
        %v4391 = vadd.f32 0.0, %v4390
        %v4392 = vpop.f32.mrb[0].mxu0
        %v4393 = vpop.f32.mrb[0].mxu0
        %v4394 = vadd.f32 0.0, %v4393
        %v4395 = vpop.f32.mrb[0].mxu0
        %4396 = vmatprep.mubr.bf16.mxu0 0
        %4397 = vmatmul.mubr.bf16.gmra.mrb[0].mxu0 %v4337
        %v4398 = vpop.f32.mrb[0].mxu0
        %v4399 = vadd.f32 0.0, %v4398
        %v4400 = vpop.f32.mrb[0].mxu0
        %v4401 = vpop.f32.mrb[0].mxu0
        %v4402 = vadd.f32 0.0, %v4401
        %v4403 = vpop.f32.mrb[0].mxu0
        %4404 = vmatprep.mubr.bf16.mxu0 0
        %4405 = vmatmul.mubr.bf16.gmra.mrb[0].mxu0 %v4340
        %v4406 = vpop.f32.mrb[0].mxu0
        %v4407 = vadd.f32 0.0, %v4406
        %v4408 = vpop.f32.mrb[0].mxu0
        %v4409 = vpop.f32.mrb[0].mxu0
        %v4410 = vadd.f32 0.0, %v4409
        %v4411 = vpop.f32.mrb[0].mxu0
        %4412 = vmatprep.mubr.bf16.mxu0 0
        %4413 = vmatmul.mubr.bf16.gmra.mrb[0].mxu0 %v4343
        %v4414 = vpop.f32.mrb[0].mxu0
        %v4415 = vadd.f32 0.0, %v4414
        %v4416 = vpop.f32.mrb[0].mxu0
        %v4417 = vpop.f32.mrb[0].mxu0
        %v4418 = vpop.f32.mrb[0].mxu0
        %4419 = vdwg.mxu0
        %v4421 = vsel %vm2348, %v4325, 0
        %v4424 = vsel %vm2348, %v4326, 0
        %v4427 = vsel %vm2348, %v4327, 0
        %v4430 = vsel %vm2348, %v4328, 0
        %v4433 = vsel %vm2348, %v4329, 0
        %v4436 = vsel %vm2572, %v3851, 0
        %4438 = vmatprep.subr.bf16.mxu0 0
        %4439 = vmatpush1.bf16.msra.mxu0 %v3847
        %4440 = vmatprep.subr.bf16.mxu0 0
        %4441 = vmatpush1.bf16.msra.mxu0 %v3848
        %4442 = vmatprep.subr.bf16.mxu0 0
        %4443 = vmatpush1.bf16.msra.mxu0 %v3849
        %4444 = vmatprep.subr.bf16.mxu0 0
        %4445 = vmatpush1.bf16.msra.mxu0 %v3850
        %4446 = vmatprep.subr.bf16.mxu0 0
        %4447 = vmatpush1.bf16.msra.mxu0 %v4436
        %4448 = vmatprep.subr.bf16.mxu0 0
        %4449 = vmatpush1.bf16.msra.mxu0 0
        %4450 = vmatprep.subr.bf16.mxu0 0
        %4451 = vmatpush1.bf16.msra.mxu0 0
        %4452 = vmatprep.subr.bf16.mxu0 0
        %4453 = vmatpush1.bf16.msra.mxu0 0
        %4454 = vmatprep.subr.bf16.mxu0 0
        %4455 = vmatpush1.bf16.msra.mxu0 0
        %4456 = vmatprep.subr.bf16.mxu0 0
        %4457 = vmatpush1.bf16.msra.mxu0 0
        %4458 = vmatprep.subr.bf16.mxu0 0
        %4459 = vmatpush1.bf16.msra.mxu0 0
        %4460 = vmatprep.subr.bf16.mxu0 0
        %4461 = vmatpush1.bf16.msra.mxu0 0
        %4462 = vmatprep.subr.bf16.mxu0 0
        %4463 = vmatpush1.bf16.msra.mxu0 0
        %4464 = vmatprep.subr.bf16.mxu0 0
        %4465 = vmatpush1.bf16.msra.mxu0 0
        %4466 = vmatprep.subr.bf16.mxu0 0
        %4467 = vmatpush1.bf16.msra.mxu0 0
        %4468 = vmatprep.subr.bf16.mxu0 0
        %4469 = vmatpush1.bf16.msra.mxu0 0
        %4470 = vmatprep.mubr.bf16.mxu0 0
        %4471 = vmatmul.mubr.bf16.gmra.mrb[0].mxu0 %v4421
        %v4472 = vpop.f32.mrb[0].mxu0
        %v4473 = vadd.f32 0.0, %v4472
        %v4474 = vpop.f32.mrb[0].mxu0
        %v4475 = vpop.f32.mrb[0].mxu0
        %v4476 = vadd.f32 0.0, %v4475
        %v4477 = vpop.f32.mrb[0].mxu0
        %4478 = vmatprep.mubr.bf16.mxu0 0
        %4479 = vmatmul.mubr.bf16.gmra.mrb[0].mxu0 %v4424
        %v4480 = vpop.f32.mrb[0].mxu0
        %v4481 = vadd.f32 0.0, %v4480
        %v4482 = vpop.f32.mrb[0].mxu0
        %v4483 = vpop.f32.mrb[0].mxu0
        %v4484 = vadd.f32 0.0, %v4483
        %v4485 = vpop.f32.mrb[0].mxu0
        %4486 = vmatprep.mubr.bf16.mxu0 0
        %4487 = vmatmul.mubr.bf16.gmra.mrb[0].mxu0 %v4427
        %v4488 = vpop.f32.mrb[0].mxu0
        %v4489 = vadd.f32 0.0, %v4488
        %v4490 = vpop.f32.mrb[0].mxu0
        %v4491 = vpop.f32.mrb[0].mxu0
        %v4492 = vadd.f32 0.0, %v4491
        %v4493 = vpop.f32.mrb[0].mxu0
        %4494 = vmatprep.mubr.bf16.mxu0 0
        %4495 = vmatmul.mubr.bf16.gmra.mrb[0].mxu0 %v4430
        %v4496 = vpop.f32.mrb[0].mxu0
        %v4497 = vadd.f32 0.0, %v4496
        %v4498 = vpop.f32.mrb[0].mxu0
        %v4499 = vpop.f32.mrb[0].mxu0
        %v4500 = vadd.f32 0.0, %v4499
        %v4501 = vpop.f32.mrb[0].mxu0
        %4502 = vmatprep.mubr.bf16.mxu0 0
        %4503 = vmatmul.mubr.bf16.gmra.mrb[0].mxu0 %v4433
        %v4504 = vpop.f32.mrb[0].mxu0
        %v4505 = vadd.f32 0.0, %v4504
        %v4506 = vpop.f32.mrb[0].mxu0
        %v4507 = vpop.f32.mrb[0].mxu0
        %v4508 = vpop.f32.mrb[0].mxu0
        %4509 = vdwg.mxu0
        %v4510 = vpack.c.bf16 %v4386, %v4383
        %v4511 = vpack.c.bf16 %v4394, %v4391
        %v4512 = vpack.c.bf16 %v4402, %v4399
        %v4513 = vpack.c.bf16 %v4410, %v4407
        %v4514 = vpack.c.bf16 %v4473, %v4415
        %v4515 = vpack.c.bf16 %v4481, %v4476
        %v4516 = vpack.c.bf16 %v4489, %v4484
        %v4517 = vpack.c.bf16 %v4497, %v4492
        %v4518 = vpack.c.bf16 %v4505, %v4500
        %v4527 = vunpack.c.l.b16 %v2040
        %v4528 = vunpack.c.h.b16 %v2040
        %v4529 = vunpack.c.l.b16 %v2041
        %v4530 = vunpack.c.h.b16 %v2041
        %v4531 = vunpack.c.l.b16 %v2042
        %v4532 = vunpack.c.h.b16 %v2042
        %v4533 = vunpack.c.l.b16 %v2043
        %v4534 = vunpack.c.h.b16 %v2043
        %v4535 = vunpack.c.l.b16 %v2044
        %v4536 = vunpack.c.h.b16 %v2044
        %v4537 = vunpack.c.l.b16 %v2045
        %v4538 = vunpack.c.h.b16 %v2045
        %v4539 = vunpack.c.l.b16 %v2046
        %v4540 = vunpack.c.h.b16 %v2046
        %v4541 = vunpack.c.l.b16 %v2047
        %v4542 = vunpack.c.h.b16 %v2047
        %v4543 = vpack.c.b16 %v4529, %v4527
        %v4544 = vpack.c.b16 %v4530, %v4528
        %v4545 = vpack.c.b16 %v4533, %v4531
        %v4546 = vpack.c.b16 %v4534, %v4532
        %v4547 = vpack.c.b16 %v4537, %v4535
        %v4548 = vpack.c.b16 %v4538, %v4536
        %v4549 = vpack.c.b16 %v4541, %v4539
        %v4550 = vpack.c.b16 %v4542, %v4540
        %v4560 = vsel %vm793, %v4510, 0
        %v4563 = vsel %vm793, %v4511, 0
        %v4566 = vsel %vm793, %v4512, 0
        %v4569 = vsel %vm793, %v4513, 0
        %v4572 = vsel %vm793, %v4514, 0
        %v4575 = vsel %vm793, %v4515, 0
        %v4578 = vsel %vm793, %v4516, 0
        %v4581 = vsel %vm793, %v4517, 0
        %v4584 = vsel %vm793, %v4518, 0
        %4586 = vmatprep.subr.bf16.mxu0 %v4544
        %4587 = vmatpush1.bf16.msra.mxu0 %v4543
        %4588 = vmatprep.subr.bf16.mxu0 %v4546
        %4589 = vmatpush1.bf16.msra.mxu0 %v4545
        %4590 = vmatprep.subr.bf16.mxu0 %v4548
        %4591 = vmatpush1.bf16.msra.mxu0 %v4547
        %4592 = vmatprep.subr.bf16.mxu0 %v4550
        %4593 = vmatpush1.bf16.msra.mxu0 %v4549
        %4594 = vmatprep.subr.bf16.mxu0 0
        %4595 = vmatpush1.bf16.msra.mxu0 0
        %4596 = vmatprep.subr.bf16.mxu0 0
        %4597 = vmatpush1.bf16.msra.mxu0 0
        %4598 = vmatprep.subr.bf16.mxu0 0
        %4599 = vmatpush1.bf16.msra.mxu0 0
        %4600 = vmatprep.subr.bf16.mxu0 0
        %4601 = vmatpush1.bf16.msra.mxu0 0
        %4602 = vmatprep.subr.bf16.mxu0 0
        %4603 = vmatpush1.bf16.msra.mxu0 0
        %4604 = vmatprep.subr.bf16.mxu0 0
        %4605 = vmatpush1.bf16.msra.mxu0 0
        %4606 = vmatprep.subr.bf16.mxu0 0
        %4607 = vmatpush1.bf16.msra.mxu0 0
        %4608 = vmatprep.subr.bf16.mxu0 0
        %4609 = vmatpush1.bf16.msra.mxu0 0
        %4610 = vmatprep.subr.bf16.mxu0 0
        %4611 = vmatpush1.bf16.msra.mxu0 0
        %4612 = vmatprep.subr.bf16.mxu0 0
        %4613 = vmatpush1.bf16.msra.mxu0 0
        %4614 = vmatprep.subr.bf16.mxu0 0
        %4615 = vmatpush1.bf16.msra.mxu0 0
        %4616 = vmatprep.subr.bf16.mxu0 0
        %4617 = vmatpush1.bf16.msra.mxu0 0
        %4618 = vmatprep.mubr.bf16.mxu0 0
        %4619 = vmatmul.mubr.bf16.gmra.mrb[0].mxu0 %v4560
        %v4620 = vpop.f32.mrb[0].mxu0
        %v4621 = vadd.f32 0.0, %v4620
        %v4622 = vpop.f32.mrb[0].mxu0
        %v4623 = vadd.f32 0.0, %v4622
        %v4624 = vpop.f32.mrb[0].mxu0
        %v4625 = vadd.f32 0.0, %v4624
        %v4626 = vpop.f32.mrb[0].mxu0
        %v4627 = vadd.f32 0.0, %v4626
        %4628 = vmatprep.mubr.bf16.mxu0 0
        %4629 = vmatmul.mubr.bf16.gmra.mrb[0].mxu0 %v4563
        %v4630 = vpop.f32.mrb[0].mxu0
        %v4631 = vadd.f32 0.0, %v4630
        %v4632 = vpop.f32.mrb[0].mxu0
        %v4633 = vadd.f32 0.0, %v4632
        %v4634 = vpop.f32.mrb[0].mxu0
        %v4635 = vadd.f32 0.0, %v4634
        %v4636 = vpop.f32.mrb[0].mxu0
        %v4637 = vadd.f32 0.0, %v4636
        %4638 = vmatprep.mubr.bf16.mxu0 0
        %4639 = vmatmul.mubr.bf16.gmra.mrb[0].mxu0 %v4566
        %v4640 = vpop.f32.mrb[0].mxu0
        %v4641 = vadd.f32 0.0, %v4640
        %v4642 = vpop.f32.mrb[0].mxu0
        %v4643 = vadd.f32 0.0, %v4642
        %v4644 = vpop.f32.mrb[0].mxu0
        %v4645 = vadd.f32 0.0, %v4644
        %v4646 = vpop.f32.mrb[0].mxu0
        %v4647 = vadd.f32 0.0, %v4646
        %4648 = vmatprep.mubr.bf16.mxu0 0
        %4649 = vmatmul.mubr.bf16.gmra.mrb[0].mxu0 %v4569
        %v4650 = vpop.f32.mrb[0].mxu0
        %v4651 = vadd.f32 0.0, %v4650
        %v4652 = vpop.f32.mrb[0].mxu0
        %v4653 = vadd.f32 0.0, %v4652
        %v4654 = vpop.f32.mrb[0].mxu0
        %v4655 = vadd.f32 0.0, %v4654
        %v4656 = vpop.f32.mrb[0].mxu0
        %v4657 = vadd.f32 0.0, %v4656
        %4658 = vmatprep.mubr.bf16.mxu0 0
        %4659 = vmatmul.mubr.bf16.gmra.mrb[0].mxu0 %v4572
        %v4660 = vpop.f32.mrb[0].mxu0
        %v4661 = vadd.f32 0.0, %v4660
        %v4662 = vpop.f32.mrb[0].mxu0
        %v4663 = vadd.f32 0.0, %v4662
        %v4664 = vpop.f32.mrb[0].mxu0
        %v4665 = vadd.f32 0.0, %v4664
        %v4666 = vpop.f32.mrb[0].mxu0
        %v4667 = vadd.f32 0.0, %v4666
        %4668 = vmatprep.mubr.bf16.mxu0 0
        %4669 = vmatmul.mubr.bf16.gmra.mrb[0].mxu0 %v4575
        %v4670 = vpop.f32.mrb[0].mxu0
        %v4671 = vadd.f32 0.0, %v4670
        %v4672 = vpop.f32.mrb[0].mxu0
        %v4673 = vadd.f32 0.0, %v4672
        %v4674 = vpop.f32.mrb[0].mxu0
        %v4675 = vadd.f32 0.0, %v4674
        %v4676 = vpop.f32.mrb[0].mxu0
        %v4677 = vadd.f32 0.0, %v4676
        %4678 = vmatprep.mubr.bf16.mxu0 0
        %4679 = vmatmul.mubr.bf16.gmra.mrb[0].mxu0 %v4578
        %v4680 = vpop.f32.mrb[0].mxu0
        %v4681 = vadd.f32 0.0, %v4680
        %v4682 = vpop.f32.mrb[0].mxu0
        %v4683 = vadd.f32 0.0, %v4682
        %v4684 = vpop.f32.mrb[0].mxu0
        %v4685 = vadd.f32 0.0, %v4684
        %v4686 = vpop.f32.mrb[0].mxu0
        %v4687 = vadd.f32 0.0, %v4686
        %4688 = vmatprep.mubr.bf16.mxu0 0
        %4689 = vmatmul.mubr.bf16.gmra.mrb[0].mxu0 %v4581
        %v4690 = vpop.f32.mrb[0].mxu0
        %v4691 = vadd.f32 0.0, %v4690
        %v4692 = vpop.f32.mrb[0].mxu0
        %v4693 = vadd.f32 0.0, %v4692
        %v4694 = vpop.f32.mrb[0].mxu0
        %v4695 = vadd.f32 0.0, %v4694
        %v4696 = vpop.f32.mrb[0].mxu0
        %v4697 = vadd.f32 0.0, %v4696
        %4698 = vmatprep.mubr.bf16.mxu0 0
        %4699 = vmatmul.mubr.bf16.gmra.mrb[0].mxu0 %v4584
        %v4700 = vpop.f32.mrb[0].mxu0
        %v4701 = vadd.f32 0.0, %v4700
        %v4702 = vpop.f32.mrb[0].mxu0
        %v4703 = vadd.f32 0.0, %v4702
        %v4704 = vpop.f32.mrb[0].mxu0
        %v4705 = vadd.f32 0.0, %v4704
        %v4706 = vpop.f32.mrb[0].mxu0
        %v4707 = vadd.f32 0.0, %v4706
        %4708 = vdwg.mxu0
        %v4709 = vadd.f32 %v3754, %v4621
        %v4710 = vadd.f32 %v3756, %v4623
        %v4711 = vadd.f32 %v3758, %v4625
        %v4712 = vadd.f32 %v3760, %v4627
        %v4713 = vadd.f32 %v3764, %v4631
        %v4714 = vadd.f32 %v3766, %v4633
        %v4715 = vadd.f32 %v3768, %v4635
        %v4716 = vadd.f32 %v3770, %v4637
        %v4717 = vadd.f32 %v3774, %v4641
        %v4718 = vadd.f32 %v3776, %v4643
        %v4719 = vadd.f32 %v3778, %v4645
        %v4720 = vadd.f32 %v3780, %v4647
        %v4721 = vadd.f32 %v3784, %v4651
        %v4722 = vadd.f32 %v3786, %v4653
        %v4723 = vadd.f32 %v3788, %v4655
        %v4724 = vadd.f32 %v3790, %v4657
        %v4725 = vadd.f32 %v3794, %v4661
        %v4726 = vadd.f32 %v3796, %v4663
        %v4727 = vadd.f32 %v3798, %v4665
        %v4728 = vadd.f32 %v3800, %v4667
        %v4729 = vadd.f32 %v3804, %v4671
        %v4730 = vadd.f32 %v3806, %v4673
        %v4731 = vadd.f32 %v3808, %v4675
        %v4732 = vadd.f32 %v3810, %v4677
        %v4733 = vadd.f32 %v3814, %v4681
        %v4734 = vadd.f32 %v3816, %v4683
        %v4735 = vadd.f32 %v3818, %v4685
        %v4736 = vadd.f32 %v3820, %v4687
        %v4737 = vadd.f32 %v3824, %v4691
        %v4738 = vadd.f32 %v3826, %v4693
        %v4739 = vadd.f32 %v3828, %v4695
        %v4740 = vadd.f32 %v3830, %v4697
        %v4741 = vadd.f32 %v3834, %v4701
        %v4742 = vadd.f32 %v3836, %v4703
        %v4743 = vadd.f32 %v3838, %v4705
        %v4744 = vadd.f32 %v3840, %v4707
        %v4745 = vadd.f32 %v755, %v4709
        %v4746 = vadd.f32 %v756, %v4710
        %v4747 = vadd.f32 %v757, %v4711
        %v4748 = vadd.f32 %v758, %v4712
        %v4749 = vadd.f32 %v759, %v4713
        %v4750 = vadd.f32 %v760, %v4714
        %v4751 = vadd.f32 %v761, %v4715
        %v4752 = vadd.f32 %v762, %v4716
        %v4753 = vadd.f32 %v763, %v4717
        %v4754 = vadd.f32 %v764, %v4718
        %v4755 = vadd.f32 %v765, %v4719
        %v4756 = vadd.f32 %v766, %v4720
        %v4757 = vadd.f32 %v767, %v4721
        %v4758 = vadd.f32 %v768, %v4722
        %v4759 = vadd.f32 %v769, %v4723
        %v4760 = vadd.f32 %v770, %v4724
        %v4761 = vadd.f32 %v771, %v4725
        %v4762 = vadd.f32 %v772, %v4726
        %v4763 = vadd.f32 %v773, %v4727
        %v4764 = vadd.f32 %v774, %v4728
        %v4765 = vadd.f32 %v775, %v4729
        %v4766 = vadd.f32 %v776, %v4730
        %v4767 = vadd.f32 %v777, %v4731
        %v4768 = vadd.f32 %v778, %v4732
        %v4769 = vadd.f32 %v779, %v4733
        %v4770 = vadd.f32 %v780, %v4734
        %v4771 = vadd.f32 %v781, %v4735
        %v4772 = vadd.f32 %v782, %v4736
        %v4773 = vadd.f32 %v783, %v4737
        %v4774 = vadd.f32 %v784, %v4738
        %v4775 = vadd.f32 %v785, %v4739
        %v4776 = vadd.f32 %v786, %v4740
        %v4777 = vadd.f32 %v787, %v4741
        %v4778 = vadd.f32 %v788, %v4742
        %v4779 = vadd.f32 %v789, %v4743
        %v4780 = vadd.f32 %v790, %v4744
        %v4781 = vld [vmem:[%s642] sm:$0x3]
        %v4783 = vlaneseq
        %v4784 = vshrl.u32 %v4783, 7
        %v4785 = vsub.s32 0, %v4784
        %v4786 = vrot.slane %v4781, %v4785
        %v4787 = vlaneseq
        %v4788 = vshrl.u32 %v4787, 7
        %v4789 = vsub.s32 1, %v4788
        %v4790 = vrot.slane %v4781, %v4789
        %v4793 = vadd.f32 %v4745, %v4786
        %v4794 = vadd.f32 %v4746, %v4790
        %v4795 = vadd.f32 %v4747, %v4786
        %v4796 = vadd.f32 %v4748, %v4790
        %v4797 = vadd.f32 %v4749, %v4786
        %v4798 = vadd.f32 %v4750, %v4790
        %v4799 = vadd.f32 %v4751, %v4786
        %v4800 = vadd.f32 %v4752, %v4790
        %v4801 = vadd.f32 %v4753, %v4786
        %v4802 = vadd.f32 %v4754, %v4790
        %v4803 = vadd.f32 %v4755, %v4786
        %v4804 = vadd.f32 %v4756, %v4790
        %v4805 = vadd.f32 %v4757, %v4786
        %v4806 = vadd.f32 %v4758, %v4790
        %v4807 = vadd.f32 %v4759, %v4786
        %v4808 = vadd.f32 %v4760, %v4790
        %v4809 = vadd.f32 %v4761, %v4786
        %v4810 = vadd.f32 %v4762, %v4790
        %v4811 = vadd.f32 %v4763, %v4786
        %v4812 = vadd.f32 %v4764, %v4790
        %v4813 = vadd.f32 %v4765, %v4786
        %v4814 = vadd.f32 %v4766, %v4790
        %v4815 = vadd.f32 %v4767, %v4786
        %v4816 = vadd.f32 %v4768, %v4790
        %v4817 = vadd.f32 %v4769, %v4786
        %v4818 = vadd.f32 %v4770, %v4790
        %v4819 = vadd.f32 %v4771, %v4786
        %v4820 = vadd.f32 %v4772, %v4790
        %v4821 = vadd.f32 %v4773, %v4786
        %v4822 = vadd.f32 %v4774, %v4790
        %v4823 = vadd.f32 %v4775, %v4786
        %v4824 = vadd.f32 %v4776, %v4790
        %v4825 = vadd.f32 %v4777, %v4786
        %v4826 = vadd.f32 %v4778, %v4790
        %v4827 = vadd.f32 %v4779, %v4786
        %v4828 = vadd.f32 %v4780, %v4790
        %v4829 = vld [vmem:[%s672] sm:$0x3]
        %v4830 = vld [vmem:[%s676] sm:$0x3]
        %v4831 = vsel %vm793, %v4794, 0.0
        %v4832 = vadd.f32 %v4793, %v4831
        %4833 = vadd.xlane.f32.xlu0 %v4832
        %v4834 = vpop.xlane.xlu0 %4833
        %v4835 = vsel %vm793, %v4796, 0.0
        %v4836 = vadd.f32 %v4795, %v4835
        %4837 = vadd.xlane.f32.xlu0 %v4836
        %v4838 = vpop.xlane.xlu0 %4837
        %v4839 = vsel %vm793, %v4798, 0.0
        %v4840 = vadd.f32 %v4797, %v4839
        %4841 = vadd.xlane.f32.xlu0 %v4840
        %v4842 = vpop.xlane.xlu0 %4841
        %v4843 = vsel %vm793, %v4800, 0.0
        %v4844 = vadd.f32 %v4799, %v4843
        %4845 = vadd.xlane.f32.xlu0 %v4844
        %v4846 = vpop.xlane.xlu0 %4845
        %v4847 = vsel %vm793, %v4802, 0.0
        %v4848 = vadd.f32 %v4801, %v4847
        %4849 = vadd.xlane.f32.xlu0 %v4848
        %v4850 = vpop.xlane.xlu0 %4849
        %v4851 = vsel %vm793, %v4804, 0.0
        %v4852 = vadd.f32 %v4803, %v4851
        %4853 = vadd.xlane.f32.xlu0 %v4852
        %v4854 = vpop.xlane.xlu0 %4853
        %v4855 = vsel %vm793, %v4806, 0.0
        %v4856 = vadd.f32 %v4805, %v4855
        %4857 = vadd.xlane.f32.xlu0 %v4856
        %v4858 = vpop.xlane.xlu0 %4857
        %v4859 = vsel %vm793, %v4808, 0.0
        %v4860 = vadd.f32 %v4807, %v4859
        %4861 = vadd.xlane.f32.xlu0 %v4860
        %v4862 = vpop.xlane.xlu0 %4861
        %v4863 = vsel %vm793, %v4810, 0.0
        %v4864 = vadd.f32 %v4809, %v4863
        %4865 = vadd.xlane.f32.xlu0 %v4864
        %v4866 = vpop.xlane.xlu0 %4865
        %v4867 = vsel %vm793, %v4812, 0.0
        %v4868 = vadd.f32 %v4811, %v4867
        %4869 = vadd.xlane.f32.xlu0 %v4868
        %v4870 = vpop.xlane.xlu0 %4869
        %v4871 = vsel %vm793, %v4814, 0.0
        %v4872 = vadd.f32 %v4813, %v4871
        %4873 = vadd.xlane.f32.xlu0 %v4872
        %v4874 = vpop.xlane.xlu0 %4873
        %v4875 = vsel %vm793, %v4816, 0.0
        %v4876 = vadd.f32 %v4815, %v4875
        %4877 = vadd.xlane.f32.xlu0 %v4876
        %v4878 = vpop.xlane.xlu0 %4877
        %v4879 = vsel %vm793, %v4818, 0.0
        %v4880 = vadd.f32 %v4817, %v4879
        %4881 = vadd.xlane.f32.xlu0 %v4880
        %v4882 = vpop.xlane.xlu0 %4881
        %v4883 = vsel %vm793, %v4820, 0.0
        %v4884 = vadd.f32 %v4819, %v4883
        %4885 = vadd.xlane.f32.xlu0 %v4884
        %v4886 = vpop.xlane.xlu0 %4885
        %v4887 = vsel %vm793, %v4822, 0.0
        %v4888 = vadd.f32 %v4821, %v4887
        %4889 = vadd.xlane.f32.xlu0 %v4888
        %v4890 = vpop.xlane.xlu0 %4889
        %v4891 = vsel %vm793, %v4824, 0.0
        %v4892 = vadd.f32 %v4823, %v4891
        %4893 = vadd.xlane.f32.xlu0 %v4892
        %v4894 = vpop.xlane.xlu0 %4893
        %v4895 = vsel %vm793, %v4826, 0.0
        %v4896 = vadd.f32 %v4825, %v4895
        %4897 = vadd.xlane.f32.xlu0 %v4896
        %v4898 = vpop.xlane.xlu0 %4897
        %v4899 = vsel %vm793, %v4828, 0.0
        %v4900 = vadd.f32 %v4827, %v4899
        %4901 = vadd.xlane.f32.xlu0 %v4900
        %v4902 = vpop.xlane.xlu0 %4901
        %v4903 = vmul.f32 %v4834, %v866
        %v4904 = vmul.f32 %v4838, %v866
        %v4905 = vmul.f32 %v4842, %v866
        %v4906 = vmul.f32 %v4846, %v866
        %v4907 = vmul.f32 %v4850, %v866
        %v4908 = vmul.f32 %v4854, %v866
        %v4909 = vmul.f32 %v4858, %v866
        %v4910 = vmul.f32 %v4862, %v866
        %v4911 = vmul.f32 %v4866, %v866
        %v4912 = vmul.f32 %v4870, %v866
        %v4913 = vmul.f32 %v4874, %v866
        %v4914 = vmul.f32 %v4878, %v866
        %v4915 = vmul.f32 %v4882, %v866
        %v4916 = vmul.f32 %v4886, %v866
        %v4917 = vmul.f32 %v4890, %v866
        %v4918 = vmul.f32 %v4894, %v866
        %v4919 = vmul.f32 %v4898, %v866
        %v4920 = vmul.f32 %v4902, %v866
        %v4921 = vsub.f32 %v4793, %v4903
        %v4922 = vsub.f32 %v4794, %v4903
        %v4923 = vsub.f32 %v4795, %v4904
        %v4924 = vsub.f32 %v4796, %v4904
        %v4925 = vsub.f32 %v4797, %v4905
        %v4926 = vsub.f32 %v4798, %v4905
        %v4927 = vsub.f32 %v4799, %v4906
        %v4928 = vsub.f32 %v4800, %v4906
        %v4929 = vsub.f32 %v4801, %v4907
        %v4930 = vsub.f32 %v4802, %v4907
        %v4931 = vsub.f32 %v4803, %v4908
        %v4932 = vsub.f32 %v4804, %v4908
        %v4933 = vsub.f32 %v4805, %v4909
        %v4934 = vsub.f32 %v4806, %v4909
        %v4935 = vsub.f32 %v4807, %v4910
        %v4936 = vsub.f32 %v4808, %v4910
        %v4937 = vsub.f32 %v4809, %v4911
        %v4938 = vsub.f32 %v4810, %v4911
        %v4939 = vsub.f32 %v4811, %v4912
        %v4940 = vsub.f32 %v4812, %v4912
        %v4941 = vsub.f32 %v4813, %v4913
        %v4942 = vsub.f32 %v4814, %v4913
        %v4943 = vsub.f32 %v4815, %v4914
        %v4944 = vsub.f32 %v4816, %v4914
        %v4945 = vsub.f32 %v4817, %v4915
        %v4946 = vsub.f32 %v4818, %v4915
        %v4947 = vsub.f32 %v4819, %v4916
        %v4948 = vsub.f32 %v4820, %v4916
        %v4949 = vsub.f32 %v4821, %v4917
        %v4950 = vsub.f32 %v4822, %v4917
        %v4951 = vsub.f32 %v4823, %v4918
        %v4952 = vsub.f32 %v4824, %v4918
        %v4953 = vsub.f32 %v4825, %v4919
        %v4954 = vsub.f32 %v4826, %v4919
        %v4955 = vsub.f32 %v4827, %v4920
        %v4956 = vsub.f32 %v4828, %v4920
        %v4957 = vmul.f32 %v4921, %v4921
        %v4958 = vmul.f32 %v4922, %v4922
        %v4959 = vmul.f32 %v4923, %v4923
        %v4960 = vmul.f32 %v4924, %v4924
        %v4961 = vmul.f32 %v4925, %v4925
        %v4962 = vmul.f32 %v4926, %v4926
        %v4963 = vmul.f32 %v4927, %v4927
        %v4964 = vmul.f32 %v4928, %v4928
        %v4965 = vmul.f32 %v4929, %v4929
        %v4966 = vmul.f32 %v4930, %v4930
        %v4967 = vmul.f32 %v4931, %v4931
        %v4968 = vmul.f32 %v4932, %v4932
        %v4969 = vmul.f32 %v4933, %v4933
        %v4970 = vmul.f32 %v4934, %v4934
        %v4971 = vmul.f32 %v4935, %v4935
        %v4972 = vmul.f32 %v4936, %v4936
        %v4973 = vmul.f32 %v4937, %v4937
        %v4974 = vmul.f32 %v4938, %v4938
        %v4975 = vmul.f32 %v4939, %v4939
        %v4976 = vmul.f32 %v4940, %v4940
        %v4977 = vmul.f32 %v4941, %v4941
        %v4978 = vmul.f32 %v4942, %v4942
        %v4979 = vmul.f32 %v4943, %v4943
        %v4980 = vmul.f32 %v4944, %v4944
        %v4981 = vmul.f32 %v4945, %v4945
        %v4982 = vmul.f32 %v4946, %v4946
        %v4983 = vmul.f32 %v4947, %v4947
        %v4984 = vmul.f32 %v4948, %v4948
        %v4985 = vmul.f32 %v4949, %v4949
        %v4986 = vmul.f32 %v4950, %v4950
        %v4987 = vmul.f32 %v4951, %v4951
        %v4988 = vmul.f32 %v4952, %v4952
        %v4989 = vmul.f32 %v4953, %v4953
        %v4990 = vmul.f32 %v4954, %v4954
        %v4991 = vmul.f32 %v4955, %v4955
        %v4992 = vmul.f32 %v4956, %v4956
        %v4993 = vsel %vm793, %v4958, 0.0
        %v4994 = vadd.f32 %v4957, %v4993
        %4995 = vadd.xlane.f32.xlu0 %v4994
        %v4996 = vpop.xlane.xlu0 %4995
        %v4997 = vsel %vm793, %v4960, 0.0
        %v4998 = vadd.f32 %v4959, %v4997
        %4999 = vadd.xlane.f32.xlu0 %v4998
        %v5000 = vpop.xlane.xlu0 %4999
        %v5001 = vsel %vm793, %v4962, 0.0
        %v5002 = vadd.f32 %v4961, %v5001
        %5003 = vadd.xlane.f32.xlu0 %v5002
        %v5004 = vpop.xlane.xlu0 %5003
        %v5005 = vsel %vm793, %v4964, 0.0
        %v5006 = vadd.f32 %v4963, %v5005
        %5007 = vadd.xlane.f32.xlu0 %v5006
        %v5008 = vpop.xlane.xlu0 %5007
        %v5009 = vsel %vm793, %v4966, 0.0
        %v5010 = vadd.f32 %v4965, %v5009
        %5011 = vadd.xlane.f32.xlu0 %v5010
        %v5012 = vpop.xlane.xlu0 %5011
        %v5013 = vsel %vm793, %v4968, 0.0
        %v5014 = vadd.f32 %v4967, %v5013
        %5015 = vadd.xlane.f32.xlu0 %v5014
        %v5016 = vpop.xlane.xlu0 %5015
        %v5017 = vsel %vm793, %v4970, 0.0
        %v5018 = vadd.f32 %v4969, %v5017
        %5019 = vadd.xlane.f32.xlu0 %v5018
        %v5020 = vpop.xlane.xlu0 %5019
        %v5021 = vsel %vm793, %v4972, 0.0
        %v5022 = vadd.f32 %v4971, %v5021
        %5023 = vadd.xlane.f32.xlu0 %v5022
        %v5024 = vpop.xlane.xlu0 %5023
        %v5025 = vsel %vm793, %v4974, 0.0
        %v5026 = vadd.f32 %v4973, %v5025
        %5027 = vadd.xlane.f32.xlu0 %v5026
        %v5028 = vpop.xlane.xlu0 %5027
        %v5029 = vsel %vm793, %v4976, 0.0
        %v5030 = vadd.f32 %v4975, %v5029
        %5031 = vadd.xlane.f32.xlu0 %v5030
        %v5032 = vpop.xlane.xlu0 %5031
        %v5033 = vsel %vm793, %v4978, 0.0
        %v5034 = vadd.f32 %v4977, %v5033
        %5035 = vadd.xlane.f32.xlu0 %v5034
        %v5036 = vpop.xlane.xlu0 %5035
        %v5037 = vsel %vm793, %v4980, 0.0
        %v5038 = vadd.f32 %v4979, %v5037
        %5039 = vadd.xlane.f32.xlu0 %v5038
        %v5040 = vpop.xlane.xlu0 %5039
        %v5041 = vsel %vm793, %v4982, 0.0
        %v5042 = vadd.f32 %v4981, %v5041
        %5043 = vadd.xlane.f32.xlu0 %v5042
        %v5044 = vpop.xlane.xlu0 %5043
        %v5045 = vsel %vm793, %v4984, 0.0
        %v5046 = vadd.f32 %v4983, %v5045
        %5047 = vadd.xlane.f32.xlu0 %v5046
        %v5048 = vpop.xlane.xlu0 %5047
        %v5049 = vsel %vm793, %v4986, 0.0
        %v5050 = vadd.f32 %v4985, %v5049
        %5051 = vadd.xlane.f32.xlu0 %v5050
        %v5052 = vpop.xlane.xlu0 %5051
        %v5053 = vsel %vm793, %v4988, 0.0
        %v5054 = vadd.f32 %v4987, %v5053
        %5055 = vadd.xlane.f32.xlu0 %v5054
        %v5056 = vpop.xlane.xlu0 %5055
        %v5057 = vsel %vm793, %v4990, 0.0
        %v5058 = vadd.f32 %v4989, %v5057
        %5059 = vadd.xlane.f32.xlu0 %v5058
        %v5060 = vpop.xlane.xlu0 %5059
        %v5061 = vsel %vm793, %v4992, 0.0
        %v5062 = vadd.f32 %v4991, %v5061
        %5063 = vadd.xlane.f32.xlu0 %v5062
        %v5064 = vpop.xlane.xlu0 %5063
        %v5065 = vmul.f32 %v4996, %v866
        %v5066 = vmul.f32 %v5000, %v866
        %v5067 = vmul.f32 %v5004, %v866
        %v5068 = vmul.f32 %v5008, %v866
        %v5069 = vmul.f32 %v5012, %v866
        %v5070 = vmul.f32 %v5016, %v866
        %v5071 = vmul.f32 %v5020, %v866
        %v5072 = vmul.f32 %v5024, %v866
        %v5073 = vmul.f32 %v5028, %v866
        %v5074 = vmul.f32 %v5032, %v866
        %v5075 = vmul.f32 %v5036, %v866
        %v5076 = vmul.f32 %v5040, %v866
        %v5077 = vmul.f32 %v5044, %v866
        %v5078 = vmul.f32 %v5048, %v866
        %v5079 = vmul.f32 %v5052, %v866
        %v5080 = vmul.f32 %v5056, %v866
        %v5081 = vmul.f32 %v5060, %v866
        %v5082 = vmul.f32 %v5064, %v866
        %v5083 = vadd.f32 %v5065, 1e-05
        %v5084 = vadd.f32 %v5066, 1e-05
        %v5085 = vadd.f32 %v5067, 1e-05
        %v5086 = vadd.f32 %v5068, 1e-05
        %v5087 = vadd.f32 %v5069, 1e-05
        %v5088 = vadd.f32 %v5070, 1e-05
        %v5089 = vadd.f32 %v5071, 1e-05
        %v5090 = vadd.f32 %v5072, 1e-05
        %v5091 = vadd.f32 %v5073, 1e-05
        %v5092 = vadd.f32 %v5074, 1e-05
        %v5093 = vadd.f32 %v5075, 1e-05
        %v5094 = vadd.f32 %v5076, 1e-05
        %v5095 = vadd.f32 %v5077, 1e-05
        %v5096 = vadd.f32 %v5078, 1e-05
        %v5097 = vadd.f32 %v5079, 1e-05
        %v5098 = vadd.f32 %v5080, 1e-05
        %v5099 = vadd.f32 %v5081, 1e-05
        %v5100 = vadd.f32 %v5082, 1e-05
        %v5101 = vrsqrt.pop %v5083
        %v5102 = vrsqrt.pop %v5084
        %v5103 = vrsqrt.pop %v5085
        %v5104 = vrsqrt.pop %v5086
        %v5105 = vrsqrt.pop %v5087
        %v5106 = vrsqrt.pop %v5088
        %v5107 = vrsqrt.pop %v5089
        %v5108 = vrsqrt.pop %v5090
        %v5109 = vrsqrt.pop %v5091
        %v5110 = vrsqrt.pop %v5092
        %v5111 = vrsqrt.pop %v5093
        %v5112 = vrsqrt.pop %v5094
        %v5113 = vrsqrt.pop %v5095
        %v5114 = vrsqrt.pop %v5096
        %v5115 = vrsqrt.pop %v5097
        %v5116 = vrsqrt.pop %v5098
        %v5117 = vrsqrt.pop %v5099
        %v5118 = vrsqrt.pop %v5100
        %v5119 = vmul.f32 %v4921, %v5101
        %v5120 = vmul.f32 %v4922, %v5101
        %v5121 = vmul.f32 %v4923, %v5102
        %v5122 = vmul.f32 %v4924, %v5102
        %v5123 = vmul.f32 %v4925, %v5103
        %v5124 = vmul.f32 %v4926, %v5103
        %v5125 = vmul.f32 %v4927, %v5104
        %v5126 = vmul.f32 %v4928, %v5104
        %v5127 = vmul.f32 %v4929, %v5105
        %v5128 = vmul.f32 %v4930, %v5105
        %v5129 = vmul.f32 %v4931, %v5106
        %v5130 = vmul.f32 %v4932, %v5106
        %v5131 = vmul.f32 %v4933, %v5107
        %v5132 = vmul.f32 %v4934, %v5107
        %v5133 = vmul.f32 %v4935, %v5108
        %v5134 = vmul.f32 %v4936, %v5108
        %v5135 = vmul.f32 %v4937, %v5109
        %v5136 = vmul.f32 %v4938, %v5109
        %v5137 = vmul.f32 %v4939, %v5110
        %v5138 = vmul.f32 %v4940, %v5110
        %v5139 = vmul.f32 %v4941, %v5111
        %v5140 = vmul.f32 %v4942, %v5111
        %v5141 = vmul.f32 %v4943, %v5112
        %v5142 = vmul.f32 %v4944, %v5112
        %v5143 = vmul.f32 %v4945, %v5113
        %v5144 = vmul.f32 %v4946, %v5113
        %v5145 = vmul.f32 %v4947, %v5114
        %v5146 = vmul.f32 %v4948, %v5114
        %v5147 = vmul.f32 %v4949, %v5115
        %v5148 = vmul.f32 %v4950, %v5115
        %v5149 = vmul.f32 %v4951, %v5116
        %v5150 = vmul.f32 %v4952, %v5116
        %v5151 = vmul.f32 %v4953, %v5117
        %v5152 = vmul.f32 %v4954, %v5117
        %v5153 = vmul.f32 %v4955, %v5118
        %v5154 = vmul.f32 %v4956, %v5118
        %v5156 = vlaneseq
        %v5157 = vshrl.u32 %v5156, 7
        %v5158 = vsub.s32 0, %v5157
        %v5159 = vrot.slane %v4829, %v5158
        %v5160 = vlaneseq
        %v5161 = vshrl.u32 %v5160, 7
        %v5162 = vsub.s32 1, %v5161
        %v5163 = vrot.slane %v4829, %v5162
        %v5166 = vmul.f32 %v5119, %v5159
        %v5167 = vmul.f32 %v5120, %v5163
        %v5168 = vmul.f32 %v5121, %v5159
        %v5169 = vmul.f32 %v5122, %v5163
        %v5170 = vmul.f32 %v5123, %v5159
        %v5171 = vmul.f32 %v5124, %v5163
        %v5172 = vmul.f32 %v5125, %v5159
        %v5173 = vmul.f32 %v5126, %v5163
        %v5174 = vmul.f32 %v5127, %v5159
        %v5175 = vmul.f32 %v5128, %v5163
        %v5176 = vmul.f32 %v5129, %v5159
        %v5177 = vmul.f32 %v5130, %v5163
        %v5178 = vmul.f32 %v5131, %v5159
        %v5179 = vmul.f32 %v5132, %v5163
        %v5180 = vmul.f32 %v5133, %v5159
        %v5181 = vmul.f32 %v5134, %v5163
        %v5182 = vmul.f32 %v5135, %v5159
        %v5183 = vmul.f32 %v5136, %v5163
        %v5184 = vmul.f32 %v5137, %v5159
        %v5185 = vmul.f32 %v5138, %v5163
        %v5186 = vmul.f32 %v5139, %v5159
        %v5187 = vmul.f32 %v5140, %v5163
        %v5188 = vmul.f32 %v5141, %v5159
        %v5189 = vmul.f32 %v5142, %v5163
        %v5190 = vmul.f32 %v5143, %v5159
        %v5191 = vmul.f32 %v5144, %v5163
        %v5192 = vmul.f32 %v5145, %v5159
        %v5193 = vmul.f32 %v5146, %v5163
        %v5194 = vmul.f32 %v5147, %v5159
        %v5195 = vmul.f32 %v5148, %v5163
        %v5196 = vmul.f32 %v5149, %v5159
        %v5197 = vmul.f32 %v5150, %v5163
        %v5198 = vmul.f32 %v5151, %v5159
        %v5199 = vmul.f32 %v5152, %v5163
        %v5200 = vmul.f32 %v5153, %v5159
        %v5201 = vmul.f32 %v5154, %v5163
        %v5203 = vlaneseq
        %v5204 = vshrl.u32 %v5203, 7
        %v5205 = vsub.s32 0, %v5204
        %v5206 = vrot.slane %v4830, %v5205
        %v5207 = vlaneseq
        %v5208 = vshrl.u32 %v5207, 7
        %v5209 = vsub.s32 1, %v5208
        %v5210 = vrot.slane %v4830, %v5209
        %v5213 = vadd.f32 %v5166, %v5206
        %v5214 = vadd.f32 %v5167, %v5210
        %v5215 = vadd.f32 %v5168, %v5206
        %v5216 = vadd.f32 %v5169, %v5210
        %v5217 = vadd.f32 %v5170, %v5206
        %v5218 = vadd.f32 %v5171, %v5210
        %v5219 = vadd.f32 %v5172, %v5206
        %v5220 = vadd.f32 %v5173, %v5210
        %v5221 = vadd.f32 %v5174, %v5206
        %v5222 = vadd.f32 %v5175, %v5210
        %v5223 = vadd.f32 %v5176, %v5206
        %v5224 = vadd.f32 %v5177, %v5210
        %v5225 = vadd.f32 %v5178, %v5206
        %v5226 = vadd.f32 %v5179, %v5210
        %v5227 = vadd.f32 %v5180, %v5206
        %v5228 = vadd.f32 %v5181, %v5210
        %v5229 = vadd.f32 %v5182, %v5206
        %v5230 = vadd.f32 %v5183, %v5210
        %v5231 = vadd.f32 %v5184, %v5206
        %v5232 = vadd.f32 %v5185, %v5210
        %v5233 = vadd.f32 %v5186, %v5206
        %v5234 = vadd.f32 %v5187, %v5210
        %v5235 = vadd.f32 %v5188, %v5206
        %v5236 = vadd.f32 %v5189, %v5210
        %v5237 = vadd.f32 %v5190, %v5206
        %v5238 = vadd.f32 %v5191, %v5210
        %v5239 = vadd.f32 %v5192, %v5206
        %v5240 = vadd.f32 %v5193, %v5210
        %v5241 = vadd.f32 %v5194, %v5206
        %v5242 = vadd.f32 %v5195, %v5210
        %v5243 = vadd.f32 %v5196, %v5206
        %v5244 = vadd.f32 %v5197, %v5210
        %v5245 = vadd.f32 %v5198, %v5206
        %v5246 = vadd.f32 %v5199, %v5210
        %v5247 = vadd.f32 %v5200, %v5206
        %v5248 = vadd.f32 %v5201, %v5210
        %v5249 = vpack.c.bf16 %v5215, %v5213
        %v5250 = vpack.c.bf16 %v5216, %v5214
        %v5251 = vpack.c.bf16 %v5219, %v5217
        %v5252 = vpack.c.bf16 %v5220, %v5218
        %v5253 = vpack.c.bf16 %v5223, %v5221
        %v5254 = vpack.c.bf16 %v5224, %v5222
        %v5255 = vpack.c.bf16 %v5227, %v5225
        %v5256 = vpack.c.bf16 %v5228, %v5226
        %v5257 = vpack.c.bf16 %v5231, %v5229
        %v5258 = vpack.c.bf16 %v5232, %v5230
        %v5259 = vpack.c.bf16 %v5235, %v5233
        %v5260 = vpack.c.bf16 %v5236, %v5234
        %v5261 = vpack.c.bf16 %v5239, %v5237
        %v5262 = vpack.c.bf16 %v5240, %v5238
        %v5263 = vpack.c.bf16 %v5243, %v5241
        %v5264 = vpack.c.bf16 %v5244, %v5242
        %v5265 = vpack.c.bf16 %v5247, %v5245
        %v5266 = vpack.c.bf16 %v5248, %v5246
        %v5267 = vld [vmem:[%s647] sm:$0xff]
        %v5268 = vld [vmem:[%s647 + $0x8] sm:$0xff]
        %v5269 = vld [vmem:[%s647 + $0x10] sm:$0xff]
        %v5270 = vld [vmem:[%s647 + $0x18] sm:$0xff]
        %v5271 = vld [vmem:[%s647 + $0x20] sm:$0xff]
        %v5272 = vld [vmem:[%s647 + $0x28] sm:$0xff]
        %v5273 = vld [vmem:[%s647 + $0x30] sm:$0xff]
        %v5274 = vld [vmem:[%s647 + $0x38] sm:$0xff]
        %v5275 = vld [vmem:[%s647 + $0x40] sm:$0xff]
        %v5276 = vld [vmem:[%s647 + $0x48] sm:$0xff]
        %v5277 = vld [vmem:[%s647 + $0x50] sm:$0xff]
        %v5278 = vld [vmem:[%s647 + $0x58] sm:$0xff]
        %v5279 = vld [vmem:[%s647 + $0x60] sm:$0xff]
        %v5280 = vld [vmem:[%s647 + $0x68] sm:$0xff]
        %v5281 = vld [vmem:[%s647 + $0x70] sm:$0xff]
        %v5282 = vld [vmem:[%s647 + $0x78] sm:$0xff]
        %v5283 = vld [vmem:[%s647 + $0x80] sm:$0xff]
        %v5284 = vld [vmem:[%s647 + $0x88] sm:$0xff]
        %v5285 = vld [vmem:[%s647 + $0x90] sm:$0xff]
        %v5286 = vld [vmem:[%s647 + $0x98] sm:$0xff]
        %v5287 = vld [vmem:[%s647 + $0xa0] sm:$0xff]
        %v5288 = vld [vmem:[%s647 + $0xa8] sm:$0xff]
        %v5289 = vld [vmem:[%s647 + $0xb0] sm:$0xff]
        %v5290 = vld [vmem:[%s647 + $0xb8] sm:$0xff]
        %v5291 = vld [vmem:[%s647 + $0xc0] sm:$0xff]
        %v5292 = vld [vmem:[%s647 + $0xc8] sm:$0xff]
        %v5293 = vld [vmem:[%s647 + $0xd0] sm:$0xff]
        %v5294 = vld [vmem:[%s647 + $0xd8] sm:$0xff]
        %v5295 = vld [vmem:[%s647 + $0xe0] sm:$0xff]
        %v5296 = vld [vmem:[%s647 + $0xe8] sm:$0xff]
        %v5297 = vld [vmem:[%s647 + $0xf0] sm:$0xff]
        %v5298 = vld [vmem:[%s647 + $0xf8] sm:$0xff]
        %v5299 = vld [vmem:[%s647 + $0x100] sm:$0xff]
        %v5300 = vld [vmem:[%s647 + $0x108] sm:$0xff]
        %v5301 = vld [vmem:[%s647 + $0x110] sm:$0xff]
        %v5302 = vld [vmem:[%s647 + $0x118] sm:$0xff]
        %v5303 = vld [vmem:[%s647 + $0x120] sm:$0xff]
        %v5304 = vld [vmem:[%s647 + $0x128] sm:$0xff]
        %v5305 = vld [vmem:[%s647 + $0x130] sm:$0xff]
        %v5306 = vld [vmem:[%s647 + $0x138] sm:$0xff]
        %v5307 = vld [vmem:[%s647 + $0x140] sm:$0xff]
        %v5308 = vld [vmem:[%s647 + $0x148] sm:$0xff]
        %v5309 = vld [vmem:[%s647 + $0x150] sm:$0xff]
        %v5310 = vld [vmem:[%s647 + $0x158] sm:$0xff]
        %v5311 = vld [vmem:[%s647 + $0x160] sm:$0xff]
        %v5312 = vld [vmem:[%s647 + $0x168] sm:$0xff]
        %v5313 = vld [vmem:[%s647 + $0x170] sm:$0xff]
        %v5314 = vld [vmem:[%s647 + $0x178] sm:$0xff]
        %v5315 = vld [vmem:[%s647 + $0x180] sm:$0xff]
        %v5316 = vld [vmem:[%s647 + $0x188] sm:$0xff]
        %v5317 = vld [vmem:[%s647 + $0x190] sm:$0xff]
        %v5318 = vld [vmem:[%s647 + $0x198] sm:$0xff]
        %v5319 = vld [vmem:[%s647 + $0x1a0] sm:$0xff]
        %v5320 = vld [vmem:[%s647 + $0x1a8] sm:$0xff]
        %v5321 = vld [vmem:[%s647 + $0x1b0] sm:$0xff]
        %v5322 = vld [vmem:[%s647 + $0x1b8] sm:$0xff]
        %v5323 = vld [vmem:[%s647 + $0x1c0] sm:$0xff]
        %v5324 = vld [vmem:[%s647 + $0x1c8] sm:$0xff]
        %v5325 = vld [vmem:[%s647 + $0x1d0] sm:$0xff]
        %v5326 = vld [vmem:[%s647 + $0x1d8] sm:$0xff]
        %v5327 = vld [vmem:[%s647 + $0x1e0] sm:$0xff]
        %v5328 = vld [vmem:[%s647 + $0x1e8] sm:$0xff]
        %v5329 = vld [vmem:[%s647 + $0x1f0] sm:$0xff]
        %v5330 = vld [vmem:[%s647 + $0x1f8] sm:$0xff]
        %v5331 = vld [vmem:[%s647 + $0x200] sm:$0xff]
        %v5332 = vld [vmem:[%s647 + $0x208] sm:$0xff]
        %v5333 = vld [vmem:[%s647 + $0x210] sm:$0xff]
        %v5334 = vld [vmem:[%s647 + $0x218] sm:$0xff]
        %v5335 = vld [vmem:[%s647 + $0x220] sm:$0xff]
        %v5336 = vld [vmem:[%s647 + $0x228] sm:$0xff]
        %v5337 = vld [vmem:[%s647 + $0x230] sm:$0xff]
        %v5338 = vld [vmem:[%s647 + $0x238] sm:$0xff]
        %v5339 = vld [vmem:[%s651] sm:$0x3f]
        %v5341 = vlaneseq
        %v5342 = vshrl.u32 %v5341, 7
        %v5343 = vsub.s32 0, %v5342
        %v5344 = vrot.slane %v5339, %v5343
        %v5345 = vlaneseq
        %v5346 = vshrl.u32 %v5345, 7
        %v5347 = vsub.s32 1, %v5346
        %v5348 = vrot.slane %v5339, %v5347
        %v5349 = vlaneseq
        %v5350 = vshrl.u32 %v5349, 7
        %v5351 = vsub.s32 2, %v5350
        %v5352 = vrot.slane %v5339, %v5351
        %v5353 = vlaneseq
        %v5354 = vshrl.u32 %v5353, 7
        %v5355 = vsub.s32 3, %v5354
        %v5356 = vrot.slane %v5339, %v5355
        %v5357 = vlaneseq
        %v5358 = vshrl.u32 %v5357, 7
        %v5359 = vsub.s32 4, %v5358
        %v5360 = vrot.slane %v5339, %v5359
        %v5361 = vlaneseq
        %v5362 = vshrl.u32 %v5361, 7
        %v5363 = vsub.s32 5, %v5362
        %v5364 = vrot.slane %v5339, %v5363
        %v5443 = vunpack.c.l.b16 %v5267
        %v5444 = vunpack.c.h.b16 %v5267
        %v5445 = vunpack.c.l.b16 %v5268
        %v5446 = vunpack.c.h.b16 %v5268
        %v5447 = vunpack.c.l.b16 %v5269
        %v5448 = vunpack.c.h.b16 %v5269
        %v5449 = vunpack.c.l.b16 %v5270
        %v5450 = vunpack.c.h.b16 %v5270
        %v5451 = vunpack.c.l.b16 %v5271
        %v5452 = vunpack.c.h.b16 %v5271
        %v5453 = vunpack.c.l.b16 %v5272
        %v5454 = vunpack.c.h.b16 %v5272
        %v5455 = vunpack.c.l.b16 %v5273
        %v5456 = vunpack.c.h.b16 %v5273
        %v5457 = vunpack.c.l.b16 %v5274
        %v5458 = vunpack.c.h.b16 %v5274
        %v5459 = vunpack.c.l.b16 %v5275
        %v5460 = vunpack.c.h.b16 %v5275
        %v5461 = vunpack.c.l.b16 %v5276
        %v5462 = vunpack.c.h.b16 %v5276
        %v5463 = vunpack.c.l.b16 %v5277
        %v5464 = vunpack.c.h.b16 %v5277
        %v5465 = vunpack.c.l.b16 %v5278
        %v5466 = vunpack.c.h.b16 %v5278
        %v5467 = vunpack.c.l.b16 %v5279
        %v5468 = vunpack.c.h.b16 %v5279
        %v5469 = vunpack.c.l.b16 %v5280
        %v5470 = vunpack.c.h.b16 %v5280
        %v5471 = vunpack.c.l.b16 %v5281
        %v5472 = vunpack.c.h.b16 %v5281
        %v5473 = vunpack.c.l.b16 %v5282
        %v5474 = vunpack.c.h.b16 %v5282
        %v5475 = vunpack.c.l.b16 %v5283
        %v5476 = vunpack.c.h.b16 %v5283
        %v5477 = vunpack.c.l.b16 %v5284
        %v5478 = vunpack.c.h.b16 %v5284
        %v5479 = vunpack.c.l.b16 %v5285
        %v5480 = vunpack.c.h.b16 %v5285
        %v5481 = vunpack.c.l.b16 %v5286
        %v5482 = vunpack.c.h.b16 %v5286
        %v5483 = vunpack.c.l.b16 %v5287
        %v5484 = vunpack.c.h.b16 %v5287
        %v5485 = vunpack.c.l.b16 %v5288
        %v5486 = vunpack.c.h.b16 %v5288
        %v5487 = vunpack.c.l.b16 %v5289
        %v5488 = vunpack.c.h.b16 %v5289
        %v5489 = vunpack.c.l.b16 %v5290
        %v5490 = vunpack.c.h.b16 %v5290
        %v5491 = vunpack.c.l.b16 %v5291
        %v5492 = vunpack.c.h.b16 %v5291
        %v5493 = vunpack.c.l.b16 %v5292
        %v5494 = vunpack.c.h.b16 %v5292
        %v5495 = vunpack.c.l.b16 %v5293
        %v5496 = vunpack.c.h.b16 %v5293
        %v5497 = vunpack.c.l.b16 %v5294
        %v5498 = vunpack.c.h.b16 %v5294
        %v5499 = vunpack.c.l.b16 %v5295
        %v5500 = vunpack.c.h.b16 %v5295
        %v5501 = vunpack.c.l.b16 %v5296
        %v5502 = vunpack.c.h.b16 %v5296
        %v5503 = vunpack.c.l.b16 %v5297
        %v5504 = vunpack.c.h.b16 %v5297
        %v5505 = vunpack.c.l.b16 %v5298
        %v5506 = vunpack.c.h.b16 %v5298
        %v5507 = vunpack.c.l.b16 %v5299
        %v5508 = vunpack.c.h.b16 %v5299
        %v5509 = vunpack.c.l.b16 %v5300
        %v5510 = vunpack.c.h.b16 %v5300
        %v5511 = vunpack.c.l.b16 %v5301
        %v5512 = vunpack.c.h.b16 %v5301
        %v5513 = vunpack.c.l.b16 %v5302
        %v5514 = vunpack.c.h.b16 %v5302
        %v5515 = vunpack.c.l.b16 %v5303
        %v5516 = vunpack.c.h.b16 %v5303
        %v5517 = vunpack.c.l.b16 %v5304
        %v5518 = vunpack.c.h.b16 %v5304
        %v5519 = vunpack.c.l.b16 %v5305
        %v5520 = vunpack.c.h.b16 %v5305
        %v5521 = vunpack.c.l.b16 %v5306
        %v5522 = vunpack.c.h.b16 %v5306
        %v5523 = vunpack.c.l.b16 %v5307
        %v5524 = vunpack.c.h.b16 %v5307
        %v5525 = vunpack.c.l.b16 %v5308
        %v5526 = vunpack.c.h.b16 %v5308
        %v5527 = vunpack.c.l.b16 %v5309
        %v5528 = vunpack.c.h.b16 %v5309
        %v5529 = vunpack.c.l.b16 %v5310
        %v5530 = vunpack.c.h.b16 %v5310
        %v5531 = vunpack.c.l.b16 %v5311
        %v5532 = vunpack.c.h.b16 %v5311
        %v5533 = vunpack.c.l.b16 %v5312
        %v5534 = vunpack.c.h.b16 %v5312
        %v5535 = vunpack.c.l.b16 %v5313
        %v5536 = vunpack.c.h.b16 %v5313
        %v5537 = vunpack.c.l.b16 %v5314
        %v5538 = vunpack.c.h.b16 %v5314
        %v5539 = vunpack.c.l.b16 %v5315
        %v5540 = vunpack.c.h.b16 %v5315
        %v5541 = vunpack.c.l.b16 %v5316
        %v5542 = vunpack.c.h.b16 %v5316
        %v5543 = vunpack.c.l.b16 %v5317
        %v5544 = vunpack.c.h.b16 %v5317
        %v5545 = vunpack.c.l.b16 %v5318
        %v5546 = vunpack.c.h.b16 %v5318
        %v5547 = vunpack.c.l.b16 %v5319
        %v5548 = vunpack.c.h.b16 %v5319
        %v5549 = vunpack.c.l.b16 %v5320
        %v5550 = vunpack.c.h.b16 %v5320
        %v5551 = vunpack.c.l.b16 %v5321
        %v5552 = vunpack.c.h.b16 %v5321
        %v5553 = vunpack.c.l.b16 %v5322
        %v5554 = vunpack.c.h.b16 %v5322
        %v5555 = vunpack.c.l.b16 %v5323
        %v5556 = vunpack.c.h.b16 %v5323
        %v5557 = vunpack.c.l.b16 %v5324
        %v5558 = vunpack.c.h.b16 %v5324
        %v5559 = vunpack.c.l.b16 %v5325
        %v5560 = vunpack.c.h.b16 %v5325
        %v5561 = vunpack.c.l.b16 %v5326
        %v5562 = vunpack.c.h.b16 %v5326
        %v5563 = vunpack.c.l.b16 %v5327
        %v5564 = vunpack.c.h.b16 %v5327
        %v5565 = vunpack.c.l.b16 %v5328
        %v5566 = vunpack.c.h.b16 %v5328
        %v5567 = vunpack.c.l.b16 %v5329
        %v5568 = vunpack.c.h.b16 %v5329
        %v5569 = vunpack.c.l.b16 %v5330
        %v5570 = vunpack.c.h.b16 %v5330
        %v5571 = vunpack.c.l.b16 %v5331
        %v5572 = vunpack.c.h.b16 %v5331
        %v5573 = vunpack.c.l.b16 %v5332
        %v5574 = vunpack.c.h.b16 %v5332
        %v5575 = vunpack.c.l.b16 %v5333
        %v5576 = vunpack.c.h.b16 %v5333
        %v5577 = vunpack.c.l.b16 %v5334
        %v5578 = vunpack.c.h.b16 %v5334
        %v5579 = vunpack.c.l.b16 %v5335
        %v5580 = vunpack.c.h.b16 %v5335
        %v5581 = vunpack.c.l.b16 %v5336
        %v5582 = vunpack.c.h.b16 %v5336
        %v5583 = vunpack.c.l.b16 %v5337
        %v5584 = vunpack.c.h.b16 %v5337
        %v5585 = vunpack.c.l.b16 %v5338
        %v5586 = vunpack.c.h.b16 %v5338
        %v5587 = vpack.c.b16 %v5449, %v5443
        %v5588 = vpack.c.b16 %v5450, %v5444
        %v5589 = vpack.c.b16 %v5451, %v5445
        %v5590 = vpack.c.b16 %v5452, %v5446
        %v5591 = vpack.c.b16 %v5453, %v5447
        %v5592 = vpack.c.b16 %v5454, %v5448
        %v5593 = vpack.c.b16 %v5461, %v5455
        %v5594 = vpack.c.b16 %v5462, %v5456
        %v5595 = vpack.c.b16 %v5463, %v5457
        %v5596 = vpack.c.b16 %v5464, %v5458
        %v5597 = vpack.c.b16 %v5465, %v5459
        %v5598 = vpack.c.b16 %v5466, %v5460
        %v5599 = vpack.c.b16 %v5473, %v5467
        %v5600 = vpack.c.b16 %v5474, %v5468
        %v5601 = vpack.c.b16 %v5475, %v5469
        %v5602 = vpack.c.b16 %v5476, %v5470
        %v5603 = vpack.c.b16 %v5477, %v5471
        %v5604 = vpack.c.b16 %v5478, %v5472
        %v5605 = vpack.c.b16 %v5485, %v5479
        %v5606 = vpack.c.b16 %v5486, %v5480
        %v5607 = vpack.c.b16 %v5487, %v5481
        %v5608 = vpack.c.b16 %v5488, %v5482
        %v5609 = vpack.c.b16 %v5489, %v5483
        %v5610 = vpack.c.b16 %v5490, %v5484
        %v5611 = vpack.c.b16 %v5497, %v5491
        %v5612 = vpack.c.b16 %v5498, %v5492
        %v5613 = vpack.c.b16 %v5499, %v5493
        %v5614 = vpack.c.b16 %v5500, %v5494
        %v5615 = vpack.c.b16 %v5501, %v5495
        %v5616 = vpack.c.b16 %v5502, %v5496
        %v5617 = vpack.c.b16 %v5509, %v5503
        %v5618 = vpack.c.b16 %v5510, %v5504
        %v5619 = vpack.c.b16 %v5511, %v5505
        %v5620 = vpack.c.b16 %v5512, %v5506
        %v5621 = vpack.c.b16 %v5513, %v5507
        %v5622 = vpack.c.b16 %v5514, %v5508
        %v5623 = vpack.c.b16 %v5521, %v5515
        %v5624 = vpack.c.b16 %v5522, %v5516
        %v5625 = vpack.c.b16 %v5523, %v5517
        %v5626 = vpack.c.b16 %v5524, %v5518
        %v5627 = vpack.c.b16 %v5525, %v5519
        %v5628 = vpack.c.b16 %v5526, %v5520
        %v5629 = vpack.c.b16 %v5533, %v5527
        %v5630 = vpack.c.b16 %v5534, %v5528
        %v5631 = vpack.c.b16 %v5535, %v5529
        %v5632 = vpack.c.b16 %v5536, %v5530
        %v5633 = vpack.c.b16 %v5537, %v5531
        %v5634 = vpack.c.b16 %v5538, %v5532
        %v5635 = vpack.c.b16 %v5545, %v5539
        %v5636 = vpack.c.b16 %v5546, %v5540
        %v5637 = vpack.c.b16 %v5547, %v5541
        %v5638 = vpack.c.b16 %v5548, %v5542
        %v5639 = vpack.c.b16 %v5549, %v5543
        %v5640 = vpack.c.b16 %v5550, %v5544
        %v5641 = vpack.c.b16 %v5557, %v5551
        %v5642 = vpack.c.b16 %v5558, %v5552
        %v5643 = vpack.c.b16 %v5559, %v5553
        %v5644 = vpack.c.b16 %v5560, %v5554
        %v5645 = vpack.c.b16 %v5561, %v5555
        %v5646 = vpack.c.b16 %v5562, %v5556
        %v5647 = vpack.c.b16 %v5569, %v5563
        %v5648 = vpack.c.b16 %v5570, %v5564
        %v5649 = vpack.c.b16 %v5571, %v5565
        %v5650 = vpack.c.b16 %v5572, %v5566
        %v5651 = vpack.c.b16 %v5573, %v5567
        %v5652 = vpack.c.b16 %v5574, %v5568
        %v5653 = vpack.c.b16 %v5581, %v5575
        %v5654 = vpack.c.b16 %v5582, %v5576
        %v5655 = vpack.c.b16 %v5583, %v5577
        %v5656 = vpack.c.b16 %v5584, %v5578
        %v5657 = vpack.c.b16 %v5585, %v5579
        %v5658 = vpack.c.b16 %v5586, %v5580
        %v5732 = vsel %vm793, %v5250, 0
        %v5735 = vsel %vm793, %v5252, 0
        %v5738 = vsel %vm793, %v5254, 0
        %v5741 = vsel %vm793, %v5256, 0
        %v5744 = vsel %vm793, %v5258, 0
        %v5747 = vsel %vm793, %v5260, 0
        %v5750 = vsel %vm793, %v5262, 0
        %v5753 = vsel %vm793, %v5264, 0
        %v5756 = vsel %vm793, %v5266, 0
        %5758 = vmatprep.subr.bf16.mxu0 %v5588
        %5759 = vmatpush1.bf16.msra.mxu0 %v5587
        %5760 = vmatprep.subr.bf16.mxu0 %v5594
        %5761 = vmatpush1.bf16.msra.mxu0 %v5593
        %5762 = vmatprep.subr.bf16.mxu0 %v5600
        %5763 = vmatpush1.bf16.msra.mxu0 %v5599
        %5764 = vmatprep.subr.bf16.mxu0 %v5606
        %5765 = vmatpush1.bf16.msra.mxu0 %v5605
        %5766 = vmatprep.subr.bf16.mxu0 %v5612
        %5767 = vmatpush1.bf16.msra.mxu0 %v5611
        %5768 = vmatprep.subr.bf16.mxu0 %v5618
        %5769 = vmatpush1.bf16.msra.mxu0 %v5617
        %5770 = vmatprep.subr.bf16.mxu0 %v5624
        %5771 = vmatpush1.bf16.msra.mxu0 %v5623
        %5772 = vmatprep.subr.bf16.mxu0 %v5630
        %5773 = vmatpush1.bf16.msra.mxu0 %v5629
        %5774 = vmatprep.subr.bf16.mxu0 %v5636
        %5775 = vmatpush1.bf16.msra.mxu0 %v5635
        %5776 = vmatprep.subr.bf16.mxu0 %v5642
        %5777 = vmatpush1.bf16.msra.mxu0 %v5641
        %5778 = vmatprep.subr.bf16.mxu0 %v5648
        %5779 = vmatpush1.bf16.msra.mxu0 %v5647
        %5780 = vmatprep.subr.bf16.mxu0 %v5654
        %5781 = vmatpush1.bf16.msra.mxu0 %v5653
        %5782 = vmatprep.subr.bf16.mxu0 0
        %5783 = vmatpush1.bf16.msra.mxu0 0
        %5784 = vmatprep.subr.bf16.mxu0 0
        %5785 = vmatpush1.bf16.msra.mxu0 0
        %5786 = vmatprep.subr.bf16.mxu0 0
        %5787 = vmatpush1.bf16.msra.mxu0 0
        %5788 = vmatprep.subr.bf16.mxu0 0
        %5789 = vmatpush1.bf16.msra.mxu0 0
        %5790 = vmatprep.mubr.bf16.mxu0 %v5732
        %5791 = vmatmul.mubr.bf16.gmra.mrb[0].mxu0 %v5249
        %v5792 = vpop.f32.mrb[0].mxu0
        %v5793 = vadd.f32 %v5344, %v5792
        %v5794 = vpop.f32.mrb[0].mxu0
        %v5795 = vadd.f32 %v5348, %v5794
        %v5796 = vpop.f32.mrb[0].mxu0
        %v5797 = vadd.f32 %v5344, %v5796
        %v5798 = vpop.f32.mrb[0].mxu0
        %v5799 = vadd.f32 %v5348, %v5798
        %5800 = vmatprep.mubr.bf16.mxu0 %v5735
        %5801 = vmatmul.mubr.bf16.gmra.mrb[0].mxu0 %v5251
        %v5802 = vpop.f32.mrb[0].mxu0
        %v5803 = vadd.f32 %v5344, %v5802
        %v5804 = vpop.f32.mrb[0].mxu0
        %v5805 = vadd.f32 %v5348, %v5804
        %v5806 = vpop.f32.mrb[0].mxu0
        %v5807 = vadd.f32 %v5344, %v5806
        %v5808 = vpop.f32.mrb[0].mxu0
        %v5809 = vadd.f32 %v5348, %v5808
        %5810 = vmatprep.mubr.bf16.mxu0 %v5738
        %5811 = vmatmul.mubr.bf16.gmra.mrb[0].mxu0 %v5253
        %v5812 = vpop.f32.mrb[0].mxu0
        %v5813 = vadd.f32 %v5344, %v5812
        %v5814 = vpop.f32.mrb[0].mxu0
        %v5815 = vadd.f32 %v5348, %v5814
        %v5816 = vpop.f32.mrb[0].mxu0
        %v5817 = vadd.f32 %v5344, %v5816
        %v5818 = vpop.f32.mrb[0].mxu0
        %v5819 = vadd.f32 %v5348, %v5818
        %5820 = vmatprep.mubr.bf16.mxu0 %v5741
        %5821 = vmatmul.mubr.bf16.gmra.mrb[0].mxu0 %v5255
        %v5822 = vpop.f32.mrb[0].mxu0
        %v5823 = vadd.f32 %v5344, %v5822
        %v5824 = vpop.f32.mrb[0].mxu0
        %v5825 = vadd.f32 %v5348, %v5824
        %v5826 = vpop.f32.mrb[0].mxu0
        %v5827 = vadd.f32 %v5344, %v5826
        %v5828 = vpop.f32.mrb[0].mxu0
        %v5829 = vadd.f32 %v5348, %v5828
        %5830 = vmatprep.mubr.bf16.mxu0 %v5744
        %5831 = vmatmul.mubr.bf16.gmra.mrb[0].mxu0 %v5257
        %v5832 = vpop.f32.mrb[0].mxu0
        %v5833 = vadd.f32 %v5344, %v5832
        %v5834 = vpop.f32.mrb[0].mxu0
        %v5835 = vadd.f32 %v5348, %v5834
        %v5836 = vpop.f32.mrb[0].mxu0
        %v5837 = vadd.f32 %v5344, %v5836
        %v5838 = vpop.f32.mrb[0].mxu0
        %v5839 = vadd.f32 %v5348, %v5838
        %5840 = vmatprep.mubr.bf16.mxu0 %v5747
        %5841 = vmatmul.mubr.bf16.gmra.mrb[0].mxu0 %v5259
        %v5842 = vpop.f32.mrb[0].mxu0
        %v5843 = vadd.f32 %v5344, %v5842
        %v5844 = vpop.f32.mrb[0].mxu0
        %v5845 = vadd.f32 %v5348, %v5844
        %v5846 = vpop.f32.mrb[0].mxu0
        %v5847 = vadd.f32 %v5344, %v5846
        %v5848 = vpop.f32.mrb[0].mxu0
        %v5849 = vadd.f32 %v5348, %v5848
        %5850 = vmatprep.mubr.bf16.mxu0 %v5750
        %5851 = vmatmul.mubr.bf16.gmra.mrb[0].mxu0 %v5261
        %v5852 = vpop.f32.mrb[0].mxu0
        %v5853 = vadd.f32 %v5344, %v5852
        %v5854 = vpop.f32.mrb[0].mxu0
        %v5855 = vadd.f32 %v5348, %v5854
        %v5856 = vpop.f32.mrb[0].mxu0
        %v5857 = vadd.f32 %v5344, %v5856
        %v5858 = vpop.f32.mrb[0].mxu0
        %v5859 = vadd.f32 %v5348, %v5858
        %5860 = vmatprep.mubr.bf16.mxu0 %v5753
        %5861 = vmatmul.mubr.bf16.gmra.mrb[0].mxu0 %v5263
        %v5862 = vpop.f32.mrb[0].mxu0
        %v5863 = vadd.f32 %v5344, %v5862
        %v5864 = vpop.f32.mrb[0].mxu0
        %v5865 = vadd.f32 %v5348, %v5864
        %v5866 = vpop.f32.mrb[0].mxu0
        %v5867 = vadd.f32 %v5344, %v5866
        %v5868 = vpop.f32.mrb[0].mxu0
        %v5869 = vadd.f32 %v5348, %v5868
        %5870 = vmatprep.mubr.bf16.mxu0 %v5756
        %5871 = vmatmul.mubr.bf16.gmra.mrb[0].mxu0 %v5265
        %v5872 = vpop.f32.mrb[0].mxu0
        %v5873 = vadd.f32 %v5344, %v5872
        %v5874 = vpop.f32.mrb[0].mxu0
        %v5875 = vadd.f32 %v5348, %v5874
        %v5876 = vpop.f32.mrb[0].mxu0
        %v5877 = vadd.f32 %v5344, %v5876
        %v5878 = vpop.f32.mrb[0].mxu0
        %v5879 = vadd.f32 %v5348, %v5878
        %5880 = vdwg.mxu0
        %5881 = vmatprep.subr.bf16.mxu0 %v5590
        %5882 = vmatpush1.bf16.msra.mxu0 %v5589
        %5883 = vmatprep.subr.bf16.mxu0 %v5596
        %5884 = vmatpush1.bf16.msra.mxu0 %v5595
        %5885 = vmatprep.subr.bf16.mxu0 %v5602
        %5886 = vmatpush1.bf16.msra.mxu0 %v5601
        %5887 = vmatprep.subr.bf16.mxu0 %v5608
        %5888 = vmatpush1.bf16.msra.mxu0 %v5607
        %5889 = vmatprep.subr.bf16.mxu0 %v5614
        %5890 = vmatpush1.bf16.msra.mxu0 %v5613
        %5891 = vmatprep.subr.bf16.mxu0 %v5620
        %5892 = vmatpush1.bf16.msra.mxu0 %v5619
        %5893 = vmatprep.subr.bf16.mxu0 %v5626
        %5894 = vmatpush1.bf16.msra.mxu0 %v5625
        %5895 = vmatprep.subr.bf16.mxu0 %v5632
        %5896 = vmatpush1.bf16.msra.mxu0 %v5631
        %5897 = vmatprep.subr.bf16.mxu0 %v5638
        %5898 = vmatpush1.bf16.msra.mxu0 %v5637
        %5899 = vmatprep.subr.bf16.mxu0 %v5644
        %5900 = vmatpush1.bf16.msra.mxu0 %v5643
        %5901 = vmatprep.subr.bf16.mxu0 %v5650
        %5902 = vmatpush1.bf16.msra.mxu0 %v5649
        %5903 = vmatprep.subr.bf16.mxu0 %v5656
        %5904 = vmatpush1.bf16.msra.mxu0 %v5655
        %5905 = vmatprep.subr.bf16.mxu0 0
        %5906 = vmatpush1.bf16.msra.mxu0 0
        %5907 = vmatprep.subr.bf16.mxu0 0
        %5908 = vmatpush1.bf16.msra.mxu0 0
        %5909 = vmatprep.subr.bf16.mxu0 0
        %5910 = vmatpush1.bf16.msra.mxu0 0
        %5911 = vmatprep.subr.bf16.mxu0 0
        %5912 = vmatpush1.bf16.msra.mxu0 0
        %5913 = vmatprep.mubr.bf16.mxu0 %v5732
        %5914 = vmatmul.mubr.bf16.gmra.mrb[0].mxu0 %v5249
        %v5915 = vpop.f32.mrb[0].mxu0
        %v5916 = vadd.f32 %v5352, %v5915
        %v5917 = vpop.f32.mrb[0].mxu0
        %v5918 = vadd.f32 %v5356, %v5917
        %v5919 = vpop.f32.mrb[0].mxu0
        %v5920 = vadd.f32 %v5352, %v5919
        %v5921 = vpop.f32.mrb[0].mxu0
        %v5922 = vadd.f32 %v5356, %v5921
        %5923 = vmatprep.mubr.bf16.mxu0 %v5735
        %5924 = vmatmul.mubr.bf16.gmra.mrb[0].mxu0 %v5251
        %v5925 = vpop.f32.mrb[0].mxu0
        %v5926 = vadd.f32 %v5352, %v5925
        %v5927 = vpop.f32.mrb[0].mxu0
        %v5928 = vadd.f32 %v5356, %v5927
        %v5929 = vpop.f32.mrb[0].mxu0
        %v5930 = vadd.f32 %v5352, %v5929
        %v5931 = vpop.f32.mrb[0].mxu0
        %v5932 = vadd.f32 %v5356, %v5931
        %5933 = vmatprep.mubr.bf16.mxu0 %v5738
        %5934 = vmatmul.mubr.bf16.gmra.mrb[0].mxu0 %v5253
        %v5935 = vpop.f32.mrb[0].mxu0
        %v5936 = vadd.f32 %v5352, %v5935
        %v5937 = vpop.f32.mrb[0].mxu0
        %v5938 = vadd.f32 %v5356, %v5937
        %v5939 = vpop.f32.mrb[0].mxu0
        %v5940 = vadd.f32 %v5352, %v5939
        %v5941 = vpop.f32.mrb[0].mxu0
        %v5942 = vadd.f32 %v5356, %v5941
        %5943 = vmatprep.mubr.bf16.mxu0 %v5741
        %5944 = vmatmul.mubr.bf16.gmra.mrb[0].mxu0 %v5255
        %v5945 = vpop.f32.mrb[0].mxu0
        %v5946 = vadd.f32 %v5352, %v5945
        %v5947 = vpop.f32.mrb[0].mxu0
        %v5948 = vadd.f32 %v5356, %v5947
        %v5949 = vpop.f32.mrb[0].mxu0
        %v5950 = vadd.f32 %v5352, %v5949
        %v5951 = vpop.f32.mrb[0].mxu0
        %v5952 = vadd.f32 %v5356, %v5951
        %5953 = vmatprep.mubr.bf16.mxu0 %v5744
        %5954 = vmatmul.mubr.bf16.gmra.mrb[0].mxu0 %v5257
        %v5955 = vpop.f32.mrb[0].mxu0
        %v5956 = vadd.f32 %v5352, %v5955
        %v5957 = vpop.f32.mrb[0].mxu0
        %v5958 = vadd.f32 %v5356, %v5957
        %v5959 = vpop.f32.mrb[0].mxu0
        %v5960 = vadd.f32 %v5352, %v5959
        %v5961 = vpop.f32.mrb[0].mxu0
        %v5962 = vadd.f32 %v5356, %v5961
        %5963 = vmatprep.mubr.bf16.mxu0 %v5747
        %5964 = vmatmul.mubr.bf16.gmra.mrb[0].mxu0 %v5259
        %v5965 = vpop.f32.mrb[0].mxu0
        %v5966 = vadd.f32 %v5352, %v5965
        %v5967 = vpop.f32.mrb[0].mxu0
        %v5968 = vadd.f32 %v5356, %v5967
        %v5969 = vpop.f32.mrb[0].mxu0
        %v5970 = vadd.f32 %v5352, %v5969
        %v5971 = vpop.f32.mrb[0].mxu0
        %v5972 = vadd.f32 %v5356, %v5971
        %5973 = vmatprep.mubr.bf16.mxu0 %v5750
        %5974 = vmatmul.mubr.bf16.gmra.mrb[0].mxu0 %v5261
        %v5975 = vpop.f32.mrb[0].mxu0
        %v5976 = vadd.f32 %v5352, %v5975
        %v5977 = vpop.f32.mrb[0].mxu0
        %v5978 = vadd.f32 %v5356, %v5977
        %v5979 = vpop.f32.mrb[0].mxu0
        %v5980 = vadd.f32 %v5352, %v5979
        %v5981 = vpop.f32.mrb[0].mxu0
        %v5982 = vadd.f32 %v5356, %v5981
        %5983 = vmatprep.mubr.bf16.mxu0 %v5753
        %5984 = vmatmul.mubr.bf16.gmra.mrb[0].mxu0 %v5263
        %v5985 = vpop.f32.mrb[0].mxu0
        %v5986 = vadd.f32 %v5352, %v5985
        %v5987 = vpop.f32.mrb[0].mxu0
        %v5988 = vadd.f32 %v5356, %v5987
        %v5989 = vpop.f32.mrb[0].mxu0
        %v5990 = vadd.f32 %v5352, %v5989
        %v5991 = vpop.f32.mrb[0].mxu0
        %v5992 = vadd.f32 %v5356, %v5991
        %5993 = vmatprep.mubr.bf16.mxu0 %v5756
        %5994 = vmatmul.mubr.bf16.gmra.mrb[0].mxu0 %v5265
        %v5995 = vpop.f32.mrb[0].mxu0
        %v5996 = vadd.f32 %v5352, %v5995
        %v5997 = vpop.f32.mrb[0].mxu0
        %v5998 = vadd.f32 %v5356, %v5997
        %v5999 = vpop.f32.mrb[0].mxu0
        %v6000 = vadd.f32 %v5352, %v5999
        %v6001 = vpop.f32.mrb[0].mxu0
        %v6002 = vadd.f32 %v5356, %v6001
        %6003 = vdwg.mxu0
        %6004 = vmatprep.subr.bf16.mxu0 %v5592
        %6005 = vmatpush1.bf16.msra.mxu0 %v5591
        %6006 = vmatprep.subr.bf16.mxu0 %v5598
        %6007 = vmatpush1.bf16.msra.mxu0 %v5597
        %6008 = vmatprep.subr.bf16.mxu0 %v5604
        %6009 = vmatpush1.bf16.msra.mxu0 %v5603
        %6010 = vmatprep.subr.bf16.mxu0 %v5610
        %6011 = vmatpush1.bf16.msra.mxu0 %v5609
        %6012 = vmatprep.subr.bf16.mxu0 %v5616
        %6013 = vmatpush1.bf16.msra.mxu0 %v5615
        %6014 = vmatprep.subr.bf16.mxu0 %v5622
        %6015 = vmatpush1.bf16.msra.mxu0 %v5621
        %6016 = vmatprep.subr.bf16.mxu0 %v5628
        %6017 = vmatpush1.bf16.msra.mxu0 %v5627
        %6018 = vmatprep.subr.bf16.mxu0 %v5634
        %6019 = vmatpush1.bf16.msra.mxu0 %v5633
        %6020 = vmatprep.subr.bf16.mxu0 %v5640
        %6021 = vmatpush1.bf16.msra.mxu0 %v5639
        %6022 = vmatprep.subr.bf16.mxu0 %v5646
        %6023 = vmatpush1.bf16.msra.mxu0 %v5645
        %6024 = vmatprep.subr.bf16.mxu0 %v5652
        %6025 = vmatpush1.bf16.msra.mxu0 %v5651
        %6026 = vmatprep.subr.bf16.mxu0 %v5658
        %6027 = vmatpush1.bf16.msra.mxu0 %v5657
        %6028 = vmatprep.subr.bf16.mxu0 0
        %6029 = vmatpush1.bf16.msra.mxu0 0
        %6030 = vmatprep.subr.bf16.mxu0 0
        %6031 = vmatpush1.bf16.msra.mxu0 0
        %6032 = vmatprep.subr.bf16.mxu0 0
        %6033 = vmatpush1.bf16.msra.mxu0 0
        %6034 = vmatprep.subr.bf16.mxu0 0
        %6035 = vmatpush1.bf16.msra.mxu0 0
        %6036 = vmatprep.mubr.bf16.mxu0 %v5732
        %6037 = vmatmul.mubr.bf16.gmra.mrb[0].mxu0 %v5249
        %v6038 = vpop.f32.mrb[0].mxu0
        %v6039 = vadd.f32 %v5360, %v6038
        %v6040 = vpop.f32.mrb[0].mxu0
        %v6041 = vadd.f32 %v5364, %v6040
        %v6042 = vpop.f32.mrb[0].mxu0
        %v6043 = vadd.f32 %v5360, %v6042
        %v6044 = vpop.f32.mrb[0].mxu0
        %v6045 = vadd.f32 %v5364, %v6044
        %6046 = vmatprep.mubr.bf16.mxu0 %v5735
        %6047 = vmatmul.mubr.bf16.gmra.mrb[0].mxu0 %v5251
        %v6048 = vpop.f32.mrb[0].mxu0
        %v6049 = vadd.f32 %v5360, %v6048
        %v6050 = vpop.f32.mrb[0].mxu0
        %v6051 = vadd.f32 %v5364, %v6050
        %v6052 = vpop.f32.mrb[0].mxu0
        %v6053 = vadd.f32 %v5360, %v6052
        %v6054 = vpop.f32.mrb[0].mxu0
        %v6055 = vadd.f32 %v5364, %v6054
        %6056 = vmatprep.mubr.bf16.mxu0 %v5738
        %6057 = vmatmul.mubr.bf16.gmra.mrb[0].mxu0 %v5253
        %v6058 = vpop.f32.mrb[0].mxu0
        %v6059 = vadd.f32 %v5360, %v6058
        %v6060 = vpop.f32.mrb[0].mxu0
        %v6061 = vadd.f32 %v5364, %v6060
        %v6062 = vpop.f32.mrb[0].mxu0
        %v6063 = vadd.f32 %v5360, %v6062
        %v6064 = vpop.f32.mrb[0].mxu0
        %v6065 = vadd.f32 %v5364, %v6064
        %6066 = vmatprep.mubr.bf16.mxu0 %v5741
        %6067 = vmatmul.mubr.bf16.gmra.mrb[0].mxu0 %v5255
        %v6068 = vpop.f32.mrb[0].mxu0
        %v6069 = vadd.f32 %v5360, %v6068
        %v6070 = vpop.f32.mrb[0].mxu0
        %v6071 = vadd.f32 %v5364, %v6070
        %v6072 = vpop.f32.mrb[0].mxu0
        %v6073 = vadd.f32 %v5360, %v6072
        %v6074 = vpop.f32.mrb[0].mxu0
        %v6075 = vadd.f32 %v5364, %v6074
        %6076 = vmatprep.mubr.bf16.mxu0 %v5744
        %6077 = vmatmul.mubr.bf16.gmra.mrb[0].mxu0 %v5257
        %v6078 = vpop.f32.mrb[0].mxu0
        %v6079 = vadd.f32 %v5360, %v6078
        %v6080 = vpop.f32.mrb[0].mxu0
        %v6081 = vadd.f32 %v5364, %v6080
        %v6082 = vpop.f32.mrb[0].mxu0
        %v6083 = vadd.f32 %v5360, %v6082
        %v6084 = vpop.f32.mrb[0].mxu0
        %v6085 = vadd.f32 %v5364, %v6084
        %6086 = vmatprep.mubr.bf16.mxu0 %v5747
        %6087 = vmatmul.mubr.bf16.gmra.mrb[0].mxu0 %v5259
        %v6088 = vpop.f32.mrb[0].mxu0
        %v6089 = vadd.f32 %v5360, %v6088
        %v6090 = vpop.f32.mrb[0].mxu0
        %v6091 = vadd.f32 %v5364, %v6090
        %v6092 = vpop.f32.mrb[0].mxu0
        %v6093 = vadd.f32 %v5360, %v6092
        %v6094 = vpop.f32.mrb[0].mxu0
        %v6095 = vadd.f32 %v5364, %v6094
        %6096 = vmatprep.mubr.bf16.mxu0 %v5750
        %6097 = vmatmul.mubr.bf16.gmra.mrb[0].mxu0 %v5261
        %v6098 = vpop.f32.mrb[0].mxu0
        %v6099 = vadd.f32 %v5360, %v6098
        %v6100 = vpop.f32.mrb[0].mxu0
        %v6101 = vadd.f32 %v5364, %v6100
        %v6102 = vpop.f32.mrb[0].mxu0
        %v6103 = vadd.f32 %v5360, %v6102
        %v6104 = vpop.f32.mrb[0].mxu0
        %v6105 = vadd.f32 %v5364, %v6104
        %6106 = vmatprep.mubr.bf16.mxu0 %v5753
        %6107 = vmatmul.mubr.bf16.gmra.mrb[0].mxu0 %v5263
        %v6108 = vpop.f32.mrb[0].mxu0
        %v6109 = vadd.f32 %v5360, %v6108
        %v6110 = vpop.f32.mrb[0].mxu0
        %v6111 = vadd.f32 %v5364, %v6110
        %v6112 = vpop.f32.mrb[0].mxu0
        %v6113 = vadd.f32 %v5360, %v6112
        %v6114 = vpop.f32.mrb[0].mxu0
        %v6115 = vadd.f32 %v5364, %v6114
        %6116 = vmatprep.mubr.bf16.mxu0 %v5756
        %6117 = vmatmul.mubr.bf16.gmra.mrb[0].mxu0 %v5265
        %v6118 = vpop.f32.mrb[0].mxu0
        %v6119 = vadd.f32 %v5360, %v6118
        %v6120 = vpop.f32.mrb[0].mxu0
        %v6121 = vadd.f32 %v5364, %v6120
        %v6122 = vpop.f32.mrb[0].mxu0
        %v6123 = vadd.f32 %v5360, %v6122
        %v6124 = vpop.f32.mrb[0].mxu0
        %v6125 = vadd.f32 %v5364, %v6124
        %6126 = vdwg.mxu0
        %v6127 = vmul.f32 %v5793, 0.5
        %v6128 = vmul.f32 %v5795, 0.5
        %v6129 = vmul.f32 %v5916, 0.5
        %v6130 = vmul.f32 %v5918, 0.5
        %v6131 = vmul.f32 %v6039, 0.5
        %v6132 = vmul.f32 %v6041, 0.5
        %v6133 = vmul.f32 %v5797, 0.5
        %v6134 = vmul.f32 %v5799, 0.5
        %v6135 = vmul.f32 %v5920, 0.5
        %v6136 = vmul.f32 %v5922, 0.5
        %v6137 = vmul.f32 %v6043, 0.5
        %v6138 = vmul.f32 %v6045, 0.5
        %v6139 = vmul.f32 %v5803, 0.5
        %v6140 = vmul.f32 %v5805, 0.5
        %v6141 = vmul.f32 %v5926, 0.5
        %v6142 = vmul.f32 %v5928, 0.5
        %v6143 = vmul.f32 %v6049, 0.5
        %v6144 = vmul.f32 %v6051, 0.5
        %v6145 = vmul.f32 %v5807, 0.5
        %v6146 = vmul.f32 %v5809, 0.5
        %v6147 = vmul.f32 %v5930, 0.5
        %v6148 = vmul.f32 %v5932, 0.5
        %v6149 = vmul.f32 %v6053, 0.5
        %v6150 = vmul.f32 %v6055, 0.5
        %v6151 = vmul.f32 %v5813, 0.5
        %v6152 = vmul.f32 %v5815, 0.5
        %v6153 = vmul.f32 %v5936, 0.5
        %v6154 = vmul.f32 %v5938, 0.5
        %v6155 = vmul.f32 %v6059, 0.5
        %v6156 = vmul.f32 %v6061, 0.5
        %v6157 = vmul.f32 %v5817, 0.5
        %v6158 = vmul.f32 %v5819, 0.5
        %v6159 = vmul.f32 %v5940, 0.5
        %v6160 = vmul.f32 %v5942, 0.5
        %v6161 = vmul.f32 %v6063, 0.5
        %v6162 = vmul.f32 %v6065, 0.5
        %v6163 = vmul.f32 %v5823, 0.5
        %v6164 = vmul.f32 %v5825, 0.5
        %v6165 = vmul.f32 %v5946, 0.5
        %v6166 = vmul.f32 %v5948, 0.5
        %v6167 = vmul.f32 %v6069, 0.5
        %v6168 = vmul.f32 %v6071, 0.5
        %v6169 = vmul.f32 %v5827, 0.5
        %v6170 = vmul.f32 %v5829, 0.5
        %v6171 = vmul.f32 %v5950, 0.5
        %v6172 = vmul.f32 %v5952, 0.5
        %v6173 = vmul.f32 %v6073, 0.5
        %v6174 = vmul.f32 %v6075, 0.5
        %v6175 = vmul.f32 %v5833, 0.5
        %v6176 = vmul.f32 %v5835, 0.5
        %v6177 = vmul.f32 %v5956, 0.5
        %v6178 = vmul.f32 %v5958, 0.5
        %v6179 = vmul.f32 %v6079, 0.5
        %v6180 = vmul.f32 %v6081, 0.5
        %v6181 = vmul.f32 %v5837, 0.5
        %v6182 = vmul.f32 %v5839, 0.5
        %v6183 = vmul.f32 %v5960, 0.5
        %v6184 = vmul.f32 %v5962, 0.5
        %v6185 = vmul.f32 %v6083, 0.5
        %v6186 = vmul.f32 %v6085, 0.5
        %v6187 = vmul.f32 %v5843, 0.5
        %v6188 = vmul.f32 %v5845, 0.5
        %v6189 = vmul.f32 %v5966, 0.5
        %v6190 = vmul.f32 %v5968, 0.5
        %v6191 = vmul.f32 %v6089, 0.5
        %v6192 = vmul.f32 %v6091, 0.5
        %v6193 = vmul.f32 %v5847, 0.5
        %v6194 = vmul.f32 %v5849, 0.5
        %v6195 = vmul.f32 %v5970, 0.5
        %v6196 = vmul.f32 %v5972, 0.5
        %v6197 = vmul.f32 %v6093, 0.5
        %v6198 = vmul.f32 %v6095, 0.5
        %v6199 = vmul.f32 %v5853, 0.5
        %v6200 = vmul.f32 %v5855, 0.5
        %v6201 = vmul.f32 %v5976, 0.5
        %v6202 = vmul.f32 %v5978, 0.5
        %v6203 = vmul.f32 %v6099, 0.5
        %v6204 = vmul.f32 %v6101, 0.5
        %v6205 = vmul.f32 %v5857, 0.5
        %v6206 = vmul.f32 %v5859, 0.5
        %v6207 = vmul.f32 %v5980, 0.5
        %v6208 = vmul.f32 %v5982, 0.5
        %v6209 = vmul.f32 %v6103, 0.5
        %v6210 = vmul.f32 %v6105, 0.5
        %v6211 = vmul.f32 %v5863, 0.5
        %v6212 = vmul.f32 %v5865, 0.5
        %v6213 = vmul.f32 %v5986, 0.5
        %v6214 = vmul.f32 %v5988, 0.5
        %v6215 = vmul.f32 %v6109, 0.5
        %v6216 = vmul.f32 %v6111, 0.5
        %v6217 = vmul.f32 %v5867, 0.5
        %v6218 = vmul.f32 %v5869, 0.5
        %v6219 = vmul.f32 %v5990, 0.5
        %v6220 = vmul.f32 %v5992, 0.5
        %v6221 = vmul.f32 %v6113, 0.5
        %v6222 = vmul.f32 %v6115, 0.5
        %v6223 = vmul.f32 %v5873, 0.5
        %v6224 = vmul.f32 %v5875, 0.5
        %v6225 = vmul.f32 %v5996, 0.5
        %v6226 = vmul.f32 %v5998, 0.5
        %v6227 = vmul.f32 %v6119, 0.5
        %v6228 = vmul.f32 %v6121, 0.5
        %v6229 = vmul.f32 %v5877, 0.5
        %v6230 = vmul.f32 %v5879, 0.5
        %v6231 = vmul.f32 %v6000, 0.5
        %v6232 = vmul.f32 %v6002, 0.5
        %v6233 = vmul.f32 %v6123, 0.5
        %v6234 = vmul.f32 %v6125, 0.5
        %v6235 = vmul.f32 %v5793, 0.044715
        %v6236 = vmul.f32 %v5795, 0.044715
        %v6237 = vmul.f32 %v5916, 0.044715
        %v6238 = vmul.f32 %v5918, 0.044715
        %v6239 = vmul.f32 %v6039, 0.044715
        %v6240 = vmul.f32 %v6041, 0.044715
        %v6241 = vmul.f32 %v5797, 0.044715
        %v6242 = vmul.f32 %v5799, 0.044715
        %v6243 = vmul.f32 %v5920, 0.044715
        %v6244 = vmul.f32 %v5922, 0.044715
        %v6245 = vmul.f32 %v6043, 0.044715
        %v6246 = vmul.f32 %v6045, 0.044715
        %v6247 = vmul.f32 %v5803, 0.044715
        %v6248 = vmul.f32 %v5805, 0.044715
        %v6249 = vmul.f32 %v5926, 0.044715
        %v6250 = vmul.f32 %v5928, 0.044715
        %v6251 = vmul.f32 %v6049, 0.044715
        %v6252 = vmul.f32 %v6051, 0.044715
        %v6253 = vmul.f32 %v5807, 0.044715
        %v6254 = vmul.f32 %v5809, 0.044715
        %v6255 = vmul.f32 %v5930, 0.044715
        %v6256 = vmul.f32 %v5932, 0.044715
        %v6257 = vmul.f32 %v6053, 0.044715
        %v6258 = vmul.f32 %v6055, 0.044715
        %v6259 = vmul.f32 %v5813, 0.044715
        %v6260 = vmul.f32 %v5815, 0.044715
        %v6261 = vmul.f32 %v5936, 0.044715
        %v6262 = vmul.f32 %v5938, 0.044715
        %v6263 = vmul.f32 %v6059, 0.044715
        %v6264 = vmul.f32 %v6061, 0.044715
        %v6265 = vmul.f32 %v5817, 0.044715
        %v6266 = vmul.f32 %v5819, 0.044715
        %v6267 = vmul.f32 %v5940, 0.044715
        %v6268 = vmul.f32 %v5942, 0.044715
        %v6269 = vmul.f32 %v6063, 0.044715
        %v6270 = vmul.f32 %v6065, 0.044715
        %v6271 = vmul.f32 %v5823, 0.044715
        %v6272 = vmul.f32 %v5825, 0.044715
        %v6273 = vmul.f32 %v5946, 0.044715
        %v6274 = vmul.f32 %v5948, 0.044715
        %v6275 = vmul.f32 %v6069, 0.044715
        %v6276 = vmul.f32 %v6071, 0.044715
        %v6277 = vmul.f32 %v5827, 0.044715
        %v6278 = vmul.f32 %v5829, 0.044715
        %v6279 = vmul.f32 %v5950, 0.044715
        %v6280 = vmul.f32 %v5952, 0.044715
        %v6281 = vmul.f32 %v6073, 0.044715
        %v6282 = vmul.f32 %v6075, 0.044715
        %v6283 = vmul.f32 %v5833, 0.044715
        %v6284 = vmul.f32 %v5835, 0.044715
        %v6285 = vmul.f32 %v5956, 0.044715
        %v6286 = vmul.f32 %v5958, 0.044715
        %v6287 = vmul.f32 %v6079, 0.044715
        %v6288 = vmul.f32 %v6081, 0.044715
        %v6289 = vmul.f32 %v5837, 0.044715
        %v6290 = vmul.f32 %v5839, 0.044715
        %v6291 = vmul.f32 %v5960, 0.044715
        %v6292 = vmul.f32 %v5962, 0.044715
        %v6293 = vmul.f32 %v6083, 0.044715
        %v6294 = vmul.f32 %v6085, 0.044715
        %v6295 = vmul.f32 %v5843, 0.044715
        %v6296 = vmul.f32 %v5845, 0.044715
        %v6297 = vmul.f32 %v5966, 0.044715
        %v6298 = vmul.f32 %v5968, 0.044715
        %v6299 = vmul.f32 %v6089, 0.044715
        %v6300 = vmul.f32 %v6091, 0.044715
        %v6301 = vmul.f32 %v5847, 0.044715
        %v6302 = vmul.f32 %v5849, 0.044715
        %v6303 = vmul.f32 %v5970, 0.044715
        %v6304 = vmul.f32 %v5972, 0.044715
        %v6305 = vmul.f32 %v6093, 0.044715
        %v6306 = vmul.f32 %v6095, 0.044715
        %v6307 = vmul.f32 %v5853, 0.044715
        %v6308 = vmul.f32 %v5855, 0.044715
        %v6309 = vmul.f32 %v5976, 0.044715
        %v6310 = vmul.f32 %v5978, 0.044715
        %v6311 = vmul.f32 %v6099, 0.044715
        %v6312 = vmul.f32 %v6101, 0.044715
        %v6313 = vmul.f32 %v5857, 0.044715
        %v6314 = vmul.f32 %v5859, 0.044715
        %v6315 = vmul.f32 %v5980, 0.044715
        %v6316 = vmul.f32 %v5982, 0.044715
        %v6317 = vmul.f32 %v6103, 0.044715
        %v6318 = vmul.f32 %v6105, 0.044715
        %v6319 = vmul.f32 %v5863, 0.044715
        %v6320 = vmul.f32 %v5865, 0.044715
        %v6321 = vmul.f32 %v5986, 0.044715
        %v6322 = vmul.f32 %v5988, 0.044715
        %v6323 = vmul.f32 %v6109, 0.044715
        %v6324 = vmul.f32 %v6111, 0.044715
        %v6325 = vmul.f32 %v5867, 0.044715
        %v6326 = vmul.f32 %v5869, 0.044715
        %v6327 = vmul.f32 %v5990, 0.044715
        %v6328 = vmul.f32 %v5992, 0.044715
        %v6329 = vmul.f32 %v6113, 0.044715
        %v6330 = vmul.f32 %v6115, 0.044715
        %v6331 = vmul.f32 %v5873, 0.044715
        %v6332 = vmul.f32 %v5875, 0.044715
        %v6333 = vmul.f32 %v5996, 0.044715
        %v6334 = vmul.f32 %v5998, 0.044715
        %v6335 = vmul.f32 %v6119, 0.044715
        %v6336 = vmul.f32 %v6121, 0.044715
        %v6337 = vmul.f32 %v5877, 0.044715
        %v6338 = vmul.f32 %v5879, 0.044715
        %v6339 = vmul.f32 %v6000, 0.044715
        %v6340 = vmul.f32 %v6002, 0.044715
        %v6341 = vmul.f32 %v6123, 0.044715
        %v6342 = vmul.f32 %v6125, 0.044715
        %v6343 = vmul.f32 %v6235, %v5793
        %v6344 = vmul.f32 %v6236, %v5795
        %v6345 = vmul.f32 %v6237, %v5916
        %v6346 = vmul.f32 %v6238, %v5918
        %v6347 = vmul.f32 %v6239, %v6039
        %v6348 = vmul.f32 %v6240, %v6041
        %v6349 = vmul.f32 %v6241, %v5797
        %v6350 = vmul.f32 %v6242, %v5799
        %v6351 = vmul.f32 %v6243, %v5920
        %v6352 = vmul.f32 %v6244, %v5922
        %v6353 = vmul.f32 %v6245, %v6043
        %v6354 = vmul.f32 %v6246, %v6045
        %v6355 = vmul.f32 %v6247, %v5803
        %v6356 = vmul.f32 %v6248, %v5805
        %v6357 = vmul.f32 %v6249, %v5926
        %v6358 = vmul.f32 %v6250, %v5928
        %v6359 = vmul.f32 %v6251, %v6049
        %v6360 = vmul.f32 %v6252, %v6051
        %v6361 = vmul.f32 %v6253, %v5807
        %v6362 = vmul.f32 %v6254, %v5809
        %v6363 = vmul.f32 %v6255, %v5930
        %v6364 = vmul.f32 %v6256, %v5932
        %v6365 = vmul.f32 %v6257, %v6053
        %v6366 = vmul.f32 %v6258, %v6055
        %v6367 = vmul.f32 %v6259, %v5813
        %v6368 = vmul.f32 %v6260, %v5815
        %v6369 = vmul.f32 %v6261, %v5936
        %v6370 = vmul.f32 %v6262, %v5938
        %v6371 = vmul.f32 %v6263, %v6059
        %v6372 = vmul.f32 %v6264, %v6061
        %v6373 = vmul.f32 %v6265, %v5817
        %v6374 = vmul.f32 %v6266, %v5819
        %v6375 = vmul.f32 %v6267, %v5940
        %v6376 = vmul.f32 %v6268, %v5942
        %v6377 = vmul.f32 %v6269, %v6063
        %v6378 = vmul.f32 %v6270, %v6065
        %v6379 = vmul.f32 %v6271, %v5823
        %v6380 = vmul.f32 %v6272, %v5825
        %v6381 = vmul.f32 %v6273, %v5946
        %v6382 = vmul.f32 %v6274, %v5948
        %v6383 = vmul.f32 %v6275, %v6069
        %v6384 = vmul.f32 %v6276, %v6071
        %v6385 = vmul.f32 %v6277, %v5827
        %v6386 = vmul.f32 %v6278, %v5829
        %v6387 = vmul.f32 %v6279, %v5950
        %v6388 = vmul.f32 %v6280, %v5952
        %v6389 = vmul.f32 %v6281, %v6073
        %v6390 = vmul.f32 %v6282, %v6075
        %v6391 = vmul.f32 %v6283, %v5833
        %v6392 = vmul.f32 %v6284, %v5835
        %v6393 = vmul.f32 %v6285, %v5956
        %v6394 = vmul.f32 %v6286, %v5958
        %v6395 = vmul.f32 %v6287, %v6079
        %v6396 = vmul.f32 %v6288, %v6081
        %v6397 = vmul.f32 %v6289, %v5837
        %v6398 = vmul.f32 %v6290, %v5839
        %v6399 = vmul.f32 %v6291, %v5960
        %v6400 = vmul.f32 %v6292, %v5962
        %v6401 = vmul.f32 %v6293, %v6083
        %v6402 = vmul.f32 %v6294, %v6085
        %v6403 = vmul.f32 %v6295, %v5843
        %v6404 = vmul.f32 %v6296, %v5845
        %v6405 = vmul.f32 %v6297, %v5966
        %v6406 = vmul.f32 %v6298, %v5968
        %v6407 = vmul.f32 %v6299, %v6089
        %v6408 = vmul.f32 %v6300, %v6091
        %v6409 = vmul.f32 %v6301, %v5847
        %v6410 = vmul.f32 %v6302, %v5849
        %v6411 = vmul.f32 %v6303, %v5970
        %v6412 = vmul.f32 %v6304, %v5972
        %v6413 = vmul.f32 %v6305, %v6093
        %v6414 = vmul.f32 %v6306, %v6095
        %v6415 = vmul.f32 %v6307, %v5853
        %v6416 = vmul.f32 %v6308, %v5855
        %v6417 = vmul.f32 %v6309, %v5976
        %v6418 = vmul.f32 %v6310, %v5978
        %v6419 = vmul.f32 %v6311, %v6099
        %v6420 = vmul.f32 %v6312, %v6101
        %v6421 = vmul.f32 %v6313, %v5857
        %v6422 = vmul.f32 %v6314, %v5859
        %v6423 = vmul.f32 %v6315, %v5980
        %v6424 = vmul.f32 %v6316, %v5982
        %v6425 = vmul.f32 %v6317, %v6103
        %v6426 = vmul.f32 %v6318, %v6105
        %v6427 = vmul.f32 %v6319, %v5863
        %v6428 = vmul.f32 %v6320, %v5865
        %v6429 = vmul.f32 %v6321, %v5986
        %v6430 = vmul.f32 %v6322, %v5988
        %v6431 = vmul.f32 %v6323, %v6109
        %v6432 = vmul.f32 %v6324, %v6111
        %v6433 = vmul.f32 %v6325, %v5867
        %v6434 = vmul.f32 %v6326, %v5869
        %v6435 = vmul.f32 %v6327, %v5990
        %v6436 = vmul.f32 %v6328, %v5992
        %v6437 = vmul.f32 %v6329, %v6113
        %v6438 = vmul.f32 %v6330, %v6115
        %v6439 = vmul.f32 %v6331, %v5873
        %v6440 = vmul.f32 %v6332, %v5875
        %v6441 = vmul.f32 %v6333, %v5996
        %v6442 = vmul.f32 %v6334, %v5998
        %v6443 = vmul.f32 %v6335, %v6119
        %v6444 = vmul.f32 %v6336, %v6121
        %v6445 = vmul.f32 %v6337, %v5877
        %v6446 = vmul.f32 %v6338, %v5879
        %v6447 = vmul.f32 %v6339, %v6000
        %v6448 = vmul.f32 %v6340, %v6002
        %v6449 = vmul.f32 %v6341, %v6123
        %v6450 = vmul.f32 %v6342, %v6125
        %v6451 = vmul.f32 %v6343, %v5793
        %v6452 = vmul.f32 %v6344, %v5795
        %v6453 = vmul.f32 %v6345, %v5916
        %v6454 = vmul.f32 %v6346, %v5918
        %v6455 = vmul.f32 %v6347, %v6039
        %v6456 = vmul.f32 %v6348, %v6041
        %v6457 = vmul.f32 %v6349, %v5797
        %v6458 = vmul.f32 %v6350, %v5799
        %v6459 = vmul.f32 %v6351, %v5920
        %v6460 = vmul.f32 %v6352, %v5922
        %v6461 = vmul.f32 %v6353, %v6043
        %v6462 = vmul.f32 %v6354, %v6045
        %v6463 = vmul.f32 %v6355, %v5803
        %v6464 = vmul.f32 %v6356, %v5805
        %v6465 = vmul.f32 %v6357, %v5926
        %v6466 = vmul.f32 %v6358, %v5928
        %v6467 = vmul.f32 %v6359, %v6049
        %v6468 = vmul.f32 %v6360, %v6051
        %v6469 = vmul.f32 %v6361, %v5807
        %v6470 = vmul.f32 %v6362, %v5809
        %v6471 = vmul.f32 %v6363, %v5930
        %v6472 = vmul.f32 %v6364, %v5932
        %v6473 = vmul.f32 %v6365, %v6053
        %v6474 = vmul.f32 %v6366, %v6055
        %v6475 = vmul.f32 %v6367, %v5813
        %v6476 = vmul.f32 %v6368, %v5815
        %v6477 = vmul.f32 %v6369, %v5936
        %v6478 = vmul.f32 %v6370, %v5938
        %v6479 = vmul.f32 %v6371, %v6059
        %v6480 = vmul.f32 %v6372, %v6061
        %v6481 = vmul.f32 %v6373, %v5817
        %v6482 = vmul.f32 %v6374, %v5819
        %v6483 = vmul.f32 %v6375, %v5940
        %v6484 = vmul.f32 %v6376, %v5942
        %v6485 = vmul.f32 %v6377, %v6063
        %v6486 = vmul.f32 %v6378, %v6065
        %v6487 = vmul.f32 %v6379, %v5823
        %v6488 = vmul.f32 %v6380, %v5825
        %v6489 = vmul.f32 %v6381, %v5946
        %v6490 = vmul.f32 %v6382, %v5948
        %v6491 = vmul.f32 %v6383, %v6069
        %v6492 = vmul.f32 %v6384, %v6071
        %v6493 = vmul.f32 %v6385, %v5827
        %v6494 = vmul.f32 %v6386, %v5829
        %v6495 = vmul.f32 %v6387, %v5950
        %v6496 = vmul.f32 %v6388, %v5952
        %v6497 = vmul.f32 %v6389, %v6073
        %v6498 = vmul.f32 %v6390, %v6075
        %v6499 = vmul.f32 %v6391, %v5833
        %v6500 = vmul.f32 %v6392, %v5835
        %v6501 = vmul.f32 %v6393, %v5956
        %v6502 = vmul.f32 %v6394, %v5958
        %v6503 = vmul.f32 %v6395, %v6079
        %v6504 = vmul.f32 %v6396, %v6081
        %v6505 = vmul.f32 %v6397, %v5837
        %v6506 = vmul.f32 %v6398, %v5839
        %v6507 = vmul.f32 %v6399, %v5960
        %v6508 = vmul.f32 %v6400, %v5962
        %v6509 = vmul.f32 %v6401, %v6083
        %v6510 = vmul.f32 %v6402, %v6085
        %v6511 = vmul.f32 %v6403, %v5843
        %v6512 = vmul.f32 %v6404, %v5845
        %v6513 = vmul.f32 %v6405, %v5966
        %v6514 = vmul.f32 %v6406, %v5968
        %v6515 = vmul.f32 %v6407, %v6089
        %v6516 = vmul.f32 %v6408, %v6091
        %v6517 = vmul.f32 %v6409, %v5847
        %v6518 = vmul.f32 %v6410, %v5849
        %v6519 = vmul.f32 %v6411, %v5970
        %v6520 = vmul.f32 %v6412, %v5972
        %v6521 = vmul.f32 %v6413, %v6093
        %v6522 = vmul.f32 %v6414, %v6095
        %v6523 = vmul.f32 %v6415, %v5853
        %v6524 = vmul.f32 %v6416, %v5855
        %v6525 = vmul.f32 %v6417, %v5976
        %v6526 = vmul.f32 %v6418, %v5978
        %v6527 = vmul.f32 %v6419, %v6099
        %v6528 = vmul.f32 %v6420, %v6101
        %v6529 = vmul.f32 %v6421, %v5857
        %v6530 = vmul.f32 %v6422, %v5859
        %v6531 = vmul.f32 %v6423, %v5980
        %v6532 = vmul.f32 %v6424, %v5982
        %v6533 = vmul.f32 %v6425, %v6103
        %v6534 = vmul.f32 %v6426, %v6105
        %v6535 = vmul.f32 %v6427, %v5863
        %v6536 = vmul.f32 %v6428, %v5865
        %v6537 = vmul.f32 %v6429, %v5986
        %v6538 = vmul.f32 %v6430, %v5988
        %v6539 = vmul.f32 %v6431, %v6109
        %v6540 = vmul.f32 %v6432, %v6111
        %v6541 = vmul.f32 %v6433, %v5867
        %v6542 = vmul.f32 %v6434, %v5869
        %v6543 = vmul.f32 %v6435, %v5990
        %v6544 = vmul.f32 %v6436, %v5992
        %v6545 = vmul.f32 %v6437, %v6113
        %v6546 = vmul.f32 %v6438, %v6115
        %v6547 = vmul.f32 %v6439, %v5873
        %v6548 = vmul.f32 %v6440, %v5875
        %v6549 = vmul.f32 %v6441, %v5996
        %v6550 = vmul.f32 %v6442, %v5998
        %v6551 = vmul.f32 %v6443, %v6119
        %v6552 = vmul.f32 %v6444, %v6121
        %v6553 = vmul.f32 %v6445, %v5877
        %v6554 = vmul.f32 %v6446, %v5879
        %v6555 = vmul.f32 %v6447, %v6000
        %v6556 = vmul.f32 %v6448, %v6002
        %v6557 = vmul.f32 %v6449, %v6123
        %v6558 = vmul.f32 %v6450, %v6125
        %v6559 = vadd.f32 %v5793, %v6451
        %v6560 = vadd.f32 %v5795, %v6452
        %v6561 = vadd.f32 %v5916, %v6453
        %v6562 = vadd.f32 %v5918, %v6454
        %v6563 = vadd.f32 %v6039, %v6455
        %v6564 = vadd.f32 %v6041, %v6456
        %v6565 = vadd.f32 %v5797, %v6457
        %v6566 = vadd.f32 %v5799, %v6458
        %v6567 = vadd.f32 %v5920, %v6459
        %v6568 = vadd.f32 %v5922, %v6460
        %v6569 = vadd.f32 %v6043, %v6461
        %v6570 = vadd.f32 %v6045, %v6462
        %v6571 = vadd.f32 %v5803, %v6463
        %v6572 = vadd.f32 %v5805, %v6464
        %v6573 = vadd.f32 %v5926, %v6465
        %v6574 = vadd.f32 %v5928, %v6466
        %v6575 = vadd.f32 %v6049, %v6467
        %v6576 = vadd.f32 %v6051, %v6468
        %v6577 = vadd.f32 %v5807, %v6469
        %v6578 = vadd.f32 %v5809, %v6470
        %v6579 = vadd.f32 %v5930, %v6471
        %v6580 = vadd.f32 %v5932, %v6472
        %v6581 = vadd.f32 %v6053, %v6473
        %v6582 = vadd.f32 %v6055, %v6474
        %v6583 = vadd.f32 %v5813, %v6475
        %v6584 = vadd.f32 %v5815, %v6476
        %v6585 = vadd.f32 %v5936, %v6477
        %v6586 = vadd.f32 %v5938, %v6478
        %v6587 = vadd.f32 %v6059, %v6479
        %v6588 = vadd.f32 %v6061, %v6480
        %v6589 = vadd.f32 %v5817, %v6481
        %v6590 = vadd.f32 %v5819, %v6482
        %v6591 = vadd.f32 %v5940, %v6483
        %v6592 = vadd.f32 %v5942, %v6484
        %v6593 = vadd.f32 %v6063, %v6485
        %v6594 = vadd.f32 %v6065, %v6486
        %v6595 = vadd.f32 %v5823, %v6487
        %v6596 = vadd.f32 %v5825, %v6488
        %v6597 = vadd.f32 %v5946, %v6489
        %v6598 = vadd.f32 %v5948, %v6490
        %v6599 = vadd.f32 %v6069, %v6491
        %v6600 = vadd.f32 %v6071, %v6492
        %v6601 = vadd.f32 %v5827, %v6493
        %v6602 = vadd.f32 %v5829, %v6494
        %v6603 = vadd.f32 %v5950, %v6495
        %v6604 = vadd.f32 %v5952, %v6496
        %v6605 = vadd.f32 %v6073, %v6497
        %v6606 = vadd.f32 %v6075, %v6498
        %v6607 = vadd.f32 %v5833, %v6499
        %v6608 = vadd.f32 %v5835, %v6500
        %v6609 = vadd.f32 %v5956, %v6501
        %v6610 = vadd.f32 %v5958, %v6502
        %v6611 = vadd.f32 %v6079, %v6503
        %v6612 = vadd.f32 %v6081, %v6504
        %v6613 = vadd.f32 %v5837, %v6505
        %v6614 = vadd.f32 %v5839, %v6506
        %v6615 = vadd.f32 %v5960, %v6507
        %v6616 = vadd.f32 %v5962, %v6508
        %v6617 = vadd.f32 %v6083, %v6509
        %v6618 = vadd.f32 %v6085, %v6510
        %v6619 = vadd.f32 %v5843, %v6511
        %v6620 = vadd.f32 %v5845, %v6512
        %v6621 = vadd.f32 %v5966, %v6513
        %v6622 = vadd.f32 %v5968, %v6514
        %v6623 = vadd.f32 %v6089, %v6515
        %v6624 = vadd.f32 %v6091, %v6516
        %v6625 = vadd.f32 %v5847, %v6517
        %v6626 = vadd.f32 %v5849, %v6518
        %v6627 = vadd.f32 %v5970, %v6519
        %v6628 = vadd.f32 %v5972, %v6520
        %v6629 = vadd.f32 %v6093, %v6521
        %v6630 = vadd.f32 %v6095, %v6522
        %v6631 = vadd.f32 %v5853, %v6523
        %v6632 = vadd.f32 %v5855, %v6524
        %v6633 = vadd.f32 %v5976, %v6525
        %v6634 = vadd.f32 %v5978, %v6526
        %v6635 = vadd.f32 %v6099, %v6527
        %v6636 = vadd.f32 %v6101, %v6528
        %v6637 = vadd.f32 %v5857, %v6529
        %v6638 = vadd.f32 %v5859, %v6530
        %v6639 = vadd.f32 %v5980, %v6531
        %v6640 = vadd.f32 %v5982, %v6532
        %v6641 = vadd.f32 %v6103, %v6533
        %v6642 = vadd.f32 %v6105, %v6534
        %v6643 = vadd.f32 %v5863, %v6535
        %v6644 = vadd.f32 %v5865, %v6536
        %v6645 = vadd.f32 %v5986, %v6537
        %v6646 = vadd.f32 %v5988, %v6538
        %v6647 = vadd.f32 %v6109, %v6539
        %v6648 = vadd.f32 %v6111, %v6540
        %v6649 = vadd.f32 %v5867, %v6541
        %v6650 = vadd.f32 %v5869, %v6542
        %v6651 = vadd.f32 %v5990, %v6543
        %v6652 = vadd.f32 %v5992, %v6544
        %v6653 = vadd.f32 %v6113, %v6545
        %v6654 = vadd.f32 %v6115, %v6546
        %v6655 = vadd.f32 %v5873, %v6547
        %v6656 = vadd.f32 %v5875, %v6548
        %v6657 = vadd.f32 %v5996, %v6549
        %v6658 = vadd.f32 %v5998, %v6550
        %v6659 = vadd.f32 %v6119, %v6551
        %v6660 = vadd.f32 %v6121, %v6552
        %v6661 = vadd.f32 %v5877, %v6553
        %v6662 = vadd.f32 %v5879, %v6554
        %v6663 = vadd.f32 %v6000, %v6555
        %v6664 = vadd.f32 %v6002, %v6556
        %v6665 = vadd.f32 %v6123, %v6557
        %v6666 = vadd.f32 %v6125, %v6558
        %v6667 = vmul.f32 %v6559, 0.7978846
        %v6668 = vmul.f32 %v6560, 0.7978846
        %v6669 = vmul.f32 %v6561, 0.7978846
        %v6670 = vmul.f32 %v6562, 0.7978846
        %v6671 = vmul.f32 %v6563, 0.7978846
        %v6672 = vmul.f32 %v6564, 0.7978846
        %v6673 = vmul.f32 %v6565, 0.7978846
        %v6674 = vmul.f32 %v6566, 0.7978846
        %v6675 = vmul.f32 %v6567, 0.7978846
        %v6676 = vmul.f32 %v6568, 0.7978846
        %v6677 = vmul.f32 %v6569, 0.7978846
        %v6678 = vmul.f32 %v6570, 0.7978846
        %v6679 = vmul.f32 %v6571, 0.7978846
        %v6680 = vmul.f32 %v6572, 0.7978846
        %v6681 = vmul.f32 %v6573, 0.7978846
        %v6682 = vmul.f32 %v6574, 0.7978846
        %v6683 = vmul.f32 %v6575, 0.7978846
        %v6684 = vmul.f32 %v6576, 0.7978846
        %v6685 = vmul.f32 %v6577, 0.7978846
        %v6686 = vmul.f32 %v6578, 0.7978846
        %v6687 = vmul.f32 %v6579, 0.7978846
        %v6688 = vmul.f32 %v6580, 0.7978846
        %v6689 = vmul.f32 %v6581, 0.7978846
        %v6690 = vmul.f32 %v6582, 0.7978846
        %v6691 = vmul.f32 %v6583, 0.7978846
        %v6692 = vmul.f32 %v6584, 0.7978846
        %v6693 = vmul.f32 %v6585, 0.7978846
        %v6694 = vmul.f32 %v6586, 0.7978846
        %v6695 = vmul.f32 %v6587, 0.7978846
        %v6696 = vmul.f32 %v6588, 0.7978846
        %v6697 = vmul.f32 %v6589, 0.7978846
        %v6698 = vmul.f32 %v6590, 0.7978846
        %v6699 = vmul.f32 %v6591, 0.7978846
        %v6700 = vmul.f32 %v6592, 0.7978846
        %v6701 = vmul.f32 %v6593, 0.7978846
        %v6702 = vmul.f32 %v6594, 0.7978846
        %v6703 = vmul.f32 %v6595, 0.7978846
        %v6704 = vmul.f32 %v6596, 0.7978846
        %v6705 = vmul.f32 %v6597, 0.7978846
        %v6706 = vmul.f32 %v6598, 0.7978846
        %v6707 = vmul.f32 %v6599, 0.7978846
        %v6708 = vmul.f32 %v6600, 0.7978846
        %v6709 = vmul.f32 %v6601, 0.7978846
        %v6710 = vmul.f32 %v6602, 0.7978846
        %v6711 = vmul.f32 %v6603, 0.7978846
        %v6712 = vmul.f32 %v6604, 0.7978846
        %v6713 = vmul.f32 %v6605, 0.7978846
        %v6714 = vmul.f32 %v6606, 0.7978846
        %v6715 = vmul.f32 %v6607, 0.7978846
        %v6716 = vmul.f32 %v6608, 0.7978846
        %v6717 = vmul.f32 %v6609, 0.7978846
        %v6718 = vmul.f32 %v6610, 0.7978846
        %v6719 = vmul.f32 %v6611, 0.7978846
        %v6720 = vmul.f32 %v6612, 0.7978846
        %v6721 = vmul.f32 %v6613, 0.7978846
        %v6722 = vmul.f32 %v6614, 0.7978846
        %v6723 = vmul.f32 %v6615, 0.7978846
        %v6724 = vmul.f32 %v6616, 0.7978846
        %v6725 = vmul.f32 %v6617, 0.7978846
        %v6726 = vmul.f32 %v6618, 0.7978846
        %v6727 = vmul.f32 %v6619, 0.7978846
        %v6728 = vmul.f32 %v6620, 0.7978846
        %v6729 = vmul.f32 %v6621, 0.7978846
        %v6730 = vmul.f32 %v6622, 0.7978846
        %v6731 = vmul.f32 %v6623, 0.7978846
        %v6732 = vmul.f32 %v6624, 0.7978846
        %v6733 = vmul.f32 %v6625, 0.7978846
        %v6734 = vmul.f32 %v6626, 0.7978846
        %v6735 = vmul.f32 %v6627, 0.7978846
        %v6736 = vmul.f32 %v6628, 0.7978846
        %v6737 = vmul.f32 %v6629, 0.7978846
        %v6738 = vmul.f32 %v6630, 0.7978846
        %v6739 = vmul.f32 %v6631, 0.7978846
        %v6740 = vmul.f32 %v6632, 0.7978846
        %v6741 = vmul.f32 %v6633, 0.7978846
        %v6742 = vmul.f32 %v6634, 0.7978846
        %v6743 = vmul.f32 %v6635, 0.7978846
        %v6744 = vmul.f32 %v6636, 0.7978846
        %v6745 = vmul.f32 %v6637, 0.7978846
        %v6746 = vmul.f32 %v6638, 0.7978846
        %v6747 = vmul.f32 %v6639, 0.7978846
        %v6748 = vmul.f32 %v6640, 0.7978846
        %v6749 = vmul.f32 %v6641, 0.7978846
        %v6750 = vmul.f32 %v6642, 0.7978846
        %v6751 = vmul.f32 %v6643, 0.7978846
        %v6752 = vmul.f32 %v6644, 0.7978846
        %v6753 = vmul.f32 %v6645, 0.7978846
        %v6754 = vmul.f32 %v6646, 0.7978846
        %v6755 = vmul.f32 %v6647, 0.7978846
        %v6756 = vmul.f32 %v6648, 0.7978846
        %v6757 = vmul.f32 %v6649, 0.7978846
        %v6758 = vmul.f32 %v6650, 0.7978846
        %v6759 = vmul.f32 %v6651, 0.7978846
        %v6760 = vmul.f32 %v6652, 0.7978846
        %v6761 = vmul.f32 %v6653, 0.7978846
        %v6762 = vmul.f32 %v6654, 0.7978846
        %v6763 = vmul.f32 %v6655, 0.7978846
        %v6764 = vmul.f32 %v6656, 0.7978846
        %v6765 = vmul.f32 %v6657, 0.7978846
        %v6766 = vmul.f32 %v6658, 0.7978846
        %v6767 = vmul.f32 %v6659, 0.7978846
        %v6768 = vmul.f32 %v6660, 0.7978846
        %v6769 = vmul.f32 %v6661, 0.7978846
        %v6770 = vmul.f32 %v6662, 0.7978846
        %v6771 = vmul.f32 %v6663, 0.7978846
        %v6772 = vmul.f32 %v6664, 0.7978846
        %v6773 = vmul.f32 %v6665, 0.7978846
        %v6774 = vmul.f32 %v6666, 0.7978846
        %v6775 = vtanh.pop %v6667
        %v6776 = vtanh.pop %v6668
        %v6777 = vtanh.pop %v6669
        %v6778 = vtanh.pop %v6670
        %v6779 = vtanh.pop %v6671
        %v6780 = vtanh.pop %v6672
        %v6781 = vtanh.pop %v6673
        %v6782 = vtanh.pop %v6674
        %v6783 = vtanh.pop %v6675
        %v6784 = vtanh.pop %v6676
        %v6785 = vtanh.pop %v6677
        %v6786 = vtanh.pop %v6678
        %v6787 = vtanh.pop %v6679
        %v6788 = vtanh.pop %v6680
        %v6789 = vtanh.pop %v6681
        %v6790 = vtanh.pop %v6682
        %v6791 = vtanh.pop %v6683
        %v6792 = vtanh.pop %v6684
        %v6793 = vtanh.pop %v6685
        %v6794 = vtanh.pop %v6686
        %v6795 = vtanh.pop %v6687
        %v6796 = vtanh.pop %v6688
        %v6797 = vtanh.pop %v6689
        %v6798 = vtanh.pop %v6690
        %v6799 = vtanh.pop %v6691
        %v6800 = vtanh.pop %v6692
        %v6801 = vtanh.pop %v6693
        %v6802 = vtanh.pop %v6694
        %v6803 = vtanh.pop %v6695
        %v6804 = vtanh.pop %v6696
        %v6805 = vtanh.pop %v6697
        %v6806 = vtanh.pop %v6698
        %v6807 = vtanh.pop %v6699
        %v6808 = vtanh.pop %v6700
        %v6809 = vtanh.pop %v6701
        %v6810 = vtanh.pop %v6702
        %v6811 = vtanh.pop %v6703
        %v6812 = vtanh.pop %v6704
        %v6813 = vtanh.pop %v6705
        %v6814 = vtanh.pop %v6706
        %v6815 = vtanh.pop %v6707
        %v6816 = vtanh.pop %v6708
        %v6817 = vtanh.pop %v6709
        %v6818 = vtanh.pop %v6710
        %v6819 = vtanh.pop %v6711
        %v6820 = vtanh.pop %v6712
        %v6821 = vtanh.pop %v6713
        %v6822 = vtanh.pop %v6714
        %v6823 = vtanh.pop %v6715
        %v6824 = vtanh.pop %v6716
        %v6825 = vtanh.pop %v6717
        %v6826 = vtanh.pop %v6718
        %v6827 = vtanh.pop %v6719
        %v6828 = vtanh.pop %v6720
        %v6829 = vtanh.pop %v6721
        %v6830 = vtanh.pop %v6722
        %v6831 = vtanh.pop %v6723
        %v6832 = vtanh.pop %v6724
        %v6833 = vtanh.pop %v6725
        %v6834 = vtanh.pop %v6726
        %v6835 = vtanh.pop %v6727
        %v6836 = vtanh.pop %v6728
        %v6837 = vtanh.pop %v6729
        %v6838 = vtanh.pop %v6730
        %v6839 = vtanh.pop %v6731
        %v6840 = vtanh.pop %v6732
        %v6841 = vtanh.pop %v6733
        %v6842 = vtanh.pop %v6734
        %v6843 = vtanh.pop %v6735
        %v6844 = vtanh.pop %v6736
        %v6845 = vtanh.pop %v6737
        %v6846 = vtanh.pop %v6738
        %v6847 = vtanh.pop %v6739
        %v6848 = vtanh.pop %v6740
        %v6849 = vtanh.pop %v6741
        %v6850 = vtanh.pop %v6742
        %v6851 = vtanh.pop %v6743
        %v6852 = vtanh.pop %v6744
        %v6853 = vtanh.pop %v6745
        %v6854 = vtanh.pop %v6746
        %v6855 = vtanh.pop %v6747
        %v6856 = vtanh.pop %v6748
        %v6857 = vtanh.pop %v6749
        %v6858 = vtanh.pop %v6750
        %v6859 = vtanh.pop %v6751
        %v6860 = vtanh.pop %v6752
        %v6861 = vtanh.pop %v6753
        %v6862 = vtanh.pop %v6754
        %v6863 = vtanh.pop %v6755
        %v6864 = vtanh.pop %v6756
        %v6865 = vtanh.pop %v6757
        %v6866 = vtanh.pop %v6758
        %v6867 = vtanh.pop %v6759
        %v6868 = vtanh.pop %v6760
        %v6869 = vtanh.pop %v6761
        %v6870 = vtanh.pop %v6762
        %v6871 = vtanh.pop %v6763
        %v6872 = vtanh.pop %v6764
        %v6873 = vtanh.pop %v6765
        %v6874 = vtanh.pop %v6766
        %v6875 = vtanh.pop %v6767
        %v6876 = vtanh.pop %v6768
        %v6877 = vtanh.pop %v6769
        %v6878 = vtanh.pop %v6770
        %v6879 = vtanh.pop %v6771
        %v6880 = vtanh.pop %v6772
        %v6881 = vtanh.pop %v6773
        %v6882 = vtanh.pop %v6774
        %v6883 = vadd.f32 %v6775, 1.0
        %v6884 = vadd.f32 %v6776, 1.0
        %v6885 = vadd.f32 %v6777, 1.0
        %v6886 = vadd.f32 %v6778, 1.0
        %v6887 = vadd.f32 %v6779, 1.0
        %v6888 = vadd.f32 %v6780, 1.0
        %v6889 = vadd.f32 %v6781, 1.0
        %v6890 = vadd.f32 %v6782, 1.0
        %v6891 = vadd.f32 %v6783, 1.0
        %v6892 = vadd.f32 %v6784, 1.0
        %v6893 = vadd.f32 %v6785, 1.0
        %v6894 = vadd.f32 %v6786, 1.0
        %v6895 = vadd.f32 %v6787, 1.0
        %v6896 = vadd.f32 %v6788, 1.0
        %v6897 = vadd.f32 %v6789, 1.0
        %v6898 = vadd.f32 %v6790, 1.0
        %v6899 = vadd.f32 %v6791, 1.0
        %v6900 = vadd.f32 %v6792, 1.0
        %v6901 = vadd.f32 %v6793, 1.0
        %v6902 = vadd.f32 %v6794, 1.0
        %v6903 = vadd.f32 %v6795, 1.0
        %v6904 = vadd.f32 %v6796, 1.0
        %v6905 = vadd.f32 %v6797, 1.0
        %v6906 = vadd.f32 %v6798, 1.0
        %v6907 = vadd.f32 %v6799, 1.0
        %v6908 = vadd.f32 %v6800, 1.0
        %v6909 = vadd.f32 %v6801, 1.0
        %v6910 = vadd.f32 %v6802, 1.0
        %v6911 = vadd.f32 %v6803, 1.0
        %v6912 = vadd.f32 %v6804, 1.0
        %v6913 = vadd.f32 %v6805, 1.0
        %v6914 = vadd.f32 %v6806, 1.0
        %v6915 = vadd.f32 %v6807, 1.0
        %v6916 = vadd.f32 %v6808, 1.0
        %v6917 = vadd.f32 %v6809, 1.0
        %v6918 = vadd.f32 %v6810, 1.0
        %v6919 = vadd.f32 %v6811, 1.0
        %v6920 = vadd.f32 %v6812, 1.0
        %v6921 = vadd.f32 %v6813, 1.0
        %v6922 = vadd.f32 %v6814, 1.0
        %v6923 = vadd.f32 %v6815, 1.0
        %v6924 = vadd.f32 %v6816, 1.0
        %v6925 = vadd.f32 %v6817, 1.0
        %v6926 = vadd.f32 %v6818, 1.0
        %v6927 = vadd.f32 %v6819, 1.0
        %v6928 = vadd.f32 %v6820, 1.0
        %v6929 = vadd.f32 %v6821, 1.0
        %v6930 = vadd.f32 %v6822, 1.0
        %v6931 = vadd.f32 %v6823, 1.0
        %v6932 = vadd.f32 %v6824, 1.0
        %v6933 = vadd.f32 %v6825, 1.0
        %v6934 = vadd.f32 %v6826, 1.0
        %v6935 = vadd.f32 %v6827, 1.0
        %v6936 = vadd.f32 %v6828, 1.0
        %v6937 = vadd.f32 %v6829, 1.0
        %v6938 = vadd.f32 %v6830, 1.0
        %v6939 = vadd.f32 %v6831, 1.0
        %v6940 = vadd.f32 %v6832, 1.0
        %v6941 = vadd.f32 %v6833, 1.0
        %v6942 = vadd.f32 %v6834, 1.0
        %v6943 = vadd.f32 %v6835, 1.0
        %v6944 = vadd.f32 %v6836, 1.0
        %v6945 = vadd.f32 %v6837, 1.0
        %v6946 = vadd.f32 %v6838, 1.0
        %v6947 = vadd.f32 %v6839, 1.0
        %v6948 = vadd.f32 %v6840, 1.0
        %v6949 = vadd.f32 %v6841, 1.0
        %v6950 = vadd.f32 %v6842, 1.0
        %v6951 = vadd.f32 %v6843, 1.0
        %v6952 = vadd.f32 %v6844, 1.0
        %v6953 = vadd.f32 %v6845, 1.0
        %v6954 = vadd.f32 %v6846, 1.0
        %v6955 = vadd.f32 %v6847, 1.0
        %v6956 = vadd.f32 %v6848, 1.0
        %v6957 = vadd.f32 %v6849, 1.0
        %v6958 = vadd.f32 %v6850, 1.0
        %v6959 = vadd.f32 %v6851, 1.0
        %v6960 = vadd.f32 %v6852, 1.0
        %v6961 = vadd.f32 %v6853, 1.0
        %v6962 = vadd.f32 %v6854, 1.0
        %v6963 = vadd.f32 %v6855, 1.0
        %v6964 = vadd.f32 %v6856, 1.0
        %v6965 = vadd.f32 %v6857, 1.0
        %v6966 = vadd.f32 %v6858, 1.0
        %v6967 = vadd.f32 %v6859, 1.0
        %v6968 = vadd.f32 %v6860, 1.0
        %v6969 = vadd.f32 %v6861, 1.0
        %v6970 = vadd.f32 %v6862, 1.0
        %v6971 = vadd.f32 %v6863, 1.0
        %v6972 = vadd.f32 %v6864, 1.0
        %v6973 = vadd.f32 %v6865, 1.0
        %v6974 = vadd.f32 %v6866, 1.0
        %v6975 = vadd.f32 %v6867, 1.0
        %v6976 = vadd.f32 %v6868, 1.0
        %v6977 = vadd.f32 %v6869, 1.0
        %v6978 = vadd.f32 %v6870, 1.0
        %v6979 = vadd.f32 %v6871, 1.0
        %v6980 = vadd.f32 %v6872, 1.0
        %v6981 = vadd.f32 %v6873, 1.0
        %v6982 = vadd.f32 %v6874, 1.0
        %v6983 = vadd.f32 %v6875, 1.0
        %v6984 = vadd.f32 %v6876, 1.0
        %v6985 = vadd.f32 %v6877, 1.0
        %v6986 = vadd.f32 %v6878, 1.0
        %v6987 = vadd.f32 %v6879, 1.0
        %v6988 = vadd.f32 %v6880, 1.0
        %v6989 = vadd.f32 %v6881, 1.0
        %v6990 = vadd.f32 %v6882, 1.0
        %v6991 = vmul.f32 %v6127, %v6883
        %v6992 = vmul.f32 %v6128, %v6884
        %v6993 = vmul.f32 %v6129, %v6885
        %v6994 = vmul.f32 %v6130, %v6886
        %v6995 = vmul.f32 %v6131, %v6887
        %v6996 = vmul.f32 %v6132, %v6888
        %v6997 = vmul.f32 %v6133, %v6889
        %v6998 = vmul.f32 %v6134, %v6890
        %v6999 = vmul.f32 %v6135, %v6891
        %v7000 = vmul.f32 %v6136, %v6892
        %v7001 = vmul.f32 %v6137, %v6893
        %v7002 = vmul.f32 %v6138, %v6894
        %v7003 = vmul.f32 %v6139, %v6895
        %v7004 = vmul.f32 %v6140, %v6896
        %v7005 = vmul.f32 %v6141, %v6897
        %v7006 = vmul.f32 %v6142, %v6898
        %v7007 = vmul.f32 %v6143, %v6899
        %v7008 = vmul.f32 %v6144, %v6900
        %v7009 = vmul.f32 %v6145, %v6901
        %v7010 = vmul.f32 %v6146, %v6902
        %v7011 = vmul.f32 %v6147, %v6903
        %v7012 = vmul.f32 %v6148, %v6904
        %v7013 = vmul.f32 %v6149, %v6905
        %v7014 = vmul.f32 %v6150, %v6906
        %v7015 = vmul.f32 %v6151, %v6907
        %v7016 = vmul.f32 %v6152, %v6908
        %v7017 = vmul.f32 %v6153, %v6909
        %v7018 = vmul.f32 %v6154, %v6910
        %v7019 = vmul.f32 %v6155, %v6911
        %v7020 = vmul.f32 %v6156, %v6912
        %v7021 = vmul.f32 %v6157, %v6913
        %v7022 = vmul.f32 %v6158, %v6914
        %v7023 = vmul.f32 %v6159, %v6915
        %v7024 = vmul.f32 %v6160, %v6916
        %v7025 = vmul.f32 %v6161, %v6917
        %v7026 = vmul.f32 %v6162, %v6918
        %v7027 = vmul.f32 %v6163, %v6919
        %v7028 = vmul.f32 %v6164, %v6920
        %v7029 = vmul.f32 %v6165, %v6921
        %v7030 = vmul.f32 %v6166, %v6922
        %v7031 = vmul.f32 %v6167, %v6923
        %v7032 = vmul.f32 %v6168, %v6924
        %v7033 = vmul.f32 %v6169, %v6925
        %v7034 = vmul.f32 %v6170, %v6926
        %v7035 = vmul.f32 %v6171, %v6927
        %v7036 = vmul.f32 %v6172, %v6928
        %v7037 = vmul.f32 %v6173, %v6929
        %v7038 = vmul.f32 %v6174, %v6930
        %v7039 = vmul.f32 %v6175, %v6931
        %v7040 = vmul.f32 %v6176, %v6932
        %v7041 = vmul.f32 %v6177, %v6933
        %v7042 = vmul.f32 %v6178, %v6934
        %v7043 = vmul.f32 %v6179, %v6935
        %v7044 = vmul.f32 %v6180, %v6936
        %v7045 = vmul.f32 %v6181, %v6937
        %v7046 = vmul.f32 %v6182, %v6938
        %v7047 = vmul.f32 %v6183, %v6939
        %v7048 = vmul.f32 %v6184, %v6940
        %v7049 = vmul.f32 %v6185, %v6941
        %v7050 = vmul.f32 %v6186, %v6942
        %v7051 = vmul.f32 %v6187, %v6943
        %v7052 = vmul.f32 %v6188, %v6944
        %v7053 = vmul.f32 %v6189, %v6945
        %v7054 = vmul.f32 %v6190, %v6946
        %v7055 = vmul.f32 %v6191, %v6947
        %v7056 = vmul.f32 %v6192, %v6948
        %v7057 = vmul.f32 %v6193, %v6949
        %v7058 = vmul.f32 %v6194, %v6950
        %v7059 = vmul.f32 %v6195, %v6951
        %v7060 = vmul.f32 %v6196, %v6952
        %v7061 = vmul.f32 %v6197, %v6953
        %v7062 = vmul.f32 %v6198, %v6954
        %v7063 = vmul.f32 %v6199, %v6955
        %v7064 = vmul.f32 %v6200, %v6956
        %v7065 = vmul.f32 %v6201, %v6957
        %v7066 = vmul.f32 %v6202, %v6958
        %v7067 = vmul.f32 %v6203, %v6959
        %v7068 = vmul.f32 %v6204, %v6960
        %v7069 = vmul.f32 %v6205, %v6961
        %v7070 = vmul.f32 %v6206, %v6962
        %v7071 = vmul.f32 %v6207, %v6963
        %v7072 = vmul.f32 %v6208, %v6964
        %v7073 = vmul.f32 %v6209, %v6965
        %v7074 = vmul.f32 %v6210, %v6966
        %v7075 = vmul.f32 %v6211, %v6967
        %v7076 = vmul.f32 %v6212, %v6968
        %v7077 = vmul.f32 %v6213, %v6969
        %v7078 = vmul.f32 %v6214, %v6970
        %v7079 = vmul.f32 %v6215, %v6971
        %v7080 = vmul.f32 %v6216, %v6972
        %v7081 = vmul.f32 %v6217, %v6973
        %v7082 = vmul.f32 %v6218, %v6974
        %v7083 = vmul.f32 %v6219, %v6975
        %v7084 = vmul.f32 %v6220, %v6976
        %v7085 = vmul.f32 %v6221, %v6977
        %v7086 = vmul.f32 %v6222, %v6978
        %v7087 = vmul.f32 %v6223, %v6979
        %v7088 = vmul.f32 %v6224, %v6980
        %v7089 = vmul.f32 %v6225, %v6981
        %v7090 = vmul.f32 %v6226, %v6982
        %v7091 = vmul.f32 %v6227, %v6983
        %v7092 = vmul.f32 %v6228, %v6984
        %v7093 = vmul.f32 %v6229, %v6985
        %v7094 = vmul.f32 %v6230, %v6986
        %v7095 = vmul.f32 %v6231, %v6987
        %v7096 = vmul.f32 %v6232, %v6988
        %v7097 = vmul.f32 %v6233, %v6989
        %v7098 = vmul.f32 %v6234, %v6990
        %v7099 = vpack.c.bf16 %v6997, %v6991
        %v7100 = vpack.c.bf16 %v6998, %v6992
        %v7101 = vpack.c.bf16 %v6999, %v6993
        %v7102 = vpack.c.bf16 %v7000, %v6994
        %v7103 = vpack.c.bf16 %v7001, %v6995
        %v7104 = vpack.c.bf16 %v7002, %v6996
        %v7105 = vpack.c.bf16 %v7009, %v7003
        %v7106 = vpack.c.bf16 %v7010, %v7004
        %v7107 = vpack.c.bf16 %v7011, %v7005
        %v7108 = vpack.c.bf16 %v7012, %v7006
        %v7109 = vpack.c.bf16 %v7013, %v7007
        %v7110 = vpack.c.bf16 %v7014, %v7008
        %v7111 = vpack.c.bf16 %v7021, %v7015
        %v7112 = vpack.c.bf16 %v7022, %v7016
        %v7113 = vpack.c.bf16 %v7023, %v7017
        %v7114 = vpack.c.bf16 %v7024, %v7018
        %v7115 = vpack.c.bf16 %v7025, %v7019
        %v7116 = vpack.c.bf16 %v7026, %v7020
        %v7117 = vpack.c.bf16 %v7033, %v7027
        %v7118 = vpack.c.bf16 %v7034, %v7028
        %v7119 = vpack.c.bf16 %v7035, %v7029
        %v7120 = vpack.c.bf16 %v7036, %v7030
        %v7121 = vpack.c.bf16 %v7037, %v7031
        %v7122 = vpack.c.bf16 %v7038, %v7032
        %v7123 = vpack.c.bf16 %v7045, %v7039
        %v7124 = vpack.c.bf16 %v7046, %v7040
        %v7125 = vpack.c.bf16 %v7047, %v7041
        %v7126 = vpack.c.bf16 %v7048, %v7042
        %v7127 = vpack.c.bf16 %v7049, %v7043
        %v7128 = vpack.c.bf16 %v7050, %v7044
        %v7129 = vpack.c.bf16 %v7057, %v7051
        %v7130 = vpack.c.bf16 %v7058, %v7052
        %v7131 = vpack.c.bf16 %v7059, %v7053
        %v7132 = vpack.c.bf16 %v7060, %v7054
        %v7133 = vpack.c.bf16 %v7061, %v7055
        %v7134 = vpack.c.bf16 %v7062, %v7056
        %v7135 = vpack.c.bf16 %v7069, %v7063
        %v7136 = vpack.c.bf16 %v7070, %v7064
        %v7137 = vpack.c.bf16 %v7071, %v7065
        %v7138 = vpack.c.bf16 %v7072, %v7066
        %v7139 = vpack.c.bf16 %v7073, %v7067
        %v7140 = vpack.c.bf16 %v7074, %v7068
        %v7141 = vpack.c.bf16 %v7081, %v7075
        %v7142 = vpack.c.bf16 %v7082, %v7076
        %v7143 = vpack.c.bf16 %v7083, %v7077
        %v7144 = vpack.c.bf16 %v7084, %v7078
        %v7145 = vpack.c.bf16 %v7085, %v7079
        %v7146 = vpack.c.bf16 %v7086, %v7080
        %v7147 = vpack.c.bf16 %v7093, %v7087
        %v7148 = vpack.c.bf16 %v7094, %v7088
        %v7149 = vpack.c.bf16 %v7095, %v7089
        %v7150 = vpack.c.bf16 %v7096, %v7090
        %v7151 = vpack.c.bf16 %v7097, %v7091
        %v7152 = vpack.c.bf16 %v7098, %v7092
        %v7153 = vld [vmem:[%s656] sm:$0xff]
        %v7154 = vld [vmem:[%s656 + $0x8] sm:$0xff]
        %v7155 = vld [vmem:[%s656 + $0x10] sm:$0xff]
        %v7156 = vld [vmem:[%s656 + $0x18] sm:$0xff]
        %v7157 = vld [vmem:[%s656 + $0x20] sm:$0xff]
        %v7158 = vld [vmem:[%s656 + $0x28] sm:$0xff]
        %v7159 = vld [vmem:[%s656 + $0x30] sm:$0xff]
        %v7160 = vld [vmem:[%s656 + $0x38] sm:$0xff]
        %v7161 = vld [vmem:[%s656 + $0x40] sm:$0xff]
        %v7162 = vld [vmem:[%s656 + $0x48] sm:$0xff]
        %v7163 = vld [vmem:[%s656 + $0x50] sm:$0xff]
        %v7164 = vld [vmem:[%s656 + $0x58] sm:$0xff]
        %v7165 = vld [vmem:[%s656 + $0x60] sm:$0xff]
        %v7166 = vld [vmem:[%s656 + $0x68] sm:$0xff]
        %v7167 = vld [vmem:[%s656 + $0x70] sm:$0xff]
        %v7168 = vld [vmem:[%s656 + $0x78] sm:$0xff]
        %v7169 = vld [vmem:[%s656 + $0x80] sm:$0xff]
        %v7170 = vld [vmem:[%s656 + $0x88] sm:$0xff]
        %v7171 = vld [vmem:[%s656 + $0x90] sm:$0xff]
        %v7172 = vld [vmem:[%s656 + $0x98] sm:$0xff]
        %v7173 = vld [vmem:[%s656 + $0xa0] sm:$0xff]
        %v7174 = vld [vmem:[%s656 + $0xa8] sm:$0xff]
        %v7175 = vld [vmem:[%s656 + $0xb0] sm:$0xff]
        %v7176 = vld [vmem:[%s656 + $0xb8] sm:$0xff]
        %v7177 = vld [vmem:[%s656 + $0xc0] sm:$0xff]
        %v7178 = vld [vmem:[%s656 + $0xc8] sm:$0xff]
        %v7179 = vld [vmem:[%s656 + $0xd0] sm:$0xff]
        %v7180 = vld [vmem:[%s656 + $0xd8] sm:$0xff]
        %v7181 = vld [vmem:[%s656 + $0xe0] sm:$0xff]
        %v7182 = vld [vmem:[%s656 + $0xe8] sm:$0xff]
        %v7183 = vld [vmem:[%s656 + $0xf0] sm:$0xff]
        %v7184 = vld [vmem:[%s656 + $0xf8] sm:$0xff]
        %v7185 = vld [vmem:[%s656 + $0x100] sm:$0xff]
        %v7186 = vld [vmem:[%s656 + $0x108] sm:$0xff]
        %v7187 = vld [vmem:[%s656 + $0x110] sm:$0xff]
        %v7188 = vld [vmem:[%s656 + $0x118] sm:$0xff]
        %v7189 = vld [vmem:[%s656 + $0x120] sm:$0xff]
        %v7190 = vld [vmem:[%s656 + $0x128] sm:$0xff]
        %v7191 = vld [vmem:[%s656 + $0x130] sm:$0xff]
        %v7192 = vld [vmem:[%s656 + $0x138] sm:$0xff]
        %v7193 = vld [vmem:[%s656 + $0x140] sm:$0xff]
        %v7194 = vld [vmem:[%s656 + $0x148] sm:$0xff]
        %v7195 = vld [vmem:[%s656 + $0x150] sm:$0xff]
        %v7196 = vld [vmem:[%s656 + $0x158] sm:$0xff]
        %v7197 = vld [vmem:[%s656 + $0x160] sm:$0xff]
        %v7198 = vld [vmem:[%s656 + $0x168] sm:$0xff]
        %v7199 = vld [vmem:[%s656 + $0x170] sm:$0xff]
        %v7200 = vld [vmem:[%s656 + $0x178] sm:$0xff]
        %v7201 = vld [vmem:[%s656 + $0x180] sm:$0xff]
        %v7202 = vld [vmem:[%s656 + $0x188] sm:$0xff]
        %v7203 = vld [vmem:[%s656 + $0x190] sm:$0xff]
        %v7204 = vld [vmem:[%s656 + $0x198] sm:$0xff]
        %v7205 = vld [vmem:[%s656 + $0x1a0] sm:$0xff]
        %v7206 = vld [vmem:[%s656 + $0x1a8] sm:$0xff]
        %v7207 = vld [vmem:[%s656 + $0x1b0] sm:$0xff]
        %v7208 = vld [vmem:[%s656 + $0x1b8] sm:$0xff]
        %v7209 = vld [vmem:[%s656 + $0x1c0] sm:$0xff]
        %v7210 = vld [vmem:[%s656 + $0x1c8] sm:$0xff]
        %v7211 = vld [vmem:[%s656 + $0x1d0] sm:$0xff]
        %v7212 = vld [vmem:[%s656 + $0x1d8] sm:$0xff]
        %v7213 = vld [vmem:[%s656 + $0x1e0] sm:$0xff]
        %v7214 = vld [vmem:[%s656 + $0x1e8] sm:$0xff]
        %v7215 = vld [vmem:[%s656 + $0x1f0] sm:$0xff]
        %v7216 = vld [vmem:[%s656 + $0x1f8] sm:$0xff]
        %v7217 = vld [vmem:[%s656 + $0x200] sm:$0xff]
        %v7218 = vld [vmem:[%s656 + $0x208] sm:$0xff]
        %v7219 = vld [vmem:[%s656 + $0x210] sm:$0xff]
        %v7220 = vld [vmem:[%s656 + $0x218] sm:$0xff]
        %v7221 = vld [vmem:[%s656 + $0x220] sm:$0xff]
        %v7222 = vld [vmem:[%s656 + $0x228] sm:$0xff]
        %v7223 = vld [vmem:[%s656 + $0x230] sm:$0xff]
        %v7224 = vld [vmem:[%s656 + $0x238] sm:$0xff]
        %v7225 = vld [vmem:[%s656 + $0x240] sm:$0xff]
        %v7226 = vld [vmem:[%s656 + $0x248] sm:$0xff]
        %v7227 = vld [vmem:[%s656 + $0x250] sm:$0xff]
        %v7228 = vld [vmem:[%s656 + $0x258] sm:$0xff]
        %v7229 = vld [vmem:[%s656 + $0x260] sm:$0xff]
        %v7230 = vld [vmem:[%s656 + $0x268] sm:$0xff]
        %v7231 = vld [vmem:[%s656 + $0x270] sm:$0xff]
        %v7232 = vld [vmem:[%s656 + $0x278] sm:$0xff]
        %v7233 = vld [vmem:[%s656 + $0x280] sm:$0xff]
        %v7234 = vld [vmem:[%s656 + $0x288] sm:$0xff]
        %v7235 = vld [vmem:[%s656 + $0x290] sm:$0xff]
        %v7236 = vld [vmem:[%s656 + $0x298] sm:$0xff]
        %v7237 = vld [vmem:[%s656 + $0x2a0] sm:$0xff]
        %v7238 = vld [vmem:[%s656 + $0x2a8] sm:$0xff]
        %v7239 = vld [vmem:[%s656 + $0x2b0] sm:$0xff]
        %v7240 = vld [vmem:[%s656 + $0x2b8] sm:$0xff]
        %v7241 = vld [vmem:[%s656 + $0x2c0] sm:$0xff]
        %v7242 = vld [vmem:[%s656 + $0x2c8] sm:$0xff]
        %v7243 = vld [vmem:[%s656 + $0x2d0] sm:$0xff]
        %v7244 = vld [vmem:[%s656 + $0x2d8] sm:$0xff]
        %v7245 = vld [vmem:[%s656 + $0x2e0] sm:$0xff]
        %v7246 = vld [vmem:[%s656 + $0x2e8] sm:$0xff]
        %v7247 = vld [vmem:[%s656 + $0x2f0] sm:$0xff]
        %v7248 = vld [vmem:[%s656 + $0x2f8] sm:$0xff]
        %v7249 = vld [vmem:[%s660] sm:$0x3]
        %v7251 = vlaneseq
        %v7252 = vshrl.u32 %v7251, 7
        %v7253 = vsub.s32 0, %v7252
        %v7254 = vrot.slane %v7249, %v7253
        %v7255 = vlaneseq
        %v7256 = vshrl.u32 %v7255, 7
        %v7257 = vsub.s32 1, %v7256
        %v7258 = vrot.slane %v7249, %v7257
        %v7357 = vunpack.c.l.b16 %v7153
        %v7358 = vunpack.c.h.b16 %v7153
        %v7359 = vunpack.c.l.b16 %v7154
        %v7360 = vunpack.c.h.b16 %v7154
        %v7361 = vunpack.c.l.b16 %v7155
        %v7362 = vunpack.c.h.b16 %v7155
        %v7363 = vunpack.c.l.b16 %v7156
        %v7364 = vunpack.c.h.b16 %v7156
        %v7365 = vunpack.c.l.b16 %v7157
        %v7366 = vunpack.c.h.b16 %v7157
        %v7367 = vunpack.c.l.b16 %v7158
        %v7368 = vunpack.c.h.b16 %v7158
        %v7369 = vunpack.c.l.b16 %v7159
        %v7370 = vunpack.c.h.b16 %v7159
        %v7371 = vunpack.c.l.b16 %v7160
        %v7372 = vunpack.c.h.b16 %v7160
        %v7373 = vunpack.c.l.b16 %v7161
        %v7374 = vunpack.c.h.b16 %v7161
        %v7375 = vunpack.c.l.b16 %v7162
        %v7376 = vunpack.c.h.b16 %v7162
        %v7377 = vunpack.c.l.b16 %v7163
        %v7378 = vunpack.c.h.b16 %v7163
        %v7379 = vunpack.c.l.b16 %v7164
        %v7380 = vunpack.c.h.b16 %v7164
        %v7381 = vunpack.c.l.b16 %v7165
        %v7382 = vunpack.c.h.b16 %v7165
        %v7383 = vunpack.c.l.b16 %v7166
        %v7384 = vunpack.c.h.b16 %v7166
        %v7385 = vunpack.c.l.b16 %v7167
        %v7386 = vunpack.c.h.b16 %v7167
        %v7387 = vunpack.c.l.b16 %v7168
        %v7388 = vunpack.c.h.b16 %v7168
        %v7389 = vunpack.c.l.b16 %v7169
        %v7390 = vunpack.c.h.b16 %v7169
        %v7391 = vunpack.c.l.b16 %v7170
        %v7392 = vunpack.c.h.b16 %v7170
        %v7393 = vunpack.c.l.b16 %v7171
        %v7394 = vunpack.c.h.b16 %v7171
        %v7395 = vunpack.c.l.b16 %v7172
        %v7396 = vunpack.c.h.b16 %v7172
        %v7397 = vunpack.c.l.b16 %v7173
        %v7398 = vunpack.c.h.b16 %v7173
        %v7399 = vunpack.c.l.b16 %v7174
        %v7400 = vunpack.c.h.b16 %v7174
        %v7401 = vunpack.c.l.b16 %v7175
        %v7402 = vunpack.c.h.b16 %v7175
        %v7403 = vunpack.c.l.b16 %v7176
        %v7404 = vunpack.c.h.b16 %v7176
        %v7405 = vunpack.c.l.b16 %v7177
        %v7406 = vunpack.c.h.b16 %v7177
        %v7407 = vunpack.c.l.b16 %v7178
        %v7408 = vunpack.c.h.b16 %v7178
        %v7409 = vunpack.c.l.b16 %v7179
        %v7410 = vunpack.c.h.b16 %v7179
        %v7411 = vunpack.c.l.b16 %v7180
        %v7412 = vunpack.c.h.b16 %v7180
        %v7413 = vunpack.c.l.b16 %v7181
        %v7414 = vunpack.c.h.b16 %v7181
        %v7415 = vunpack.c.l.b16 %v7182
        %v7416 = vunpack.c.h.b16 %v7182
        %v7417 = vunpack.c.l.b16 %v7183
        %v7418 = vunpack.c.h.b16 %v7183
        %v7419 = vunpack.c.l.b16 %v7184
        %v7420 = vunpack.c.h.b16 %v7184
        %v7421 = vunpack.c.l.b16 %v7185
        %v7422 = vunpack.c.h.b16 %v7185
        %v7423 = vunpack.c.l.b16 %v7186
        %v7424 = vunpack.c.h.b16 %v7186
        %v7425 = vunpack.c.l.b16 %v7187
        %v7426 = vunpack.c.h.b16 %v7187
        %v7427 = vunpack.c.l.b16 %v7188
        %v7428 = vunpack.c.h.b16 %v7188
        %v7429 = vunpack.c.l.b16 %v7189
        %v7430 = vunpack.c.h.b16 %v7189
        %v7431 = vunpack.c.l.b16 %v7190
        %v7432 = vunpack.c.h.b16 %v7190
        %v7433 = vunpack.c.l.b16 %v7191
        %v7434 = vunpack.c.h.b16 %v7191
        %v7435 = vunpack.c.l.b16 %v7192
        %v7436 = vunpack.c.h.b16 %v7192
        %v7437 = vunpack.c.l.b16 %v7193
        %v7438 = vunpack.c.h.b16 %v7193
        %v7439 = vunpack.c.l.b16 %v7194
        %v7440 = vunpack.c.h.b16 %v7194
        %v7441 = vunpack.c.l.b16 %v7195
        %v7442 = vunpack.c.h.b16 %v7195
        %v7443 = vunpack.c.l.b16 %v7196
        %v7444 = vunpack.c.h.b16 %v7196
        %v7445 = vunpack.c.l.b16 %v7197
        %v7446 = vunpack.c.h.b16 %v7197
        %v7447 = vunpack.c.l.b16 %v7198
        %v7448 = vunpack.c.h.b16 %v7198
        %v7449 = vunpack.c.l.b16 %v7199
        %v7450 = vunpack.c.h.b16 %v7199
        %v7451 = vunpack.c.l.b16 %v7200
        %v7452 = vunpack.c.h.b16 %v7200
        %v7453 = vunpack.c.l.b16 %v7201
        %v7454 = vunpack.c.h.b16 %v7201
        %v7455 = vunpack.c.l.b16 %v7202
        %v7456 = vunpack.c.h.b16 %v7202
        %v7457 = vunpack.c.l.b16 %v7203
        %v7458 = vunpack.c.h.b16 %v7203
        %v7459 = vunpack.c.l.b16 %v7204
        %v7460 = vunpack.c.h.b16 %v7204
        %v7461 = vunpack.c.l.b16 %v7205
        %v7462 = vunpack.c.h.b16 %v7205
        %v7463 = vunpack.c.l.b16 %v7206
        %v7464 = vunpack.c.h.b16 %v7206
        %v7465 = vunpack.c.l.b16 %v7207
        %v7466 = vunpack.c.h.b16 %v7207
        %v7467 = vunpack.c.l.b16 %v7208
        %v7468 = vunpack.c.h.b16 %v7208
        %v7469 = vunpack.c.l.b16 %v7209
        %v7470 = vunpack.c.h.b16 %v7209
        %v7471 = vunpack.c.l.b16 %v7210
        %v7472 = vunpack.c.h.b16 %v7210
        %v7473 = vunpack.c.l.b16 %v7211
        %v7474 = vunpack.c.h.b16 %v7211
        %v7475 = vunpack.c.l.b16 %v7212
        %v7476 = vunpack.c.h.b16 %v7212
        %v7477 = vunpack.c.l.b16 %v7213
        %v7478 = vunpack.c.h.b16 %v7213
        %v7479 = vunpack.c.l.b16 %v7214
        %v7480 = vunpack.c.h.b16 %v7214
        %v7481 = vunpack.c.l.b16 %v7215
        %v7482 = vunpack.c.h.b16 %v7215
        %v7483 = vunpack.c.l.b16 %v7216
        %v7484 = vunpack.c.h.b16 %v7216
        %v7485 = vunpack.c.l.b16 %v7217
        %v7486 = vunpack.c.h.b16 %v7217
        %v7487 = vunpack.c.l.b16 %v7218
        %v7488 = vunpack.c.h.b16 %v7218
        %v7489 = vunpack.c.l.b16 %v7219
        %v7490 = vunpack.c.h.b16 %v7219
        %v7491 = vunpack.c.l.b16 %v7220
        %v7492 = vunpack.c.h.b16 %v7220
        %v7493 = vunpack.c.l.b16 %v7221
        %v7494 = vunpack.c.h.b16 %v7221
        %v7495 = vunpack.c.l.b16 %v7222
        %v7496 = vunpack.c.h.b16 %v7222
        %v7497 = vunpack.c.l.b16 %v7223
        %v7498 = vunpack.c.h.b16 %v7223
        %v7499 = vunpack.c.l.b16 %v7224
        %v7500 = vunpack.c.h.b16 %v7224
        %v7501 = vunpack.c.l.b16 %v7225
        %v7502 = vunpack.c.h.b16 %v7225
        %v7503 = vunpack.c.l.b16 %v7226
        %v7504 = vunpack.c.h.b16 %v7226
        %v7505 = vunpack.c.l.b16 %v7227
        %v7506 = vunpack.c.h.b16 %v7227
        %v7507 = vunpack.c.l.b16 %v7228
        %v7508 = vunpack.c.h.b16 %v7228
        %v7509 = vunpack.c.l.b16 %v7229
        %v7510 = vunpack.c.h.b16 %v7229
        %v7511 = vunpack.c.l.b16 %v7230
        %v7512 = vunpack.c.h.b16 %v7230
        %v7513 = vunpack.c.l.b16 %v7231
        %v7514 = vunpack.c.h.b16 %v7231
        %v7515 = vunpack.c.l.b16 %v7232
        %v7516 = vunpack.c.h.b16 %v7232
        %v7517 = vunpack.c.l.b16 %v7233
        %v7518 = vunpack.c.h.b16 %v7233
        %v7519 = vunpack.c.l.b16 %v7234
        %v7520 = vunpack.c.h.b16 %v7234
        %v7521 = vunpack.c.l.b16 %v7235
        %v7522 = vunpack.c.h.b16 %v7235
        %v7523 = vunpack.c.l.b16 %v7236
        %v7524 = vunpack.c.h.b16 %v7236
        %v7525 = vunpack.c.l.b16 %v7237
        %v7526 = vunpack.c.h.b16 %v7237
        %v7527 = vunpack.c.l.b16 %v7238
        %v7528 = vunpack.c.h.b16 %v7238
        %v7529 = vunpack.c.l.b16 %v7239
        %v7530 = vunpack.c.h.b16 %v7239
        %v7531 = vunpack.c.l.b16 %v7240
        %v7532 = vunpack.c.h.b16 %v7240
        %v7533 = vunpack.c.l.b16 %v7241
        %v7534 = vunpack.c.h.b16 %v7241
        %v7535 = vunpack.c.l.b16 %v7242
        %v7536 = vunpack.c.h.b16 %v7242
        %v7537 = vunpack.c.l.b16 %v7243
        %v7538 = vunpack.c.h.b16 %v7243
        %v7539 = vunpack.c.l.b16 %v7244
        %v7540 = vunpack.c.h.b16 %v7244
        %v7541 = vunpack.c.l.b16 %v7245
        %v7542 = vunpack.c.h.b16 %v7245
        %v7543 = vunpack.c.l.b16 %v7246
        %v7544 = vunpack.c.h.b16 %v7246
        %v7545 = vunpack.c.l.b16 %v7247
        %v7546 = vunpack.c.h.b16 %v7247
        %v7547 = vunpack.c.l.b16 %v7248
        %v7548 = vunpack.c.h.b16 %v7248
        %v7549 = vpack.c.b16 %v7359, %v7357
        %v7550 = vpack.c.b16 %v7360, %v7358
        %v7551 = vpack.c.b16 %v7363, %v7361
        %v7552 = vpack.c.b16 %v7364, %v7362
        %v7553 = vpack.c.b16 %v7367, %v7365
        %v7554 = vpack.c.b16 %v7368, %v7366
        %v7555 = vpack.c.b16 %v7371, %v7369
        %v7556 = vpack.c.b16 %v7372, %v7370
        %v7557 = vpack.c.b16 %v7375, %v7373
        %v7558 = vpack.c.b16 %v7376, %v7374
        %v7559 = vpack.c.b16 %v7379, %v7377
        %v7560 = vpack.c.b16 %v7380, %v7378
        %v7561 = vpack.c.b16 %v7383, %v7381
        %v7562 = vpack.c.b16 %v7384, %v7382
        %v7563 = vpack.c.b16 %v7387, %v7385
        %v7564 = vpack.c.b16 %v7388, %v7386
        %v7565 = vpack.c.b16 %v7391, %v7389
        %v7566 = vpack.c.b16 %v7392, %v7390
        %v7567 = vpack.c.b16 %v7395, %v7393
        %v7568 = vpack.c.b16 %v7396, %v7394
        %v7569 = vpack.c.b16 %v7399, %v7397
        %v7570 = vpack.c.b16 %v7400, %v7398
        %v7571 = vpack.c.b16 %v7403, %v7401
        %v7572 = vpack.c.b16 %v7404, %v7402
        %v7573 = vpack.c.b16 %v7407, %v7405
        %v7574 = vpack.c.b16 %v7408, %v7406
        %v7575 = vpack.c.b16 %v7411, %v7409
        %v7576 = vpack.c.b16 %v7412, %v7410
        %v7577 = vpack.c.b16 %v7415, %v7413
        %v7578 = vpack.c.b16 %v7416, %v7414
        %v7579 = vpack.c.b16 %v7419, %v7417
        %v7580 = vpack.c.b16 %v7420, %v7418
        %v7581 = vpack.c.b16 %v7423, %v7421
        %v7582 = vpack.c.b16 %v7424, %v7422
        %v7583 = vpack.c.b16 %v7427, %v7425
        %v7584 = vpack.c.b16 %v7428, %v7426
        %v7585 = vpack.c.b16 %v7431, %v7429
        %v7586 = vpack.c.b16 %v7432, %v7430
        %v7587 = vpack.c.b16 %v7435, %v7433
        %v7588 = vpack.c.b16 %v7436, %v7434
        %v7589 = vpack.c.b16 %v7439, %v7437
        %v7590 = vpack.c.b16 %v7440, %v7438
        %v7591 = vpack.c.b16 %v7443, %v7441
        %v7592 = vpack.c.b16 %v7444, %v7442
        %v7593 = vpack.c.b16 %v7447, %v7445
        %v7594 = vpack.c.b16 %v7448, %v7446
        %v7595 = vpack.c.b16 %v7451, %v7449
        %v7596 = vpack.c.b16 %v7452, %v7450
        %v7597 = vpack.c.b16 %v7455, %v7453
        %v7598 = vpack.c.b16 %v7456, %v7454
        %v7599 = vpack.c.b16 %v7459, %v7457
        %v7600 = vpack.c.b16 %v7460, %v7458
        %v7601 = vpack.c.b16 %v7463, %v7461
        %v7602 = vpack.c.b16 %v7464, %v7462
        %v7603 = vpack.c.b16 %v7467, %v7465
        %v7604 = vpack.c.b16 %v7468, %v7466
        %v7605 = vpack.c.b16 %v7471, %v7469
        %v7606 = vpack.c.b16 %v7472, %v7470
        %v7607 = vpack.c.b16 %v7475, %v7473
        %v7608 = vpack.c.b16 %v7476, %v7474
        %v7609 = vpack.c.b16 %v7479, %v7477
        %v7610 = vpack.c.b16 %v7480, %v7478
        %v7611 = vpack.c.b16 %v7483, %v7481
        %v7612 = vpack.c.b16 %v7484, %v7482
        %v7613 = vpack.c.b16 %v7487, %v7485
        %v7614 = vpack.c.b16 %v7488, %v7486
        %v7615 = vpack.c.b16 %v7491, %v7489
        %v7616 = vpack.c.b16 %v7492, %v7490
        %v7617 = vpack.c.b16 %v7495, %v7493
        %v7618 = vpack.c.b16 %v7496, %v7494
        %v7619 = vpack.c.b16 %v7499, %v7497
        %v7620 = vpack.c.b16 %v7500, %v7498
        %v7621 = vpack.c.b16 %v7503, %v7501
        %v7622 = vpack.c.b16 %v7504, %v7502
        %v7623 = vpack.c.b16 %v7507, %v7505
        %v7624 = vpack.c.b16 %v7508, %v7506
        %v7625 = vpack.c.b16 %v7511, %v7509
        %v7626 = vpack.c.b16 %v7512, %v7510
        %v7627 = vpack.c.b16 %v7515, %v7513
        %v7628 = vpack.c.b16 %v7516, %v7514
        %v7629 = vpack.c.b16 %v7519, %v7517
        %v7630 = vpack.c.b16 %v7520, %v7518
        %v7631 = vpack.c.b16 %v7523, %v7521
        %v7632 = vpack.c.b16 %v7524, %v7522
        %v7633 = vpack.c.b16 %v7527, %v7525
        %v7634 = vpack.c.b16 %v7528, %v7526
        %v7635 = vpack.c.b16 %v7531, %v7529
        %v7636 = vpack.c.b16 %v7532, %v7530
        %v7637 = vpack.c.b16 %v7535, %v7533
        %v7638 = vpack.c.b16 %v7536, %v7534
        %v7639 = vpack.c.b16 %v7539, %v7537
        %v7640 = vpack.c.b16 %v7540, %v7538
        %v7641 = vpack.c.b16 %v7543, %v7541
        %v7642 = vpack.c.b16 %v7544, %v7542
        %v7643 = vpack.c.b16 %v7547, %v7545
        %v7644 = vpack.c.b16 %v7548, %v7546
        %7741 = vmatprep.subr.bf16.mxu0 %v7550
        %7742 = vmatpush1.bf16.msra.mxu0 %v7549
        %7743 = vmatprep.subr.bf16.mxu0 %v7552
        %7744 = vmatpush1.bf16.msra.mxu0 %v7551
        %7745 = vmatprep.subr.bf16.mxu0 %v7554
        %7746 = vmatpush1.bf16.msra.mxu0 %v7553
        %7747 = vmatprep.subr.bf16.mxu0 %v7556
        %7748 = vmatpush1.bf16.msra.mxu0 %v7555
        %7749 = vmatprep.subr.bf16.mxu0 %v7558
        %7750 = vmatpush1.bf16.msra.mxu0 %v7557
        %7751 = vmatprep.subr.bf16.mxu0 %v7560
        %7752 = vmatpush1.bf16.msra.mxu0 %v7559
        %7753 = vmatprep.subr.bf16.mxu0 %v7562
        %7754 = vmatpush1.bf16.msra.mxu0 %v7561
        %7755 = vmatprep.subr.bf16.mxu0 %v7564
        %7756 = vmatpush1.bf16.msra.mxu0 %v7563
        %7757 = vmatprep.subr.bf16.mxu0 %v7566
        %7758 = vmatpush1.bf16.msra.mxu0 %v7565
        %7759 = vmatprep.subr.bf16.mxu0 %v7568
        %7760 = vmatpush1.bf16.msra.mxu0 %v7567
        %7761 = vmatprep.subr.bf16.mxu0 %v7570
        %7762 = vmatpush1.bf16.msra.mxu0 %v7569
        %7763 = vmatprep.subr.bf16.mxu0 %v7572
        %7764 = vmatpush1.bf16.msra.mxu0 %v7571
        %7765 = vmatprep.subr.bf16.mxu0 %v7574
        %7766 = vmatpush1.bf16.msra.mxu0 %v7573
        %7767 = vmatprep.subr.bf16.mxu0 %v7576
        %7768 = vmatpush1.bf16.msra.mxu0 %v7575
        %7769 = vmatprep.subr.bf16.mxu0 %v7578
        %7770 = vmatpush1.bf16.msra.mxu0 %v7577
        %7771 = vmatprep.subr.bf16.mxu0 %v7580
        %7772 = vmatpush1.bf16.msra.mxu0 %v7579
        %7773 = vmatprep.mubr.bf16.mxu0 %v7100
        %7774 = vmatmul.mubr.bf16.gmra.mrb[0].mxu0 %v7099
        %v7775 = vpop.f32.mrb[0].mxu0
        %v7776 = vadd.f32 %v7254, %v7775
        %v7777 = vpop.f32.mrb[0].mxu0
        %v7778 = vadd.f32 %v7258, %v7777
        %v7779 = vpop.f32.mrb[0].mxu0
        %v7780 = vadd.f32 %v7254, %v7779
        %v7781 = vpop.f32.mrb[0].mxu0
        %v7782 = vadd.f32 %v7258, %v7781
        %7783 = vmatprep.mubr.bf16.mxu0 %v7106
        %7784 = vmatmul.mubr.bf16.gmra.mrb[0].mxu0 %v7105
        %v7785 = vpop.f32.mrb[0].mxu0
        %v7786 = vadd.f32 %v7254, %v7785
        %v7787 = vpop.f32.mrb[0].mxu0
        %v7788 = vadd.f32 %v7258, %v7787
        %v7789 = vpop.f32.mrb[0].mxu0
        %v7790 = vadd.f32 %v7254, %v7789
        %v7791 = vpop.f32.mrb[0].mxu0
        %v7792 = vadd.f32 %v7258, %v7791
        %7793 = vmatprep.mubr.bf16.mxu0 %v7112
        %7794 = vmatmul.mubr.bf16.gmra.mrb[0].mxu0 %v7111
        %v7795 = vpop.f32.mrb[0].mxu0
        %v7796 = vadd.f32 %v7254, %v7795
        %v7797 = vpop.f32.mrb[0].mxu0
        %v7798 = vadd.f32 %v7258, %v7797
        %v7799 = vpop.f32.mrb[0].mxu0
        %v7800 = vadd.f32 %v7254, %v7799
        %v7801 = vpop.f32.mrb[0].mxu0
        %v7802 = vadd.f32 %v7258, %v7801
        %7803 = vmatprep.mubr.bf16.mxu0 %v7118
        %7804 = vmatmul.mubr.bf16.gmra.mrb[0].mxu0 %v7117
        %v7805 = vpop.f32.mrb[0].mxu0
        %v7806 = vadd.f32 %v7254, %v7805
        %v7807 = vpop.f32.mrb[0].mxu0
        %v7808 = vadd.f32 %v7258, %v7807
        %v7809 = vpop.f32.mrb[0].mxu0
        %v7810 = vadd.f32 %v7254, %v7809
        %v7811 = vpop.f32.mrb[0].mxu0
        %v7812 = vadd.f32 %v7258, %v7811
        %7813 = vmatprep.mubr.bf16.mxu0 %v7124
        %7814 = vmatmul.mubr.bf16.gmra.mrb[0].mxu0 %v7123
        %v7815 = vpop.f32.mrb[0].mxu0
        %v7816 = vadd.f32 %v7254, %v7815
        %v7817 = vpop.f32.mrb[0].mxu0
        %v7818 = vadd.f32 %v7258, %v7817
        %v7819 = vpop.f32.mrb[0].mxu0
        %v7820 = vadd.f32 %v7254, %v7819
        %v7821 = vpop.f32.mrb[0].mxu0
        %v7822 = vadd.f32 %v7258, %v7821
        %7823 = vmatprep.mubr.bf16.mxu0 %v7130
        %7824 = vmatmul.mubr.bf16.gmra.mrb[0].mxu0 %v7129
        %v7825 = vpop.f32.mrb[0].mxu0
        %v7826 = vadd.f32 %v7254, %v7825
        %v7827 = vpop.f32.mrb[0].mxu0
        %v7828 = vadd.f32 %v7258, %v7827
        %v7829 = vpop.f32.mrb[0].mxu0
        %v7830 = vadd.f32 %v7254, %v7829
        %v7831 = vpop.f32.mrb[0].mxu0
        %v7832 = vadd.f32 %v7258, %v7831
        %7833 = vmatprep.mubr.bf16.mxu0 %v7136
        %7834 = vmatmul.mubr.bf16.gmra.mrb[0].mxu0 %v7135
        %v7835 = vpop.f32.mrb[0].mxu0
        %v7836 = vadd.f32 %v7254, %v7835
        %v7837 = vpop.f32.mrb[0].mxu0
        %v7838 = vadd.f32 %v7258, %v7837
        %v7839 = vpop.f32.mrb[0].mxu0
        %v7840 = vadd.f32 %v7254, %v7839
        %v7841 = vpop.f32.mrb[0].mxu0
        %v7842 = vadd.f32 %v7258, %v7841
        %7843 = vmatprep.mubr.bf16.mxu0 %v7142
        %7844 = vmatmul.mubr.bf16.gmra.mrb[0].mxu0 %v7141
        %v7845 = vpop.f32.mrb[0].mxu0
        %v7846 = vadd.f32 %v7254, %v7845
        %v7847 = vpop.f32.mrb[0].mxu0
        %v7848 = vadd.f32 %v7258, %v7847
        %v7849 = vpop.f32.mrb[0].mxu0
        %v7850 = vadd.f32 %v7254, %v7849
        %v7851 = vpop.f32.mrb[0].mxu0
        %v7852 = vadd.f32 %v7258, %v7851
        %7853 = vmatprep.mubr.bf16.mxu0 %v7148
        %7854 = vmatmul.mubr.bf16.gmra.mrb[0].mxu0 %v7147
        %v7855 = vpop.f32.mrb[0].mxu0
        %v7856 = vadd.f32 %v7254, %v7855
        %v7857 = vpop.f32.mrb[0].mxu0
        %v7858 = vadd.f32 %v7258, %v7857
        %v7859 = vpop.f32.mrb[0].mxu0
        %v7860 = vadd.f32 %v7254, %v7859
        %v7861 = vpop.f32.mrb[0].mxu0
        %v7862 = vadd.f32 %v7258, %v7861
        %7863 = vdwg.mxu0
        %7864 = vmatprep.subr.bf16.mxu0 %v7582
        %7865 = vmatpush1.bf16.msra.mxu0 %v7581
        %7866 = vmatprep.subr.bf16.mxu0 %v7584
        %7867 = vmatpush1.bf16.msra.mxu0 %v7583
        %7868 = vmatprep.subr.bf16.mxu0 %v7586
        %7869 = vmatpush1.bf16.msra.mxu0 %v7585
        %7870 = vmatprep.subr.bf16.mxu0 %v7588
        %7871 = vmatpush1.bf16.msra.mxu0 %v7587
        %7872 = vmatprep.subr.bf16.mxu0 %v7590
        %7873 = vmatpush1.bf16.msra.mxu0 %v7589
        %7874 = vmatprep.subr.bf16.mxu0 %v7592
        %7875 = vmatpush1.bf16.msra.mxu0 %v7591
        %7876 = vmatprep.subr.bf16.mxu0 %v7594
        %7877 = vmatpush1.bf16.msra.mxu0 %v7593
        %7878 = vmatprep.subr.bf16.mxu0 %v7596
        %7879 = vmatpush1.bf16.msra.mxu0 %v7595
        %7880 = vmatprep.subr.bf16.mxu0 %v7598
        %7881 = vmatpush1.bf16.msra.mxu0 %v7597
        %7882 = vmatprep.subr.bf16.mxu0 %v7600
        %7883 = vmatpush1.bf16.msra.mxu0 %v7599
        %7884 = vmatprep.subr.bf16.mxu0 %v7602
        %7885 = vmatpush1.bf16.msra.mxu0 %v7601
        %7886 = vmatprep.subr.bf16.mxu0 %v7604
        %7887 = vmatpush1.bf16.msra.mxu0 %v7603
        %7888 = vmatprep.subr.bf16.mxu0 %v7606
        %7889 = vmatpush1.bf16.msra.mxu0 %v7605
        %7890 = vmatprep.subr.bf16.mxu0 %v7608
        %7891 = vmatpush1.bf16.msra.mxu0 %v7607
        %7892 = vmatprep.subr.bf16.mxu0 %v7610
        %7893 = vmatpush1.bf16.msra.mxu0 %v7609
        %7894 = vmatprep.subr.bf16.mxu0 %v7612
        %7895 = vmatpush1.bf16.msra.mxu0 %v7611
        %7896 = vmatprep.mubr.bf16.mxu0 %v7102
        %7897 = vmatmul.mubr.bf16.gmra.mrb[0].mxu0 %v7101
        %v7898 = vpop.f32.mrb[0].mxu0
        %v7899 = vadd.f32 %v7776, %v7898
        %v7900 = vpop.f32.mrb[0].mxu0
        %v7901 = vadd.f32 %v7778, %v7900
        %v7902 = vpop.f32.mrb[0].mxu0
        %v7903 = vadd.f32 %v7780, %v7902
        %v7904 = vpop.f32.mrb[0].mxu0
        %v7905 = vadd.f32 %v7782, %v7904
        %7906 = vmatprep.mubr.bf16.mxu0 %v7108
        %7907 = vmatmul.mubr.bf16.gmra.mrb[0].mxu0 %v7107
        %v7908 = vpop.f32.mrb[0].mxu0
        %v7909 = vadd.f32 %v7786, %v7908
        %v7910 = vpop.f32.mrb[0].mxu0
        %v7911 = vadd.f32 %v7788, %v7910
        %v7912 = vpop.f32.mrb[0].mxu0
        %v7913 = vadd.f32 %v7790, %v7912
        %v7914 = vpop.f32.mrb[0].mxu0
        %v7915 = vadd.f32 %v7792, %v7914
        %7916 = vmatprep.mubr.bf16.mxu0 %v7114
        %7917 = vmatmul.mubr.bf16.gmra.mrb[0].mxu0 %v7113
        %v7918 = vpop.f32.mrb[0].mxu0
        %v7919 = vadd.f32 %v7796, %v7918
        %v7920 = vpop.f32.mrb[0].mxu0
        %v7921 = vadd.f32 %v7798, %v7920
        %v7922 = vpop.f32.mrb[0].mxu0
        %v7923 = vadd.f32 %v7800, %v7922
        %v7924 = vpop.f32.mrb[0].mxu0
        %v7925 = vadd.f32 %v7802, %v7924
        %7926 = vmatprep.mubr.bf16.mxu0 %v7120
        %7927 = vmatmul.mubr.bf16.gmra.mrb[0].mxu0 %v7119
        %v7928 = vpop.f32.mrb[0].mxu0
        %v7929 = vadd.f32 %v7806, %v7928
        %v7930 = vpop.f32.mrb[0].mxu0
        %v7931 = vadd.f32 %v7808, %v7930
        %v7932 = vpop.f32.mrb[0].mxu0
        %v7933 = vadd.f32 %v7810, %v7932
        %v7934 = vpop.f32.mrb[0].mxu0
        %v7935 = vadd.f32 %v7812, %v7934
        %7936 = vmatprep.mubr.bf16.mxu0 %v7126
        %7937 = vmatmul.mubr.bf16.gmra.mrb[0].mxu0 %v7125
        %v7938 = vpop.f32.mrb[0].mxu0
        %v7939 = vadd.f32 %v7816, %v7938
        %v7940 = vpop.f32.mrb[0].mxu0
        %v7941 = vadd.f32 %v7818, %v7940
        %v7942 = vpop.f32.mrb[0].mxu0
        %v7943 = vadd.f32 %v7820, %v7942
        %v7944 = vpop.f32.mrb[0].mxu0
        %v7945 = vadd.f32 %v7822, %v7944
        %7946 = vmatprep.mubr.bf16.mxu0 %v7132
        %7947 = vmatmul.mubr.bf16.gmra.mrb[0].mxu0 %v7131
        %v7948 = vpop.f32.mrb[0].mxu0
        %v7949 = vadd.f32 %v7826, %v7948
        %v7950 = vpop.f32.mrb[0].mxu0
        %v7951 = vadd.f32 %v7828, %v7950
        %v7952 = vpop.f32.mrb[0].mxu0
        %v7953 = vadd.f32 %v7830, %v7952
        %v7954 = vpop.f32.mrb[0].mxu0
        %v7955 = vadd.f32 %v7832, %v7954
        %7956 = vmatprep.mubr.bf16.mxu0 %v7138
        %7957 = vmatmul.mubr.bf16.gmra.mrb[0].mxu0 %v7137
        %v7958 = vpop.f32.mrb[0].mxu0
        %v7959 = vadd.f32 %v7836, %v7958
        %v7960 = vpop.f32.mrb[0].mxu0
        %v7961 = vadd.f32 %v7838, %v7960
        %v7962 = vpop.f32.mrb[0].mxu0
        %v7963 = vadd.f32 %v7840, %v7962
        %v7964 = vpop.f32.mrb[0].mxu0
        %v7965 = vadd.f32 %v7842, %v7964
        %7966 = vmatprep.mubr.bf16.mxu0 %v7144
        %7967 = vmatmul.mubr.bf16.gmra.mrb[0].mxu0 %v7143
        %v7968 = vpop.f32.mrb[0].mxu0
        %v7969 = vadd.f32 %v7846, %v7968
        %v7970 = vpop.f32.mrb[0].mxu0
        %v7971 = vadd.f32 %v7848, %v7970
        %v7972 = vpop.f32.mrb[0].mxu0
        %v7973 = vadd.f32 %v7850, %v7972
        %v7974 = vpop.f32.mrb[0].mxu0
        %v7975 = vadd.f32 %v7852, %v7974
        %7976 = vmatprep.mubr.bf16.mxu0 %v7150
        %7977 = vmatmul.mubr.bf16.gmra.mrb[0].mxu0 %v7149
        %v7978 = vpop.f32.mrb[0].mxu0
        %v7979 = vadd.f32 %v7856, %v7978
        %v7980 = vpop.f32.mrb[0].mxu0
        %v7981 = vadd.f32 %v7858, %v7980
        %v7982 = vpop.f32.mrb[0].mxu0
        %v7983 = vadd.f32 %v7860, %v7982
        %v7984 = vpop.f32.mrb[0].mxu0
        %v7985 = vadd.f32 %v7862, %v7984
        %7986 = vdwg.mxu0
        %7987 = vmatprep.subr.bf16.mxu0 %v7614
        %7988 = vmatpush1.bf16.msra.mxu0 %v7613
        %7989 = vmatprep.subr.bf16.mxu0 %v7616
        %7990 = vmatpush1.bf16.msra.mxu0 %v7615
        %7991 = vmatprep.subr.bf16.mxu0 %v7618
        %7992 = vmatpush1.bf16.msra.mxu0 %v7617
        %7993 = vmatprep.subr.bf16.mxu0 %v7620
        %7994 = vmatpush1.bf16.msra.mxu0 %v7619
        %7995 = vmatprep.subr.bf16.mxu0 %v7622
        %7996 = vmatpush1.bf16.msra.mxu0 %v7621
        %7997 = vmatprep.subr.bf16.mxu0 %v7624
        %7998 = vmatpush1.bf16.msra.mxu0 %v7623
        %7999 = vmatprep.subr.bf16.mxu0 %v7626
        %8000 = vmatpush1.bf16.msra.mxu0 %v7625
        %8001 = vmatprep.subr.bf16.mxu0 %v7628
        %8002 = vmatpush1.bf16.msra.mxu0 %v7627
        %8003 = vmatprep.subr.bf16.mxu0 %v7630
        %8004 = vmatpush1.bf16.msra.mxu0 %v7629
        %8005 = vmatprep.subr.bf16.mxu0 %v7632
        %8006 = vmatpush1.bf16.msra.mxu0 %v7631
        %8007 = vmatprep.subr.bf16.mxu0 %v7634
        %8008 = vmatpush1.bf16.msra.mxu0 %v7633
        %8009 = vmatprep.subr.bf16.mxu0 %v7636
        %8010 = vmatpush1.bf16.msra.mxu0 %v7635
        %8011 = vmatprep.subr.bf16.mxu0 %v7638
        %8012 = vmatpush1.bf16.msra.mxu0 %v7637
        %8013 = vmatprep.subr.bf16.mxu0 %v7640
        %8014 = vmatpush1.bf16.msra.mxu0 %v7639
        %8015 = vmatprep.subr.bf16.mxu0 %v7642
        %8016 = vmatpush1.bf16.msra.mxu0 %v7641
        %8017 = vmatprep.subr.bf16.mxu0 %v7644
        %8018 = vmatpush1.bf16.msra.mxu0 %v7643
        %8019 = vmatprep.mubr.bf16.mxu0 %v7104
        %8020 = vmatmul.mubr.bf16.gmra.mrb[0].mxu0 %v7103
        %v8021 = vpop.f32.mrb[0].mxu0
        %v8022 = vadd.f32 %v7899, %v8021
        %v8023 = vpop.f32.mrb[0].mxu0
        %v8024 = vadd.f32 %v7901, %v8023
        %v8025 = vpop.f32.mrb[0].mxu0
        %v8026 = vadd.f32 %v7903, %v8025
        %v8027 = vpop.f32.mrb[0].mxu0
        %v8028 = vadd.f32 %v7905, %v8027
        %8029 = vmatprep.mubr.bf16.mxu0 %v7110
        %8030 = vmatmul.mubr.bf16.gmra.mrb[0].mxu0 %v7109
        %v8031 = vpop.f32.mrb[0].mxu0
        %v8032 = vadd.f32 %v7909, %v8031
        %v8033 = vpop.f32.mrb[0].mxu0
        %v8034 = vadd.f32 %v7911, %v8033
        %v8035 = vpop.f32.mrb[0].mxu0
        %v8036 = vadd.f32 %v7913, %v8035
        %v8037 = vpop.f32.mrb[0].mxu0
        %v8038 = vadd.f32 %v7915, %v8037
        %8039 = vmatprep.mubr.bf16.mxu0 %v7116
        %8040 = vmatmul.mubr.bf16.gmra.mrb[0].mxu0 %v7115
        %v8041 = vpop.f32.mrb[0].mxu0
        %v8042 = vadd.f32 %v7919, %v8041
        %v8043 = vpop.f32.mrb[0].mxu0
        %v8044 = vadd.f32 %v7921, %v8043
        %v8045 = vpop.f32.mrb[0].mxu0
        %v8046 = vadd.f32 %v7923, %v8045
        %v8047 = vpop.f32.mrb[0].mxu0
        %v8048 = vadd.f32 %v7925, %v8047
        %8049 = vmatprep.mubr.bf16.mxu0 %v7122
        %8050 = vmatmul.mubr.bf16.gmra.mrb[0].mxu0 %v7121
        %v8051 = vpop.f32.mrb[0].mxu0
        %v8052 = vadd.f32 %v7929, %v8051
        %v8053 = vpop.f32.mrb[0].mxu0
        %v8054 = vadd.f32 %v7931, %v8053
        %v8055 = vpop.f32.mrb[0].mxu0
        %v8056 = vadd.f32 %v7933, %v8055
        %v8057 = vpop.f32.mrb[0].mxu0
        %v8058 = vadd.f32 %v7935, %v8057
        %8059 = vmatprep.mubr.bf16.mxu0 %v7128
        %8060 = vmatmul.mubr.bf16.gmra.mrb[0].mxu0 %v7127
        %v8061 = vpop.f32.mrb[0].mxu0
        %v8062 = vadd.f32 %v7939, %v8061
        %v8063 = vpop.f32.mrb[0].mxu0
        %v8064 = vadd.f32 %v7941, %v8063
        %v8065 = vpop.f32.mrb[0].mxu0
        %v8066 = vadd.f32 %v7943, %v8065
        %v8067 = vpop.f32.mrb[0].mxu0
        %v8068 = vadd.f32 %v7945, %v8067
        %8069 = vmatprep.mubr.bf16.mxu0 %v7134
        %8070 = vmatmul.mubr.bf16.gmra.mrb[0].mxu0 %v7133
        %v8071 = vpop.f32.mrb[0].mxu0
        %v8072 = vadd.f32 %v7949, %v8071
        %v8073 = vpop.f32.mrb[0].mxu0
        %v8074 = vadd.f32 %v7951, %v8073
        %v8075 = vpop.f32.mrb[0].mxu0
        %v8076 = vadd.f32 %v7953, %v8075
        %v8077 = vpop.f32.mrb[0].mxu0
        %v8078 = vadd.f32 %v7955, %v8077
        %8079 = vmatprep.mubr.bf16.mxu0 %v7140
        %8080 = vmatmul.mubr.bf16.gmra.mrb[0].mxu0 %v7139
        %v8081 = vpop.f32.mrb[0].mxu0
        %v8082 = vadd.f32 %v7959, %v8081
        %v8083 = vpop.f32.mrb[0].mxu0
        %v8084 = vadd.f32 %v7961, %v8083
        %v8085 = vpop.f32.mrb[0].mxu0
        %v8086 = vadd.f32 %v7963, %v8085
        %v8087 = vpop.f32.mrb[0].mxu0
        %v8088 = vadd.f32 %v7965, %v8087
        %8089 = vmatprep.mubr.bf16.mxu0 %v7146
        %8090 = vmatmul.mubr.bf16.gmra.mrb[0].mxu0 %v7145
        %v8091 = vpop.f32.mrb[0].mxu0
        %v8092 = vadd.f32 %v7969, %v8091
        %v8093 = vpop.f32.mrb[0].mxu0
        %v8094 = vadd.f32 %v7971, %v8093
        %v8095 = vpop.f32.mrb[0].mxu0
        %v8096 = vadd.f32 %v7973, %v8095
        %v8097 = vpop.f32.mrb[0].mxu0
        %v8098 = vadd.f32 %v7975, %v8097
        %8099 = vmatprep.mubr.bf16.mxu0 %v7152
        %8100 = vmatmul.mubr.bf16.gmra.mrb[0].mxu0 %v7151
        %v8101 = vpop.f32.mrb[0].mxu0
        %v8102 = vadd.f32 %v7979, %v8101
        %v8103 = vpop.f32.mrb[0].mxu0
        %v8104 = vadd.f32 %v7981, %v8103
        %v8105 = vpop.f32.mrb[0].mxu0
        %v8106 = vadd.f32 %v7983, %v8105
        %v8107 = vpop.f32.mrb[0].mxu0
        %v8108 = vadd.f32 %v7985, %v8107
        %8109 = vdwg.mxu0
        %v8110 = vadd.f32 %v4793, %v8022
        %v8111 = vadd.f32 %v4794, %v8024
        %v8112 = vadd.f32 %v4795, %v8026
        %v8113 = vadd.f32 %v4796, %v8028
        %v8114 = vadd.f32 %v4797, %v8032
        %v8115 = vadd.f32 %v4798, %v8034
        %v8116 = vadd.f32 %v4799, %v8036
        %v8117 = vadd.f32 %v4800, %v8038
        %v8118 = vadd.f32 %v4801, %v8042
        %v8119 = vadd.f32 %v4802, %v8044
        %v8120 = vadd.f32 %v4803, %v8046
        %v8121 = vadd.f32 %v4804, %v8048
        %v8122 = vadd.f32 %v4805, %v8052
        %v8123 = vadd.f32 %v4806, %v8054
        %v8124 = vadd.f32 %v4807, %v8056
        %v8125 = vadd.f32 %v4808, %v8058
        %v8126 = vadd.f32 %v4809, %v8062
        %v8127 = vadd.f32 %v4810, %v8064
        %v8128 = vadd.f32 %v4811, %v8066
        %v8129 = vadd.f32 %v4812, %v8068
        %v8130 = vadd.f32 %v4813, %v8072
        %v8131 = vadd.f32 %v4814, %v8074
        %v8132 = vadd.f32 %v4815, %v8076
        %v8133 = vadd.f32 %v4816, %v8078
        %v8134 = vadd.f32 %v4817, %v8082
        %v8135 = vadd.f32 %v4818, %v8084
        %v8136 = vadd.f32 %v4819, %v8086
        %v8137 = vadd.f32 %v4820, %v8088
        %v8138 = vadd.f32 %v4821, %v8092
        %v8139 = vadd.f32 %v4822, %v8094
        %v8140 = vadd.f32 %v4823, %v8096
        %v8141 = vadd.f32 %v4824, %v8098
        %v8142 = vadd.f32 %v4825, %v8102
        %v8143 = vadd.f32 %v4826, %v8104
        %v8144 = vadd.f32 %v4827, %v8106
        %v8145 = vadd.f32 %v4828, %v8108
        %8146 = vst [vmem:[#allocation2] sm:$0xff] %v8110
        %8147 = vst.msk [vmem:[#allocation2 + $0x8] sm:$0xff] %vm793, %v8111
        %8148 = vst [vmem:[#allocation2 + $0x10] sm:$0xff] %v8112
        %8149 = vst.msk [vmem:[#allocation2 + $0x18] sm:$0xff] %vm793, %v8113
        %8150 = vst [vmem:[#allocation2 + $0x20] sm:$0xff] %v8114
        %8151 = vst.msk [vmem:[#allocation2 + $0x28] sm:$0xff] %vm793, %v8115
        %8152 = vst [vmem:[#allocation2 + $0x30] sm:$0xff] %v8116
        %8153 = vst.msk [vmem:[#allocation2 + $0x38] sm:$0xff] %vm793, %v8117
        %8154 = vst [vmem:[#allocation2 + $0x40] sm:$0xff] %v8118
        %8155 = vst.msk [vmem:[#allocation2 + $0x48] sm:$0xff] %vm793, %v8119
        %8156 = vst [vmem:[#allocation2 + $0x50] sm:$0xff] %v8120
        %8157 = vst.msk [vmem:[#allocation2 + $0x58] sm:$0xff] %vm793, %v8121
        %8158 = vst [vmem:[#allocation2 + $0x60] sm:$0xff] %v8122
        %8159 = vst.msk [vmem:[#allocation2 + $0x68] sm:$0xff] %vm793, %v8123
        %8160 = vst [vmem:[#allocation2 + $0x70] sm:$0xff] %v8124
        %8161 = vst.msk [vmem:[#allocation2 + $0x78] sm:$0xff] %vm793, %v8125
        %8162 = vst [vmem:[#allocation2 + $0x80] sm:$0xff] %v8126
        %8163 = vst.msk [vmem:[#allocation2 + $0x88] sm:$0xff] %vm793, %v8127
        %8164 = vst [vmem:[#allocation2 + $0x90] sm:$0xff] %v8128
        %8165 = vst.msk [vmem:[#allocation2 + $0x98] sm:$0xff] %vm793, %v8129
        %8166 = vst [vmem:[#allocation2 + $0xa0] sm:$0xff] %v8130
        %8167 = vst.msk [vmem:[#allocation2 + $0xa8] sm:$0xff] %vm793, %v8131
        %8168 = vst [vmem:[#allocation2 + $0xb0] sm:$0xff] %v8132
        %8169 = vst.msk [vmem:[#allocation2 + $0xb8] sm:$0xff] %vm793, %v8133
        %8170 = vst [vmem:[#allocation2 + $0xc0] sm:$0xff] %v8134
        %8171 = vst.msk [vmem:[#allocation2 + $0xc8] sm:$0xff] %vm793, %v8135
        %8172 = vst [vmem:[#allocation2 + $0xd0] sm:$0xff] %v8136
        %8173 = vst.msk [vmem:[#allocation2 + $0xd8] sm:$0xff] %vm793, %v8137
        %8174 = vst [vmem:[#allocation2 + $0xe0] sm:$0xff] %v8138
        %8175 = vst.msk [vmem:[#allocation2 + $0xe8] sm:$0xff] %vm793, %v8139
        %8176 = vst [vmem:[#allocation2 + $0xf0] sm:$0xff] %v8140
        %8177 = vst.msk [vmem:[#allocation2 + $0xf8] sm:$0xff] %vm793, %v8141
        %8178 = vst [vmem:[#allocation2 + $0x100] sm:$0xff] %v8142
        %8179 = vst.msk [vmem:[#allocation2 + $0x108] sm:$0xff] %vm793, %v8143
        %8180 = vst [vmem:[#allocation2 + $0x110] sm:$0xff] %v8144
        %8181 = vst.msk [vmem:[#allocation2 + $0x118] sm:$0xff] %vm793, %v8145
        %p8182 = scmp.eq.s32.totalorder %s27, 11
        // Predicated region
        $region85: #{energy_net_forward.3} parent=79 // pred_check
          %p8183 = pneg %p8182
        $region86: #{energy_net_forward.3} parent=79 // pred_check_branch
          %8185 = sbr.rel (%p8183) target = $region88
        $region87: #{energy_net_forward.3} parent=79 // pred_region
          %v8190 = vrot.slane %v8128, 7
          %vm8191 = vcmask 1041409
          %v8192 = vsel %vm8191, %v8190, %v8110
          %v8193 = vrot.slane %v8129, 7
          %v8194 = vsel %vm8191, %v8193, %v8111
          %vm8197 = vcmask 1041408
          %v8198 = vsel %vm8197, %v8192, 0.0
          %vm8199 = vcmask 517120
          %v8200 = vsel %vm8199, %v8194, 0.0
          %v8201 = vadd.f32 %v8198, %v8200
          %8202 = vadd.xlane.f32.xlu0 %v8201
          %v8203 = vpop.xlane.xlu0 %8202
          %v8204 = vmul.f32 %v8203, %v866
          %v8206 = vrot.slane %v8204, 1
          %v8209 = vsub.f32 %v8110, %v8204
          %v8210 = vsub.f32 %v8111, %v8204
          %v8211 = vsub.f32 %v8128, %v8206
          %v8212 = vsub.f32 %v8129, %v8206
          %v8213 = vmul.f32 %v8209, %v8209
          %v8214 = vmul.f32 %v8210, %v8210
          %v8215 = vmul.f32 %v8211, %v8211
          %v8216 = vmul.f32 %v8212, %v8212
          %v8221 = vrot.slane %v8215, 7
          %v8222 = vsel %vm8191, %v8221, %v8213
          %v8223 = vrot.slane %v8216, 7
          %v8224 = vsel %vm8191, %v8223, %v8214
          %v8227 = vsel %vm8197, %v8222, 0.0
          %v8228 = vsel %vm8199, %v8224, 0.0
          %v8229 = vadd.f32 %v8227, %v8228
          %8230 = vadd.xlane.f32.xlu0 %v8229
          %v8231 = vpop.xlane.xlu0 %8230
          %v8232 = vmul.f32 %v8231, %v866
          %v8233 = vadd.f32 %v8232, 1e-05
          %v8234 = vrsqrt.pop %v8233
          %v8236 = vrot.slane %v8234, 1
          %v8239 = vmul.f32 %v8209, %v8234
          %v8240 = vmul.f32 %v8210, %v8234
          %v8241 = vmul.f32 %v8211, %v8236
          %v8242 = vmul.f32 %v8212, %v8236
          %v8243 = vld [vmem:[%s13] sm:$0x3]
          %v8245 = vlaneseq
          %v8246 = vshrl.u32 %v8245, 7
          %v8247 = vsub.s32 0, %v8246
          %v8248 = vrot.slane %v8243, %v8247
          %v8249 = vlaneseq
          %v8250 = vshrl.u32 %v8249, 7
          %v8251 = vsub.s32 1, %v8250
          %v8252 = vrot.slane %v8243, %v8251
          %v8255 = vmul.f32 %v8239, %v8248
          %v8256 = vmul.f32 %v8240, %v8252
          %v8257 = vmul.f32 %v8241, %v8248
          %v8258 = vmul.f32 %v8242, %v8252
          %v8259 = vld [vmem:[%s14] sm:$0x3]
          %v8261 = vlaneseq
          %v8262 = vshrl.u32 %v8261, 7
          %v8263 = vsub.s32 0, %v8262
          %v8264 = vrot.slane %v8259, %v8263
          %v8265 = vlaneseq
          %v8266 = vshrl.u32 %v8265, 7
          %v8267 = vsub.s32 1, %v8266
          %v8268 = vrot.slane %v8259, %v8267
          %v8271 = vadd.f32 %v8255, %v8264
          %v8272 = vadd.f32 %v8256, %v8268
          %v8273 = vadd.f32 %v8257, %v8264
          %v8274 = vadd.f32 %v8258, %v8268
          %v8279 = vcombine.low %v8271, %v8272
          %v8281 = vunpack.c.l.s4 1983009808
          %v8282 = vunpack.c.0.s8 %v8281
          %v8283 = vlaneseq
          %v8284 = vshrl.u32 %v8283, 7
          %v8285 = vsub.s32 %v8282, %v8284
          %v8286 = vrot.slane %v8279, %v8285
          %v8287 = vcombine.low %v8273, %v8274
          %v8289 = vunpack.c.l.s4 1983009808
          %v8290 = vunpack.c.0.s8 %v8289
          %v8291 = vlaneseq
          %v8292 = vshrl.u32 %v8291, 7
          %v8293 = vsub.s32 %v8290, %v8292
          %v8294 = vrot.slane %v8287, %v8293
          %vm8295 = vcmask 1044484
          %v8296 = vsel %vm8295, %v8286, %v8286
          %vm8297 = vcmask 1046534
          %v8298 = vsel %vm8297, %v8286, %v8296
          %v8299 = vrot.slane %v8294, 7
          %v8300 = vsel %vm8191, %v8299, %v8298
          %vm8301 = vcmask 1043459
          %v8302 = vsel %vm8301, %v8299, %v8300
          %vm8303 = vcmask 1045509
          %v8304 = vsel %vm8303, %v8299, %v8302
          %vm8305 = vcmask 1047559
          %v8306 = vsel %vm8305, %v8299, %v8304
          %vm8308 = vcmask 519170
          %vm8309 = vmor %vm8308, %vm8197
          %8310 = vst.msk [vmem:[#allocation3] sm:$0xf] %vm8309, %v8306
        $region88: #{energy_net_forward.3} parent=79 // pred_fallthru
          _
        // Predicated region
        $region89: #{energy_net_forward.3} parent=79 // pred_check
          %p8311 = pneg %p415
        $region90: #{energy_net_forward.3} parent=79 // pred_check_branch
          %8313 = sbr.rel (%p8311) target = $region92
        $region91: #{energy_net_forward.3} parent=79 // pred_region
          %s8315 = ssub.s32 64, 64
          %8316 = vsyncadd [#allocation4], %s8315
          %s8318 = sshll.u32 [#allocation3], 4
          %s8319 = int_to_ptr.vmem [resolvable:$true] %s8318
          %8321 = dma.vmem_to_hbm [thread:$0]  %s8319, 64, %s15, [#allocation4]
        $region92: #{energy_net_forward.3} parent=79 // pred_fallthru
          _
        // Predicated region
        $region93: #{energy_net_forward.3} parent=79 // pred_check
          %p8322 = pneg %p415
        $region94: #{energy_net_forward.3} parent=79 // pred_check_branch
          %8324 = sbr.rel (%p8322) target = $region96
        $region95: #{energy_net_forward.3} parent=79 // pred_region
          %8325 = dma.done [#allocation4], 64
        $region96: #{energy_net_forward.3} parent=79 // pred_fallthru
          _
      $region80: #{energy_net_forward.3} parent=5 // pred_fallthru
        _
      %p8326 = scmp.le.s32.totalorder 2, %s22
      // Predicated region
      $region97: #{energy_net_forward.3} parent=5 // pred_check
        %p8327 = pneg %p8326
      $region98: #{energy_net_forward.3} parent=5 // pred_check_branch
        %8329 = sbr.rel (%p8327) target = $region100
      $region99: #{energy_net_forward.3} parent=5 // pred_region
        %s8330 = ssub.s32 %s22, 2
      $region100: #{energy_net_forward.3} parent=5 // pred_fallthru
        _
    $region6: #{energy_net_forward.3} parent=1 // loop_footer
      %s26 = sadd.s32 1, %s22
    $region7: #{energy_net_forward.3} parent=1 // loop_footer_branch
      %21 = sbr.rel target = $region3
    $region8: #{energy_net_forward.3} parent=1 // loop_exit
      _
    %8331 = vsyncpa [#allocation4], 1
    %s8332 = scalar_lea.sflag [#allocation4], 1
    %8333 = vsyncpa %s8332, 1

</llo_original>
